<compile_context>
chip_gen: v6e
topology: v6e:2x2x1
jax: 0.10.0
libtpu: 0.0.40
codegen_flags: <defaults>
</compile_context>

<pallas_src>
import jax
import jax.numpy as jnp
from jax import lax
from jax.experimental import pallas as pl
from jax.experimental.pallas import tpu as pltpu


def _vmem():
    return pl.BlockSpec(memory_space=pltpu.MemorySpace.VMEM)


def _any():
    return pl.BlockSpec(memory_space=pl.ANY)


def _total_bytes(arrays=(), f32_shapes=()):
    tot = 0
    for a in arrays:
        tot += int(a.size) * a.dtype.itemsize
    for s in f32_shapes:
        n = 1
        for d in s:
            n *= int(d)
        tot += 4 * n
    return tot


def _vmem_limit(nbytes):
    # 2x headroom (compiler-internal scratch, relayouts); floor well above the
    # demo shapes, cap at 128 MiB (re-derive tiling for v7x's 64 MiB if hit).
    return int(min(max(2 * nbytes, 16 << 20), 128 << 20))


# --------------------------------------------------------------------------
# Fused 2-layer bidirectional encoder (+ encoder2decoder tanh projection).
# --------------------------------------------------------------------------
def _encoder_kernel(src_ref,
                    w0f_ref, b0f_ref, u0f_ref,      # layer0 fwd (src emb folded)
                    w0b_ref, b0b_ref, u0b_ref,      # layer0 bwd (src emb folded)
                    l1f_hbm, b1f_ref,               # layer1 fwd [Wih_top,Wih_bot,Whh] in HBM
                    l1b_hbm, b1b_ref,               # layer1 bwd [Wih_top,Wih_bot,Whh] in HBM
                    e2dw_hbm, e2db_ref,             # encoder2decoder (weight in HBM)
                    srch_ref, dinit_ref, ct_ref,    # outputs
                    hfseq_sc, hbseq_sc, gxf_sc, gxb_sc,
                    l1f_sc, l1b_sc, e2dw_sc, dma_sem):
    S = src_ref.shape[0]
    Hs = u0f_ref.shape[0]        # per-direction hidden size
    G = 3 * Hs                   # width of the contiguous sigmoid block
    unroll = True if S <= 64 else 8   # bounded unroll for long sequences

    # Start streaming layer-1 / encoder2decoder weights HBM->VMEM now; with a
    # single grid point there is no BlockSpec pipelining, so these copies
    # complete for free under the latency-bound, HBM-idle layer-0 recurrence.
    cp_f = pltpu.make_async_copy(l1f_hbm, l1f_sc, dma_sem.at[0])
    cp_b = pltpu.make_async_copy(l1b_hbm, l1b_sc, dma_sem.at[1])
    cp_e = pltpu.make_async_copy(e2dw_hbm, e2dw_sc, dma_sem.at[2])
    cp_f.start()
    cp_b.start()
    cp_e.start()

    # TODO(synk): on v7x the independent fwd/bwd chains could be split across
    # the 2 TensorCores via pl.core_map(create_tensorcore_mesh(...)).
    # TODO(synk): for long S, chunk-pipeline layer0/layer1 and batch the
    # per-step row stores into (8, Hs) sublane tiles to keep more chains in
    # flight and avoid masked single-row stores.
    def bidir_layer(u_f, u_b):
        """Both directions over the whole sequence.  gates_x must already be
        in gxf_sc / gxb_sc.  Hidden sequences go to hfseq_sc / hbseq_sc (bwd
        written at its original time index).  Returns final (hf, cf, hb, cb)."""
        def step(t, carry):
            hf, cf, hb, cb = carry
            tb = S - 1 - t
            gf = (jnp.dot(hf.astype(u_f.dtype), u_f,
                          preferred_element_type=jnp.float32)
                  + gxf_sc[pl.ds(t, 1), :])
            gb = (jnp.dot(hb.astype(u_b.dtype), u_b,
                          preferred_element_type=jnp.float32)
                  + gxb_sc[pl.ds(tb, 1), :])
            sf = jax.nn.sigmoid(gf[:, :G])     # [i, f, o] in one EUP launch
            gtf = jnp.tanh(gf[:, G:])          # g
            sb = jax.nn.sigmoid(gb[:, :G])
            gtb = jnp.tanh(gb[:, G:])
            cf = sf[:, Hs:2 * Hs] * cf + sf[:, :Hs] * gtf
            hf = sf[:, 2 * Hs:3 * Hs] * jnp.tanh(cf)
            cb = sb[:, Hs:2 * Hs] * cb + sb[:, :Hs] * gtb
            hb = sb[:, 2 * Hs:3 * Hs] * jnp.tanh(cb)
            hfseq_sc[pl.ds(t, 1), :] = hf
            hbseq_sc[pl.ds(tb, 1), :] = hb
            return hf, cf, hb, cb

        z = jnp.zeros((1, Hs), jnp.float32)    # zero initial states (get_state)
        return lax.fori_loop(0, S, step, (z, z, z, z), unroll=unroll)

    # ---- layer 0: src embedding folded into w0*/b0*, so gates_x is a pure
    #      VPU broadcast (S,1)*(1,4Hs) product (no M=1 / K=1 matmuls).
    src = src_ref[...].astype(jnp.float32)
    gxf_sc[...] = src * w0f_ref[...].astype(jnp.float32) + b0f_ref[...]
    gxb_sc[...] = src * w0b_ref[...].astype(jnp.float32) + b0b_ref[...]
    hf0, cf0, hb0, cb0 = bidir_layer(u0f_ref[...], u0b_ref[...])

    # ---- layer 1: weights arrived during layer 0.  wih is pre-split into
    #      fwd/bwd input halves so no (S,2Hs) lane-concat feeds the MXU.
    cp_f.wait()
    cp_b.wait()
    w1f_top, w1f_bot, u1f = l1f_sc[0], l1f_sc[1], l1f_sc[2]
    w1b_top, w1b_bot, u1b = l1b_sc[0], l1b_sc[1], l1b_sc[2]
    x_f = hfseq_sc[...].astype(w1f_top.dtype)
    x_b = hbseq_sc[...].astype(w1f_top.dtype)
    gxf_sc[...] = (jnp.dot(x_f, w1f_top, preferred_element_type=jnp.float32)
                   + jnp.dot(x_b, w1f_bot, preferred_element_type=jnp.float32)
                   + b1f_ref[...])
    gxb_sc[...] = (jnp.dot(x_f, w1b_top, preferred_element_type=jnp.float32)
                   + jnp.dot(x_b, w1b_bot, preferred_element_type=jnp.float32)
                   + b1b_ref[...])
    hf1, cf1, hb1, cb1 = bidir_layer(u1f, u1b)

    # lane-dense single store of the full encoder output (fwd ; bwd).
    srch_ref[...] = jnp.concatenate([hfseq_sc[...], hbseq_sc[...]], axis=1)

    # ---- final states (PyTorch layout: row l = [fwd ; bwd]) and fused
    #      decoder_init = tanh(encoder2decoder(h_t)).
    cp_e.wait()
    h_t = jnp.concatenate([jnp.concatenate([hf0, hb0], axis=1),
                           jnp.concatenate([hf1, hb1], axis=1)], axis=0)
    c_t = jnp.concatenate([jnp.concatenate([cf0, cb0], axis=1),
                           jnp.concatenate([cf1, cb1], axis=1)], axis=0)
    ct_ref[...] = c_t
    e2dw = e2dw_sc[...]
    dinit_ref[...] = jnp.tanh(
        jnp.dot(h_t.astype(e2dw.dtype), e2dw, preferred_element_type=jnp.float32)
        + e2db_ref[...])


def encoder_forward(p, input_src):
    S = input_src.shape[0]
    Hs = p["enc0_fwd"]["whh"].shape[0]
    H = 2 * Hs
    e0f, e0b = p["enc0_fwd"], p["enc0_bwd"]
    l1f, l1b = p["enc1_fwd_stack"], p["enc1_bwd_stack"]
    b1f, b1b = p["enc1_fwd_b"], p["enc1_bwd_b"]
    e2dw, e2db = p["e2d_w"], p["e2d_b"]

    scratch = [pltpu.VMEM((S, Hs), jnp.float32),        # fwd hidden seq
               pltpu.VMEM((S, Hs), jnp.float32),        # bwd hidden seq
               pltpu.VMEM((S, 4 * Hs), jnp.float32),    # gates_x fwd
               pltpu.VMEM((S, 4 * Hs), jnp.float32),    # gates_x bwd
               pltpu.VMEM(l1f.shape, l1f.dtype),        # layer-1 fwd DMA dst
               pltpu.VMEM(l1b.shape, l1b.dtype),        # layer-1 bwd DMA dst
               pltpu.VMEM(e2dw.shape, e2dw.dtype),      # e2d weight DMA dst
               pltpu.SemaphoreType.DMA((3,))]

    nbytes = _total_bytes(
        arrays=(input_src, e0f["wih"], e0f["b"], e0f["whh"],
                e0b["wih"], e0b["b"], e0b["whh"],
                l1f, b1f, l1b, b1b, e2dw, e2db,
                l1f, l1b, e2dw),                        # DMA scratch copies
        f32_shapes=((S, H), (2, H), (2, H),             # outputs
                    (S, Hs), (S, Hs), (S, 4 * Hs), (S, 4 * Hs)))

    return pl.pallas_call(
        _encoder_kernel,
        out_shape=(jax.ShapeDtypeStruct((S, H), jnp.float32),   # src_h
                   jax.ShapeDtypeStruct((2, H), jnp.float32),   # decoder init h
                   jax.ShapeDtypeStruct((2, H), jnp.float32)),  # decoder init c
        in_specs=[_vmem(),
                  _vmem(), _vmem(), _vmem(),
                  _vmem(), _vmem(), _vmem(),
                  _any(), _vmem(),
                  _any(), _vmem(),
                  _any(), _vmem()],
        out_specs=(_vmem(), _vmem(), _vmem()),
        scratch_shapes=scratch,
        compiler_params=pltpu.CompilerParams(
            vmem_limit_bytes=_vmem_limit(nbytes)),
    )(input_src,
      e0f["wih"], e0f["b"], e0f["whh"],
      e0b["wih"], e0b["b"], e0b["whh"],
      l1f, b1f,
      l1b, b1b,
      e2dw, e2db)


# --------------------------------------------------------------------------
# Fused 2-layer decoder (+ fast-attention context).
# --------------------------------------------------------------------------
def _decoder_kernel(trg_ref,
                    w0_ref, b0_ref, u0_ref,       # layer0 (trg emb folded)
                    l1_hbm, b1_ref,               # layer1 [Wih, Whh] stacked in HBM
                    dinit_ref, ct_ref, srch_ref,
                    trgh_ref, ctx_ref,            # outputs
                    h0_sc, gx_sc, l1_sc, dma_sem):
    T = trg_ref.shape[0]
    H = u0_ref.shape[0]
    G = 3 * H
    unroll = True if T <= 64 else 8

    # Stream layer-1 weights under layer-0's latency-bound recurrence.
    cp1 = pltpu.make_async_copy(l1_hbm, l1_sc, dma_sem.at[0])
    cp1.start()

    # TODO(synk): chunk-pipeline layer0/layer1 (run layer1's recurrence for
    # chunk k against layer0's for chunk k+1) to fill idle MXU/EUP slots.
    def run_layer(u, h0, c0, out_ref):
        def step(t, carry):
            h, c = carry
            g = (jnp.dot(h.astype(u.dtype), u, preferred_element_type=jnp.float32)
                 + gx_sc[pl.ds(t, 1), :])
            s = jax.nn.sigmoid(g[:, :G])       # [i, f, o]
            gt = jnp.tanh(g[:, G:])            # g
            c = s[:, H:2 * H] * c + s[:, :H] * gt
            h = s[:, 2 * H:3 * H] * jnp.tanh(c)
            out_ref[pl.ds(t, 1), :] = h
            return h, c

        lax.fori_loop(0, T, step, (h0, c0), unroll=unroll)

    # layer 0: hoisted gates_x matmul (trg embedding composed into w0/b0).
    w0 = w0_ref[...]
    gx_sc[...] = (jnp.dot(trg_ref[...].astype(w0.dtype), w0,
                          preferred_element_type=jnp.float32) + b0_ref[...])
    run_layer(u0_ref[...], dinit_ref[0:1, :], ct_ref[0:1, :], h0_sc)

    # layer 1: weights arrived during layer 0; inter-layer activation stays in VMEM.
    cp1.wait()
    w1, u1 = l1_sc[0], l1_sc[1]
    gx_sc[...] = (jnp.dot(h0_sc[...].astype(w1.dtype), w1,
                          preferred_element_type=jnp.float32) + b1_ref[...])
    run_layer(u1, dinit_ref[1:2, :], ct_ref[1:2, :], trgh_ref)

    # fast attention (matches the torch.bmm pair, no softmax/scaling):
    #   ctx = (trg_h @ src_h^T) @ src_h, computed while trg_h is in VMEM.
    trg_h = trgh_ref[...]
    src_h = srch_ref[...]
    scores = lax.dot_general(trg_h, src_h, (((1,), (1,)), ((), ())),
                             preferred_element_type=jnp.float32)   # (T, S)
    ctx_ref[...] = jnp.dot(scores, src_h, preferred_element_type=jnp.float32)


def decoder_forward(p, input_trg, dec_init, c_t, src_h):
    T = input_trg.shape[0]
    H = p["dec0"]["whh"].shape[0]
    d0 = p["dec0"]
    l1, b1 = p["dec1_stack"], p["dec1_b"]

    scratch = [pltpu.VMEM((T, H), jnp.float32),          # layer0 hidden seq
               pltpu.VMEM((T, 4 * H), jnp.float32),      # gates_x
               pltpu.VMEM(l1.shape, l1.dtype),           # layer-1 weights DMA dst
               pltpu.SemaphoreType.DMA((1,))]

    nbytes = _total_bytes(
        arrays=(input_trg, d0["wih"], d0["b"], d0["whh"], l1, b1,
                dec_init, c_t, src_h, l1),
        f32_shapes=((T, H), (T, H), (T, H), (T, 4 * H)))

    return pl.pallas_call(
        _decoder_kernel,
        out_shape=(jax.ShapeDtypeStruct((T, H), jnp.float32),   # trg_h
                   jax.ShapeDtypeStruct((T, H), jnp.float32)),  # ctx
        in_specs=[_vmem(), _vmem(), _vmem(), _vmem(),
                  _any(), _vmem(),
                  _vmem(), _vmem(), _vmem()],
        out_specs=(_vmem(), _vmem()),
        scratch_shapes=scratch,
        compiler_params=pltpu.CompilerParams(
            vmem_limit_bytes=_vmem_limit(nbytes)),
    )(input_trg, d0["wih"], d0["b"], d0["whh"], l1, b1,
      dec_init, c_t, src_h)


# --------------------------------------------------------------------------
# decoder2vocab, grid-tiled over the vocab dimension, weights pre-split so no
# (T, 2H) concat temporary is materialized; activations cast to weight dtype
# at the dot sites (native bf16 MXU path when weights are bf16).
# --------------------------------------------------------------------------
def _vocab_kernel(trgh_ref, ctx_ref, wt_ref, wb_ref, b_ref, o_ref):
    wt = wt_ref[...]
    wb = wb_ref[...]
    o_ref[...] = (
        jnp.dot(trgh_ref[...].astype(wt.dtype), wt,
                preferred_element_type=jnp.float32)
        + jnp.dot(ctx_ref[...].astype(wb.dtype), wb,
                  preferred_element_type=jnp.float32)
        + b_ref[...]).astype(o_ref.dtype)


def vocab_projection(trg_h, ctx, w_top, w_bot, b, *, tile_n=1024):
    T, H = trg_h.shape
    V = w_top.shape[1]
    # Full vocab in one block when small; otherwise 128-multiple tiles for
    # lane-dense unmasked stores and double-buffered weight streaming.
    tn = V if V <= tile_n else tile_n
    grid = (pl.cdiv(V, tn),)
    nbytes = (_total_bytes(arrays=(trg_h, ctx),
                           f32_shapes=((T, tn), (1, tn)))
              + 2 * H * tn * w_top.dtype.itemsize)
    # TODO(synk): on v5e, int8 d2v weights with per-column scales would cut
    # this pure weight-streaming kernel a further ~2x.
    return pl.pallas_call(
        _vocab_kernel,
        out_shape=jax.ShapeDtypeStruct((T, V), jnp.float32),
        grid=grid,
        in_specs=[pl.BlockSpec((T, H), lambda j: (0, 0)),
                  pl.BlockSpec((T, H), lambda j: (0, 0)),
                  pl.BlockSpec((H, tn), lambda j: (0, j)),
                  pl.BlockSpec((H, tn), lambda j: (0, j)),
                  pl.BlockSpec((1, tn), lambda j: (0, j))],
        out_specs=pl.BlockSpec((T, tn), lambda j: (0, j)),
        compiler_params=pltpu.CompilerParams(
            dimension_semantics=("parallel",),
            vmem_limit_bytes=_vmem_limit(nbytes)),
    )(trg_h, ctx, w_top, w_bot, b)


# --------------------------------------------------------------------------
# Parameters: synthetic PyTorch-equivalent init + one-time kernel-layout prep.
# --------------------------------------------------------------------------
def init_params(key, trg_dim, src_emb_dim, trg_emb_dim, hidden_dim,
                nlayers=2, nlayers_trg=2):
    """PyTorch-equivalent params: Linear/LSTM weights stored (in, out), LSTM
    gates in PyTorch order [i, f, g, o], bias = (b_ih + b_hh) pre-folded."""
    src_hid = hidden_dim // 2   # bidirectional encoder
    keys = iter(jax.random.split(key, 64))

    def w(shape, scale=0.1):
        return jax.random.normal(next(keys), shape, jnp.float32) * scale

    p = {
        "src_emb_w": w((1, src_emb_dim)),
        "src_emb_b": w((1, src_emb_dim)),
        "trg_emb_w": w((trg_dim, trg_emb_dim)),
        "trg_emb_b": w((1, trg_emb_dim)),
        "e2d_w": w((2 * src_hid, hidden_dim)),
        "e2d_b": jnp.zeros((1, hidden_dim), jnp.float32),   # bias.fill_(0)
        "d2v_w": w((2 * hidden_dim, trg_dim)),
        "d2v_b": jnp.zeros((1, trg_dim), jnp.float32),      # bias.fill_(0)
    }
    enc = []
    for l in range(nlayers):
        in_dim = src_emb_dim if l == 0 else 2 * src_hid
        layer = {}
        for d in ("fwd", "bwd"):
            layer[d] = dict(wih=w((in_dim, 4 * src_hid)),
                            whh=w((src_hid, 4 * src_hid)),
                            b=w((1, 4 * src_hid)))
        enc.append(layer)
    p["enc"] = enc
    dec = []
    for l in range(nlayers_trg):
        in_dim = trg_emb_dim if l == 0 else hidden_dim
        dec.append(dict(wih=w((in_dim, 4 * hidden_dim)),
                        whh=w((hidden_dim, 4 * hidden_dim)),
                        b=w((1, 4 * hidden_dim))))
    p["dec"] = dec
    return p


def _reorder_gates(m, h):
    """PyTorch gate columns [i,f,g,o] -> kernel layout [i,f,o,g]."""
    return jnp.concatenate([m[..., 0:h], m[..., h:2 * h],
                            m[..., 3 * h:4 * h], m[..., 2 * h:3 * h]], axis=-1)


def prepare_params(p, hidden_dim, weight_dtype=jnp.float32):
    """One-time (plain JAX) rewrite of PyTorch-layout params into kernel layout:
      * LSTM gate columns reordered to [i, f, o | g],
      * src/trg embedding Linears exactly folded into layer-0 input weights
        (x@We@Wih == (x@We)@Wih, so forward semantics are unchanged),
      * encoder layer-1 wih split into fwd/bwd input halves and stacked with
        whh (one async copy per direction, no (S,2Hs) concat feeding the MXU),
      * decoder layer-1 [wih, whh] stacked for a single async copy,
      * decoder2vocab weight pre-split into trg_h / ctx halves.
    Set weight_dtype=jnp.bfloat16 on v6e/v7x to halve weight footprint and hit
    the native bf16 MXU path (f32 accumulation kept via preferred_element_type;
    expect small numeric drift vs the f32 PyTorch reference).
    TODO(synk): for large models, zero-pad Hs/H to a multiple of 128 here so
    the per-gate lane slices in the recurrences are vreg-aligned."""
    src_hid = hidden_dim // 2
    cast = lambda x: x.astype(weight_dtype)

    kp = {"e2d_w": cast(p["e2d_w"]), "e2d_b": p["e2d_b"],
          "d2v_w_top": cast(p["d2v_w"][:hidden_dim, :]),
          "d2v_w_bot": cast(p["d2v_w"][hidden_dim:, :]),
          "d2v_b": p["d2v_b"]}

    # encoder layer 0 (src embedding Linear(1, E) folded in exactly)
    for d in ("fwd", "bwd"):
        layer = p["enc"][0][d]
        wih = _reorder_gates(layer["wih"], src_hid)
        whh = _reorder_gates(layer["whh"], src_hid)
        b = _reorder_gates(layer["b"], src_hid)
        b = p["src_emb_b"] @ wih + b
        wih = p["src_emb_w"] @ wih
        kp["enc0_" + d] = dict(wih=cast(wih), whh=cast(whh), b=b)

    # encoder layer 1: split wih into fwd/bwd input halves, stack with whh.
    for d in ("fwd", "bwd"):
        layer = p["enc"][1][d]
        wih = _reorder_gates(layer["wih"], src_hid)     # (2Hs, 4Hs)
        whh = _reorder_gates(layer["whh"], src_hid)     # (Hs, 4Hs)
        kp["enc1_" + d + "_stack"] = cast(jnp.stack(
            [wih[:src_hid, :], wih[src_hid:, :], whh], axis=0))
        kp["enc1_" + d + "_b"] = _reorder_gates(layer["b"], src_hid)

    # decoder layer 0 (trg embedding Linear(trg_dim, E) folded in exactly)
    d0 = p["dec"][0]
    wih = _reorder_gates(d0["wih"], hidden_dim)
    whh = _reorder_gates(d0["whh"], hidden_dim)
    b = _reorder_gates(d0["b"], hidden_dim)
    b = p["trg_emb_b"] @ wih + b
    wih = p["trg_emb_w"] @ wih
    kp["dec0"] = dict(wih=cast(wih), whh=cast(whh), b=b)

    # decoder layer 1: stack [wih, whh] for a single streamed copy.
    d1 = p["dec"][1]
    kp["dec1_stack"] = cast(jnp.stack(
        [_reorder_gates(d1["wih"], hidden_dim),
         _reorder_gates(d1["whh"], hidden_dim)], axis=0))
    kp["dec1_b"] = _reorder_gates(d1["b"], hidden_dim)
    return kp


# --------------------------------------------------------------------------
# Full forward pass (3 pallas_calls total).
# --------------------------------------------------------------------------
def seq2seq_fast_attention(kparams, input_src, input_trg):
    src_h, dec_init, c_t = encoder_forward(kparams, input_src)
    trg_h, ctx = decoder_forward(kparams, input_trg, dec_init, c_t, src_h)
    logits = vocab_projection(trg_h, ctx, kparams["d2v_w_top"],
                              kparams["d2v_w_bot"], kparams["d2v_b"])
    return logits[None, :, :]                      # (1, T, trg_dim)


if __name__ == "__main__":
    trg_dim, src_emb_dim, trg_emb_dim, hidden_dim = 4, 16, 16, 32
    S, T = 12, 8

    key = jax.random.PRNGKey(0)
    kp_, ks, kt = jax.random.split(key, 3)
    params = init_params(kp_, trg_dim, src_emb_dim, trg_emb_dim, hidden_dim)
    # weight_dtype=jnp.bfloat16 on v6e/v7x for the native bf16 MXU path.
    kparams = prepare_params(params, hidden_dim)

    input_src = jax.random.normal(ks, (S, 1), jnp.float32)        # (src_len, 1)
    input_trg = jax.random.normal(kt, (T, trg_dim), jnp.float32)  # (trg_len, trg_dim)

    out = seq2seq_fast_attention(kparams, input_src, input_trg)
    out = jax.block_until_ready(out)
    assert out.shape == (1, T, trg_dim), out.shape
    assert bool(jnp.all(jnp.isfinite(out)))
    print("KERNEL_OK")
</pallas_src>

<mosaic_0001>
module attributes {stable_mosaic.version = 11 : i64} {
  func.func @_encoder_kernel(%arg0: memref<12x1xf32, #tpu.memory_space<vmem>>, %arg1: memref<1x64xf32, #tpu.memory_space<vmem>>, %arg2: memref<1x64xf32, #tpu.memory_space<vmem>>, %arg3: memref<16x64xf32, #tpu.memory_space<vmem>>, %arg4: memref<1x64xf32, #tpu.memory_space<vmem>>, %arg5: memref<1x64xf32, #tpu.memory_space<vmem>>, %arg6: memref<16x64xf32, #tpu.memory_space<vmem>>, %arg7: memref<3x16x64xf32, #tpu.memory_space<any>>, %arg8: memref<1x64xf32, #tpu.memory_space<vmem>>, %arg9: memref<3x16x64xf32, #tpu.memory_space<any>>, %arg10: memref<1x64xf32, #tpu.memory_space<vmem>>, %arg11: memref<32x32xf32, #tpu.memory_space<any>>, %arg12: memref<1x32xf32, #tpu.memory_space<vmem>>, %arg13: memref<12x32xf32, #tpu.memory_space<vmem>>, %arg14: memref<2x32xf32, #tpu.memory_space<vmem>>, %arg15: memref<2x32xf32, #tpu.memory_space<vmem>>, %arg16: memref<12x16xf32, #tpu.memory_space<vmem>>, %arg17: memref<12x16xf32, #tpu.memory_space<vmem>>, %arg18: memref<12x64xf32, #tpu.memory_space<vmem>>, %arg19: memref<12x64xf32, #tpu.memory_space<vmem>>, %arg20: memref<3x16x64xf32, #tpu.memory_space<vmem>>, %arg21: memref<3x16x64xf32, #tpu.memory_space<vmem>>, %arg22: memref<32x32xf32, #tpu.memory_space<vmem>>, %arg23: memref<3x!tpu.dma_semaphore, #tpu.memory_space<semaphore_mem>>) attributes {dimension_semantics = [], scalar_prefetch = 0 : i64, scratch_operands = 8 : i64, tpu.core_type = #tpu.core_type<tc>} {
    %c0_i32 = arith.constant 0 : i32
    %0 = tpu.memref_slice %arg23[%c0_i32] : memref<3x!tpu.dma_semaphore, #tpu.memory_space<semaphore_mem>> -> memref<1x!tpu.dma_semaphore, #tpu.memory_space<semaphore_mem>>
    %1 = tpu.memref_squeeze %0 : memref<1x!tpu.dma_semaphore, #tpu.memory_space<semaphore_mem>> -> memref<!tpu.dma_semaphore, #tpu.memory_space<semaphore_mem>>
    tpu.enqueue_dma source(%arg7 : memref<3x16x64xf32, #tpu.memory_space<any>>) target(%arg20 : memref<3x16x64xf32, #tpu.memory_space<vmem>>) target_semaphore(%1 : memref<!tpu.dma_semaphore, #tpu.memory_space<semaphore_mem>>)
    %c1_i32 = arith.constant 1 : i32
    %2 = tpu.memref_slice %arg23[%c1_i32] : memref<3x!tpu.dma_semaphore, #tpu.memory_space<semaphore_mem>> -> memref<1x!tpu.dma_semaphore, #tpu.memory_space<semaphore_mem>>
    %3 = tpu.memref_squeeze %2 : memref<1x!tpu.dma_semaphore, #tpu.memory_space<semaphore_mem>> -> memref<!tpu.dma_semaphore, #tpu.memory_space<semaphore_mem>>
    tpu.enqueue_dma source(%arg9 : memref<3x16x64xf32, #tpu.memory_space<any>>) target(%arg21 : memref<3x16x64xf32, #tpu.memory_space<vmem>>) target_semaphore(%3 : memref<!tpu.dma_semaphore, #tpu.memory_space<semaphore_mem>>)
    %c2_i32 = arith.constant 2 : i32
    %4 = tpu.memref_slice %arg23[%c2_i32] : memref<3x!tpu.dma_semaphore, #tpu.memory_space<semaphore_mem>> -> memref<1x!tpu.dma_semaphore, #tpu.memory_space<semaphore_mem>>
    %5 = tpu.memref_squeeze %4 : memref<1x!tpu.dma_semaphore, #tpu.memory_space<semaphore_mem>> -> memref<!tpu.dma_semaphore, #tpu.memory_space<semaphore_mem>>
    tpu.enqueue_dma source(%arg11 : memref<32x32xf32, #tpu.memory_space<any>>) target(%arg22 : memref<32x32xf32, #tpu.memory_space<vmem>>) target_semaphore(%5 : memref<!tpu.dma_semaphore, #tpu.memory_space<semaphore_mem>>)
    %c0 = arith.constant 0 : index
    %c0_0 = arith.constant 0 : index
    %6 = vector.load %arg0[%c0, %c0_0] : memref<12x1xf32, #tpu.memory_space<vmem>>, vector<12x1xf32>
    %c0_1 = arith.constant 0 : index
    %c0_2 = arith.constant 0 : index
    %7 = vector.load %arg1[%c0_1, %c0_2] : memref<1x64xf32, #tpu.memory_space<vmem>>, vector<1x64xf32>
    %8 = vector.broadcast %6 : vector<12x1xf32> to vector<12x64xf32>
    %9 = vector.broadcast %7 : vector<1x64xf32> to vector<12x64xf32>
    %10 = arith.mulf %8, %9 : vector<12x64xf32>
    %c0_3 = arith.constant 0 : index
    %c0_4 = arith.constant 0 : index
    %11 = vector.load %arg2[%c0_3, %c0_4] : memref<1x64xf32, #tpu.memory_space<vmem>>, vector<1x64xf32>
    %12 = vector.broadcast %11 : vector<1x64xf32> to vector<12x64xf32>
    %13 = arith.addf %10, %12 : vector<12x64xf32>
    %c0_5 = arith.constant 0 : index
    %c0_6 = arith.constant 0 : index
    %14 = vector.load %arg18[%c0_5, %c0_6] : memref<12x64xf32, #tpu.memory_space<vmem>>, vector<12x64xf32>
    tpu.vector_store %arg18[%c0_5, %c0_6], %13 {strides = array<i32>} : memref<12x64xf32, #tpu.memory_space<vmem>>, vector<12x64xf32>,
    %c0_7 = arith.constant 0 : index
    %c0_8 = arith.constant 0 : index
    %15 = vector.load %arg4[%c0_7, %c0_8] : memref<1x64xf32, #tpu.memory_space<vmem>>, vector<1x64xf32>
    %16 = vector.broadcast %6 : vector<12x1xf32> to vector<12x64xf32>
    %17 = vector.broadcast %15 : vector<1x64xf32> to vector<12x64xf32>
    %18 = arith.mulf %16, %17 : vector<12x64xf32>
    %c0_9 = arith.constant 0 : index
    %c0_10 = arith.constant 0 : index
    %19 = vector.load %arg5[%c0_9, %c0_10] : memref<1x64xf32, #tpu.memory_space<vmem>>, vector<1x64xf32>
    %20 = vector.broadcast %19 : vector<1x64xf32> to vector<12x64xf32>
    %21 = arith.addf %18, %20 : vector<12x64xf32>
    %c0_11 = arith.constant 0 : index
    %c0_12 = arith.constant 0 : index
    %22 = vector.load %arg19[%c0_11, %c0_12] : memref<12x64xf32, #tpu.memory_space<vmem>>, vector<12x64xf32>
    tpu.vector_store %arg19[%c0_11, %c0_12], %21 {strides = array<i32>} : memref<12x64xf32, #tpu.memory_space<vmem>>, vector<12x64xf32>,
    %c0_13 = arith.constant 0 : index
    %c0_14 = arith.constant 0 : index
    %23 = vector.load %arg3[%c0_13, %c0_14] : memref<16x64xf32, #tpu.memory_space<vmem>>, vector<16x64xf32>
    %c0_15 = arith.constant 0 : index
    %c0_16 = arith.constant 0 : index
    %24 = vector.load %arg6[%c0_15, %c0_16] : memref<16x64xf32, #tpu.memory_space<vmem>>, vector<16x64xf32>
    %cst = arith.constant 0.000000e+00 : f32
    %25 = vector.broadcast %cst : f32 to vector<1x16xf32>
    %c0_i32_17 = arith.constant 0 : i32
    %c11_i32 = arith.constant 11 : i32
    %26 = arith.subi %c11_i32, %c0_i32_17 : i32
    %cst_18 = arith.constant dense<0.000000e+00> : vector<1x64xf32>
    %27 = tpu.matmul %25, %23, %cst_18 {dimension_numbers = #tpu.dot_dimension_numbers<[1], [0], [0], [1], [0, 0, 1, 1], [], []>} : vector<1x16xf32>, vector<16x64xf32>, vector<1x64xf32> -> vector<1x64xf32>
    %28 = arith.index_cast %c0_i32_17 : i32 to index
    %c0_19 = arith.constant 0 : index
    %29 = vector.load %arg18[%28, %c0_19] : memref<12x64xf32, #tpu.memory_space<vmem>>, vector<1x64xf32>
    %30 = arith.addf %27, %29 : vector<1x64xf32>
    %cst_20 = arith.constant dense<0.000000e+00> : vector<1x64xf32>
    %31 = tpu.matmul %25, %24, %cst_20 {dimension_numbers = #tpu.dot_dimension_numbers<[1], [0], [0], [1], [0, 0, 1, 1], [], []>} : vector<1x16xf32>, vector<16x64xf32>, vector<1x64xf32> -> vector<1x64xf32>
    %32 = arith.index_cast %26 : i32 to index
    %c0_21 = arith.constant 0 : index
    %33 = vector.load %arg19[%32, %c0_21] : memref<12x64xf32, #tpu.memory_space<vmem>>, vector<1x64xf32>
    %34 = arith.addf %31, %33 : vector<1x64xf32>
    %35 = vector.extract_strided_slice %30 {offsets = [0, 0], sizes = [1, 48], strides = [1, 1]} : vector<1x64xf32> to vector<1x48xf32>
    %36 = arith.negf %35 : vector<1x48xf32>
    %37 = math.exp %36 : vector<1x48xf32>
    %cst_22 = arith.constant 1.000000e+00 : f32
    %38 = vector.broadcast %cst_22 : f32 to vector<1x48xf32>
    %39 = arith.addf %38, %37 : vector<1x48xf32>
    %40 = arith.divf %38, %39 : vector<1x48xf32>
    %41 = vector.extract_strided_slice %30 {offsets = [0, 48], sizes = [1, 16], strides = [1, 1]} : vector<1x64xf32> to vector<1x16xf32>
    %42 = math.tanh %41 : vector<1x16xf32>
    %43 = vector.extract_strided_slice %34 {offsets = [0, 0], sizes = [1, 48], strides = [1, 1]} : vector<1x64xf32> to vector<1x48xf32>
    %44 = arith.negf %43 : vector<1x48xf32>
    %45 = math.exp %44 : vector<1x48xf32>
    %cst_23 = arith.constant 1.000000e+00 : f32
    %46 = vector.broadcast %cst_23 : f32 to vector<1x48xf32>
    %47 = arith.addf %46, %45 : vector<1x48xf32>
    %48 = arith.divf %46, %47 : vector<1x48xf32>
    %49 = vector.extract_strided_slice %34 {offsets = [0, 48], sizes = [1, 16], strides = [1, 1]} : vector<1x64xf32> to vector<1x16xf32>
    %50 = math.tanh %49 : vector<1x16xf32>
    %51 = vector.extract_strided_slice %40 {offsets = [0, 16], sizes = [1, 16], strides = [1, 1]} : vector<1x48xf32> to vector<1x16xf32>
    %52 = arith.mulf %51, %25 : vector<1x16xf32>
    %53 = vector.extract_strided_slice %40 {offsets = [0, 0], sizes = [1, 16], strides = [1, 1]} : vector<1x48xf32> to vector<1x16xf32>
    %54 = arith.mulf %53, %42 : vector<1x16xf32>
    %55 = arith.addf %52, %54 : vector<1x16xf32>
    %56 = vector.extract_strided_slice %40 {offsets = [0, 32], sizes = [1, 16], strides = [1, 1]} : vector<1x48xf32> to vector<1x16xf32>
    %57 = math.tanh %55 : vector<1x16xf32>
    %58 = arith.mulf %56, %57 : vector<1x16xf32>
    %59 = vector.extract_strided_slice %48 {offsets = [0, 16], sizes = [1, 16], strides = [1, 1]} : vector<1x48xf32> to vector<1x16xf32>
    %60 = arith.mulf %59, %25 : vector<1x16xf32>
    %61 = vector.extract_strided_slice %48 {offsets = [0, 0], sizes = [1, 16], strides = [1, 1]} : vector<1x48xf32> to vector<1x16xf32>
    %62 = arith.mulf %61, %50 : vector<1x16xf32>
    %63 = arith.addf %60, %62 : vector<1x16xf32>
    %64 = vector.extract_strided_slice %48 {offsets = [0, 32], sizes = [1, 16], strides = [1, 1]} : vector<1x48xf32> to vector<1x16xf32>
    %65 = math.tanh %63 : vector<1x16xf32>
    %66 = arith.mulf %64, %65 : vector<1x16xf32>
    %67 = arith.index_cast %c0_i32_17 : i32 to index
    %c0_24 = arith.constant 0 : index
    %68 = vector.load %arg16[%67, %c0_24] : memref<12x16xf32, #tpu.memory_space<vmem>>, vector<1x16xf32>
    tpu.vector_store %arg16[%67, %c0_24], %58 {strides = array<i32>} : memref<12x16xf32, #tpu.memory_space<vmem>>, vector<1x16xf32>,
    %69 = arith.index_cast %26 : i32 to index
    %c0_25 = arith.constant 0 : index
    %70 = vector.load %arg17[%69, %c0_25] : memref<12x16xf32, #tpu.memory_space<vmem>>, vector<1x16xf32>
    tpu.vector_store %arg17[%69, %c0_25], %66 {strides = array<i32>} : memref<12x16xf32, #tpu.memory_space<vmem>>, vector<1x16xf32>,
    %c1_i32_26 = arith.constant 1 : i32
    %c11_i32_27 = arith.constant 11 : i32
    %71 = arith.subi %c11_i32_27, %c1_i32_26 : i32
    %cst_28 = arith.constant dense<0.000000e+00> : vector<1x64xf32>
    %72 = tpu.matmul %58, %23, %cst_28 {dimension_numbers = #tpu.dot_dimension_numbers<[1], [0], [0], [1], [0, 0, 1, 1], [], []>} : vector<1x16xf32>, vector<16x64xf32>, vector<1x64xf32> -> vector<1x64xf32>
    %73 = arith.index_cast %c1_i32_26 : i32 to index
    %c0_29 = arith.constant 0 : index
    %74 = vector.load %arg18[%73, %c0_29] : memref<12x64xf32, #tpu.memory_space<vmem>>, vector<1x64xf32>
    %75 = arith.addf %72, %74 : vector<1x64xf32>
    %cst_30 = arith.constant dense<0.000000e+00> : vector<1x64xf32>
    %76 = tpu.matmul %66, %24, %cst_30 {dimension_numbers = #tpu.dot_dimension_numbers<[1], [0], [0], [1], [0, 0, 1, 1], [], []>} : vector<1x16xf32>, vector<16x64xf32>, vector<1x64xf32> -> vector<1x64xf32>
    %77 = arith.index_cast %71 : i32 to index
    %c0_31 = arith.constant 0 : index
    %78 = vector.load %arg19[%77, %c0_31] : memref<12x64xf32, #tpu.memory_space<vmem>>, vector<1x64xf32>
    %79 = arith.addf %76, %78 : vector<1x64xf32>
    %80 = vector.extract_strided_slice %75 {offsets = [0, 0], sizes = [1, 48], strides = [1, 1]} : vector<1x64xf32> to vector<1x48xf32>
    %81 = arith.negf %80 : vector<1x48xf32>
    %82 = math.exp %81 : vector<1x48xf32>
    %cst_32 = arith.constant 1.000000e+00 : f32
    %83 = vector.broadcast %cst_32 : f32 to vector<1x48xf32>
    %84 = arith.addf %83, %82 : vector<1x48xf32>
    %85 = arith.divf %83, %84 : vector<1x48xf32>
    %86 = vector.extract_strided_slice %75 {offsets = [0, 48], sizes = [1, 16], strides = [1, 1]} : vector<1x64xf32> to vector<1x16xf32>
    %87 = math.tanh %86 : vector<1x16xf32>
    %88 = vector.extract_strided_slice %79 {offsets = [0, 0], sizes = [1, 48], strides = [1, 1]} : vector<1x64xf32> to vector<1x48xf32>
    %89 = arith.negf %88 : vector<1x48xf32>
    %90 = math.exp %89 : vector<1x48xf32>
    %cst_33 = arith.constant 1.000000e+00 : f32
    %91 = vector.broadcast %cst_33 : f32 to vector<1x48xf32>
    %92 = arith.addf %91, %90 : vector<1x48xf32>
    %93 = arith.divf %91, %92 : vector<1x48xf32>
    %94 = vector.extract_strided_slice %79 {offsets = [0, 48], sizes = [1, 16], strides = [1, 1]} : vector<1x64xf32> to vector<1x16xf32>
    %95 = math.tanh %94 : vector<1x16xf32>
    %96 = vector.extract_strided_slice %85 {offsets = [0, 16], sizes = [1, 16], strides = [1, 1]} : vector<1x48xf32> to vector<1x16xf32>
    %97 = arith.mulf %96, %55 : vector<1x16xf32>
    %98 = vector.extract_strided_slice %85 {offsets = [0, 0], sizes = [1, 16], strides = [1, 1]} : vector<1x48xf32> to vector<1x16xf32>
    %99 = arith.mulf %98, %87 : vector<1x16xf32>
    %100 = arith.addf %97, %99 : vector<1x16xf32>
    %101 = vector.extract_strided_slice %85 {offsets = [0, 32], sizes = [1, 16], strides = [1, 1]} : vector<1x48xf32> to vector<1x16xf32>
    %102 = math.tanh %100 : vector<1x16xf32>
    %103 = arith.mulf %101, %102 : vector<1x16xf32>
    %104 = vector.extract_strided_slice %93 {offsets = [0, 16], sizes = [1, 16], strides = [1, 1]} : vector<1x48xf32> to vector<1x16xf32>
    %105 = arith.mulf %104, %63 : vector<1x16xf32>
    %106 = vector.extract_strided_slice %93 {offsets = [0, 0], sizes = [1, 16], strides = [1, 1]} : vector<1x48xf32> to vector<1x16xf32>
    %107 = arith.mulf %106, %95 : vector<1x16xf32>
    %108 = arith.addf %105, %107 : vector<1x16xf32>
    %109 = vector.extract_strided_slice %93 {offsets = [0, 32], sizes = [1, 16], strides = [1, 1]} : vector<1x48xf32> to vector<1x16xf32>
    %110 = math.tanh %108 : vector<1x16xf32>
    %111 = arith.mulf %109, %110 : vector<1x16xf32>
    %112 = arith.index_cast %c1_i32_26 : i32 to index
    %c0_34 = arith.constant 0 : index
    %113 = vector.load %arg16[%112, %c0_34] : memref<12x16xf32, #tpu.memory_space<vmem>>, vector<1x16xf32>
    tpu.vector_store %arg16[%112, %c0_34], %103 {strides = array<i32>} : memref<12x16xf32, #tpu.memory_space<vmem>>, vector<1x16xf32>,
    %114 = arith.index_cast %71 : i32 to index
    %c0_35 = arith.constant 0 : index
    %115 = vector.load %arg17[%114, %c0_35] : memref<12x16xf32, #tpu.memory_space<vmem>>, vector<1x16xf32>
    tpu.vector_store %arg17[%114, %c0_35], %111 {strides = array<i32>} : memref<12x16xf32, #tpu.memory_space<vmem>>, vector<1x16xf32>,
    %c2_i32_36 = arith.constant 2 : i32
    %c11_i32_37 = arith.constant 11 : i32
    %116 = arith.subi %c11_i32_37, %c2_i32_36 : i32
    %cst_38 = arith.constant dense<0.000000e+00> : vector<1x64xf32>
    %117 = tpu.matmul %103, %23, %cst_38 {dimension_numbers = #tpu.dot_dimension_numbers<[1], [0], [0], [1], [0, 0, 1, 1], [], []>} : vector<1x16xf32>, vector<16x64xf32>, vector<1x64xf32> -> vector<1x64xf32>
    %118 = arith.index_cast %c2_i32_36 : i32 to index
    %c0_39 = arith.constant 0 : index
    %119 = vector.load %arg18[%118, %c0_39] : memref<12x64xf32, #tpu.memory_space<vmem>>, vector<1x64xf32>
    %120 = arith.addf %117, %119 : vector<1x64xf32>
    %cst_40 = arith.constant dense<0.000000e+00> : vector<1x64xf32>
    %121 = tpu.matmul %111, %24, %cst_40 {dimension_numbers = #tpu.dot_dimension_numbers<[1], [0], [0], [1], [0, 0, 1, 1], [], []>} : vector<1x16xf32>, vector<16x64xf32>, vector<1x64xf32> -> vector<1x64xf32>
    %122 = arith.index_cast %116 : i32 to index
    %c0_41 = arith.constant 0 : index
    %123 = vector.load %arg19[%122, %c0_41] : memref<12x64xf32, #tpu.memory_space<vmem>>, vector<1x64xf32>
    %124 = arith.addf %121, %123 : vector<1x64xf32>
    %125 = vector.extract_strided_slice %120 {offsets = [0, 0], sizes = [1, 48], strides = [1, 1]} : vector<1x64xf32> to vector<1x48xf32>
    %126 = arith.negf %125 : vector<1x48xf32>
    %127 = math.exp %126 : vector<1x48xf32>
    %cst_42 = arith.constant 1.000000e+00 : f32
    %128 = vector.broadcast %cst_42 : f32 to vector<1x48xf32>
    %129 = arith.addf %128, %127 : vector<1x48xf32>
    %130 = arith.divf %128, %129 : vector<1x48xf32>
    %131 = vector.extract_strided_slice %120 {offsets = [0, 48], sizes = [1, 16], strides = [1, 1]} : vector<1x64xf32> to vector<1x16xf32>
    %132 = math.tanh %131 : vector<1x16xf32>
    %133 = vector.extract_strided_slice %124 {offsets = [0, 0], sizes = [1, 48], strides = [1, 1]} : vector<1x64xf32> to vector<1x48xf32>
    %134 = arith.negf %133 : vector<1x48xf32>
    %135 = math.exp %134 : vector<1x48xf32>
    %cst_43 = arith.constant 1.000000e+00 : f32
    %136 = vector.broadcast %cst_43 : f32 to vector<1x48xf32>
    %137 = arith.addf %136, %135 : vector<1x48xf32>
    %138 = arith.divf %136, %137 : vector<1x48xf32>
    %139 = vector.extract_strided_slice %124 {offsets = [0, 48], sizes = [1, 16], strides = [1, 1]} : vector<1x64xf32> to vector<1x16xf32>
    %140 = math.tanh %139 : vector<1x16xf32>
    %141 = vector.extract_strided_slice %130 {offsets = [0, 16], sizes = [1, 16], strides = [1, 1]} : vector<1x48xf32> to vector<1x16xf32>
    %142 = arith.mulf %141, %100 : vector<1x16xf32>
    %143 = vector.extract_strided_slice %130 {offsets = [0, 0], sizes = [1, 16], strides = [1, 1]} : vector<1x48xf32> to vector<1x16xf32>
    %144 = arith.mulf %143, %132 : vector<1x16xf32>
    %145 = arith.addf %142, %144 : vector<1x16xf32>
    %146 = vector.extract_strided_slice %130 {offsets = [0, 32], sizes = [1, 16], strides = [1, 1]} : vector<1x48xf32> to vector<1x16xf32>
    %147 = math.tanh %145 : vector<1x16xf32>
    %148 = arith.mulf %146, %147 : vector<1x16xf32>
    %149 = vector.extract_strided_slice %138 {offsets = [0, 16], sizes = [1, 16], strides = [1, 1]} : vector<1x48xf32> to vector<1x16xf32>
    %150 = arith.mulf %149, %108 : vector<1x16xf32>
    %151 = vector.extract_strided_slice %138 {offsets = [0, 0], sizes = [1, 16], strides = [1, 1]} : vector<1x48xf32> to vector<1x16xf32>
    %152 = arith.mulf %151, %140 : vector<1x16xf32>
    %153 = arith.addf %150, %152 : vector<1x16xf32>
    %154 = vector.extract_strided_slice %138 {offsets = [0, 32], sizes = [1, 16], strides = [1, 1]} : vector<1x48xf32> to vector<1x16xf32>
    %155 = math.tanh %153 : vector<1x16xf32>
    %156 = arith.mulf %154, %155 : vector<1x16xf32>
    %157 = arith.index_cast %c2_i32_36 : i32 to index
    %c0_44 = arith.constant 0 : index
    %158 = vector.load %arg16[%157, %c0_44] : memref<12x16xf32, #tpu.memory_space<vmem>>, vector<1x16xf32>
    tpu.vector_store %arg16[%157, %c0_44], %148 {strides = array<i32>} : memref<12x16xf32, #tpu.memory_space<vmem>>, vector<1x16xf32>,
    %159 = arith.index_cast %116 : i32 to index
    %c0_45 = arith.constant 0 : index
    %160 = vector.load %arg17[%159, %c0_45] : memref<12x16xf32, #tpu.memory_space<vmem>>, vector<1x16xf32>
    tpu.vector_store %arg17[%159, %c0_45], %156 {strides = array<i32>} : memref<12x16xf32, #tpu.memory_space<vmem>>, vector<1x16xf32>,
    %c3_i32 = arith.constant 3 : i32
    %c11_i32_46 = arith.constant 11 : i32
    %161 = arith.subi %c11_i32_46, %c3_i32 : i32
    %cst_47 = arith.constant dense<0.000000e+00> : vector<1x64xf32>
    %162 = tpu.matmul %148, %23, %cst_47 {dimension_numbers = #tpu.dot_dimension_numbers<[1], [0], [0], [1], [0, 0, 1, 1], [], []>} : vector<1x16xf32>, vector<16x64xf32>, vector<1x64xf32> -> vector<1x64xf32>
    %163 = arith.index_cast %c3_i32 : i32 to index
    %c0_48 = arith.constant 0 : index
    %164 = vector.load %arg18[%163, %c0_48] : memref<12x64xf32, #tpu.memory_space<vmem>>, vector<1x64xf32>
    %165 = arith.addf %162, %164 : vector<1x64xf32>
    %cst_49 = arith.constant dense<0.000000e+00> : vector<1x64xf32>
    %166 = tpu.matmul %156, %24, %cst_49 {dimension_numbers = #tpu.dot_dimension_numbers<[1], [0], [0], [1], [0, 0, 1, 1], [], []>} : vector<1x16xf32>, vector<16x64xf32>, vector<1x64xf32> -> vector<1x64xf32>
    %167 = arith.index_cast %161 : i32 to index
    %c0_50 = arith.constant 0 : index
    %168 = vector.load %arg19[%167, %c0_50] : memref<12x64xf32, #tpu.memory_space<vmem>>, vector<1x64xf32>
    %169 = arith.addf %166, %168 : vector<1x64xf32>
    %170 = vector.extract_strided_slice %165 {offsets = [0, 0], sizes = [1, 48], strides = [1, 1]} : vector<1x64xf32> to vector<1x48xf32>
    %171 = arith.negf %170 : vector<1x48xf32>
    %172 = math.exp %171 : vector<1x48xf32>
    %cst_51 = arith.constant 1.000000e+00 : f32
    %173 = vector.broadcast %cst_51 : f32 to vector<1x48xf32>
    %174 = arith.addf %173, %172 : vector<1x48xf32>
    %175 = arith.divf %173, %174 : vector<1x48xf32>
    %176 = vector.extract_strided_slice %165 {offsets = [0, 48], sizes = [1, 16], strides = [1, 1]} : vector<1x64xf32> to vector<1x16xf32>
    %177 = math.tanh %176 : vector<1x16xf32>
    %178 = vector.extract_strided_slice %169 {offsets = [0, 0], sizes = [1, 48], strides = [1, 1]} : vector<1x64xf32> to vector<1x48xf32>
    %179 = arith.negf %178 : vector<1x48xf32>
    %180 = math.exp %179 : vector<1x48xf32>
    %cst_52 = arith.constant 1.000000e+00 : f32
    %181 = vector.broadcast %cst_52 : f32 to vector<1x48xf32>
    %182 = arith.addf %181, %180 : vector<1x48xf32>
    %183 = arith.divf %181, %182 : vector<1x48xf32>
    %184 = vector.extract_strided_slice %169 {offsets = [0, 48], sizes = [1, 16], strides = [1, 1]} : vector<1x64xf32> to vector<1x16xf32>
    %185 = math.tanh %184 : vector<1x16xf32>
    %186 = vector.extract_strided_slice %175 {offsets = [0, 16], sizes = [1, 16], strides = [1, 1]} : vector<1x48xf32> to vector<1x16xf32>
    %187 = arith.mulf %186, %145 : vector<1x16xf32>
    %188 = vector.extract_strided_slice %175 {offsets = [0, 0], sizes = [1, 16], strides = [1, 1]} : vector<1x48xf32> to vector<1x16xf32>
    %189 = arith.mulf %188, %177 : vector<1x16xf32>
    %190 = arith.addf %187, %189 : vector<1x16xf32>
    %191 = vector.extract_strided_slice %175 {offsets = [0, 32], sizes = [1, 16], strides = [1, 1]} : vector<1x48xf32> to vector<1x16xf32>
    %192 = math.tanh %190 : vector<1x16xf32>
    %193 = arith.mulf %191, %192 : vector<1x16xf32>
    %194 = vector.extract_strided_slice %183 {offsets = [0, 16], sizes = [1, 16], strides = [1, 1]} : vector<1x48xf32> to vector<1x16xf32>
    %195 = arith.mulf %194, %153 : vector<1x16xf32>
    %196 = vector.extract_strided_slice %183 {offsets = [0, 0], sizes = [1, 16], strides = [1, 1]} : vector<1x48xf32> to vector<1x16xf32>
    %197 = arith.mulf %196, %185 : vector<1x16xf32>
    %198 = arith.addf %195, %197 : vector<1x16xf32>
    %199 = vector.extract_strided_slice %183 {offsets = [0, 32], sizes = [1, 16], strides = [1, 1]} : vector<1x48xf32> to vector<1x16xf32>
    %200 = math.tanh %198 : vector<1x16xf32>
    %201 = arith.mulf %199, %200 : vector<1x16xf32>
    %202 = arith.index_cast %c3_i32 : i32 to index
    %c0_53 = arith.constant 0 : index
    %203 = vector.load %arg16[%202, %c0_53] : memref<12x16xf32, #tpu.memory_space<vmem>>, vector<1x16xf32>
    tpu.vector_store %arg16[%202, %c0_53], %193 {strides = array<i32>} : memref<12x16xf32, #tpu.memory_space<vmem>>, vector<1x16xf32>,
    %204 = arith.index_cast %161 : i32 to index
    %c0_54 = arith.constant 0 : index
    %205 = vector.load %arg17[%204, %c0_54] : memref<12x16xf32, #tpu.memory_space<vmem>>, vector<1x16xf32>
    tpu.vector_store %arg17[%204, %c0_54], %201 {strides = array<i32>} : memref<12x16xf32, #tpu.memory_space<vmem>>, vector<1x16xf32>,
    %c4_i32 = arith.constant 4 : i32
    %c11_i32_55 = arith.constant 11 : i32
    %206 = arith.subi %c11_i32_55, %c4_i32 : i32
    %cst_56 = arith.constant dense<0.000000e+00> : vector<1x64xf32>
    %207 = tpu.matmul %193, %23, %cst_56 {dimension_numbers = #tpu.dot_dimension_numbers<[1], [0], [0], [1], [0, 0, 1, 1], [], []>} : vector<1x16xf32>, vector<16x64xf32>, vector<1x64xf32> -> vector<1x64xf32>
    %208 = arith.index_cast %c4_i32 : i32 to index
    %c0_57 = arith.constant 0 : index
    %209 = vector.load %arg18[%208, %c0_57] : memref<12x64xf32, #tpu.memory_space<vmem>>, vector<1x64xf32>
    %210 = arith.addf %207, %209 : vector<1x64xf32>
    %cst_58 = arith.constant dense<0.000000e+00> : vector<1x64xf32>
    %211 = tpu.matmul %201, %24, %cst_58 {dimension_numbers = #tpu.dot_dimension_numbers<[1], [0], [0], [1], [0, 0, 1, 1], [], []>} : vector<1x16xf32>, vector<16x64xf32>, vector<1x64xf32> -> vector<1x64xf32>
    %212 = arith.index_cast %206 : i32 to index
    %c0_59 = arith.constant 0 : index
    %213 = vector.load %arg19[%212, %c0_59] : memref<12x64xf32, #tpu.memory_space<vmem>>, vector<1x64xf32>
    %214 = arith.addf %211, %213 : vector<1x64xf32>
    %215 = vector.extract_strided_slice %210 {offsets = [0, 0], sizes = [1, 48], strides = [1, 1]} : vector<1x64xf32> to vector<1x48xf32>
    %216 = arith.negf %215 : vector<1x48xf32>
    %217 = math.exp %216 : vector<1x48xf32>
    %cst_60 = arith.constant 1.000000e+00 : f32
    %218 = vector.broadcast %cst_60 : f32 to vector<1x48xf32>
    %219 = arith.addf %218, %217 : vector<1x48xf32>
    %220 = arith.divf %218, %219 : vector<1x48xf32>
    %221 = vector.extract_strided_slice %210 {offsets = [0, 48], sizes = [1, 16], strides = [1, 1]} : vector<1x64xf32> to vector<1x16xf32>
    %222 = math.tanh %221 : vector<1x16xf32>
    %223 = vector.extract_strided_slice %214 {offsets = [0, 0], sizes = [1, 48], strides = [1, 1]} : vector<1x64xf32> to vector<1x48xf32>
    %224 = arith.negf %223 : vector<1x48xf32>
    %225 = math.exp %224 : vector<1x48xf32>
    %cst_61 = arith.constant 1.000000e+00 : f32
    %226 = vector.broadcast %cst_61 : f32 to vector<1x48xf32>
    %227 = arith.addf %226, %225 : vector<1x48xf32>
    %228 = arith.divf %226, %227 : vector<1x48xf32>
    %229 = vector.extract_strided_slice %214 {offsets = [0, 48], sizes = [1, 16], strides = [1, 1]} : vector<1x64xf32> to vector<1x16xf32>
    %230 = math.tanh %229 : vector<1x16xf32>
    %231 = vector.extract_strided_slice %220 {offsets = [0, 16], sizes = [1, 16], strides = [1, 1]} : vector<1x48xf32> to vector<1x16xf32>
    %232 = arith.mulf %231, %190 : vector<1x16xf32>
    %233 = vector.extract_strided_slice %220 {offsets = [0, 0], sizes = [1, 16], strides = [1, 1]} : vector<1x48xf32> to vector<1x16xf32>
    %234 = arith.mulf %233, %222 : vector<1x16xf32>
    %235 = arith.addf %232, %234 : vector<1x16xf32>
    %236 = vector.extract_strided_slice %220 {offsets = [0, 32], sizes = [1, 16], strides = [1, 1]} : vector<1x48xf32> to vector<1x16xf32>
    %237 = math.tanh %235 : vector<1x16xf32>
    %238 = arith.mulf %236, %237 : vector<1x16xf32>
    %239 = vector.extract_strided_slice %228 {offsets = [0, 16], sizes = [1, 16], strides = [1, 1]} : vector<1x48xf32> to vector<1x16xf32>
    %240 = arith.mulf %239, %198 : vector<1x16xf32>
    %241 = vector.extract_strided_slice %228 {offsets = [0, 0], sizes = [1, 16], strides = [1, 1]} : vector<1x48xf32> to vector<1x16xf32>
    %242 = arith.mulf %241, %230 : vector<1x16xf32>
    %243 = arith.addf %240, %242 : vector<1x16xf32>
    %244 = vector.extract_strided_slice %228 {offsets = [0, 32], sizes = [1, 16], strides = [1, 1]} : vector<1x48xf32> to vector<1x16xf32>
    %245 = math.tanh %243 : vector<1x16xf32>
    %246 = arith.mulf %244, %245 : vector<1x16xf32>
    %247 = arith.index_cast %c4_i32 : i32 to index
    %c0_62 = arith.constant 0 : index
    %248 = vector.load %arg16[%247, %c0_62] : memref<12x16xf32, #tpu.memory_space<vmem>>, vector<1x16xf32>
    tpu.vector_store %arg16[%247, %c0_62], %238 {strides = array<i32>} : memref<12x16xf32, #tpu.memory_space<vmem>>, vector<1x16xf32>,
    %249 = arith.index_cast %206 : i32 to index
    %c0_63 = arith.constant 0 : index
    %250 = vector.load %arg17[%249, %c0_63] : memref<12x16xf32, #tpu.memory_space<vmem>>, vector<1x16xf32>
    tpu.vector_store %arg17[%249, %c0_63], %246 {strides = array<i32>} : memref<12x16xf32, #tpu.memory_space<vmem>>, vector<1x16xf32>,
    %c5_i32 = arith.constant 5 : i32
    %c11_i32_64 = arith.constant 11 : i32
    %251 = arith.subi %c11_i32_64, %c5_i32 : i32
    %cst_65 = arith.constant dense<0.000000e+00> : vector<1x64xf32>
    %252 = tpu.matmul %238, %23, %cst_65 {dimension_numbers = #tpu.dot_dimension_numbers<[1], [0], [0], [1], [0, 0, 1, 1], [], []>} : vector<1x16xf32>, vector<16x64xf32>, vector<1x64xf32> -> vector<1x64xf32>
    %253 = arith.index_cast %c5_i32 : i32 to index
    %c0_66 = arith.constant 0 : index
    %254 = vector.load %arg18[%253, %c0_66] : memref<12x64xf32, #tpu.memory_space<vmem>>, vector<1x64xf32>
    %255 = arith.addf %252, %254 : vector<1x64xf32>
    %cst_67 = arith.constant dense<0.000000e+00> : vector<1x64xf32>
    %256 = tpu.matmul %246, %24, %cst_67 {dimension_numbers = #tpu.dot_dimension_numbers<[1], [0], [0], [1], [0, 0, 1, 1], [], []>} : vector<1x16xf32>, vector<16x64xf32>, vector<1x64xf32> -> vector<1x64xf32>
    %257 = arith.index_cast %251 : i32 to index
    %c0_68 = arith.constant 0 : index
    %258 = vector.load %arg19[%257, %c0_68] : memref<12x64xf32, #tpu.memory_space<vmem>>, vector<1x64xf32>
    %259 = arith.addf %256, %258 : vector<1x64xf32>
    %260 = vector.extract_strided_slice %255 {offsets = [0, 0], sizes = [1, 48], strides = [1, 1]} : vector<1x64xf32> to vector<1x48xf32>
    %261 = arith.negf %260 : vector<1x48xf32>
    %262 = math.exp %261 : vector<1x48xf32>
    %cst_69 = arith.constant 1.000000e+00 : f32
    %263 = vector.broadcast %cst_69 : f32 to vector<1x48xf32>
    %264 = arith.addf %263, %262 : vector<1x48xf32>
    %265 = arith.divf %263, %264 : vector<1x48xf32>
    %266 = vector.extract_strided_slice %255 {offsets = [0, 48], sizes = [1, 16], strides = [1, 1]} : vector<1x64xf32> to vector<1x16xf32>
    %267 = math.tanh %266 : vector<1x16xf32>
    %268 = vector.extract_strided_slice %259 {offsets = [0, 0], sizes = [1, 48], strides = [1, 1]} : vector<1x64xf32> to vector<1x48xf32>
    %269 = arith.negf %268 : vector<1x48xf32>
    %270 = math.exp %269 : vector<1x48xf32>
    %cst_70 = arith.constant 1.000000e+00 : f32
    %271 = vector.broadcast %cst_70 : f32 to vector<1x48xf32>
    %272 = arith.addf %271, %270 : vector<1x48xf32>
    %273 = arith.divf %271, %272 : vector<1x48xf32>
    %274 = vector.extract_strided_slice %259 {offsets = [0, 48], sizes = [1, 16], strides = [1, 1]} : vector<1x64xf32> to vector<1x16xf32>
    %275 = math.tanh %274 : vector<1x16xf32>
    %276 = vector.extract_strided_slice %265 {offsets = [0, 16], sizes = [1, 16], strides = [1, 1]} : vector<1x48xf32> to vector<1x16xf32>
    %277 = arith.mulf %276, %235 : vector<1x16xf32>
    %278 = vector.extract_strided_slice %265 {offsets = [0, 0], sizes = [1, 16], strides = [1, 1]} : vector<1x48xf32> to vector<1x16xf32>
    %279 = arith.mulf %278, %267 : vector<1x16xf32>
    %280 = arith.addf %277, %279 : vector<1x16xf32>
    %281 = vector.extract_strided_slice %265 {offsets = [0, 32], sizes = [1, 16], strides = [1, 1]} : vector<1x48xf32> to vector<1x16xf32>
    %282 = math.tanh %280 : vector<1x16xf32>
    %283 = arith.mulf %281, %282 : vector<1x16xf32>
    %284 = vector.extract_strided_slice %273 {offsets = [0, 16], sizes = [1, 16], strides = [1, 1]} : vector<1x48xf32> to vector<1x16xf32>
    %285 = arith.mulf %284, %243 : vector<1x16xf32>
    %286 = vector.extract_strided_slice %273 {offsets = [0, 0], sizes = [1, 16], strides = [1, 1]} : vector<1x48xf32> to vector<1x16xf32>
    %287 = arith.mulf %286, %275 : vector<1x16xf32>
    %288 = arith.addf %285, %287 : vector<1x16xf32>
    %289 = vector.extract_strided_slice %273 {offsets = [0, 32], sizes = [1, 16], strides = [1, 1]} : vector<1x48xf32> to vector<1x16xf32>
    %290 = math.tanh %288 : vector<1x16xf32>
    %291 = arith.mulf %289, %290 : vector<1x16xf32>
    %292 = arith.index_cast %c5_i32 : i32 to index
    %c0_71 = arith.constant 0 : index
    %293 = vector.load %arg16[%292, %c0_71] : memref<12x16xf32, #tpu.memory_space<vmem>>, vector<1x16xf32>
    tpu.vector_store %arg16[%292, %c0_71], %283 {strides = array<i32>} : memref<12x16xf32, #tpu.memory_space<vmem>>, vector<1x16xf32>,
    %294 = arith.index_cast %251 : i32 to index
    %c0_72 = arith.constant 0 : index
    %295 = vector.load %arg17[%294, %c0_72] : memref<12x16xf32, #tpu.memory_space<vmem>>, vector<1x16xf32>
    tpu.vector_store %arg17[%294, %c0_72], %291 {strides = array<i32>} : memref<12x16xf32, #tpu.memory_space<vmem>>, vector<1x16xf32>,
    %c6_i32 = arith.constant 6 : i32
    %c11_i32_73 = arith.constant 11 : i32
    %296 = arith.subi %c11_i32_73, %c6_i32 : i32
    %cst_74 = arith.constant dense<0.000000e+00> : vector<1x64xf32>
    %297 = tpu.matmul %283, %23, %cst_74 {dimension_numbers = #tpu.dot_dimension_numbers<[1], [0], [0], [1], [0, 0, 1, 1], [], []>} : vector<1x16xf32>, vector<16x64xf32>, vector<1x64xf32> -> vector<1x64xf32>
    %298 = arith.index_cast %c6_i32 : i32 to index
    %c0_75 = arith.constant 0 : index
    %299 = vector.load %arg18[%298, %c0_75] : memref<12x64xf32, #tpu.memory_space<vmem>>, vector<1x64xf32>
    %300 = arith.addf %297, %299 : vector<1x64xf32>
    %cst_76 = arith.constant dense<0.000000e+00> : vector<1x64xf32>
    %301 = tpu.matmul %291, %24, %cst_76 {dimension_numbers = #tpu.dot_dimension_numbers<[1], [0], [0], [1], [0, 0, 1, 1], [], []>} : vector<1x16xf32>, vector<16x64xf32>, vector<1x64xf32> -> vector<1x64xf32>
    %302 = arith.index_cast %296 : i32 to index
    %c0_77 = arith.constant 0 : index
    %303 = vector.load %arg19[%302, %c0_77] : memref<12x64xf32, #tpu.memory_space<vmem>>, vector<1x64xf32>
    %304 = arith.addf %301, %303 : vector<1x64xf32>
    %305 = vector.extract_strided_slice %300 {offsets = [0, 0], sizes = [1, 48], strides = [1, 1]} : vector<1x64xf32> to vector<1x48xf32>
    %306 = arith.negf %305 : vector<1x48xf32>
    %307 = math.exp %306 : vector<1x48xf32>
    %cst_78 = arith.constant 1.000000e+00 : f32
    %308 = vector.broadcast %cst_78 : f32 to vector<1x48xf32>
    %309 = arith.addf %308, %307 : vector<1x48xf32>
    %310 = arith.divf %308, %309 : vector<1x48xf32>
    %311 = vector.extract_strided_slice %300 {offsets = [0, 48], sizes = [1, 16], strides = [1, 1]} : vector<1x64xf32> to vector<1x16xf32>
    %312 = math.tanh %311 : vector<1x16xf32>
    %313 = vector.extract_strided_slice %304 {offsets = [0, 0], sizes = [1, 48], strides = [1, 1]} : vector<1x64xf32> to vector<1x48xf32>
    %314 = arith.negf %313 : vector<1x48xf32>
    %315 = math.exp %314 : vector<1x48xf32>
    %cst_79 = arith.constant 1.000000e+00 : f32
    %316 = vector.broadcast %cst_79 : f32 to vector<1x48xf32>
    %317 = arith.addf %316, %315 : vector<1x48xf32>
    %318 = arith.divf %316, %317 : vector<1x48xf32>
    %319 = vector.extract_strided_slice %304 {offsets = [0, 48], sizes = [1, 16], strides = [1, 1]} : vector<1x64xf32> to vector<1x16xf32>
    %320 = math.tanh %319 : vector<1x16xf32>
    %321 = vector.extract_strided_slice %310 {offsets = [0, 16], sizes = [1, 16], strides = [1, 1]} : vector<1x48xf32> to vector<1x16xf32>
    %322 = arith.mulf %321, %280 : vector<1x16xf32>
    %323 = vector.extract_strided_slice %310 {offsets = [0, 0], sizes = [1, 16], strides = [1, 1]} : vector<1x48xf32> to vector<1x16xf32>
    %324 = arith.mulf %323, %312 : vector<1x16xf32>
    %325 = arith.addf %322, %324 : vector<1x16xf32>
    %326 = vector.extract_strided_slice %310 {offsets = [0, 32], sizes = [1, 16], strides = [1, 1]} : vector<1x48xf32> to vector<1x16xf32>
    %327 = math.tanh %325 : vector<1x16xf32>
    %328 = arith.mulf %326, %327 : vector<1x16xf32>
    %329 = vector.extract_strided_slice %318 {offsets = [0, 16], sizes = [1, 16], strides = [1, 1]} : vector<1x48xf32> to vector<1x16xf32>
    %330 = arith.mulf %329, %288 : vector<1x16xf32>
    %331 = vector.extract_strided_slice %318 {offsets = [0, 0], sizes = [1, 16], strides = [1, 1]} : vector<1x48xf32> to vector<1x16xf32>
    %332 = arith.mulf %331, %320 : vector<1x16xf32>
    %333 = arith.addf %330, %332 : vector<1x16xf32>
    %334 = vector.extract_strided_slice %318 {offsets = [0, 32], sizes = [1, 16], strides = [1, 1]} : vector<1x48xf32> to vector<1x16xf32>
    %335 = math.tanh %333 : vector<1x16xf32>
    %336 = arith.mulf %334, %335 : vector<1x16xf32>
    %337 = arith.index_cast %c6_i32 : i32 to index
    %c0_80 = arith.constant 0 : index
    %338 = vector.load %arg16[%337, %c0_80] : memref<12x16xf32, #tpu.memory_space<vmem>>, vector<1x16xf32>
    tpu.vector_store %arg16[%337, %c0_80], %328 {strides = array<i32>} : memref<12x16xf32, #tpu.memory_space<vmem>>, vector<1x16xf32>,
    %339 = arith.index_cast %296 : i32 to index
    %c0_81 = arith.constant 0 : index
    %340 = vector.load %arg17[%339, %c0_81] : memref<12x16xf32, #tpu.memory_space<vmem>>, vector<1x16xf32>
    tpu.vector_store %arg17[%339, %c0_81], %336 {strides = array<i32>} : memref<12x16xf32, #tpu.memory_space<vmem>>, vector<1x16xf32>,
    %c7_i32 = arith.constant 7 : i32
    %c11_i32_82 = arith.constant 11 : i32
    %341 = arith.subi %c11_i32_82, %c7_i32 : i32
    %cst_83 = arith.constant dense<0.000000e+00> : vector<1x64xf32>
    %342 = tpu.matmul %328, %23, %cst_83 {dimension_numbers = #tpu.dot_dimension_numbers<[1], [0], [0], [1], [0, 0, 1, 1], [], []>} : vector<1x16xf32>, vector<16x64xf32>, vector<1x64xf32> -> vector<1x64xf32>
    %343 = arith.index_cast %c7_i32 : i32 to index
    %c0_84 = arith.constant 0 : index
    %344 = vector.load %arg18[%343, %c0_84] : memref<12x64xf32, #tpu.memory_space<vmem>>, vector<1x64xf32>
    %345 = arith.addf %342, %344 : vector<1x64xf32>
    %cst_85 = arith.constant dense<0.000000e+00> : vector<1x64xf32>
    %346 = tpu.matmul %336, %24, %cst_85 {dimension_numbers = #tpu.dot_dimension_numbers<[1], [0], [0], [1], [0, 0, 1, 1], [], []>} : vector<1x16xf32>, vector<16x64xf32>, vector<1x64xf32> -> vector<1x64xf32>
    %347 = arith.index_cast %341 : i32 to index
    %c0_86 = arith.constant 0 : index
    %348 = vector.load %arg19[%347, %c0_86] : memref<12x64xf32, #tpu.memory_space<vmem>>, vector<1x64xf32>
    %349 = arith.addf %346, %348 : vector<1x64xf32>
    %350 = vector.extract_strided_slice %345 {offsets = [0, 0], sizes = [1, 48], strides = [1, 1]} : vector<1x64xf32> to vector<1x48xf32>
    %351 = arith.negf %350 : vector<1x48xf32>
    %352 = math.exp %351 : vector<1x48xf32>
    %cst_87 = arith.constant 1.000000e+00 : f32
    %353 = vector.broadcast %cst_87 : f32 to vector<1x48xf32>
    %354 = arith.addf %353, %352 : vector<1x48xf32>
    %355 = arith.divf %353, %354 : vector<1x48xf32>
    %356 = vector.extract_strided_slice %345 {offsets = [0, 48], sizes = [1, 16], strides = [1, 1]} : vector<1x64xf32> to vector<1x16xf32>
    %357 = math.tanh %356 : vector<1x16xf32>
    %358 = vector.extract_strided_slice %349 {offsets = [0, 0], sizes = [1, 48], strides = [1, 1]} : vector<1x64xf32> to vector<1x48xf32>
    %359 = arith.negf %358 : vector<1x48xf32>
    %360 = math.exp %359 : vector<1x48xf32>
    %cst_88 = arith.constant 1.000000e+00 : f32
    %361 = vector.broadcast %cst_88 : f32 to vector<1x48xf32>
    %362 = arith.addf %361, %360 : vector<1x48xf32>
    %363 = arith.divf %361, %362 : vector<1x48xf32>
    %364 = vector.extract_strided_slice %349 {offsets = [0, 48], sizes = [1, 16], strides = [1, 1]} : vector<1x64xf32> to vector<1x16xf32>
    %365 = math.tanh %364 : vector<1x16xf32>
    %366 = vector.extract_strided_slice %355 {offsets = [0, 16], sizes = [1, 16], strides = [1, 1]} : vector<1x48xf32> to vector<1x16xf32>
    %367 = arith.mulf %366, %325 : vector<1x16xf32>
    %368 = vector.extract_strided_slice %355 {offsets = [0, 0], sizes = [1, 16], strides = [1, 1]} : vector<1x48xf32> to vector<1x16xf32>
    %369 = arith.mulf %368, %357 : vector<1x16xf32>
    %370 = arith.addf %367, %369 : vector<1x16xf32>
    %371 = vector.extract_strided_slice %355 {offsets = [0, 32], sizes = [1, 16], strides = [1, 1]} : vector<1x48xf32> to vector<1x16xf32>
    %372 = math.tanh %370 : vector<1x16xf32>
    %373 = arith.mulf %371, %372 : vector<1x16xf32>
    %374 = vector.extract_strided_slice %363 {offsets = [0, 16], sizes = [1, 16], strides = [1, 1]} : vector<1x48xf32> to vector<1x16xf32>
    %375 = arith.mulf %374, %333 : vector<1x16xf32>
    %376 = vector.extract_strided_slice %363 {offsets = [0, 0], sizes = [1, 16], strides = [1, 1]} : vector<1x48xf32> to vector<1x16xf32>
    %377 = arith.mulf %376, %365 : vector<1x16xf32>
    %378 = arith.addf %375, %377 : vector<1x16xf32>
    %379 = vector.extract_strided_slice %363 {offsets = [0, 32], sizes = [1, 16], strides = [1, 1]} : vector<1x48xf32> to vector<1x16xf32>
    %380 = math.tanh %378 : vector<1x16xf32>
    %381 = arith.mulf %379, %380 : vector<1x16xf32>
    %382 = arith.index_cast %c7_i32 : i32 to index
    %c0_89 = arith.constant 0 : index
    %383 = vector.load %arg16[%382, %c0_89] : memref<12x16xf32, #tpu.memory_space<vmem>>, vector<1x16xf32>
    tpu.vector_store %arg16[%382, %c0_89], %373 {strides = array<i32>} : memref<12x16xf32, #tpu.memory_space<vmem>>, vector<1x16xf32>,
    %384 = arith.index_cast %341 : i32 to index
    %c0_90 = arith.constant 0 : index
    %385 = vector.load %arg17[%384, %c0_90] : memref<12x16xf32, #tpu.memory_space<vmem>>, vector<1x16xf32>
    tpu.vector_store %arg17[%384, %c0_90], %381 {strides = array<i32>} : memref<12x16xf32, #tpu.memory_space<vmem>>, vector<1x16xf32>,
    %c8_i32 = arith.constant 8 : i32
    %c11_i32_91 = arith.constant 11 : i32
    %386 = arith.subi %c11_i32_91, %c8_i32 : i32
    %cst_92 = arith.constant dense<0.000000e+00> : vector<1x64xf32>
    %387 = tpu.matmul %373, %23, %cst_92 {dimension_numbers = #tpu.dot_dimension_numbers<[1], [0], [0], [1], [0, 0, 1, 1], [], []>} : vector<1x16xf32>, vector<16x64xf32>, vector<1x64xf32> -> vector<1x64xf32>
    %388 = arith.index_cast %c8_i32 : i32 to index
    %c0_93 = arith.constant 0 : index
    %389 = vector.load %arg18[%388, %c0_93] : memref<12x64xf32, #tpu.memory_space<vmem>>, vector<1x64xf32>
    %390 = arith.addf %387, %389 : vector<1x64xf32>
    %cst_94 = arith.constant dense<0.000000e+00> : vector<1x64xf32>
    %391 = tpu.matmul %381, %24, %cst_94 {dimension_numbers = #tpu.dot_dimension_numbers<[1], [0], [0], [1], [0, 0, 1, 1], [], []>} : vector<1x16xf32>, vector<16x64xf32>, vector<1x64xf32> -> vector<1x64xf32>
    %392 = arith.index_cast %386 : i32 to index
    %c0_95 = arith.constant 0 : index
    %393 = vector.load %arg19[%392, %c0_95] : memref<12x64xf32, #tpu.memory_space<vmem>>, vector<1x64xf32>
    %394 = arith.addf %391, %393 : vector<1x64xf32>
    %395 = vector.extract_strided_slice %390 {offsets = [0, 0], sizes = [1, 48], strides = [1, 1]} : vector<1x64xf32> to vector<1x48xf32>
    %396 = arith.negf %395 : vector<1x48xf32>
    %397 = math.exp %396 : vector<1x48xf32>
    %cst_96 = arith.constant 1.000000e+00 : f32
    %398 = vector.broadcast %cst_96 : f32 to vector<1x48xf32>
    %399 = arith.addf %398, %397 : vector<1x48xf32>
    %400 = arith.divf %398, %399 : vector<1x48xf32>
    %401 = vector.extract_strided_slice %390 {offsets = [0, 48], sizes = [1, 16], strides = [1, 1]} : vector<1x64xf32> to vector<1x16xf32>
    %402 = math.tanh %401 : vector<1x16xf32>
    %403 = vector.extract_strided_slice %394 {offsets = [0, 0], sizes = [1, 48], strides = [1, 1]} : vector<1x64xf32> to vector<1x48xf32>
    %404 = arith.negf %403 : vector<1x48xf32>
    %405 = math.exp %404 : vector<1x48xf32>
    %cst_97 = arith.constant 1.000000e+00 : f32
    %406 = vector.broadcast %cst_97 : f32 to vector<1x48xf32>
    %407 = arith.addf %406, %405 : vector<1x48xf32>
    %408 = arith.divf %406, %407 : vector<1x48xf32>
    %409 = vector.extract_strided_slice %394 {offsets = [0, 48], sizes = [1, 16], strides = [1, 1]} : vector<1x64xf32> to vector<1x16xf32>
    %410 = math.tanh %409 : vector<1x16xf32>
    %411 = vector.extract_strided_slice %400 {offsets = [0, 16], sizes = [1, 16], strides = [1, 1]} : vector<1x48xf32> to vector<1x16xf32>
    %412 = arith.mulf %411, %370 : vector<1x16xf32>
    %413 = vector.extract_strided_slice %400 {offsets = [0, 0], sizes = [1, 16], strides = [1, 1]} : vector<1x48xf32> to vector<1x16xf32>
    %414 = arith.mulf %413, %402 : vector<1x16xf32>
    %415 = arith.addf %412, %414 : vector<1x16xf32>
    %416 = vector.extract_strided_slice %400 {offsets = [0, 32], sizes = [1, 16], strides = [1, 1]} : vector<1x48xf32> to vector<1x16xf32>
    %417 = math.tanh %415 : vector<1x16xf32>
    %418 = arith.mulf %416, %417 : vector<1x16xf32>
    %419 = vector.extract_strided_slice %408 {offsets = [0, 16], sizes = [1, 16], strides = [1, 1]} : vector<1x48xf32> to vector<1x16xf32>
    %420 = arith.mulf %419, %378 : vector<1x16xf32>
    %421 = vector.extract_strided_slice %408 {offsets = [0, 0], sizes = [1, 16], strides = [1, 1]} : vector<1x48xf32> to vector<1x16xf32>
    %422 = arith.mulf %421, %410 : vector<1x16xf32>
    %423 = arith.addf %420, %422 : vector<1x16xf32>
    %424 = vector.extract_strided_slice %408 {offsets = [0, 32], sizes = [1, 16], strides = [1, 1]} : vector<1x48xf32> to vector<1x16xf32>
    %425 = math.tanh %423 : vector<1x16xf32>
    %426 = arith.mulf %424, %425 : vector<1x16xf32>
    %427 = arith.index_cast %c8_i32 : i32 to index
    %c0_98 = arith.constant 0 : index
    %428 = vector.load %arg16[%427, %c0_98] : memref<12x16xf32, #tpu.memory_space<vmem>>, vector<1x16xf32>
    tpu.vector_store %arg16[%427, %c0_98], %418 {strides = array<i32>} : memref<12x16xf32, #tpu.memory_space<vmem>>, vector<1x16xf32>,
    %429 = arith.index_cast %386 : i32 to index
    %c0_99 = arith.constant 0 : index
    %430 = vector.load %arg17[%429, %c0_99] : memref<12x16xf32, #tpu.memory_space<vmem>>, vector<1x16xf32>
    tpu.vector_store %arg17[%429, %c0_99], %426 {strides = array<i32>} : memref<12x16xf32, #tpu.memory_space<vmem>>, vector<1x16xf32>,
    %c9_i32 = arith.constant 9 : i32
    %c11_i32_100 = arith.constant 11 : i32
    %431 = arith.subi %c11_i32_100, %c9_i32 : i32
    %cst_101 = arith.constant dense<0.000000e+00> : vector<1x64xf32>
    %432 = tpu.matmul %418, %23, %cst_101 {dimension_numbers = #tpu.dot_dimension_numbers<[1], [0], [0], [1], [0, 0, 1, 1], [], []>} : vector<1x16xf32>, vector<16x64xf32>, vector<1x64xf32> -> vector<1x64xf32>
    %433 = arith.index_cast %c9_i32 : i32 to index
    %c0_102 = arith.constant 0 : index
    %434 = vector.load %arg18[%433, %c0_102] : memref<12x64xf32, #tpu.memory_space<vmem>>, vector<1x64xf32>
    %435 = arith.addf %432, %434 : vector<1x64xf32>
    %cst_103 = arith.constant dense<0.000000e+00> : vector<1x64xf32>
    %436 = tpu.matmul %426, %24, %cst_103 {dimension_numbers = #tpu.dot_dimension_numbers<[1], [0], [0], [1], [0, 0, 1, 1], [], []>} : vector<1x16xf32>, vector<16x64xf32>, vector<1x64xf32> -> vector<1x64xf32>
    %437 = arith.index_cast %431 : i32 to index
    %c0_104 = arith.constant 0 : index
    %438 = vector.load %arg19[%437, %c0_104] : memref<12x64xf32, #tpu.memory_space<vmem>>, vector<1x64xf32>
    %439 = arith.addf %436, %438 : vector<1x64xf32>
    %440 = vector.extract_strided_slice %435 {offsets = [0, 0], sizes = [1, 48], strides = [1, 1]} : vector<1x64xf32> to vector<1x48xf32>
    %441 = arith.negf %440 : vector<1x48xf32>
    %442 = math.exp %441 : vector<1x48xf32>
    %cst_105 = arith.constant 1.000000e+00 : f32
    %443 = vector.broadcast %cst_105 : f32 to vector<1x48xf32>
    %444 = arith.addf %443, %442 : vector<1x48xf32>
    %445 = arith.divf %443, %444 : vector<1x48xf32>
    %446 = vector.extract_strided_slice %435 {offsets = [0, 48], sizes = [1, 16], strides = [1, 1]} : vector<1x64xf32> to vector<1x16xf32>
    %447 = math.tanh %446 : vector<1x16xf32>
    %448 = vector.extract_strided_slice %439 {offsets = [0, 0], sizes = [1, 48], strides = [1, 1]} : vector<1x64xf32> to vector<1x48xf32>
    %449 = arith.negf %448 : vector<1x48xf32>
    %450 = math.exp %449 : vector<1x48xf32>
    %cst_106 = arith.constant 1.000000e+00 : f32
    %451 = vector.broadcast %cst_106 : f32 to vector<1x48xf32>
    %452 = arith.addf %451, %450 : vector<1x48xf32>
    %453 = arith.divf %451, %452 : vector<1x48xf32>
    %454 = vector.extract_strided_slice %439 {offsets = [0, 48], sizes = [1, 16], strides = [1, 1]} : vector<1x64xf32> to vector<1x16xf32>
    %455 = math.tanh %454 : vector<1x16xf32>
    %456 = vector.extract_strided_slice %445 {offsets = [0, 16], sizes = [1, 16], strides = [1, 1]} : vector<1x48xf32> to vector<1x16xf32>
    %457 = arith.mulf %456, %415 : vector<1x16xf32>
    %458 = vector.extract_strided_slice %445 {offsets = [0, 0], sizes = [1, 16], strides = [1, 1]} : vector<1x48xf32> to vector<1x16xf32>
    %459 = arith.mulf %458, %447 : vector<1x16xf32>
    %460 = arith.addf %457, %459 : vector<1x16xf32>
    %461 = vector.extract_strided_slice %445 {offsets = [0, 32], sizes = [1, 16], strides = [1, 1]} : vector<1x48xf32> to vector<1x16xf32>
    %462 = math.tanh %460 : vector<1x16xf32>
    %463 = arith.mulf %461, %462 : vector<1x16xf32>
    %464 = vector.extract_strided_slice %453 {offsets = [0, 16], sizes = [1, 16], strides = [1, 1]} : vector<1x48xf32> to vector<1x16xf32>
    %465 = arith.mulf %464, %423 : vector<1x16xf32>
    %466 = vector.extract_strided_slice %453 {offsets = [0, 0], sizes = [1, 16], strides = [1, 1]} : vector<1x48xf32> to vector<1x16xf32>
    %467 = arith.mulf %466, %455 : vector<1x16xf32>
    %468 = arith.addf %465, %467 : vector<1x16xf32>
    %469 = vector.extract_strided_slice %453 {offsets = [0, 32], sizes = [1, 16], strides = [1, 1]} : vector<1x48xf32> to vector<1x16xf32>
    %470 = math.tanh %468 : vector<1x16xf32>
    %471 = arith.mulf %469, %470 : vector<1x16xf32>
    %472 = arith.index_cast %c9_i32 : i32 to index
    %c0_107 = arith.constant 0 : index
    %473 = vector.load %arg16[%472, %c0_107] : memref<12x16xf32, #tpu.memory_space<vmem>>, vector<1x16xf32>
    tpu.vector_store %arg16[%472, %c0_107], %463 {strides = array<i32>} : memref<12x16xf32, #tpu.memory_space<vmem>>, vector<1x16xf32>,
    %474 = arith.index_cast %431 : i32 to index
    %c0_108 = arith.constant 0 : index
    %475 = vector.load %arg17[%474, %c0_108] : memref<12x16xf32, #tpu.memory_space<vmem>>, vector<1x16xf32>
    tpu.vector_store %arg17[%474, %c0_108], %471 {strides = array<i32>} : memref<12x16xf32, #tpu.memory_space<vmem>>, vector<1x16xf32>,
    %c10_i32 = arith.constant 10 : i32
    %c11_i32_109 = arith.constant 11 : i32
    %476 = arith.subi %c11_i32_109, %c10_i32 : i32
    %cst_110 = arith.constant dense<0.000000e+00> : vector<1x64xf32>
    %477 = tpu.matmul %463, %23, %cst_110 {dimension_numbers = #tpu.dot_dimension_numbers<[1], [0], [0], [1], [0, 0, 1, 1], [], []>} : vector<1x16xf32>, vector<16x64xf32>, vector<1x64xf32> -> vector<1x64xf32>
    %478 = arith.index_cast %c10_i32 : i32 to index
    %c0_111 = arith.constant 0 : index
    %479 = vector.load %arg18[%478, %c0_111] : memref<12x64xf32, #tpu.memory_space<vmem>>, vector<1x64xf32>
    %480 = arith.addf %477, %479 : vector<1x64xf32>
    %cst_112 = arith.constant dense<0.000000e+00> : vector<1x64xf32>
    %481 = tpu.matmul %471, %24, %cst_112 {dimension_numbers = #tpu.dot_dimension_numbers<[1], [0], [0], [1], [0, 0, 1, 1], [], []>} : vector<1x16xf32>, vector<16x64xf32>, vector<1x64xf32> -> vector<1x64xf32>
    %482 = arith.index_cast %476 : i32 to index
    %c0_113 = arith.constant 0 : index
    %483 = vector.load %arg19[%482, %c0_113] : memref<12x64xf32, #tpu.memory_space<vmem>>, vector<1x64xf32>
    %484 = arith.addf %481, %483 : vector<1x64xf32>
    %485 = vector.extract_strided_slice %480 {offsets = [0, 0], sizes = [1, 48], strides = [1, 1]} : vector<1x64xf32> to vector<1x48xf32>
    %486 = arith.negf %485 : vector<1x48xf32>
    %487 = math.exp %486 : vector<1x48xf32>
    %cst_114 = arith.constant 1.000000e+00 : f32
    %488 = vector.broadcast %cst_114 : f32 to vector<1x48xf32>
    %489 = arith.addf %488, %487 : vector<1x48xf32>
    %490 = arith.divf %488, %489 : vector<1x48xf32>
    %491 = vector.extract_strided_slice %480 {offsets = [0, 48], sizes = [1, 16], strides = [1, 1]} : vector<1x64xf32> to vector<1x16xf32>
    %492 = math.tanh %491 : vector<1x16xf32>
    %493 = vector.extract_strided_slice %484 {offsets = [0, 0], sizes = [1, 48], strides = [1, 1]} : vector<1x64xf32> to vector<1x48xf32>
    %494 = arith.negf %493 : vector<1x48xf32>
    %495 = math.exp %494 : vector<1x48xf32>
    %cst_115 = arith.constant 1.000000e+00 : f32
    %496 = vector.broadcast %cst_115 : f32 to vector<1x48xf32>
    %497 = arith.addf %496, %495 : vector<1x48xf32>
    %498 = arith.divf %496, %497 : vector<1x48xf32>
    %499 = vector.extract_strided_slice %484 {offsets = [0, 48], sizes = [1, 16], strides = [1, 1]} : vector<1x64xf32> to vector<1x16xf32>
    %500 = math.tanh %499 : vector<1x16xf32>
    %501 = vector.extract_strided_slice %490 {offsets = [0, 16], sizes = [1, 16], strides = [1, 1]} : vector<1x48xf32> to vector<1x16xf32>
    %502 = arith.mulf %501, %460 : vector<1x16xf32>
    %503 = vector.extract_strided_slice %490 {offsets = [0, 0], sizes = [1, 16], strides = [1, 1]} : vector<1x48xf32> to vector<1x16xf32>
    %504 = arith.mulf %503, %492 : vector<1x16xf32>
    %505 = arith.addf %502, %504 : vector<1x16xf32>
    %506 = vector.extract_strided_slice %490 {offsets = [0, 32], sizes = [1, 16], strides = [1, 1]} : vector<1x48xf32> to vector<1x16xf32>
    %507 = math.tanh %505 : vector<1x16xf32>
    %508 = arith.mulf %506, %507 : vector<1x16xf32>
    %509 = vector.extract_strided_slice %498 {offsets = [0, 16], sizes = [1, 16], strides = [1, 1]} : vector<1x48xf32> to vector<1x16xf32>
    %510 = arith.mulf %509, %468 : vector<1x16xf32>
    %511 = vector.extract_strided_slice %498 {offsets = [0, 0], sizes = [1, 16], strides = [1, 1]} : vector<1x48xf32> to vector<1x16xf32>
    %512 = arith.mulf %511, %500 : vector<1x16xf32>
    %513 = arith.addf %510, %512 : vector<1x16xf32>
    %514 = vector.extract_strided_slice %498 {offsets = [0, 32], sizes = [1, 16], strides = [1, 1]} : vector<1x48xf32> to vector<1x16xf32>
    %515 = math.tanh %513 : vector<1x16xf32>
    %516 = arith.mulf %514, %515 : vector<1x16xf32>
    %517 = arith.index_cast %c10_i32 : i32 to index
    %c0_116 = arith.constant 0 : index
    %518 = vector.load %arg16[%517, %c0_116] : memref<12x16xf32, #tpu.memory_space<vmem>>, vector<1x16xf32>
    tpu.vector_store %arg16[%517, %c0_116], %508 {strides = array<i32>} : memref<12x16xf32, #tpu.memory_space<vmem>>, vector<1x16xf32>,
    %519 = arith.index_cast %476 : i32 to index
    %c0_117 = arith.constant 0 : index
    %520 = vector.load %arg17[%519, %c0_117] : memref<12x16xf32, #tpu.memory_space<vmem>>, vector<1x16xf32>
    tpu.vector_store %arg17[%519, %c0_117], %516 {strides = array<i32>} : memref<12x16xf32, #tpu.memory_space<vmem>>, vector<1x16xf32>,
    %c11_i32_118 = arith.constant 11 : i32
    %c11_i32_119 = arith.constant 11 : i32
    %521 = arith.subi %c11_i32_119, %c11_i32_118 : i32
    %cst_120 = arith.constant dense<0.000000e+00> : vector<1x64xf32>
    %522 = tpu.matmul %508, %23, %cst_120 {dimension_numbers = #tpu.dot_dimension_numbers<[1], [0], [0], [1], [0, 0, 1, 1], [], []>} : vector<1x16xf32>, vector<16x64xf32>, vector<1x64xf32> -> vector<1x64xf32>
    %523 = arith.index_cast %c11_i32_118 : i32 to index
    %c0_121 = arith.constant 0 : index
    %524 = vector.load %arg18[%523, %c0_121] : memref<12x64xf32, #tpu.memory_space<vmem>>, vector<1x64xf32>
    %525 = arith.addf %522, %524 : vector<1x64xf32>
    %cst_122 = arith.constant dense<0.000000e+00> : vector<1x64xf32>
    %526 = tpu.matmul %516, %24, %cst_122 {dimension_numbers = #tpu.dot_dimension_numbers<[1], [0], [0], [1], [0, 0, 1, 1], [], []>} : vector<1x16xf32>, vector<16x64xf32>, vector<1x64xf32> -> vector<1x64xf32>
    %527 = arith.index_cast %521 : i32 to index
    %c0_123 = arith.constant 0 : index
    %528 = vector.load %arg19[%527, %c0_123] : memref<12x64xf32, #tpu.memory_space<vmem>>, vector<1x64xf32>
    %529 = arith.addf %526, %528 : vector<1x64xf32>
    %530 = vector.extract_strided_slice %525 {offsets = [0, 0], sizes = [1, 48], strides = [1, 1]} : vector<1x64xf32> to vector<1x48xf32>
    %531 = arith.negf %530 : vector<1x48xf32>
    %532 = math.exp %531 : vector<1x48xf32>
    %cst_124 = arith.constant 1.000000e+00 : f32
    %533 = vector.broadcast %cst_124 : f32 to vector<1x48xf32>
    %534 = arith.addf %533, %532 : vector<1x48xf32>
    %535 = arith.divf %533, %534 : vector<1x48xf32>
    %536 = vector.extract_strided_slice %525 {offsets = [0, 48], sizes = [1, 16], strides = [1, 1]} : vector<1x64xf32> to vector<1x16xf32>
    %537 = math.tanh %536 : vector<1x16xf32>
    %538 = vector.extract_strided_slice %529 {offsets = [0, 0], sizes = [1, 48], strides = [1, 1]} : vector<1x64xf32> to vector<1x48xf32>
    %539 = arith.negf %538 : vector<1x48xf32>
    %540 = math.exp %539 : vector<1x48xf32>
    %cst_125 = arith.constant 1.000000e+00 : f32
    %541 = vector.broadcast %cst_125 : f32 to vector<1x48xf32>
    %542 = arith.addf %541, %540 : vector<1x48xf32>
    %543 = arith.divf %541, %542 : vector<1x48xf32>
    %544 = vector.extract_strided_slice %529 {offsets = [0, 48], sizes = [1, 16], strides = [1, 1]} : vector<1x64xf32> to vector<1x16xf32>
    %545 = math.tanh %544 : vector<1x16xf32>
    %546 = vector.extract_strided_slice %535 {offsets = [0, 16], sizes = [1, 16], strides = [1, 1]} : vector<1x48xf32> to vector<1x16xf32>
    %547 = arith.mulf %546, %505 : vector<1x16xf32>
    %548 = vector.extract_strided_slice %535 {offsets = [0, 0], sizes = [1, 16], strides = [1, 1]} : vector<1x48xf32> to vector<1x16xf32>
    %549 = arith.mulf %548, %537 : vector<1x16xf32>
    %550 = arith.addf %547, %549 : vector<1x16xf32>
    %551 = vector.extract_strided_slice %535 {offsets = [0, 32], sizes = [1, 16], strides = [1, 1]} : vector<1x48xf32> to vector<1x16xf32>
    %552 = math.tanh %550 : vector<1x16xf32>
    %553 = arith.mulf %551, %552 : vector<1x16xf32>
    %554 = vector.extract_strided_slice %543 {offsets = [0, 16], sizes = [1, 16], strides = [1, 1]} : vector<1x48xf32> to vector<1x16xf32>
    %555 = arith.mulf %554, %513 : vector<1x16xf32>
    %556 = vector.extract_strided_slice %543 {offsets = [0, 0], sizes = [1, 16], strides = [1, 1]} : vector<1x48xf32> to vector<1x16xf32>
    %557 = arith.mulf %556, %545 : vector<1x16xf32>
    %558 = arith.addf %555, %557 : vector<1x16xf32>
    %559 = vector.extract_strided_slice %543 {offsets = [0, 32], sizes = [1, 16], strides = [1, 1]} : vector<1x48xf32> to vector<1x16xf32>
    %560 = math.tanh %558 : vector<1x16xf32>
    %561 = arith.mulf %559, %560 : vector<1x16xf32>
    %562 = arith.index_cast %c11_i32_118 : i32 to index
    %c0_126 = arith.constant 0 : index
    %563 = vector.load %arg16[%562, %c0_126] : memref<12x16xf32, #tpu.memory_space<vmem>>, vector<1x16xf32>
    tpu.vector_store %arg16[%562, %c0_126], %553 {strides = array<i32>} : memref<12x16xf32, #tpu.memory_space<vmem>>, vector<1x16xf32>,
    %564 = arith.index_cast %521 : i32 to index
    %c0_127 = arith.constant 0 : index
    %565 = vector.load %arg17[%564, %c0_127] : memref<12x16xf32, #tpu.memory_space<vmem>>, vector<1x16xf32>
    tpu.vector_store %arg17[%564, %c0_127], %561 {strides = array<i32>} : memref<12x16xf32, #tpu.memory_space<vmem>>, vector<1x16xf32>,
    %c12_i32 = arith.constant 12 : i32
    %c0_i32_128 = arith.constant 0 : i32
    %566 = tpu.memref_slice %arg23[%c0_i32_128] : memref<3x!tpu.dma_semaphore, #tpu.memory_space<semaphore_mem>> -> memref<1x!tpu.dma_semaphore, #tpu.memory_space<semaphore_mem>>
    %567 = tpu.memref_squeeze %566 : memref<1x!tpu.dma_semaphore, #tpu.memory_space<semaphore_mem>> -> memref<!tpu.dma_semaphore, #tpu.memory_space<semaphore_mem>>
    tpu.wait_dma2 semaphore(%567 : memref<!tpu.dma_semaphore, #tpu.memory_space<semaphore_mem>>) src(%arg7 : memref<3x16x64xf32, #tpu.memory_space<any>>) dst(%arg20 : memref<3x16x64xf32, #tpu.memory_space<vmem>>)
    %c1_i32_129 = arith.constant 1 : i32
    %568 = tpu.memref_slice %arg23[%c1_i32_129] : memref<3x!tpu.dma_semaphore, #tpu.memory_space<semaphore_mem>> -> memref<1x!tpu.dma_semaphore, #tpu.memory_space<semaphore_mem>>
    %569 = tpu.memref_squeeze %568 : memref<1x!tpu.dma_semaphore, #tpu.memory_space<semaphore_mem>> -> memref<!tpu.dma_semaphore, #tpu.memory_space<semaphore_mem>>
    tpu.wait_dma2 semaphore(%569 : memref<!tpu.dma_semaphore, #tpu.memory_space<semaphore_mem>>) src(%arg9 : memref<3x16x64xf32, #tpu.memory_space<any>>) dst(%arg21 : memref<3x16x64xf32, #tpu.memory_space<vmem>>)
    %c0_130 = arith.constant 0 : index
    %c0_131 = arith.constant 0 : index
    %c0_132 = arith.constant 0 : index
    %570 = vector.load %arg20[%c0_130, %c0_131, %c0_132] : memref<3x16x64xf32, #tpu.memory_space<vmem>>, vector<1x16x64xf32>
    %571 = vector.shape_cast %570 : vector<1x16x64xf32> to vector<16x64xf32>
    %c1 = arith.constant 1 : index
    %c0_133 = arith.constant 0 : index
    %c0_134 = arith.constant 0 : index
    %572 = vector.load %arg20[%c1, %c0_133, %c0_134] : memref<3x16x64xf32, #tpu.memory_space<vmem>>, vector<1x16x64xf32>
    %573 = vector.shape_cast %572 : vector<1x16x64xf32> to vector<16x64xf32>
    %c2 = arith.constant 2 : index
    %c0_135 = arith.constant 0 : index
    %c0_136 = arith.constant 0 : index
    %574 = vector.load %arg20[%c2, %c0_135, %c0_136] : memref<3x16x64xf32, #tpu.memory_space<vmem>>, vector<1x16x64xf32>
    %575 = vector.shape_cast %574 : vector<1x16x64xf32> to vector<16x64xf32>
    %c0_137 = arith.constant 0 : index
    %c0_138 = arith.constant 0 : index
    %c0_139 = arith.constant 0 : index
    %576 = vector.load %arg21[%c0_137, %c0_138, %c0_139] : memref<3x16x64xf32, #tpu.memory_space<vmem>>, vector<1x16x64xf32>
    %577 = vector.shape_cast %576 : vector<1x16x64xf32> to vector<16x64xf32>
    %c1_140 = arith.constant 1 : index
    %c0_141 = arith.constant 0 : index
    %c0_142 = arith.constant 0 : index
    %578 = vector.load %arg21[%c1_140, %c0_141, %c0_142] : memref<3x16x64xf32, #tpu.memory_space<vmem>>, vector<1x16x64xf32>
    %579 = vector.shape_cast %578 : vector<1x16x64xf32> to vector<16x64xf32>
    %c2_143 = arith.constant 2 : index
    %c0_144 = arith.constant 0 : index
    %c0_145 = arith.constant 0 : index
    %580 = vector.load %arg21[%c2_143, %c0_144, %c0_145] : memref<3x16x64xf32, #tpu.memory_space<vmem>>, vector<1x16x64xf32>
    %581 = vector.shape_cast %580 : vector<1x16x64xf32> to vector<16x64xf32>
    %c0_146 = arith.constant 0 : index
    %c0_147 = arith.constant 0 : index
    %582 = vector.load %arg16[%c0_146, %c0_147] : memref<12x16xf32, #tpu.memory_space<vmem>>, vector<12x16xf32>
    %c0_148 = arith.constant 0 : index
    %c0_149 = arith.constant 0 : index
    %583 = vector.load %arg17[%c0_148, %c0_149] : memref<12x16xf32, #tpu.memory_space<vmem>>, vector<12x16xf32>
    %cst_150 = arith.constant dense<0.000000e+00> : vector<12x64xf32>
    %584 = tpu.matmul %582, %571, %cst_150 {dimension_numbers = #tpu.dot_dimension_numbers<[1], [0], [0], [1], [0, 0, 1, 1], [], []>} : vector<12x16xf32>, vector<16x64xf32>, vector<12x64xf32> -> vector<12x64xf32>
    %cst_151 = arith.constant dense<0.000000e+00> : vector<12x64xf32>
    %585 = tpu.matmul %583, %573, %cst_151 {dimension_numbers = #tpu.dot_dimension_numbers<[1], [0], [0], [1], [0, 0, 1, 1], [], []>} : vector<12x16xf32>, vector<16x64xf32>, vector<12x64xf32> -> vector<12x64xf32>
    %586 = arith.addf %584, %585 : vector<12x64xf32>
    %c0_152 = arith.constant 0 : index
    %c0_153 = arith.constant 0 : index
    %587 = vector.load %arg8[%c0_152, %c0_153] : memref<1x64xf32, #tpu.memory_space<vmem>>, vector<1x64xf32>
    %588 = vector.broadcast %587 : vector<1x64xf32> to vector<12x64xf32>
    %589 = arith.addf %586, %588 : vector<12x64xf32>
    %c0_154 = arith.constant 0 : index
    %c0_155 = arith.constant 0 : index
    %590 = vector.load %arg18[%c0_154, %c0_155] : memref<12x64xf32, #tpu.memory_space<vmem>>, vector<12x64xf32>
    tpu.vector_store %arg18[%c0_154, %c0_155], %589 {strides = array<i32>} : memref<12x64xf32, #tpu.memory_space<vmem>>, vector<12x64xf32>,
    %cst_156 = arith.constant dense<0.000000e+00> : vector<12x64xf32>
    %591 = tpu.matmul %582, %577, %cst_156 {dimension_numbers = #tpu.dot_dimension_numbers<[1], [0], [0], [1], [0, 0, 1, 1], [], []>} : vector<12x16xf32>, vector<16x64xf32>, vector<12x64xf32> -> vector<12x64xf32>
    %cst_157 = arith.constant dense<0.000000e+00> : vector<12x64xf32>
    %592 = tpu.matmul %583, %579, %cst_157 {dimension_numbers = #tpu.dot_dimension_numbers<[1], [0], [0], [1], [0, 0, 1, 1], [], []>} : vector<12x16xf32>, vector<16x64xf32>, vector<12x64xf32> -> vector<12x64xf32>
    %593 = arith.addf %591, %592 : vector<12x64xf32>
    %c0_158 = arith.constant 0 : index
    %c0_159 = arith.constant 0 : index
    %594 = vector.load %arg10[%c0_158, %c0_159] : memref<1x64xf32, #tpu.memory_space<vmem>>, vector<1x64xf32>
    %595 = vector.broadcast %594 : vector<1x64xf32> to vector<12x64xf32>
    %596 = arith.addf %593, %595 : vector<12x64xf32>
    %c0_160 = arith.constant 0 : index
    %c0_161 = arith.constant 0 : index
    %597 = vector.load %arg19[%c0_160, %c0_161] : memref<12x64xf32, #tpu.memory_space<vmem>>, vector<12x64xf32>
    tpu.vector_store %arg19[%c0_160, %c0_161], %596 {strides = array<i32>} : memref<12x64xf32, #tpu.memory_space<vmem>>, vector<12x64xf32>,
    %cst_162 = arith.constant 0.000000e+00 : f32
    %598 = vector.broadcast %cst_162 : f32 to vector<1x16xf32>
    %c0_i32_163 = arith.constant 0 : i32
    %c11_i32_164 = arith.constant 11 : i32
    %599 = arith.subi %c11_i32_164, %c0_i32_163 : i32
    %cst_165 = arith.constant dense<0.000000e+00> : vector<1x64xf32>
    %600 = tpu.matmul %598, %575, %cst_165 {dimension_numbers = #tpu.dot_dimension_numbers<[1], [0], [0], [1], [0, 0, 1, 1], [], []>} : vector<1x16xf32>, vector<16x64xf32>, vector<1x64xf32> -> vector<1x64xf32>
    %601 = arith.index_cast %c0_i32_163 : i32 to index
    %c0_166 = arith.constant 0 : index
    %602 = vector.load %arg18[%601, %c0_166] : memref<12x64xf32, #tpu.memory_space<vmem>>, vector<1x64xf32>
    %603 = arith.addf %600, %602 : vector<1x64xf32>
    %cst_167 = arith.constant dense<0.000000e+00> : vector<1x64xf32>
    %604 = tpu.matmul %598, %581, %cst_167 {dimension_numbers = #tpu.dot_dimension_numbers<[1], [0], [0], [1], [0, 0, 1, 1], [], []>} : vector<1x16xf32>, vector<16x64xf32>, vector<1x64xf32> -> vector<1x64xf32>
    %605 = arith.index_cast %599 : i32 to index
    %c0_168 = arith.constant 0 : index
    %606 = vector.load %arg19[%605, %c0_168] : memref<12x64xf32, #tpu.memory_space<vmem>>, vector<1x64xf32>
    %607 = arith.addf %604, %606 : vector<1x64xf32>
    %608 = vector.extract_strided_slice %603 {offsets = [0, 0], sizes = [1, 48], strides = [1, 1]} : vector<1x64xf32> to vector<1x48xf32>
    %609 = arith.negf %608 : vector<1x48xf32>
    %610 = math.exp %609 : vector<1x48xf32>
    %cst_169 = arith.constant 1.000000e+00 : f32
    %611 = vector.broadcast %cst_169 : f32 to vector<1x48xf32>
    %612 = arith.addf %611, %610 : vector<1x48xf32>
    %613 = arith.divf %611, %612 : vector<1x48xf32>
    %614 = vector.extract_strided_slice %603 {offsets = [0, 48], sizes = [1, 16], strides = [1, 1]} : vector<1x64xf32> to vector<1x16xf32>
    %615 = math.tanh %614 : vector<1x16xf32>
    %616 = vector.extract_strided_slice %607 {offsets = [0, 0], sizes = [1, 48], strides = [1, 1]} : vector<1x64xf32> to vector<1x48xf32>
    %617 = arith.negf %616 : vector<1x48xf32>
    %618 = math.exp %617 : vector<1x48xf32>
    %cst_170 = arith.constant 1.000000e+00 : f32
    %619 = vector.broadcast %cst_170 : f32 to vector<1x48xf32>
    %620 = arith.addf %619, %618 : vector<1x48xf32>
    %621 = arith.divf %619, %620 : vector<1x48xf32>
    %622 = vector.extract_strided_slice %607 {offsets = [0, 48], sizes = [1, 16], strides = [1, 1]} : vector<1x64xf32> to vector<1x16xf32>
    %623 = math.tanh %622 : vector<1x16xf32>
    %624 = vector.extract_strided_slice %613 {offsets = [0, 16], sizes = [1, 16], strides = [1, 1]} : vector<1x48xf32> to vector<1x16xf32>
    %625 = arith.mulf %624, %598 : vector<1x16xf32>
    %626 = vector.extract_strided_slice %613 {offsets = [0, 0], sizes = [1, 16], strides = [1, 1]} : vector<1x48xf32> to vector<1x16xf32>
    %627 = arith.mulf %626, %615 : vector<1x16xf32>
    %628 = arith.addf %625, %627 : vector<1x16xf32>
    %629 = vector.extract_strided_slice %613 {offsets = [0, 32], sizes = [1, 16], strides = [1, 1]} : vector<1x48xf32> to vector<1x16xf32>
    %630 = math.tanh %628 : vector<1x16xf32>
    %631 = arith.mulf %629, %630 : vector<1x16xf32>
    %632 = vector.extract_strided_slice %621 {offsets = [0, 16], sizes = [1, 16], strides = [1, 1]} : vector<1x48xf32> to vector<1x16xf32>
    %633 = arith.mulf %632, %598 : vector<1x16xf32>
    %634 = vector.extract_strided_slice %621 {offsets = [0, 0], sizes = [1, 16], strides = [1, 1]} : vector<1x48xf32> to vector<1x16xf32>
    %635 = arith.mulf %634, %623 : vector<1x16xf32>
    %636 = arith.addf %633, %635 : vector<1x16xf32>
    %637 = vector.extract_strided_slice %621 {offsets = [0, 32], sizes = [1, 16], strides = [1, 1]} : vector<1x48xf32> to vector<1x16xf32>
    %638 = math.tanh %636 : vector<1x16xf32>
    %639 = arith.mulf %637, %638 : vector<1x16xf32>
    %640 = arith.index_cast %c0_i32_163 : i32 to index
    %c0_171 = arith.constant 0 : index
    %641 = vector.load %arg16[%640, %c0_171] : memref<12x16xf32, #tpu.memory_space<vmem>>, vector<1x16xf32>
    tpu.vector_store %arg16[%640, %c0_171], %631 {strides = array<i32>} : memref<12x16xf32, #tpu.memory_space<vmem>>, vector<1x16xf32>,
    %642 = arith.index_cast %599 : i32 to index
    %c0_172 = arith.constant 0 : index
    %643 = vector.load %arg17[%642, %c0_172] : memref<12x16xf32, #tpu.memory_space<vmem>>, vector<1x16xf32>
    tpu.vector_store %arg17[%642, %c0_172], %639 {strides = array<i32>} : memref<12x16xf32, #tpu.memory_space<vmem>>, vector<1x16xf32>,
    %c1_i32_173 = arith.constant 1 : i32
    %c11_i32_174 = arith.constant 11 : i32
    %644 = arith.subi %c11_i32_174, %c1_i32_173 : i32
    %cst_175 = arith.constant dense<0.000000e+00> : vector<1x64xf32>
    %645 = tpu.matmul %631, %575, %cst_175 {dimension_numbers = #tpu.dot_dimension_numbers<[1], [0], [0], [1], [0, 0, 1, 1], [], []>} : vector<1x16xf32>, vector<16x64xf32>, vector<1x64xf32> -> vector<1x64xf32>
    %646 = arith.index_cast %c1_i32_173 : i32 to index
    %c0_176 = arith.constant 0 : index
    %647 = vector.load %arg18[%646, %c0_176] : memref<12x64xf32, #tpu.memory_space<vmem>>, vector<1x64xf32>
    %648 = arith.addf %645, %647 : vector<1x64xf32>
    %cst_177 = arith.constant dense<0.000000e+00> : vector<1x64xf32>
    %649 = tpu.matmul %639, %581, %cst_177 {dimension_numbers = #tpu.dot_dimension_numbers<[1], [0], [0], [1], [0, 0, 1, 1], [], []>} : vector<1x16xf32>, vector<16x64xf32>, vector<1x64xf32> -> vector<1x64xf32>
    %650 = arith.index_cast %644 : i32 to index
    %c0_178 = arith.constant 0 : index
    %651 = vector.load %arg19[%650, %c0_178] : memref<12x64xf32, #tpu.memory_space<vmem>>, vector<1x64xf32>
    %652 = arith.addf %649, %651 : vector<1x64xf32>
    %653 = vector.extract_strided_slice %648 {offsets = [0, 0], sizes = [1, 48], strides = [1, 1]} : vector<1x64xf32> to vector<1x48xf32>
    %654 = arith.negf %653 : vector<1x48xf32>
    %655 = math.exp %654 : vector<1x48xf32>
    %cst_179 = arith.constant 1.000000e+00 : f32
    %656 = vector.broadcast %cst_179 : f32 to vector<1x48xf32>
    %657 = arith.addf %656, %655 : vector<1x48xf32>
    %658 = arith.divf %656, %657 : vector<1x48xf32>
    %659 = vector.extract_strided_slice %648 {offsets = [0, 48], sizes = [1, 16], strides = [1, 1]} : vector<1x64xf32> to vector<1x16xf32>
    %660 = math.tanh %659 : vector<1x16xf32>
    %661 = vector.extract_strided_slice %652 {offsets = [0, 0], sizes = [1, 48], strides = [1, 1]} : vector<1x64xf32> to vector<1x48xf32>
    %662 = arith.negf %661 : vector<1x48xf32>
    %663 = math.exp %662 : vector<1x48xf32>
    %cst_180 = arith.constant 1.000000e+00 : f32
    %664 = vector.broadcast %cst_180 : f32 to vector<1x48xf32>
    %665 = arith.addf %664, %663 : vector<1x48xf32>
    %666 = arith.divf %664, %665 : vector<1x48xf32>
    %667 = vector.extract_strided_slice %652 {offsets = [0, 48], sizes = [1, 16], strides = [1, 1]} : vector<1x64xf32> to vector<1x16xf32>
    %668 = math.tanh %667 : vector<1x16xf32>
    %669 = vector.extract_strided_slice %658 {offsets = [0, 16], sizes = [1, 16], strides = [1, 1]} : vector<1x48xf32> to vector<1x16xf32>
    %670 = arith.mulf %669, %628 : vector<1x16xf32>
    %671 = vector.extract_strided_slice %658 {offsets = [0, 0], sizes = [1, 16], strides = [1, 1]} : vector<1x48xf32> to vector<1x16xf32>
    %672 = arith.mulf %671, %660 : vector<1x16xf32>
    %673 = arith.addf %670, %672 : vector<1x16xf32>
    %674 = vector.extract_strided_slice %658 {offsets = [0, 32], sizes = [1, 16], strides = [1, 1]} : vector<1x48xf32> to vector<1x16xf32>
    %675 = math.tanh %673 : vector<1x16xf32>
    %676 = arith.mulf %674, %675 : vector<1x16xf32>
    %677 = vector.extract_strided_slice %666 {offsets = [0, 16], sizes = [1, 16], strides = [1, 1]} : vector<1x48xf32> to vector<1x16xf32>
    %678 = arith.mulf %677, %636 : vector<1x16xf32>
    %679 = vector.extract_strided_slice %666 {offsets = [0, 0], sizes = [1, 16], strides = [1, 1]} : vector<1x48xf32> to vector<1x16xf32>
    %680 = arith.mulf %679, %668 : vector<1x16xf32>
    %681 = arith.addf %678, %680 : vector<1x16xf32>
    %682 = vector.extract_strided_slice %666 {offsets = [0, 32], sizes = [1, 16], strides = [1, 1]} : vector<1x48xf32> to vector<1x16xf32>
    %683 = math.tanh %681 : vector<1x16xf32>
    %684 = arith.mulf %682, %683 : vector<1x16xf32>
    %685 = arith.index_cast %c1_i32_173 : i32 to index
    %c0_181 = arith.constant 0 : index
    %686 = vector.load %arg16[%685, %c0_181] : memref<12x16xf32, #tpu.memory_space<vmem>>, vector<1x16xf32>
    tpu.vector_store %arg16[%685, %c0_181], %676 {strides = array<i32>} : memref<12x16xf32, #tpu.memory_space<vmem>>, vector<1x16xf32>,
    %687 = arith.index_cast %644 : i32 to index
    %c0_182 = arith.constant 0 : index
    %688 = vector.load %arg17[%687, %c0_182] : memref<12x16xf32, #tpu.memory_space<vmem>>, vector<1x16xf32>
    tpu.vector_store %arg17[%687, %c0_182], %684 {strides = array<i32>} : memref<12x16xf32, #tpu.memory_space<vmem>>, vector<1x16xf32>,
    %c2_i32_183 = arith.constant 2 : i32
    %c11_i32_184 = arith.constant 11 : i32
    %689 = arith.subi %c11_i32_184, %c2_i32_183 : i32
    %cst_185 = arith.constant dense<0.000000e+00> : vector<1x64xf32>
    %690 = tpu.matmul %676, %575, %cst_185 {dimension_numbers = #tpu.dot_dimension_numbers<[1], [0], [0], [1], [0, 0, 1, 1], [], []>} : vector<1x16xf32>, vector<16x64xf32>, vector<1x64xf32> -> vector<1x64xf32>
    %691 = arith.index_cast %c2_i32_183 : i32 to index
    %c0_186 = arith.constant 0 : index
    %692 = vector.load %arg18[%691, %c0_186] : memref<12x64xf32, #tpu.memory_space<vmem>>, vector<1x64xf32>
    %693 = arith.addf %690, %692 : vector<1x64xf32>
    %cst_187 = arith.constant dense<0.000000e+00> : vector<1x64xf32>
    %694 = tpu.matmul %684, %581, %cst_187 {dimension_numbers = #tpu.dot_dimension_numbers<[1], [0], [0], [1], [0, 0, 1, 1], [], []>} : vector<1x16xf32>, vector<16x64xf32>, vector<1x64xf32> -> vector<1x64xf32>
    %695 = arith.index_cast %689 : i32 to index
    %c0_188 = arith.constant 0 : index
    %696 = vector.load %arg19[%695, %c0_188] : memref<12x64xf32, #tpu.memory_space<vmem>>, vector<1x64xf32>
    %697 = arith.addf %694, %696 : vector<1x64xf32>
    %698 = vector.extract_strided_slice %693 {offsets = [0, 0], sizes = [1, 48], strides = [1, 1]} : vector<1x64xf32> to vector<1x48xf32>
    %699 = arith.negf %698 : vector<1x48xf32>
    %700 = math.exp %699 : vector<1x48xf32>
    %cst_189 = arith.constant 1.000000e+00 : f32
    %701 = vector.broadcast %cst_189 : f32 to vector<1x48xf32>
    %702 = arith.addf %701, %700 : vector<1x48xf32>
    %703 = arith.divf %701, %702 : vector<1x48xf32>
    %704 = vector.extract_strided_slice %693 {offsets = [0, 48], sizes = [1, 16], strides = [1, 1]} : vector<1x64xf32> to vector<1x16xf32>
    %705 = math.tanh %704 : vector<1x16xf32>
    %706 = vector.extract_strided_slice %697 {offsets = [0, 0], sizes = [1, 48], strides = [1, 1]} : vector<1x64xf32> to vector<1x48xf32>
    %707 = arith.negf %706 : vector<1x48xf32>
    %708 = math.exp %707 : vector<1x48xf32>
    %cst_190 = arith.constant 1.000000e+00 : f32
    %709 = vector.broadcast %cst_190 : f32 to vector<1x48xf32>
    %710 = arith.addf %709, %708 : vector<1x48xf32>
    %711 = arith.divf %709, %710 : vector<1x48xf32>
    %712 = vector.extract_strided_slice %697 {offsets = [0, 48], sizes = [1, 16], strides = [1, 1]} : vector<1x64xf32> to vector<1x16xf32>
    %713 = math.tanh %712 : vector<1x16xf32>
    %714 = vector.extract_strided_slice %703 {offsets = [0, 16], sizes = [1, 16], strides = [1, 1]} : vector<1x48xf32> to vector<1x16xf32>
    %715 = arith.mulf %714, %673 : vector<1x16xf32>
    %716 = vector.extract_strided_slice %703 {offsets = [0, 0], sizes = [1, 16], strides = [1, 1]} : vector<1x48xf32> to vector<1x16xf32>
    %717 = arith.mulf %716, %705 : vector<1x16xf32>
    %718 = arith.addf %715, %717 : vector<1x16xf32>
    %719 = vector.extract_strided_slice %703 {offsets = [0, 32], sizes = [1, 16], strides = [1, 1]} : vector<1x48xf32> to vector<1x16xf32>
    %720 = math.tanh %718 : vector<1x16xf32>
    %721 = arith.mulf %719, %720 : vector<1x16xf32>
    %722 = vector.extract_strided_slice %711 {offsets = [0, 16], sizes = [1, 16], strides = [1, 1]} : vector<1x48xf32> to vector<1x16xf32>
    %723 = arith.mulf %722, %681 : vector<1x16xf32>
    %724 = vector.extract_strided_slice %711 {offsets = [0, 0], sizes = [1, 16], strides = [1, 1]} : vector<1x48xf32> to vector<1x16xf32>
    %725 = arith.mulf %724, %713 : vector<1x16xf32>
    %726 = arith.addf %723, %725 : vector<1x16xf32>
    %727 = vector.extract_strided_slice %711 {offsets = [0, 32], sizes = [1, 16], strides = [1, 1]} : vector<1x48xf32> to vector<1x16xf32>
    %728 = math.tanh %726 : vector<1x16xf32>
    %729 = arith.mulf %727, %728 : vector<1x16xf32>
    %730 = arith.index_cast %c2_i32_183 : i32 to index
    %c0_191 = arith.constant 0 : index
    %731 = vector.load %arg16[%730, %c0_191] : memref<12x16xf32, #tpu.memory_space<vmem>>, vector<1x16xf32>
    tpu.vector_store %arg16[%730, %c0_191], %721 {strides = array<i32>} : memref<12x16xf32, #tpu.memory_space<vmem>>, vector<1x16xf32>,
    %732 = arith.index_cast %689 : i32 to index
    %c0_192 = arith.constant 0 : index
    %733 = vector.load %arg17[%732, %c0_192] : memref<12x16xf32, #tpu.memory_space<vmem>>, vector<1x16xf32>
    tpu.vector_store %arg17[%732, %c0_192], %729 {strides = array<i32>} : memref<12x16xf32, #tpu.memory_space<vmem>>, vector<1x16xf32>,
    %c3_i32_193 = arith.constant 3 : i32
    %c11_i32_194 = arith.constant 11 : i32
    %734 = arith.subi %c11_i32_194, %c3_i32_193 : i32
    %cst_195 = arith.constant dense<0.000000e+00> : vector<1x64xf32>
    %735 = tpu.matmul %721, %575, %cst_195 {dimension_numbers = #tpu.dot_dimension_numbers<[1], [0], [0], [1], [0, 0, 1, 1], [], []>} : vector<1x16xf32>, vector<16x64xf32>, vector<1x64xf32> -> vector<1x64xf32>
    %736 = arith.index_cast %c3_i32_193 : i32 to index
    %c0_196 = arith.constant 0 : index
    %737 = vector.load %arg18[%736, %c0_196] : memref<12x64xf32, #tpu.memory_space<vmem>>, vector<1x64xf32>
    %738 = arith.addf %735, %737 : vector<1x64xf32>
    %cst_197 = arith.constant dense<0.000000e+00> : vector<1x64xf32>
    %739 = tpu.matmul %729, %581, %cst_197 {dimension_numbers = #tpu.dot_dimension_numbers<[1], [0], [0], [1], [0, 0, 1, 1], [], []>} : vector<1x16xf32>, vector<16x64xf32>, vector<1x64xf32> -> vector<1x64xf32>
    %740 = arith.index_cast %734 : i32 to index
    %c0_198 = arith.constant 0 : index
    %741 = vector.load %arg19[%740, %c0_198] : memref<12x64xf32, #tpu.memory_space<vmem>>, vector<1x64xf32>
    %742 = arith.addf %739, %741 : vector<1x64xf32>
    %743 = vector.extract_strided_slice %738 {offsets = [0, 0], sizes = [1, 48], strides = [1, 1]} : vector<1x64xf32> to vector<1x48xf32>
    %744 = arith.negf %743 : vector<1x48xf32>
    %745 = math.exp %744 : vector<1x48xf32>
    %cst_199 = arith.constant 1.000000e+00 : f32
    %746 = vector.broadcast %cst_199 : f32 to vector<1x48xf32>
    %747 = arith.addf %746, %745 : vector<1x48xf32>
    %748 = arith.divf %746, %747 : vector<1x48xf32>
    %749 = vector.extract_strided_slice %738 {offsets = [0, 48], sizes = [1, 16], strides = [1, 1]} : vector<1x64xf32> to vector<1x16xf32>
    %750 = math.tanh %749 : vector<1x16xf32>
    %751 = vector.extract_strided_slice %742 {offsets = [0, 0], sizes = [1, 48], strides = [1, 1]} : vector<1x64xf32> to vector<1x48xf32>
    %752 = arith.negf %751 : vector<1x48xf32>
    %753 = math.exp %752 : vector<1x48xf32>
    %cst_200 = arith.constant 1.000000e+00 : f32
    %754 = vector.broadcast %cst_200 : f32 to vector<1x48xf32>
    %755 = arith.addf %754, %753 : vector<1x48xf32>
    %756 = arith.divf %754, %755 : vector<1x48xf32>
    %757 = vector.extract_strided_slice %742 {offsets = [0, 48], sizes = [1, 16], strides = [1, 1]} : vector<1x64xf32> to vector<1x16xf32>
    %758 = math.tanh %757 : vector<1x16xf32>
    %759 = vector.extract_strided_slice %748 {offsets = [0, 16], sizes = [1, 16], strides = [1, 1]} : vector<1x48xf32> to vector<1x16xf32>
    %760 = arith.mulf %759, %718 : vector<1x16xf32>
    %761 = vector.extract_strided_slice %748 {offsets = [0, 0], sizes = [1, 16], strides = [1, 1]} : vector<1x48xf32> to vector<1x16xf32>
    %762 = arith.mulf %761, %750 : vector<1x16xf32>
    %763 = arith.addf %760, %762 : vector<1x16xf32>
    %764 = vector.extract_strided_slice %748 {offsets = [0, 32], sizes = [1, 16], strides = [1, 1]} : vector<1x48xf32> to vector<1x16xf32>
    %765 = math.tanh %763 : vector<1x16xf32>
    %766 = arith.mulf %764, %765 : vector<1x16xf32>
    %767 = vector.extract_strided_slice %756 {offsets = [0, 16], sizes = [1, 16], strides = [1, 1]} : vector<1x48xf32> to vector<1x16xf32>
    %768 = arith.mulf %767, %726 : vector<1x16xf32>
    %769 = vector.extract_strided_slice %756 {offsets = [0, 0], sizes = [1, 16], strides = [1, 1]} : vector<1x48xf32> to vector<1x16xf32>
    %770 = arith.mulf %769, %758 : vector<1x16xf32>
    %771 = arith.addf %768, %770 : vector<1x16xf32>
    %772 = vector.extract_strided_slice %756 {offsets = [0, 32], sizes = [1, 16], strides = [1, 1]} : vector<1x48xf32> to vector<1x16xf32>
    %773 = math.tanh %771 : vector<1x16xf32>
    %774 = arith.mulf %772, %773 : vector<1x16xf32>
    %775 = arith.index_cast %c3_i32_193 : i32 to index
    %c0_201 = arith.constant 0 : index
    %776 = vector.load %arg16[%775, %c0_201] : memref<12x16xf32, #tpu.memory_space<vmem>>, vector<1x16xf32>
    tpu.vector_store %arg16[%775, %c0_201], %766 {strides = array<i32>} : memref<12x16xf32, #tpu.memory_space<vmem>>, vector<1x16xf32>,
    %777 = arith.index_cast %734 : i32 to index
    %c0_202 = arith.constant 0 : index
    %778 = vector.load %arg17[%777, %c0_202] : memref<12x16xf32, #tpu.memory_space<vmem>>, vector<1x16xf32>
    tpu.vector_store %arg17[%777, %c0_202], %774 {strides = array<i32>} : memref<12x16xf32, #tpu.memory_space<vmem>>, vector<1x16xf32>,
    %c4_i32_203 = arith.constant 4 : i32
    %c11_i32_204 = arith.constant 11 : i32
    %779 = arith.subi %c11_i32_204, %c4_i32_203 : i32
    %cst_205 = arith.constant dense<0.000000e+00> : vector<1x64xf32>
    %780 = tpu.matmul %766, %575, %cst_205 {dimension_numbers = #tpu.dot_dimension_numbers<[1], [0], [0], [1], [0, 0, 1, 1], [], []>} : vector<1x16xf32>, vector<16x64xf32>, vector<1x64xf32> -> vector<1x64xf32>
    %781 = arith.index_cast %c4_i32_203 : i32 to index
    %c0_206 = arith.constant 0 : index
    %782 = vector.load %arg18[%781, %c0_206] : memref<12x64xf32, #tpu.memory_space<vmem>>, vector<1x64xf32>
    %783 = arith.addf %780, %782 : vector<1x64xf32>
    %cst_207 = arith.constant dense<0.000000e+00> : vector<1x64xf32>
    %784 = tpu.matmul %774, %581, %cst_207 {dimension_numbers = #tpu.dot_dimension_numbers<[1], [0], [0], [1], [0, 0, 1, 1], [], []>} : vector<1x16xf32>, vector<16x64xf32>, vector<1x64xf32> -> vector<1x64xf32>
    %785 = arith.index_cast %779 : i32 to index
    %c0_208 = arith.constant 0 : index
    %786 = vector.load %arg19[%785, %c0_208] : memref<12x64xf32, #tpu.memory_space<vmem>>, vector<1x64xf32>
    %787 = arith.addf %784, %786 : vector<1x64xf32>
    %788 = vector.extract_strided_slice %783 {offsets = [0, 0], sizes = [1, 48], strides = [1, 1]} : vector<1x64xf32> to vector<1x48xf32>
    %789 = arith.negf %788 : vector<1x48xf32>
    %790 = math.exp %789 : vector<1x48xf32>
    %cst_209 = arith.constant 1.000000e+00 : f32
    %791 = vector.broadcast %cst_209 : f32 to vector<1x48xf32>
    %792 = arith.addf %791, %790 : vector<1x48xf32>
    %793 = arith.divf %791, %792 : vector<1x48xf32>
    %794 = vector.extract_strided_slice %783 {offsets = [0, 48], sizes = [1, 16], strides = [1, 1]} : vector<1x64xf32> to vector<1x16xf32>
    %795 = math.tanh %794 : vector<1x16xf32>
    %796 = vector.extract_strided_slice %787 {offsets = [0, 0], sizes = [1, 48], strides = [1, 1]} : vector<1x64xf32> to vector<1x48xf32>
    %797 = arith.negf %796 : vector<1x48xf32>
    %798 = math.exp %797 : vector<1x48xf32>
    %cst_210 = arith.constant 1.000000e+00 : f32
    %799 = vector.broadcast %cst_210 : f32 to vector<1x48xf32>
    %800 = arith.addf %799, %798 : vector<1x48xf32>
    %801 = arith.divf %799, %800 : vector<1x48xf32>
    %802 = vector.extract_strided_slice %787 {offsets = [0, 48], sizes = [1, 16], strides = [1, 1]} : vector<1x64xf32> to vector<1x16xf32>
    %803 = math.tanh %802 : vector<1x16xf32>
    %804 = vector.extract_strided_slice %793 {offsets = [0, 16], sizes = [1, 16], strides = [1, 1]} : vector<1x48xf32> to vector<1x16xf32>
    %805 = arith.mulf %804, %763 : vector<1x16xf32>
    %806 = vector.extract_strided_slice %793 {offsets = [0, 0], sizes = [1, 16], strides = [1, 1]} : vector<1x48xf32> to vector<1x16xf32>
    %807 = arith.mulf %806, %795 : vector<1x16xf32>
    %808 = arith.addf %805, %807 : vector<1x16xf32>
    %809 = vector.extract_strided_slice %793 {offsets = [0, 32], sizes = [1, 16], strides = [1, 1]} : vector<1x48xf32> to vector<1x16xf32>
    %810 = math.tanh %808 : vector<1x16xf32>
    %811 = arith.mulf %809, %810 : vector<1x16xf32>
    %812 = vector.extract_strided_slice %801 {offsets = [0, 16], sizes = [1, 16], strides = [1, 1]} : vector<1x48xf32> to vector<1x16xf32>
    %813 = arith.mulf %812, %771 : vector<1x16xf32>
    %814 = vector.extract_strided_slice %801 {offsets = [0, 0], sizes = [1, 16], strides = [1, 1]} : vector<1x48xf32> to vector<1x16xf32>
    %815 = arith.mulf %814, %803 : vector<1x16xf32>
    %816 = arith.addf %813, %815 : vector<1x16xf32>
    %817 = vector.extract_strided_slice %801 {offsets = [0, 32], sizes = [1, 16], strides = [1, 1]} : vector<1x48xf32> to vector<1x16xf32>
    %818 = math.tanh %816 : vector<1x16xf32>
    %819 = arith.mulf %817, %818 : vector<1x16xf32>
    %820 = arith.index_cast %c4_i32_203 : i32 to index
    %c0_211 = arith.constant 0 : index
    %821 = vector.load %arg16[%820, %c0_211] : memref<12x16xf32, #tpu.memory_space<vmem>>, vector<1x16xf32>
    tpu.vector_store %arg16[%820, %c0_211], %811 {strides = array<i32>} : memref<12x16xf32, #tpu.memory_space<vmem>>, vector<1x16xf32>,
    %822 = arith.index_cast %779 : i32 to index
    %c0_212 = arith.constant 0 : index
    %823 = vector.load %arg17[%822, %c0_212] : memref<12x16xf32, #tpu.memory_space<vmem>>, vector<1x16xf32>
    tpu.vector_store %arg17[%822, %c0_212], %819 {strides = array<i32>} : memref<12x16xf32, #tpu.memory_space<vmem>>, vector<1x16xf32>,
    %c5_i32_213 = arith.constant 5 : i32
    %c11_i32_214 = arith.constant 11 : i32
    %824 = arith.subi %c11_i32_214, %c5_i32_213 : i32
    %cst_215 = arith.constant dense<0.000000e+00> : vector<1x64xf32>
    %825 = tpu.matmul %811, %575, %cst_215 {dimension_numbers = #tpu.dot_dimension_numbers<[1], [0], [0], [1], [0, 0, 1, 1], [], []>} : vector<1x16xf32>, vector<16x64xf32>, vector<1x64xf32> -> vector<1x64xf32>
    %826 = arith.index_cast %c5_i32_213 : i32 to index
    %c0_216 = arith.constant 0 : index
    %827 = vector.load %arg18[%826, %c0_216] : memref<12x64xf32, #tpu.memory_space<vmem>>, vector<1x64xf32>
    %828 = arith.addf %825, %827 : vector<1x64xf32>
    %cst_217 = arith.constant dense<0.000000e+00> : vector<1x64xf32>
    %829 = tpu.matmul %819, %581, %cst_217 {dimension_numbers = #tpu.dot_dimension_numbers<[1], [0], [0], [1], [0, 0, 1, 1], [], []>} : vector<1x16xf32>, vector<16x64xf32>, vector<1x64xf32> -> vector<1x64xf32>
    %830 = arith.index_cast %824 : i32 to index
    %c0_218 = arith.constant 0 : index
    %831 = vector.load %arg19[%830, %c0_218] : memref<12x64xf32, #tpu.memory_space<vmem>>, vector<1x64xf32>
    %832 = arith.addf %829, %831 : vector<1x64xf32>
    %833 = vector.extract_strided_slice %828 {offsets = [0, 0], sizes = [1, 48], strides = [1, 1]} : vector<1x64xf32> to vector<1x48xf32>
    %834 = arith.negf %833 : vector<1x48xf32>
    %835 = math.exp %834 : vector<1x48xf32>
    %cst_219 = arith.constant 1.000000e+00 : f32
    %836 = vector.broadcast %cst_219 : f32 to vector<1x48xf32>
    %837 = arith.addf %836, %835 : vector<1x48xf32>
    %838 = arith.divf %836, %837 : vector<1x48xf32>
    %839 = vector.extract_strided_slice %828 {offsets = [0, 48], sizes = [1, 16], strides = [1, 1]} : vector<1x64xf32> to vector<1x16xf32>
    %840 = math.tanh %839 : vector<1x16xf32>
    %841 = vector.extract_strided_slice %832 {offsets = [0, 0], sizes = [1, 48], strides = [1, 1]} : vector<1x64xf32> to vector<1x48xf32>
    %842 = arith.negf %841 : vector<1x48xf32>
    %843 = math.exp %842 : vector<1x48xf32>
    %cst_220 = arith.constant 1.000000e+00 : f32
    %844 = vector.broadcast %cst_220 : f32 to vector<1x48xf32>
    %845 = arith.addf %844, %843 : vector<1x48xf32>
    %846 = arith.divf %844, %845 : vector<1x48xf32>
    %847 = vector.extract_strided_slice %832 {offsets = [0, 48], sizes = [1, 16], strides = [1, 1]} : vector<1x64xf32> to vector<1x16xf32>
    %848 = math.tanh %847 : vector<1x16xf32>
    %849 = vector.extract_strided_slice %838 {offsets = [0, 16], sizes = [1, 16], strides = [1, 1]} : vector<1x48xf32> to vector<1x16xf32>
    %850 = arith.mulf %849, %808 : vector<1x16xf32>
    %851 = vector.extract_strided_slice %838 {offsets = [0, 0], sizes = [1, 16], strides = [1, 1]} : vector<1x48xf32> to vector<1x16xf32>
    %852 = arith.mulf %851, %840 : vector<1x16xf32>
    %853 = arith.addf %850, %852 : vector<1x16xf32>
    %854 = vector.extract_strided_slice %838 {offsets = [0, 32], sizes = [1, 16], strides = [1, 1]} : vector<1x48xf32> to vector<1x16xf32>
    %855 = math.tanh %853 : vector<1x16xf32>
    %856 = arith.mulf %854, %855 : vector<1x16xf32>
    %857 = vector.extract_strided_slice %846 {offsets = [0, 16], sizes = [1, 16], strides = [1, 1]} : vector<1x48xf32> to vector<1x16xf32>
    %858 = arith.mulf %857, %816 : vector<1x16xf32>
    %859 = vector.extract_strided_slice %846 {offsets = [0, 0], sizes = [1, 16], strides = [1, 1]} : vector<1x48xf32> to vector<1x16xf32>
    %860 = arith.mulf %859, %848 : vector<1x16xf32>
    %861 = arith.addf %858, %860 : vector<1x16xf32>
    %862 = vector.extract_strided_slice %846 {offsets = [0, 32], sizes = [1, 16], strides = [1, 1]} : vector<1x48xf32> to vector<1x16xf32>
    %863 = math.tanh %861 : vector<1x16xf32>
    %864 = arith.mulf %862, %863 : vector<1x16xf32>
    %865 = arith.index_cast %c5_i32_213 : i32 to index
    %c0_221 = arith.constant 0 : index
    %866 = vector.load %arg16[%865, %c0_221] : memref<12x16xf32, #tpu.memory_space<vmem>>, vector<1x16xf32>
    tpu.vector_store %arg16[%865, %c0_221], %856 {strides = array<i32>} : memref<12x16xf32, #tpu.memory_space<vmem>>, vector<1x16xf32>,
    %867 = arith.index_cast %824 : i32 to index
    %c0_222 = arith.constant 0 : index
    %868 = vector.load %arg17[%867, %c0_222] : memref<12x16xf32, #tpu.memory_space<vmem>>, vector<1x16xf32>
    tpu.vector_store %arg17[%867, %c0_222], %864 {strides = array<i32>} : memref<12x16xf32, #tpu.memory_space<vmem>>, vector<1x16xf32>,
    %c6_i32_223 = arith.constant 6 : i32
    %c11_i32_224 = arith.constant 11 : i32
    %869 = arith.subi %c11_i32_224, %c6_i32_223 : i32
    %cst_225 = arith.constant dense<0.000000e+00> : vector<1x64xf32>
    %870 = tpu.matmul %856, %575, %cst_225 {dimension_numbers = #tpu.dot_dimension_numbers<[1], [0], [0], [1], [0, 0, 1, 1], [], []>} : vector<1x16xf32>, vector<16x64xf32>, vector<1x64xf32> -> vector<1x64xf32>
    %871 = arith.index_cast %c6_i32_223 : i32 to index
    %c0_226 = arith.constant 0 : index
    %872 = vector.load %arg18[%871, %c0_226] : memref<12x64xf32, #tpu.memory_space<vmem>>, vector<1x64xf32>
    %873 = arith.addf %870, %872 : vector<1x64xf32>
    %cst_227 = arith.constant dense<0.000000e+00> : vector<1x64xf32>
    %874 = tpu.matmul %864, %581, %cst_227 {dimension_numbers = #tpu.dot_dimension_numbers<[1], [0], [0], [1], [0, 0, 1, 1], [], []>} : vector<1x16xf32>, vector<16x64xf32>, vector<1x64xf32> -> vector<1x64xf32>
    %875 = arith.index_cast %869 : i32 to index
    %c0_228 = arith.constant 0 : index
    %876 = vector.load %arg19[%875, %c0_228] : memref<12x64xf32, #tpu.memory_space<vmem>>, vector<1x64xf32>
    %877 = arith.addf %874, %876 : vector<1x64xf32>
    %878 = vector.extract_strided_slice %873 {offsets = [0, 0], sizes = [1, 48], strides = [1, 1]} : vector<1x64xf32> to vector<1x48xf32>
    %879 = arith.negf %878 : vector<1x48xf32>
    %880 = math.exp %879 : vector<1x48xf32>
    %cst_229 = arith.constant 1.000000e+00 : f32
    %881 = vector.broadcast %cst_229 : f32 to vector<1x48xf32>
    %882 = arith.addf %881, %880 : vector<1x48xf32>
    %883 = arith.divf %881, %882 : vector<1x48xf32>
    %884 = vector.extract_strided_slice %873 {offsets = [0, 48], sizes = [1, 16], strides = [1, 1]} : vector<1x64xf32> to vector<1x16xf32>
    %885 = math.tanh %884 : vector<1x16xf32>
    %886 = vector.extract_strided_slice %877 {offsets = [0, 0], sizes = [1, 48], strides = [1, 1]} : vector<1x64xf32> to vector<1x48xf32>
    %887 = arith.negf %886 : vector<1x48xf32>
    %888 = math.exp %887 : vector<1x48xf32>
    %cst_230 = arith.constant 1.000000e+00 : f32
    %889 = vector.broadcast %cst_230 : f32 to vector<1x48xf32>
    %890 = arith.addf %889, %888 : vector<1x48xf32>
    %891 = arith.divf %889, %890 : vector<1x48xf32>
    %892 = vector.extract_strided_slice %877 {offsets = [0, 48], sizes = [1, 16], strides = [1, 1]} : vector<1x64xf32> to vector<1x16xf32>
    %893 = math.tanh %892 : vector<1x16xf32>
    %894 = vector.extract_strided_slice %883 {offsets = [0, 16], sizes = [1, 16], strides = [1, 1]} : vector<1x48xf32> to vector<1x16xf32>
    %895 = arith.mulf %894, %853 : vector<1x16xf32>
    %896 = vector.extract_strided_slice %883 {offsets = [0, 0], sizes = [1, 16], strides = [1, 1]} : vector<1x48xf32> to vector<1x16xf32>
    %897 = arith.mulf %896, %885 : vector<1x16xf32>
    %898 = arith.addf %895, %897 : vector<1x16xf32>
    %899 = vector.extract_strided_slice %883 {offsets = [0, 32], sizes = [1, 16], strides = [1, 1]} : vector<1x48xf32> to vector<1x16xf32>
    %900 = math.tanh %898 : vector<1x16xf32>
    %901 = arith.mulf %899, %900 : vector<1x16xf32>
    %902 = vector.extract_strided_slice %891 {offsets = [0, 16], sizes = [1, 16], strides = [1, 1]} : vector<1x48xf32> to vector<1x16xf32>
    %903 = arith.mulf %902, %861 : vector<1x16xf32>
    %904 = vector.extract_strided_slice %891 {offsets = [0, 0], sizes = [1, 16], strides = [1, 1]} : vector<1x48xf32> to vector<1x16xf32>
    %905 = arith.mulf %904, %893 : vector<1x16xf32>
    %906 = arith.addf %903, %905 : vector<1x16xf32>
    %907 = vector.extract_strided_slice %891 {offsets = [0, 32], sizes = [1, 16], strides = [1, 1]} : vector<1x48xf32> to vector<1x16xf32>
    %908 = math.tanh %906 : vector<1x16xf32>
    %909 = arith.mulf %907, %908 : vector<1x16xf32>
    %910 = arith.index_cast %c6_i32_223 : i32 to index
    %c0_231 = arith.constant 0 : index
    %911 = vector.load %arg16[%910, %c0_231] : memref<12x16xf32, #tpu.memory_space<vmem>>, vector<1x16xf32>
    tpu.vector_store %arg16[%910, %c0_231], %901 {strides = array<i32>} : memref<12x16xf32, #tpu.memory_space<vmem>>, vector<1x16xf32>,
    %912 = arith.index_cast %869 : i32 to index
    %c0_232 = arith.constant 0 : index
    %913 = vector.load %arg17[%912, %c0_232] : memref<12x16xf32, #tpu.memory_space<vmem>>, vector<1x16xf32>
    tpu.vector_store %arg17[%912, %c0_232], %909 {strides = array<i32>} : memref<12x16xf32, #tpu.memory_space<vmem>>, vector<1x16xf32>,
    %c7_i32_233 = arith.constant 7 : i32
    %c11_i32_234 = arith.constant 11 : i32
    %914 = arith.subi %c11_i32_234, %c7_i32_233 : i32
    %cst_235 = arith.constant dense<0.000000e+00> : vector<1x64xf32>
    %915 = tpu.matmul %901, %575, %cst_235 {dimension_numbers = #tpu.dot_dimension_numbers<[1], [0], [0], [1], [0, 0, 1, 1], [], []>} : vector<1x16xf32>, vector<16x64xf32>, vector<1x64xf32> -> vector<1x64xf32>
    %916 = arith.index_cast %c7_i32_233 : i32 to index
    %c0_236 = arith.constant 0 : index
    %917 = vector.load %arg18[%916, %c0_236] : memref<12x64xf32, #tpu.memory_space<vmem>>, vector<1x64xf32>
    %918 = arith.addf %915, %917 : vector<1x64xf32>
    %cst_237 = arith.constant dense<0.000000e+00> : vector<1x64xf32>
    %919 = tpu.matmul %909, %581, %cst_237 {dimension_numbers = #tpu.dot_dimension_numbers<[1], [0], [0], [1], [0, 0, 1, 1], [], []>} : vector<1x16xf32>, vector<16x64xf32>, vector<1x64xf32> -> vector<1x64xf32>
    %920 = arith.index_cast %914 : i32 to index
    %c0_238 = arith.constant 0 : index
    %921 = vector.load %arg19[%920, %c0_238] : memref<12x64xf32, #tpu.memory_space<vmem>>, vector<1x64xf32>
    %922 = arith.addf %919, %921 : vector<1x64xf32>
    %923 = vector.extract_strided_slice %918 {offsets = [0, 0], sizes = [1, 48], strides = [1, 1]} : vector<1x64xf32> to vector<1x48xf32>
    %924 = arith.negf %923 : vector<1x48xf32>
    %925 = math.exp %924 : vector<1x48xf32>
    %cst_239 = arith.constant 1.000000e+00 : f32
    %926 = vector.broadcast %cst_239 : f32 to vector<1x48xf32>
    %927 = arith.addf %926, %925 : vector<1x48xf32>
    %928 = arith.divf %926, %927 : vector<1x48xf32>
    %929 = vector.extract_strided_slice %918 {offsets = [0, 48], sizes = [1, 16], strides = [1, 1]} : vector<1x64xf32> to vector<1x16xf32>
    %930 = math.tanh %929 : vector<1x16xf32>
    %931 = vector.extract_strided_slice %922 {offsets = [0, 0], sizes = [1, 48], strides = [1, 1]} : vector<1x64xf32> to vector<1x48xf32>
    %932 = arith.negf %931 : vector<1x48xf32>
    %933 = math.exp %932 : vector<1x48xf32>
    %cst_240 = arith.constant 1.000000e+00 : f32
    %934 = vector.broadcast %cst_240 : f32 to vector<1x48xf32>
    %935 = arith.addf %934, %933 : vector<1x48xf32>
    %936 = arith.divf %934, %935 : vector<1x48xf32>
    %937 = vector.extract_strided_slice %922 {offsets = [0, 48], sizes = [1, 16], strides = [1, 1]} : vector<1x64xf32> to vector<1x16xf32>
    %938 = math.tanh %937 : vector<1x16xf32>
    %939 = vector.extract_strided_slice %928 {offsets = [0, 16], sizes = [1, 16], strides = [1, 1]} : vector<1x48xf32> to vector<1x16xf32>
    %940 = arith.mulf %939, %898 : vector<1x16xf32>
    %941 = vector.extract_strided_slice %928 {offsets = [0, 0], sizes = [1, 16], strides = [1, 1]} : vector<1x48xf32> to vector<1x16xf32>
    %942 = arith.mulf %941, %930 : vector<1x16xf32>
    %943 = arith.addf %940, %942 : vector<1x16xf32>
    %944 = vector.extract_strided_slice %928 {offsets = [0, 32], sizes = [1, 16], strides = [1, 1]} : vector<1x48xf32> to vector<1x16xf32>
    %945 = math.tanh %943 : vector<1x16xf32>
    %946 = arith.mulf %944, %945 : vector<1x16xf32>
    %947 = vector.extract_strided_slice %936 {offsets = [0, 16], sizes = [1, 16], strides = [1, 1]} : vector<1x48xf32> to vector<1x16xf32>
    %948 = arith.mulf %947, %906 : vector<1x16xf32>
    %949 = vector.extract_strided_slice %936 {offsets = [0, 0], sizes = [1, 16], strides = [1, 1]} : vector<1x48xf32> to vector<1x16xf32>
    %950 = arith.mulf %949, %938 : vector<1x16xf32>
    %951 = arith.addf %948, %950 : vector<1x16xf32>
    %952 = vector.extract_strided_slice %936 {offsets = [0, 32], sizes = [1, 16], strides = [1, 1]} : vector<1x48xf32> to vector<1x16xf32>
    %953 = math.tanh %951 : vector<1x16xf32>
    %954 = arith.mulf %952, %953 : vector<1x16xf32>
    %955 = arith.index_cast %c7_i32_233 : i32 to index
    %c0_241 = arith.constant 0 : index
    %956 = vector.load %arg16[%955, %c0_241] : memref<12x16xf32, #tpu.memory_space<vmem>>, vector<1x16xf32>
    tpu.vector_store %arg16[%955, %c0_241], %946 {strides = array<i32>} : memref<12x16xf32, #tpu.memory_space<vmem>>, vector<1x16xf32>,
    %957 = arith.index_cast %914 : i32 to index
    %c0_242 = arith.constant 0 : index
    %958 = vector.load %arg17[%957, %c0_242] : memref<12x16xf32, #tpu.memory_space<vmem>>, vector<1x16xf32>
    tpu.vector_store %arg17[%957, %c0_242], %954 {strides = array<i32>} : memref<12x16xf32, #tpu.memory_space<vmem>>, vector<1x16xf32>,
    %c8_i32_243 = arith.constant 8 : i32
    %c11_i32_244 = arith.constant 11 : i32
    %959 = arith.subi %c11_i32_244, %c8_i32_243 : i32
    %cst_245 = arith.constant dense<0.000000e+00> : vector<1x64xf32>
    %960 = tpu.matmul %946, %575, %cst_245 {dimension_numbers = #tpu.dot_dimension_numbers<[1], [0], [0], [1], [0, 0, 1, 1], [], []>} : vector<1x16xf32>, vector<16x64xf32>, vector<1x64xf32> -> vector<1x64xf32>
    %961 = arith.index_cast %c8_i32_243 : i32 to index
    %c0_246 = arith.constant 0 : index
    %962 = vector.load %arg18[%961, %c0_246] : memref<12x64xf32, #tpu.memory_space<vmem>>, vector<1x64xf32>
    %963 = arith.addf %960, %962 : vector<1x64xf32>
    %cst_247 = arith.constant dense<0.000000e+00> : vector<1x64xf32>
    %964 = tpu.matmul %954, %581, %cst_247 {dimension_numbers = #tpu.dot_dimension_numbers<[1], [0], [0], [1], [0, 0, 1, 1], [], []>} : vector<1x16xf32>, vector<16x64xf32>, vector<1x64xf32> -> vector<1x64xf32>
    %965 = arith.index_cast %959 : i32 to index
    %c0_248 = arith.constant 0 : index
    %966 = vector.load %arg19[%965, %c0_248] : memref<12x64xf32, #tpu.memory_space<vmem>>, vector<1x64xf32>
    %967 = arith.addf %964, %966 : vector<1x64xf32>
    %968 = vector.extract_strided_slice %963 {offsets = [0, 0], sizes = [1, 48], strides = [1, 1]} : vector<1x64xf32> to vector<1x48xf32>
    %969 = arith.negf %968 : vector<1x48xf32>
    %970 = math.exp %969 : vector<1x48xf32>
    %cst_249 = arith.constant 1.000000e+00 : f32
    %971 = vector.broadcast %cst_249 : f32 to vector<1x48xf32>
    %972 = arith.addf %971, %970 : vector<1x48xf32>
    %973 = arith.divf %971, %972 : vector<1x48xf32>
    %974 = vector.extract_strided_slice %963 {offsets = [0, 48], sizes = [1, 16], strides = [1, 1]} : vector<1x64xf32> to vector<1x16xf32>
    %975 = math.tanh %974 : vector<1x16xf32>
    %976 = vector.extract_strided_slice %967 {offsets = [0, 0], sizes = [1, 48], strides = [1, 1]} : vector<1x64xf32> to vector<1x48xf32>
    %977 = arith.negf %976 : vector<1x48xf32>
    %978 = math.exp %977 : vector<1x48xf32>
    %cst_250 = arith.constant 1.000000e+00 : f32
    %979 = vector.broadcast %cst_250 : f32 to vector<1x48xf32>
    %980 = arith.addf %979, %978 : vector<1x48xf32>
    %981 = arith.divf %979, %980 : vector<1x48xf32>
    %982 = vector.extract_strided_slice %967 {offsets = [0, 48], sizes = [1, 16], strides = [1, 1]} : vector<1x64xf32> to vector<1x16xf32>
    %983 = math.tanh %982 : vector<1x16xf32>
    %984 = vector.extract_strided_slice %973 {offsets = [0, 16], sizes = [1, 16], strides = [1, 1]} : vector<1x48xf32> to vector<1x16xf32>
    %985 = arith.mulf %984, %943 : vector<1x16xf32>
    %986 = vector.extract_strided_slice %973 {offsets = [0, 0], sizes = [1, 16], strides = [1, 1]} : vector<1x48xf32> to vector<1x16xf32>
    %987 = arith.mulf %986, %975 : vector<1x16xf32>
    %988 = arith.addf %985, %987 : vector<1x16xf32>
    %989 = vector.extract_strided_slice %973 {offsets = [0, 32], sizes = [1, 16], strides = [1, 1]} : vector<1x48xf32> to vector<1x16xf32>
    %990 = math.tanh %988 : vector<1x16xf32>
    %991 = arith.mulf %989, %990 : vector<1x16xf32>
    %992 = vector.extract_strided_slice %981 {offsets = [0, 16], sizes = [1, 16], strides = [1, 1]} : vector<1x48xf32> to vector<1x16xf32>
    %993 = arith.mulf %992, %951 : vector<1x16xf32>
    %994 = vector.extract_strided_slice %981 {offsets = [0, 0], sizes = [1, 16], strides = [1, 1]} : vector<1x48xf32> to vector<1x16xf32>
    %995 = arith.mulf %994, %983 : vector<1x16xf32>
    %996 = arith.addf %993, %995 : vector<1x16xf32>
    %997 = vector.extract_strided_slice %981 {offsets = [0, 32], sizes = [1, 16], strides = [1, 1]} : vector<1x48xf32> to vector<1x16xf32>
    %998 = math.tanh %996 : vector<1x16xf32>
    %999 = arith.mulf %997, %998 : vector<1x16xf32>
    %1000 = arith.index_cast %c8_i32_243 : i32 to index
    %c0_251 = arith.constant 0 : index
    %1001 = vector.load %arg16[%1000, %c0_251] : memref<12x16xf32, #tpu.memory_space<vmem>>, vector<1x16xf32>
    tpu.vector_store %arg16[%1000, %c0_251], %991 {strides = array<i32>} : memref<12x16xf32, #tpu.memory_space<vmem>>, vector<1x16xf32>,
    %1002 = arith.index_cast %959 : i32 to index
    %c0_252 = arith.constant 0 : index
    %1003 = vector.load %arg17[%1002, %c0_252] : memref<12x16xf32, #tpu.memory_space<vmem>>, vector<1x16xf32>
    tpu.vector_store %arg17[%1002, %c0_252], %999 {strides = array<i32>} : memref<12x16xf32, #tpu.memory_space<vmem>>, vector<1x16xf32>,
    %c9_i32_253 = arith.constant 9 : i32
    %c11_i32_254 = arith.constant 11 : i32
    %1004 = arith.subi %c11_i32_254, %c9_i32_253 : i32
    %cst_255 = arith.constant dense<0.000000e+00> : vector<1x64xf32>
    %1005 = tpu.matmul %991, %575, %cst_255 {dimension_numbers = #tpu.dot_dimension_numbers<[1], [0], [0], [1], [0, 0, 1, 1], [], []>} : vector<1x16xf32>, vector<16x64xf32>, vector<1x64xf32> -> vector<1x64xf32>
    %1006 = arith.index_cast %c9_i32_253 : i32 to index
    %c0_256 = arith.constant 0 : index
    %1007 = vector.load %arg18[%1006, %c0_256] : memref<12x64xf32, #tpu.memory_space<vmem>>, vector<1x64xf32>
    %1008 = arith.addf %1005, %1007 : vector<1x64xf32>
    %cst_257 = arith.constant dense<0.000000e+00> : vector<1x64xf32>
    %1009 = tpu.matmul %999, %581, %cst_257 {dimension_numbers = #tpu.dot_dimension_numbers<[1], [0], [0], [1], [0, 0, 1, 1], [], []>} : vector<1x16xf32>, vector<16x64xf32>, vector<1x64xf32> -> vector<1x64xf32>
    %1010 = arith.index_cast %1004 : i32 to index
    %c0_258 = arith.constant 0 : index
    %1011 = vector.load %arg19[%1010, %c0_258] : memref<12x64xf32, #tpu.memory_space<vmem>>, vector<1x64xf32>
    %1012 = arith.addf %1009, %1011 : vector<1x64xf32>
    %1013 = vector.extract_strided_slice %1008 {offsets = [0, 0], sizes = [1, 48], strides = [1, 1]} : vector<1x64xf32> to vector<1x48xf32>
    %1014 = arith.negf %1013 : vector<1x48xf32>
    %1015 = math.exp %1014 : vector<1x48xf32>
    %cst_259 = arith.constant 1.000000e+00 : f32
    %1016 = vector.broadcast %cst_259 : f32 to vector<1x48xf32>
    %1017 = arith.addf %1016, %1015 : vector<1x48xf32>
    %1018 = arith.divf %1016, %1017 : vector<1x48xf32>
    %1019 = vector.extract_strided_slice %1008 {offsets = [0, 48], sizes = [1, 16], strides = [1, 1]} : vector<1x64xf32> to vector<1x16xf32>
    %1020 = math.tanh %1019 : vector<1x16xf32>
    %1021 = vector.extract_strided_slice %1012 {offsets = [0, 0], sizes = [1, 48], strides = [1, 1]} : vector<1x64xf32> to vector<1x48xf32>
    %1022 = arith.negf %1021 : vector<1x48xf32>
    %1023 = math.exp %1022 : vector<1x48xf32>
    %cst_260 = arith.constant 1.000000e+00 : f32
    %1024 = vector.broadcast %cst_260 : f32 to vector<1x48xf32>
    %1025 = arith.addf %1024, %1023 : vector<1x48xf32>
    %1026 = arith.divf %1024, %1025 : vector<1x48xf32>
    %1027 = vector.extract_strided_slice %1012 {offsets = [0, 48], sizes = [1, 16], strides = [1, 1]} : vector<1x64xf32> to vector<1x16xf32>
    %1028 = math.tanh %1027 : vector<1x16xf32>
    %1029 = vector.extract_strided_slice %1018 {offsets = [0, 16], sizes = [1, 16], strides = [1, 1]} : vector<1x48xf32> to vector<1x16xf32>
    %1030 = arith.mulf %1029, %988 : vector<1x16xf32>
    %1031 = vector.extract_strided_slice %1018 {offsets = [0, 0], sizes = [1, 16], strides = [1, 1]} : vector<1x48xf32> to vector<1x16xf32>
    %1032 = arith.mulf %1031, %1020 : vector<1x16xf32>
    %1033 = arith.addf %1030, %1032 : vector<1x16xf32>
    %1034 = vector.extract_strided_slice %1018 {offsets = [0, 32], sizes = [1, 16], strides = [1, 1]} : vector<1x48xf32> to vector<1x16xf32>
    %1035 = math.tanh %1033 : vector<1x16xf32>
    %1036 = arith.mulf %1034, %1035 : vector<1x16xf32>
    %1037 = vector.extract_strided_slice %1026 {offsets = [0, 16], sizes = [1, 16], strides = [1, 1]} : vector<1x48xf32> to vector<1x16xf32>
    %1038 = arith.mulf %1037, %996 : vector<1x16xf32>
    %1039 = vector.extract_strided_slice %1026 {offsets = [0, 0], sizes = [1, 16], strides = [1, 1]} : vector<1x48xf32> to vector<1x16xf32>
    %1040 = arith.mulf %1039, %1028 : vector<1x16xf32>
    %1041 = arith.addf %1038, %1040 : vector<1x16xf32>
    %1042 = vector.extract_strided_slice %1026 {offsets = [0, 32], sizes = [1, 16], strides = [1, 1]} : vector<1x48xf32> to vector<1x16xf32>
    %1043 = math.tanh %1041 : vector<1x16xf32>
    %1044 = arith.mulf %1042, %1043 : vector<1x16xf32>
    %1045 = arith.index_cast %c9_i32_253 : i32 to index
    %c0_261 = arith.constant 0 : index
    %1046 = vector.load %arg16[%1045, %c0_261] : memref<12x16xf32, #tpu.memory_space<vmem>>, vector<1x16xf32>
    tpu.vector_store %arg16[%1045, %c0_261], %1036 {strides = array<i32>} : memref<12x16xf32, #tpu.memory_space<vmem>>, vector<1x16xf32>,
    %1047 = arith.index_cast %1004 : i32 to index
    %c0_262 = arith.constant 0 : index
    %1048 = vector.load %arg17[%1047, %c0_262] : memref<12x16xf32, #tpu.memory_space<vmem>>, vector<1x16xf32>
    tpu.vector_store %arg17[%1047, %c0_262], %1044 {strides = array<i32>} : memref<12x16xf32, #tpu.memory_space<vmem>>, vector<1x16xf32>,
    %c10_i32_263 = arith.constant 10 : i32
    %c11_i32_264 = arith.constant 11 : i32
    %1049 = arith.subi %c11_i32_264, %c10_i32_263 : i32
    %cst_265 = arith.constant dense<0.000000e+00> : vector<1x64xf32>
    %1050 = tpu.matmul %1036, %575, %cst_265 {dimension_numbers = #tpu.dot_dimension_numbers<[1], [0], [0], [1], [0, 0, 1, 1], [], []>} : vector<1x16xf32>, vector<16x64xf32>, vector<1x64xf32> -> vector<1x64xf32>
    %1051 = arith.index_cast %c10_i32_263 : i32 to index
    %c0_266 = arith.constant 0 : index
    %1052 = vector.load %arg18[%1051, %c0_266] : memref<12x64xf32, #tpu.memory_space<vmem>>, vector<1x64xf32>
    %1053 = arith.addf %1050, %1052 : vector<1x64xf32>
    %cst_267 = arith.constant dense<0.000000e+00> : vector<1x64xf32>
    %1054 = tpu.matmul %1044, %581, %cst_267 {dimension_numbers = #tpu.dot_dimension_numbers<[1], [0], [0], [1], [0, 0, 1, 1], [], []>} : vector<1x16xf32>, vector<16x64xf32>, vector<1x64xf32> -> vector<1x64xf32>
    %1055 = arith.index_cast %1049 : i32 to index
    %c0_268 = arith.constant 0 : index
    %1056 = vector.load %arg19[%1055, %c0_268] : memref<12x64xf32, #tpu.memory_space<vmem>>, vector<1x64xf32>
    %1057 = arith.addf %1054, %1056 : vector<1x64xf32>
    %1058 = vector.extract_strided_slice %1053 {offsets = [0, 0], sizes = [1, 48], strides = [1, 1]} : vector<1x64xf32> to vector<1x48xf32>
    %1059 = arith.negf %1058 : vector<1x48xf32>
    %1060 = math.exp %1059 : vector<1x48xf32>
    %cst_269 = arith.constant 1.000000e+00 : f32
    %1061 = vector.broadcast %cst_269 : f32 to vector<1x48xf32>
    %1062 = arith.addf %1061, %1060 : vector<1x48xf32>
    %1063 = arith.divf %1061, %1062 : vector<1x48xf32>
    %1064 = vector.extract_strided_slice %1053 {offsets = [0, 48], sizes = [1, 16], strides = [1, 1]} : vector<1x64xf32> to vector<1x16xf32>
    %1065 = math.tanh %1064 : vector<1x16xf32>
    %1066 = vector.extract_strided_slice %1057 {offsets = [0, 0], sizes = [1, 48], strides = [1, 1]} : vector<1x64xf32> to vector<1x48xf32>
    %1067 = arith.negf %1066 : vector<1x48xf32>
    %1068 = math.exp %1067 : vector<1x48xf32>
    %cst_270 = arith.constant 1.000000e+00 : f32
    %1069 = vector.broadcast %cst_270 : f32 to vector<1x48xf32>
    %1070 = arith.addf %1069, %1068 : vector<1x48xf32>
    %1071 = arith.divf %1069, %1070 : vector<1x48xf32>
    %1072 = vector.extract_strided_slice %1057 {offsets = [0, 48], sizes = [1, 16], strides = [1, 1]} : vector<1x64xf32> to vector<1x16xf32>
    %1073 = math.tanh %1072 : vector<1x16xf32>
    %1074 = vector.extract_strided_slice %1063 {offsets = [0, 16], sizes = [1, 16], strides = [1, 1]} : vector<1x48xf32> to vector<1x16xf32>
    %1075 = arith.mulf %1074, %1033 : vector<1x16xf32>
    %1076 = vector.extract_strided_slice %1063 {offsets = [0, 0], sizes = [1, 16], strides = [1, 1]} : vector<1x48xf32> to vector<1x16xf32>
    %1077 = arith.mulf %1076, %1065 : vector<1x16xf32>
    %1078 = arith.addf %1075, %1077 : vector<1x16xf32>
    %1079 = vector.extract_strided_slice %1063 {offsets = [0, 32], sizes = [1, 16], strides = [1, 1]} : vector<1x48xf32> to vector<1x16xf32>
    %1080 = math.tanh %1078 : vector<1x16xf32>
    %1081 = arith.mulf %1079, %1080 : vector<1x16xf32>
    %1082 = vector.extract_strided_slice %1071 {offsets = [0, 16], sizes = [1, 16], strides = [1, 1]} : vector<1x48xf32> to vector<1x16xf32>
    %1083 = arith.mulf %1082, %1041 : vector<1x16xf32>
    %1084 = vector.extract_strided_slice %1071 {offsets = [0, 0], sizes = [1, 16], strides = [1, 1]} : vector<1x48xf32> to vector<1x16xf32>
    %1085 = arith.mulf %1084, %1073 : vector<1x16xf32>
    %1086 = arith.addf %1083, %1085 : vector<1x16xf32>
    %1087 = vector.extract_strided_slice %1071 {offsets = [0, 32], sizes = [1, 16], strides = [1, 1]} : vector<1x48xf32> to vector<1x16xf32>
    %1088 = math.tanh %1086 : vector<1x16xf32>
    %1089 = arith.mulf %1087, %1088 : vector<1x16xf32>
    %1090 = arith.index_cast %c10_i32_263 : i32 to index
    %c0_271 = arith.constant 0 : index
    %1091 = vector.load %arg16[%1090, %c0_271] : memref<12x16xf32, #tpu.memory_space<vmem>>, vector<1x16xf32>
    tpu.vector_store %arg16[%1090, %c0_271], %1081 {strides = array<i32>} : memref<12x16xf32, #tpu.memory_space<vmem>>, vector<1x16xf32>,
    %1092 = arith.index_cast %1049 : i32 to index
    %c0_272 = arith.constant 0 : index
    %1093 = vector.load %arg17[%1092, %c0_272] : memref<12x16xf32, #tpu.memory_space<vmem>>, vector<1x16xf32>
    tpu.vector_store %arg17[%1092, %c0_272], %1089 {strides = array<i32>} : memref<12x16xf32, #tpu.memory_space<vmem>>, vector<1x16xf32>,
    %c11_i32_273 = arith.constant 11 : i32
    %c11_i32_274 = arith.constant 11 : i32
    %1094 = arith.subi %c11_i32_274, %c11_i32_273 : i32
    %cst_275 = arith.constant dense<0.000000e+00> : vector<1x64xf32>
    %1095 = tpu.matmul %1081, %575, %cst_275 {dimension_numbers = #tpu.dot_dimension_numbers<[1], [0], [0], [1], [0, 0, 1, 1], [], []>} : vector<1x16xf32>, vector<16x64xf32>, vector<1x64xf32> -> vector<1x64xf32>
    %1096 = arith.index_cast %c11_i32_273 : i32 to index
    %c0_276 = arith.constant 0 : index
    %1097 = vector.load %arg18[%1096, %c0_276] : memref<12x64xf32, #tpu.memory_space<vmem>>, vector<1x64xf32>
    %1098 = arith.addf %1095, %1097 : vector<1x64xf32>
    %cst_277 = arith.constant dense<0.000000e+00> : vector<1x64xf32>
    %1099 = tpu.matmul %1089, %581, %cst_277 {dimension_numbers = #tpu.dot_dimension_numbers<[1], [0], [0], [1], [0, 0, 1, 1], [], []>} : vector<1x16xf32>, vector<16x64xf32>, vector<1x64xf32> -> vector<1x64xf32>
    %1100 = arith.index_cast %1094 : i32 to index
    %c0_278 = arith.constant 0 : index
    %1101 = vector.load %arg19[%1100, %c0_278] : memref<12x64xf32, #tpu.memory_space<vmem>>, vector<1x64xf32>
    %1102 = arith.addf %1099, %1101 : vector<1x64xf32>
    %1103 = vector.extract_strided_slice %1098 {offsets = [0, 0], sizes = [1, 48], strides = [1, 1]} : vector<1x64xf32> to vector<1x48xf32>
    %1104 = arith.negf %1103 : vector<1x48xf32>
    %1105 = math.exp %1104 : vector<1x48xf32>
    %cst_279 = arith.constant 1.000000e+00 : f32
    %1106 = vector.broadcast %cst_279 : f32 to vector<1x48xf32>
    %1107 = arith.addf %1106, %1105 : vector<1x48xf32>
    %1108 = arith.divf %1106, %1107 : vector<1x48xf32>
    %1109 = vector.extract_strided_slice %1098 {offsets = [0, 48], sizes = [1, 16], strides = [1, 1]} : vector<1x64xf32> to vector<1x16xf32>
    %1110 = math.tanh %1109 : vector<1x16xf32>
    %1111 = vector.extract_strided_slice %1102 {offsets = [0, 0], sizes = [1, 48], strides = [1, 1]} : vector<1x64xf32> to vector<1x48xf32>
    %1112 = arith.negf %1111 : vector<1x48xf32>
    %1113 = math.exp %1112 : vector<1x48xf32>
    %cst_280 = arith.constant 1.000000e+00 : f32
    %1114 = vector.broadcast %cst_280 : f32 to vector<1x48xf32>
    %1115 = arith.addf %1114, %1113 : vector<1x48xf32>
    %1116 = arith.divf %1114, %1115 : vector<1x48xf32>
    %1117 = vector.extract_strided_slice %1102 {offsets = [0, 48], sizes = [1, 16], strides = [1, 1]} : vector<1x64xf32> to vector<1x16xf32>
    %1118 = math.tanh %1117 : vector<1x16xf32>
    %1119 = vector.extract_strided_slice %1108 {offsets = [0, 16], sizes = [1, 16], strides = [1, 1]} : vector<1x48xf32> to vector<1x16xf32>
    %1120 = arith.mulf %1119, %1078 : vector<1x16xf32>
    %1121 = vector.extract_strided_slice %1108 {offsets = [0, 0], sizes = [1, 16], strides = [1, 1]} : vector<1x48xf32> to vector<1x16xf32>
    %1122 = arith.mulf %1121, %1110 : vector<1x16xf32>
    %1123 = arith.addf %1120, %1122 : vector<1x16xf32>
    %1124 = vector.extract_strided_slice %1108 {offsets = [0, 32], sizes = [1, 16], strides = [1, 1]} : vector<1x48xf32> to vector<1x16xf32>
    %1125 = math.tanh %1123 : vector<1x16xf32>
    %1126 = arith.mulf %1124, %1125 : vector<1x16xf32>
    %1127 = vector.extract_strided_slice %1116 {offsets = [0, 16], sizes = [1, 16], strides = [1, 1]} : vector<1x48xf32> to vector<1x16xf32>
    %1128 = arith.mulf %1127, %1086 : vector<1x16xf32>
    %1129 = vector.extract_strided_slice %1116 {offsets = [0, 0], sizes = [1, 16], strides = [1, 1]} : vector<1x48xf32> to vector<1x16xf32>
    %1130 = arith.mulf %1129, %1118 : vector<1x16xf32>
    %1131 = arith.addf %1128, %1130 : vector<1x16xf32>
    %1132 = vector.extract_strided_slice %1116 {offsets = [0, 32], sizes = [1, 16], strides = [1, 1]} : vector<1x48xf32> to vector<1x16xf32>
    %1133 = math.tanh %1131 : vector<1x16xf32>
    %1134 = arith.mulf %1132, %1133 : vector<1x16xf32>
    %1135 = arith.index_cast %c11_i32_273 : i32 to index
    %c0_281 = arith.constant 0 : index
    %1136 = vector.load %arg16[%1135, %c0_281] : memref<12x16xf32, #tpu.memory_space<vmem>>, vector<1x16xf32>
    tpu.vector_store %arg16[%1135, %c0_281], %1126 {strides = array<i32>} : memref<12x16xf32, #tpu.memory_space<vmem>>, vector<1x16xf32>,
    %1137 = arith.index_cast %1094 : i32 to index
    %c0_282 = arith.constant 0 : index
    %1138 = vector.load %arg17[%1137, %c0_282] : memref<12x16xf32, #tpu.memory_space<vmem>>, vector<1x16xf32>
    tpu.vector_store %arg17[%1137, %c0_282], %1134 {strides = array<i32>} : memref<12x16xf32, #tpu.memory_space<vmem>>, vector<1x16xf32>,
    %c12_i32_283 = arith.constant 12 : i32
    %c0_284 = arith.constant 0 : index
    %c0_285 = arith.constant 0 : index
    %1139 = vector.load %arg16[%c0_284, %c0_285] : memref<12x16xf32, #tpu.memory_space<vmem>>, vector<12x16xf32>
    %c0_286 = arith.constant 0 : index
    %c0_287 = arith.constant 0 : index
    %1140 = vector.load %arg17[%c0_286, %c0_287] : memref<12x16xf32, #tpu.memory_space<vmem>>, vector<12x16xf32>
    %1141 = tpu.concatenate %1139, %1140 in 1 : vector<12x16xf32>, vector<12x16xf32> -> vector<12x32xf32>
    %c0_288 = arith.constant 0 : index
    %c0_289 = arith.constant 0 : index
    %1142 = vector.load %arg13[%c0_288, %c0_289] : memref<12x32xf32, #tpu.memory_space<vmem>>, vector<12x32xf32>
    tpu.vector_store %arg13[%c0_288, %c0_289], %1141 {strides = array<i32>} : memref<12x32xf32, #tpu.memory_space<vmem>>, vector<12x32xf32>,
    %c2_i32_290 = arith.constant 2 : i32
    %1143 = tpu.memref_slice %arg23[%c2_i32_290] : memref<3x!tpu.dma_semaphore, #tpu.memory_space<semaphore_mem>> -> memref<1x!tpu.dma_semaphore, #tpu.memory_space<semaphore_mem>>
    %1144 = tpu.memref_squeeze %1143 : memref<1x!tpu.dma_semaphore, #tpu.memory_space<semaphore_mem>> -> memref<!tpu.dma_semaphore, #tpu.memory_space<semaphore_mem>>
    tpu.wait_dma2 semaphore(%1144 : memref<!tpu.dma_semaphore, #tpu.memory_space<semaphore_mem>>) src(%arg11 : memref<32x32xf32, #tpu.memory_space<any>>) dst(%arg22 : memref<32x32xf32, #tpu.memory_space<vmem>>)
    %1145 = tpu.concatenate %553, %561 in 1 : vector<1x16xf32>, vector<1x16xf32> -> vector<1x32xf32>
    %1146 = tpu.concatenate %1126, %1134 in 1 : vector<1x16xf32>, vector<1x16xf32> -> vector<1x32xf32>
    %1147 = tpu.concatenate %1145, %1146 in 0 : vector<1x32xf32>, vector<1x32xf32> -> vector<2x32xf32>
    %1148 = tpu.concatenate %550, %558 in 1 : vector<1x16xf32>, vector<1x16xf32> -> vector<1x32xf32>
    %1149 = tpu.concatenate %1123, %1131 in 1 : vector<1x16xf32>, vector<1x16xf32> -> vector<1x32xf32>
    %1150 = tpu.concatenate %1148, %1149 in 0 : vector<1x32xf32>, vector<1x32xf32> -> vector<2x32xf32>
    %c0_291 = arith.constant 0 : index
    %c0_292 = arith.constant 0 : index
    %1151 = vector.load %arg15[%c0_291, %c0_292] : memref<2x32xf32, #tpu.memory_space<vmem>>, vector<2x32xf32>
    tpu.vector_store %arg15[%c0_291, %c0_292], %1150 {strides = array<i32>} : memref<2x32xf32, #tpu.memory_space<vmem>>, vector<2x32xf32>,
    %c0_293 = arith.constant 0 : index
    %c0_294 = arith.constant 0 : index
    %1152 = vector.load %arg22[%c0_293, %c0_294] : memref<32x32xf32, #tpu.memory_space<vmem>>, vector<32x32xf32>
    %cst_295 = arith.constant dense<0.000000e+00> : vector<2x32xf32>
    %1153 = tpu.matmul %1147, %1152, %cst_295 {dimension_numbers = #tpu.dot_dimension_numbers<[1], [0], [0], [1], [0, 0, 1, 1], [], []>} : vector<2x32xf32>, vector<32x32xf32>, vector<2x32xf32> -> vector<2x32xf32>
    %c0_296 = arith.constant 0 : index
    %c0_297 = arith.constant 0 : index
    %1154 = vector.load %arg12[%c0_296, %c0_297] : memref<1x32xf32, #tpu.memory_space<vmem>>, vector<1x32xf32>
    %1155 = vector.broadcast %1154 : vector<1x32xf32> to vector<2x32xf32>
    %1156 = arith.addf %1153, %1155 : vector<2x32xf32>
    %1157 = math.tanh %1156 : vector<2x32xf32>
    %c0_298 = arith.constant 0 : index
    %c0_299 = arith.constant 0 : index
    %1158 = vector.load %arg14[%c0_298, %c0_299] : memref<2x32xf32, #tpu.memory_space<vmem>>, vector<2x32xf32>
    tpu.vector_store %arg14[%c0_298, %c0_299], %1157 {strides = array<i32>} : memref<2x32xf32, #tpu.memory_space<vmem>>, vector<2x32xf32>,
    return
  }
}

</mosaic_0001>

<llo_original>
// kernel: tpu_custom_call.1
$region0: #{tpu_custom_call.1}
  #allocation0 [shape = 'u32[]', space=smem, size = 0x4, offset = 0x4, fixed_abs, tag = 'smem constant byte address 0x4 - core index']
  #allocation1 [shape = 'u32[144,128]{1,0:T(1,128)}', space=vmem, size = 0x12000, scoped, tag = 'internal scratch']
  #allocation2 [shape = 'f32[12,16]{1,0:T(8,128)}', space=vmem, size = 0x2000, scoped, tag = 'scratch operand']
  #allocation3 [shape = 'f32[12,16]{1,0:T(8,128)}', space=vmem, size = 0x2000, scoped, tag = 'scratch operand']
  #allocation4 [shape = 'f32[12,64]{1,0:T(8,128)}', space=vmem, size = 0x2000, scoped, tag = 'scratch operand']
  #allocation5 [shape = 'f32[12,64]{1,0:T(8,128)}', space=vmem, size = 0x2000, scoped, tag = 'scratch operand']
  #allocation6 [shape = 'f32[3,16,64]{2,1,0:T(8,128)}', space=vmem, size = 0x6000, scoped, tag = 'scratch operand']
  #allocation7 [shape = 'f32[3,16,64]{2,1,0:T(8,128)}', space=vmem, size = 0x6000, scoped, tag = 'scratch operand']
  #allocation8 [shape = 'f32[32,32]{1,0:T(8,128)}', space=vmem, size = 0x4000, scoped, tag = 'scratch operand']
  #allocation9 [shape = 's32[3]{0}', space=sflag, size = 0xc, scoped, tag = 'scratch operand']
  #allocation20 [shape = 's32[]', space=sflag, size = 0x4, offset = 0, fixed_abs, tag = 'sflag constant byte address 0x0 - dummy sync flag']
  #allocation21 [shape = 's32[]', space=sflag, size = 0x4, offset = 0, fixed_abs, tag = 'sflag constant byte address 0x0 - dummy sync flag']
  #allocation22 [shape = 'u32[]', space=smem, size = 0x4, offset = 0x44, fixed_abs, tag = 'smem constant byte address 0x44 - assertion arg 0']
  #allocation23 [shape = 'u32[]', space=smem, size = 0x4, offset = 0x48, fixed_abs, tag = 'smem constant byte address 0x48 - assertion arg 1']
  #allocation24 [shape = 's32[]', space=sflag, size = 0x4, offset = 0, fixed_abs, tag = 'sflag constant byte address 0x0 - dummy sync flag']
  #allocation25 [shape = 's32[]', space=sflag, size = 0x4, offset = 0, fixed_abs, tag = 'sflag constant byte address 0x0 - dummy sync flag']
  #allocation26 [shape = 's32[]', space=sflag, size = 0x4, offset = 0, fixed_abs, tag = 'sflag constant byte address 0x0 - dummy sync flag']
  %s0 = inlined_call_operand.vmem [shape: f32[12,1], index: 0, kind: input, shape index: {}]
  %s1 = inlined_call_operand.vmem [shape: f32[1,64], index: 1, kind: input, shape index: {}]
  %s2 = inlined_call_operand.vmem [shape: f32[1,64], index: 2, kind: input, shape index: {}]
  %s3 = inlined_call_operand.hbm [shape: f32[16,64], index: 3, kind: input, shape index: {}]
  %s4 = inlined_call_operand.vmem [shape: f32[1,64], index: 4, kind: input, shape index: {}]
  %s5 = inlined_call_operand.vmem [shape: f32[1,64], index: 5, kind: input, shape index: {}]
  %s6 = inlined_call_operand.hbm [shape: f32[16,64], index: 6, kind: input, shape index: {}]
  %s7 = inlined_call_operand.hbm [shape: f32[3,16,64], index: 7, kind: input, shape index: {}]
  %s8 = inlined_call_operand.vmem [shape: f32[1,64], index: 8, kind: input, shape index: {}]
  %s9 = inlined_call_operand.hbm [shape: f32[3,16,64], index: 9, kind: input, shape index: {}]
  %s10 = inlined_call_operand.hbm [shape: f32[1,64], index: 10, kind: input, shape index: {}]
  %s11 = inlined_call_operand.vmem [shape: f32[32,32], index: 11, kind: input, shape index: {}]
  %s12 = inlined_call_operand.vmem [shape: f32[1,32], index: 12, kind: input, shape index: {}]
  %s13 = inlined_call_operand.hbm [shape: f32[12,32], index: 13, kind: output, shape index: {0}]
  %s14 = inlined_call_operand.hbm [shape: f32[2,32], index: 14, kind: output, shape index: {1}]
  %s15 = inlined_call_operand.hbm [shape: f32[2,32], index: 15, kind: output, shape index: {2}]
  %16 = xla_tuple %s13, %s14, %s15
  %s17 = sld [smem:[#allocation0]]
  $region120: #{tpu_custom_call.1} parent=0
    _
  %s19 = ssub.s32 1, %s17
  %s20 = scalar_select 0, %s19, %s17
  $region1: #{tpu_custom_call.1} parent=0
    #allocation10 [shape = 'u8[8192]{0}', space=vmem, size = 0x2000, scoped, tag = 'input window, operand 3, single buffered']
    #allocation11 [shape = 's32[1]{0}', space=sflag, size = 0x4, scoped, tag = 'scoped memory for tpu_custom_call.1']
    #allocation12 [shape = 's32[1]{0}', space=sflag, size = 0x4, scoped, tag = 'scoped memory for tpu_custom_call.1']
    #allocation13 [shape = 'u8[8192]{0}', space=vmem, size = 0x2000, scoped, tag = 'input window, operand 6, single buffered']
    #allocation14 [shape = 's32[1]{0}', space=sflag, size = 0x4, scoped, tag = 'scoped memory for tpu_custom_call.1']
    #allocation15 [shape = 'u8[512]{0}', space=vmem, size = 0x400, scoped, tag = 'input window, operand 10, single buffered']
    #allocation16 [shape = 'u8[8192]{0}', space=vmem, size = 0x2000, scoped, tag = 'output window, operand 0, single buffered']
    #allocation17 [shape = 'u8[1024]{0}', space=vmem, size = 0x400, scoped, tag = 'output window, operand 1, single buffered']
    #allocation18 [shape = 's32[1]{0}', space=sflag, size = 0x4, scoped, tag = 'scoped memory for tpu_custom_call.1']
    #allocation19 [shape = 'u8[1024]{0}', space=vmem, size = 0x400, scoped, tag = 'output window, operand 2, single buffered']
    %21 = vsyncpa [#allocation11], 0
    %22 = vsyncpa [#allocation14], 0
    %23 = vsyncpa [#allocation12], 0
    %24 = vsyncpa [#allocation18], 0
    // Predicated region
    $region2: #{tpu_custom_call.1} parent=1 // pred_check
      _
    $region3: #{tpu_custom_call.1} parent=1 // pred_check_branch
      %26 = sbr.rel (0) target = $region5
    $region4: #{tpu_custom_call.1} parent=1 // pred_region
      _
    $region5: #{tpu_custom_call.1} parent=1 // pred_fallthru
      _
    // Predicated region
    $region6: #{tpu_custom_call.1} parent=1 // pred_check
      _
    $region7: #{tpu_custom_call.1} parent=1 // pred_check_branch
      %28 = sbr.rel (0) target = $region9
    $region8: #{tpu_custom_call.1} parent=1 // pred_region
      _
    $region9: #{tpu_custom_call.1} parent=1 // pred_fallthru
      _
    // Predicated region
    $region10: #{tpu_custom_call.1} parent=1 // pred_check
      _
    $region11: #{tpu_custom_call.1} parent=1 // pred_check_branch
      %30 = sbr.rel (0) target = $region13
    $region12: #{tpu_custom_call.1} parent=1 // pred_region
      _
    $region13: #{tpu_custom_call.1} parent=1 // pred_fallthru
      _
    // Predicated region
    $region14: #{tpu_custom_call.1} parent=1 // pred_check
      _
    $region15: #{tpu_custom_call.1} parent=1 // pred_check_branch
      %32 = sbr.rel (0) target = $region17
    $region16: #{tpu_custom_call.1} parent=1 // pred_region
      %s34 = ssub.s32 256, 256
      %35 = vsyncadd [#allocation11], %s34
      %s36 = sshll.u32 [#allocation10], 4
      %s37 = int_to_ptr.vmem [resolvable:$true] %s36
      %42 = dma.hbm_to_vmem [thread:$0]  %s3, 256, %s37, [#allocation11], 128, 128, 8
    $region17: #{tpu_custom_call.1} parent=1 // pred_fallthru
      _
    // Predicated region
    $region18: #{tpu_custom_call.1} parent=1 // pred_check
      _
    $region19: #{tpu_custom_call.1} parent=1 // pred_check_branch
      %44 = sbr.rel (0) target = $region21
    $region20: #{tpu_custom_call.1} parent=1 // pred_region
      _
    $region21: #{tpu_custom_call.1} parent=1 // pred_fallthru
      _
    // Predicated region
    $region22: #{tpu_custom_call.1} parent=1 // pred_check
      _
    $region23: #{tpu_custom_call.1} parent=1 // pred_check_branch
      %46 = sbr.rel (0) target = $region25
    $region24: #{tpu_custom_call.1} parent=1 // pred_region
      _
    $region25: #{tpu_custom_call.1} parent=1 // pred_fallthru
      _
    // Predicated region
    $region26: #{tpu_custom_call.1} parent=1 // pred_check
      _
    $region27: #{tpu_custom_call.1} parent=1 // pred_check_branch
      %48 = sbr.rel (0) target = $region29
    $region28: #{tpu_custom_call.1} parent=1 // pred_region
      %s50 = ssub.s32 256, 256
      %51 = vsyncadd [#allocation14], %s50
      %s52 = sshll.u32 [#allocation13], 4
      %s53 = int_to_ptr.vmem [resolvable:$true] %s52
      %58 = dma.hbm_to_vmem [thread:$0]  %s6, 256, %s53, [#allocation14], 128, 128, 8
    $region29: #{tpu_custom_call.1} parent=1 // pred_fallthru
      _
    // Predicated region
    $region30: #{tpu_custom_call.1} parent=1 // pred_check
      _
    $region31: #{tpu_custom_call.1} parent=1 // pred_check_branch
      %60 = sbr.rel (0) target = $region33
    $region32: #{tpu_custom_call.1} parent=1 // pred_region
      _
    $region33: #{tpu_custom_call.1} parent=1 // pred_fallthru
      _
    // Predicated region
    $region34: #{tpu_custom_call.1} parent=1 // pred_check
      _
    $region35: #{tpu_custom_call.1} parent=1 // pred_check_branch
      %62 = sbr.rel (0) target = $region37
    $region36: #{tpu_custom_call.1} parent=1 // pred_region
      %s64 = ssub.s32 16, 16
      %65 = vsyncadd [#allocation14], %s64
      %s67 = sshll.u32 [#allocation15], 4
      %s68 = int_to_ptr.vmem [resolvable:$true] %s67
      %70 = dma.hbm_to_vmem [thread:$0]  %s10, 16, %s68, [#allocation14]
    $region37: #{tpu_custom_call.1} parent=1 // pred_fallthru
      _
    // Predicated region
    $region38: #{tpu_custom_call.1} parent=1 // pred_check
      _
    $region39: #{tpu_custom_call.1} parent=1 // pred_check_branch
      %72 = sbr.rel (0) target = $region41
    $region40: #{tpu_custom_call.1} parent=1 // pred_region
      _
    $region41: #{tpu_custom_call.1} parent=1 // pred_fallthru
      _
    // Predicated region
    $region42: #{tpu_custom_call.1} parent=1 // pred_check
      _
    $region43: #{tpu_custom_call.1} parent=1 // pred_check_branch
      %74 = sbr.rel (0) target = $region45
    $region44: #{tpu_custom_call.1} parent=1 // pred_region
      %75 = dma.done [#allocation11], 256
    $region45: #{tpu_custom_call.1} parent=1 // pred_fallthru
      _
    // Predicated region
    $region46: #{tpu_custom_call.1} parent=1 // pred_check
      _
    $region47: #{tpu_custom_call.1} parent=1 // pred_check_branch
      %77 = sbr.rel (0) target = $region49
    $region48: #{tpu_custom_call.1} parent=1 // pred_region
      %78 = dma.done [#allocation14], 256
    $region49: #{tpu_custom_call.1} parent=1 // pred_fallthru
      _
    // Predicated region
    $region50: #{tpu_custom_call.1} parent=1 // pred_check
      _
    $region51: #{tpu_custom_call.1} parent=1 // pred_check_branch
      %80 = sbr.rel (0) target = $region53
    $region52: #{tpu_custom_call.1} parent=1 // pred_region
      %81 = dma.done [#allocation14], 16
    $region53: #{tpu_custom_call.1} parent=1 // pred_fallthru
      _
    // Predicated region
    $region54: #{tpu_custom_call.1} parent=1 // pred_check
      _
    $region55: #{tpu_custom_call.1} parent=1 // pred_check_branch
      %83 = sbr.rel target = $region57
    $region56: #{tpu_custom_call.1} parent=1 // pred_region
      %84 = sst [smem:[#allocation22]] [#allocation21]
      %85 = sst [smem:[#allocation23]] [#allocation20]
    $region57: #{tpu_custom_call.1} parent=1 // pred_fallthru
      _
    %87 = shalt.err (0)
    %s89 = sshll.u32 [#allocation6], 4
    %s90 = int_to_ptr.vmem [resolvable:$true] %s89
    %92 = dma.hbm_to_vmem [thread:$0]  %s7, 768, %s90, [#allocation9]
    %s93 = scalar_lea.sflag [#allocation9], 1
    // Predicated region
    $region58: #{tpu_custom_call.1} parent=1 // pred_check
      _
    $region59: #{tpu_custom_call.1} parent=1 // pred_check_branch
      %95 = sbr.rel target = $region61
    $region60: #{tpu_custom_call.1} parent=1 // pred_region
      %96 = sst [smem:[#allocation22]] [#allocation25]
      %97 = sst [smem:[#allocation23]] [#allocation24]
    $region61: #{tpu_custom_call.1} parent=1 // pred_fallthru
      _
    %99 = shalt.err (0)
    %s101 = sshll.u32 [#allocation7], 4
    %s102 = int_to_ptr.vmem [resolvable:$true] %s101
    %104 = dma.hbm_to_vmem [thread:$0]  %s9, 768, %s102, %s93
    %s105 = scalar_lea.sflag [#allocation9], 2
    %p107 = scmp.lt.u32.totalorder 32, 8
    %p108 = pneg %p107
    // Predicated region
    $region62: #{tpu_custom_call.1} parent=1 // pred_check
      _
    $region63: #{tpu_custom_call.1} parent=1 // pred_check_branch
      %110 = sbr.rel (%p107) target = $region65
    $region64: #{tpu_custom_call.1} parent=1 // pred_region
      %s126 = sand.u32 32, 7
      %p127 = scmp.eq.s32.totalorder %s126, 0
      // Predicated region
      $region77: #{tpu_custom_call.1} parent=64 // pred_check
        %p128 = pneg %p127
      $region78: #{tpu_custom_call.1} parent=64 // pred_check_branch
        %130 = sbr.rel (%p128) target = $region80
      $region79: #{tpu_custom_call.1} parent=64 // pred_region
        loop: start=0, step=1, limit=1
        $region81: #{tpu_custom_call.1} parent=79 // loop_pre_header
          _
        $region82: #{tpu_custom_call.1} parent=79 // loop_header
          %s132 = sphi 0, %s136
          %p133 = scmp.ge.s32.totalorder %s132, 1
          %s137 = sphi %s11, %s11
          %s138 = sphi [#allocation8], [#allocation8]
        $region83: #{tpu_custom_call.1} parent=79 // loop_header_branch
          %135 = sbr.rel (%p133) target = $region87
        $region84: #{tpu_custom_call.1} parent=79 // loop_body
          %v139 = vld [vmem:[%s137] sm:$0xff]
          %140 = vst [vmem:[%s138] sm:$0xff] %v139
          %v141 = vld [vmem:[%s137 + $0x8] sm:$0xff]
          %142 = vst [vmem:[%s138 + $0x8] sm:$0xff] %v141
          %v143 = vld [vmem:[%s137 + $0x10] sm:$0xff]
          %144 = vst [vmem:[%s138 + $0x10] sm:$0xff] %v143
          %v145 = vld [vmem:[%s137 + $0x18] sm:$0xff]
          %146 = vst [vmem:[%s138 + $0x18] sm:$0xff] %v145
        $region85: #{tpu_custom_call.1} parent=79 // loop_footer
          %s136 = sadd.s32 1, %s132
        $region86: #{tpu_custom_call.1} parent=79 // loop_footer_branch
          %131 = sbr.rel target = $region82
        $region87: #{tpu_custom_call.1} parent=79 // loop_exit
          _
      $region80: #{tpu_custom_call.1} parent=64 // pred_fallthru
        _
      %p147 = pneg %p127
      // Predicated region
      $region88: #{tpu_custom_call.1} parent=64 // pred_check
        _
      $region89: #{tpu_custom_call.1} parent=64 // pred_check_branch
        %149 = sbr.rel (%p127) target = $region91
      $region90: #{tpu_custom_call.1} parent=64 // pred_region
        %s150 = sand.u32 32, 7
      $region91: #{tpu_custom_call.1} parent=64 // pred_fallthru
        _
    $region65: #{tpu_custom_call.1} parent=1 // pred_fallthru
      _
    // Predicated region
    $region66: #{tpu_custom_call.1} parent=1 // pred_check
      %p111 = pneg %p107
    $region67: #{tpu_custom_call.1} parent=1 // pred_check_branch
      %113 = sbr.rel (%p111) target = $region69
    $region68: #{tpu_custom_call.1} parent=1 // pred_region
      %s114 = sshll.u32 1, 32
      %s115 = ssub.s32 %s114, 1
      loop: start=0, step=1, limit=1
      $region70: #{tpu_custom_call.1} parent=68 // loop_pre_header
        _
      $region71: #{tpu_custom_call.1} parent=68 // loop_header
        %s117 = sphi 0, %s121
        %p118 = scmp.ge.s32.totalorder %s117, 1
        %s122 = sphi %s11, %s11
        %s123 = sphi [#allocation8], [#allocation8]
      $region72: #{tpu_custom_call.1} parent=68 // loop_header_branch
        %120 = sbr.rel (%p118) target = $region76
      $region73: #{tpu_custom_call.1} parent=68 // loop_body
        %v124 = vld [vmem:[%s122] sm:%s115]
        %125 = vst [vmem:[%s123] sm:%s115] %v124
      $region74: #{tpu_custom_call.1} parent=68 // loop_footer
        %s121 = sadd.s32 1, %s117
      $region75: #{tpu_custom_call.1} parent=68 // loop_footer_branch
        %116 = sbr.rel target = $region71
      $region76: #{tpu_custom_call.1} parent=68 // loop_exit
        _
    $region69: #{tpu_custom_call.1} parent=1 // pred_fallthru
      _
    // Predicated region
    $region92: #{tpu_custom_call.1} parent=1 // pred_check
      _
    $region93: #{tpu_custom_call.1} parent=1 // pred_check_branch
      %153 = sbr.rel (0) target = $region95
    $region94: #{tpu_custom_call.1} parent=1 // pred_region
      %154 = vsyncadd %s105, 512
    $region95: #{tpu_custom_call.1} parent=1 // pred_fallthru
      _
    %v155 = vld [vmem:[%s0] sm:$0xff]
    %v156 = vld [vmem:[%s0 + $0x8] sm:$0xf]
    %v157 = vld [vmem:[%s1] sm:$0x1]
    %159 = vset.pattern.permute.xlu0 0
    %160 = vperm.xlu0 %159, %v155
    %v161 = vpop.permute.xlu0 %160
    %164 = vset.pattern.permute.xlu0 0
    %165 = vperm.xlu0 %164, %v156
    %v166 = vpop.permute.xlu0 %165
    %v169 = vlaneseq
    %v170 = vshrl.u32 %v169, 7
    %v171 = vsub.s32 0, %v170
    %v172 = vrot.slane %v157, %v171
    %v174 = vmul.f32 %v161, %v172
    %v175 = vmul.f32 %v166, %v172
    %v176 = vld [vmem:[%s2] sm:$0x1]
    %v178 = vlaneseq
    %v179 = vshrl.u32 %v178, 7
    %v180 = vsub.s32 0, %v179
    %v181 = vrot.slane %v176, %v180
    %v183 = vadd.f32 %v174, %v181
    %v184 = vadd.f32 %v175, %v181
    %vm185 = vcmask 523264
    %186 = vst.msk [vmem:[#allocation4] sm:$0xff] %vm185, %v183
    %vm187 = vcmask 519168
    %188 = vst.msk [vmem:[#allocation4 + $0x8] sm:$0xf] %vm187, %v184
    %v189 = vld [vmem:[%s4] sm:$0x1]
    %v191 = vlaneseq
    %v192 = vshrl.u32 %v191, 7
    %v193 = vsub.s32 0, %v192
    %v194 = vrot.slane %v189, %v193
    %v196 = vmul.f32 %v161, %v194
    %v197 = vmul.f32 %v166, %v194
    %v198 = vld [vmem:[%s5] sm:$0x1]
    %v200 = vlaneseq
    %v201 = vshrl.u32 %v200, 7
    %v202 = vsub.s32 0, %v201
    %v203 = vrot.slane %v198, %v202
    %v205 = vadd.f32 %v196, %v203
    %v206 = vadd.f32 %v197, %v203
    %207 = vst.msk [vmem:[#allocation5] sm:$0xff] %vm185, %v205
    %208 = vst.msk [vmem:[#allocation5 + $0x8] sm:$0xf] %vm187, %v206
    %v209 = vld [vmem:[#allocation10] sm:$0xff]
    %v210 = vld [vmem:[#allocation10 + $0x8] sm:$0xff]
    %v211 = vld [vmem:[#allocation13] sm:$0xff]
    %v212 = vld [vmem:[#allocation13 + $0x8] sm:$0xff]
    %v213 = vld [vmem:[#allocation4] sm:$0x1]
    %vm214 = vcmask 130048
    %v216 = vsel %vm214, 0.0, 0
    %218 = vmatprep.subr.mxu0 0.0
    %219 = vmatpush1.msra.mxu0 0.0
    %220 = vmatprep.subr.mxu0 0.0
    %221 = vmatpush1.msra.mxu0 0.0
    %222 = vmatprep.subr.mxu0 0.0
    %223 = vmatpush1.msra.mxu0 0.0
    %224 = vmatprep.subr.mxu0 0.0
    %225 = vmatpush1.msra.mxu0 0.0
    %226 = vmatprep.subr.mxu0 0.0
    %227 = vmatpush1.msra.mxu0 0.0
    %228 = vmatprep.subr.mxu0 0.0
    %229 = vmatpush1.msra.mxu0 0.0
    %230 = vmatprep.subr.mxu0 0.0
    %231 = vmatpush1.msra.mxu0 0.0
    %232 = vmatprep.subr.mxu0 0.0
    %233 = vmatpush1.msra.mxu0 0.0
    %234 = vmatprep.subr.mxu0 0.0
    %235 = vmatpush1.msra.mxu0 0.0
    %236 = vmatprep.subr.mxu0 0.0
    %237 = vmatpush1.msra.mxu0 0.0
    %238 = vmatprep.subr.mxu0 0.0
    %239 = vmatpush1.msra.mxu0 0.0
    %240 = vmatprep.subr.mxu0 0.0
    %241 = vmatpush1.msra.mxu0 0.0
    %242 = vmatprep.subr.mxu0 0.0
    %243 = vmatpush1.msra.mxu0 0.0
    %244 = vmatprep.subr.mxu0 0.0
    %245 = vmatpush1.msra.mxu0 0.0
    %246 = vmatprep.subr.mxu0 0.0
    %247 = vmatpush1.msra.mxu0 %v210
    %248 = vmatprep.subr.mxu0 0.0
    %249 = vmatpush1.msra.mxu0 %v209
    %250 = vmatprep.subr.mxu0 0.0
    %251 = vmatpush2.msra.mxu0 0.0
    %252 = vmatprep.subr.mxu0 0.0
    %253 = vmatpush2.msra.mxu0 0.0
    %254 = vmatprep.subr.mxu0 0.0
    %255 = vmatpush2.msra.mxu0 0.0
    %256 = vmatprep.subr.mxu0 0.0
    %257 = vmatpush2.msra.mxu0 0.0
    %258 = vmatprep.subr.mxu0 0.0
    %259 = vmatpush2.msra.mxu0 0.0
    %260 = vmatprep.subr.mxu0 0.0
    %261 = vmatpush2.msra.mxu0 0.0
    %262 = vmatprep.subr.mxu0 0.0
    %263 = vmatpush2.msra.mxu0 0.0
    %264 = vmatprep.subr.mxu0 0.0
    %265 = vmatpush2.msra.mxu0 0.0
    %266 = vmatprep.subr.mxu0 0.0
    %267 = vmatpush2.msra.mxu0 0.0
    %268 = vmatprep.subr.mxu0 0.0
    %269 = vmatpush2.msra.mxu0 0.0
    %270 = vmatprep.subr.mxu0 0.0
    %271 = vmatpush2.msra.mxu0 0.0
    %272 = vmatprep.subr.mxu0 0.0
    %273 = vmatpush2.msra.mxu0 0.0
    %274 = vmatprep.subr.mxu0 0.0
    %275 = vmatpush2.msra.mxu0 0.0
    %276 = vmatprep.subr.mxu0 0.0
    %277 = vmatpush2.msra.mxu0 0.0
    %278 = vmatprep.subr.mxu0 0.0
    %279 = vmatpush2.msra.mxu0 0.0
    %280 = vmatprep.subr.mxu0 0.0
    %281 = vmatpush2.msra.mxu0 0.0
    %282 = vmatprep.mubr.f32.mxu0 0.0
    %283 = vmatmul.mubr.f32.gmra.mxu0 %v216
    %v284 = vpop.f32.mrf.mxu0
    %v285 = vadd.f32 %v213, %v284
    %v286 = vpop.f32.mrf.mxu0
    %287 = vdwg.mxu0
    %v288 = vld [vmem:[#allocation5 + $0xb] sm:$0x1]
    %289 = vmatprep.subr.mxu0 0.0
    %290 = vmatpush1.msra.mxu0 0.0
    %291 = vmatprep.subr.mxu0 0.0
    %292 = vmatpush1.msra.mxu0 0.0
    %293 = vmatprep.subr.mxu0 0.0
    %294 = vmatpush1.msra.mxu0 0.0
    %295 = vmatprep.subr.mxu0 0.0
    %296 = vmatpush1.msra.mxu0 0.0
    %297 = vmatprep.subr.mxu0 0.0
    %298 = vmatpush1.msra.mxu0 0.0
    %299 = vmatprep.subr.mxu0 0.0
    %300 = vmatpush1.msra.mxu0 0.0
    %301 = vmatprep.subr.mxu0 0.0
    %302 = vmatpush1.msra.mxu0 0.0
    %303 = vmatprep.subr.mxu0 0.0
    %304 = vmatpush1.msra.mxu0 0.0
    %305 = vmatprep.subr.mxu0 0.0
    %306 = vmatpush1.msra.mxu0 0.0
    %307 = vmatprep.subr.mxu0 0.0
    %308 = vmatpush1.msra.mxu0 0.0
    %309 = vmatprep.subr.mxu0 0.0
    %310 = vmatpush1.msra.mxu0 0.0
    %311 = vmatprep.subr.mxu0 0.0
    %312 = vmatpush1.msra.mxu0 0.0
    %313 = vmatprep.subr.mxu0 0.0
    %314 = vmatpush1.msra.mxu0 0.0
    %315 = vmatprep.subr.mxu0 0.0
    %316 = vmatpush1.msra.mxu0 0.0
    %317 = vmatprep.subr.mxu0 0.0
    %318 = vmatpush1.msra.mxu0 %v212
    %319 = vmatprep.subr.mxu0 0.0
    %320 = vmatpush1.msra.mxu0 %v211
    %321 = vmatprep.subr.mxu0 0.0
    %322 = vmatpush2.msra.mxu0 0.0
    %323 = vmatprep.subr.mxu0 0.0
    %324 = vmatpush2.msra.mxu0 0.0
    %325 = vmatprep.subr.mxu0 0.0
    %326 = vmatpush2.msra.mxu0 0.0
    %327 = vmatprep.subr.mxu0 0.0
    %328 = vmatpush2.msra.mxu0 0.0
    %329 = vmatprep.subr.mxu0 0.0
    %330 = vmatpush2.msra.mxu0 0.0
    %331 = vmatprep.subr.mxu0 0.0
    %332 = vmatpush2.msra.mxu0 0.0
    %333 = vmatprep.subr.mxu0 0.0
    %334 = vmatpush2.msra.mxu0 0.0
    %335 = vmatprep.subr.mxu0 0.0
    %336 = vmatpush2.msra.mxu0 0.0
    %337 = vmatprep.subr.mxu0 0.0
    %338 = vmatpush2.msra.mxu0 0.0
    %339 = vmatprep.subr.mxu0 0.0
    %340 = vmatpush2.msra.mxu0 0.0
    %341 = vmatprep.subr.mxu0 0.0
    %342 = vmatpush2.msra.mxu0 0.0
    %343 = vmatprep.subr.mxu0 0.0
    %344 = vmatpush2.msra.mxu0 0.0
    %345 = vmatprep.subr.mxu0 0.0
    %346 = vmatpush2.msra.mxu0 0.0
    %347 = vmatprep.subr.mxu0 0.0
    %348 = vmatpush2.msra.mxu0 0.0
    %349 = vmatprep.subr.mxu0 0.0
    %350 = vmatpush2.msra.mxu0 0.0
    %351 = vmatprep.subr.mxu0 0.0
    %352 = vmatpush2.msra.mxu0 0.0
    %353 = vmatprep.mubr.f32.mxu0 0.0
    %354 = vmatmul.mubr.f32.gmra.mxu0 %v216
    %v355 = vpop.f32.mrf.mxu0
    %v356 = vadd.f32 %v288, %v355
    %v357 = vpop.f32.mrf.mxu0
    %358 = vdwg.mxu0
    %v359 = vxor.u32 %v285, 2147483648
    %v360 = vmul.f32 %v359, 1.442695
    %v361 = vpow.pop %v360
    %v362 = vadd.f32 %v361, 1.0
    %v363 = vrcp.pop %v362
    %v364 = vmul.f32 1.0, %v363
    %v365 = vtanh.pop %v285
    %v366 = vxor.u32 %v356, 2147483648
    %v367 = vmul.f32 %v366, 1.442695
    %v368 = vpow.pop %v367
    %v369 = vadd.f32 %v368, 1.0
    %v370 = vrcp.pop %v369
    %v371 = vmul.f32 1.0, %v370
    %v372 = vtanh.pop %v356
    %v373 = vmul.f32 %v364, 0.0
    %375 = vrot.lane.b32.xlu0 %v365, 80
    %v376 = vpop.permute.xlu0 %375
    %v378 = vmul.f32 %v364, %v376
    %380 = vrot.lane.b32.xlu0 %v378, 16
    %v381 = vpop.permute.xlu0 %380
    %v383 = vadd.f32 %v373, %v381
    %v384 = vtanh.pop %v383
    %386 = vrot.lane.b32.xlu0 %v384, 16
    %v387 = vpop.permute.xlu0 %386
    %v389 = vmul.f32 %v364, %v387
    %v390 = vmul.f32 %v371, 0.0
    %392 = vrot.lane.b32.xlu0 %v372, 80
    %v393 = vpop.permute.xlu0 %392
    %v395 = vmul.f32 %v371, %v393
    %397 = vrot.lane.b32.xlu0 %v395, 16
    %v398 = vpop.permute.xlu0 %397
    %v400 = vadd.f32 %v390, %v398
    %v401 = vtanh.pop %v400
    %403 = vrot.lane.b32.xlu0 %v401, 16
    %v404 = vpop.permute.xlu0 %403
    %v406 = vmul.f32 %v371, %v404
    %408 = vrot.lane.b32.xlu0 %v389, 96
    %v409 = vpop.permute.xlu0 %408
    %vm411 = vcmask 122880
    %412 = vst.msk [vmem:[#allocation2] sm:$0x1] %vm411, %v409
    %414 = vrot.lane.b32.xlu0 %v406, 96
    %v415 = vpop.permute.xlu0 %414
    %417 = vst.msk [vmem:[#allocation3 + $0xb] sm:$0x1] %vm411, %v415
    %v418 = vld [vmem:[#allocation4 + $0x1] sm:$0x1]
    %v419 = vsel %vm214, %v409, 0
    %421 = vmatprep.subr.mxu0 0.0
    %422 = vmatpush1.msra.mxu0 0.0
    %423 = vmatprep.subr.mxu0 0.0
    %424 = vmatpush1.msra.mxu0 0.0
    %425 = vmatprep.subr.mxu0 0.0
    %426 = vmatpush1.msra.mxu0 0.0
    %427 = vmatprep.subr.mxu0 0.0
    %428 = vmatpush1.msra.mxu0 0.0
    %429 = vmatprep.subr.mxu0 0.0
    %430 = vmatpush1.msra.mxu0 0.0
    %431 = vmatprep.subr.mxu0 0.0
    %432 = vmatpush1.msra.mxu0 0.0
    %433 = vmatprep.subr.mxu0 0.0
    %434 = vmatpush1.msra.mxu0 0.0
    %435 = vmatprep.subr.mxu0 0.0
    %436 = vmatpush1.msra.mxu0 0.0
    %437 = vmatprep.subr.mxu0 0.0
    %438 = vmatpush1.msra.mxu0 0.0
    %439 = vmatprep.subr.mxu0 0.0
    %440 = vmatpush1.msra.mxu0 0.0
    %441 = vmatprep.subr.mxu0 0.0
    %442 = vmatpush1.msra.mxu0 0.0
    %443 = vmatprep.subr.mxu0 0.0
    %444 = vmatpush1.msra.mxu0 0.0
    %445 = vmatprep.subr.mxu0 0.0
    %446 = vmatpush1.msra.mxu0 0.0
    %447 = vmatprep.subr.mxu0 0.0
    %448 = vmatpush1.msra.mxu0 0.0
    %449 = vmatprep.subr.mxu0 0.0
    %450 = vmatpush1.msra.mxu0 %v210
    %451 = vmatprep.subr.mxu0 0.0
    %452 = vmatpush1.msra.mxu0 %v209
    %453 = vmatprep.subr.mxu0 0.0
    %454 = vmatpush2.msra.mxu0 0.0
    %455 = vmatprep.subr.mxu0 0.0
    %456 = vmatpush2.msra.mxu0 0.0
    %457 = vmatprep.subr.mxu0 0.0
    %458 = vmatpush2.msra.mxu0 0.0
    %459 = vmatprep.subr.mxu0 0.0
    %460 = vmatpush2.msra.mxu0 0.0
    %461 = vmatprep.subr.mxu0 0.0
    %462 = vmatpush2.msra.mxu0 0.0
    %463 = vmatprep.subr.mxu0 0.0
    %464 = vmatpush2.msra.mxu0 0.0
    %465 = vmatprep.subr.mxu0 0.0
    %466 = vmatpush2.msra.mxu0 0.0
    %467 = vmatprep.subr.mxu0 0.0
    %468 = vmatpush2.msra.mxu0 0.0
    %469 = vmatprep.subr.mxu0 0.0
    %470 = vmatpush2.msra.mxu0 0.0
    %471 = vmatprep.subr.mxu0 0.0
    %472 = vmatpush2.msra.mxu0 0.0
    %473 = vmatprep.subr.mxu0 0.0
    %474 = vmatpush2.msra.mxu0 0.0
    %475 = vmatprep.subr.mxu0 0.0
    %476 = vmatpush2.msra.mxu0 0.0
    %477 = vmatprep.subr.mxu0 0.0
    %478 = vmatpush2.msra.mxu0 0.0
    %479 = vmatprep.subr.mxu0 0.0
    %480 = vmatpush2.msra.mxu0 0.0
    %481 = vmatprep.subr.mxu0 0.0
    %482 = vmatpush2.msra.mxu0 0.0
    %483 = vmatprep.subr.mxu0 0.0
    %484 = vmatpush2.msra.mxu0 0.0
    %485 = vmatprep.mubr.f32.mxu0 0.0
    %486 = vmatmul.mubr.f32.gmra.mxu0 %v419
    %v487 = vpop.f32.mrf.mxu0
    %v488 = vadd.f32 %v418, %v487
    %v489 = vpop.f32.mrf.mxu0
    %490 = vdwg.mxu0
    %v491 = vld [vmem:[#allocation5 + $0xa] sm:$0x1]
    %v492 = vsel %vm214, %v415, 0
    %494 = vmatprep.subr.mxu0 0.0
    %495 = vmatpush1.msra.mxu0 0.0
    %496 = vmatprep.subr.mxu0 0.0
    %497 = vmatpush1.msra.mxu0 0.0
    %498 = vmatprep.subr.mxu0 0.0
    %499 = vmatpush1.msra.mxu0 0.0
    %500 = vmatprep.subr.mxu0 0.0
    %501 = vmatpush1.msra.mxu0 0.0
    %502 = vmatprep.subr.mxu0 0.0
    %503 = vmatpush1.msra.mxu0 0.0
    %504 = vmatprep.subr.mxu0 0.0
    %505 = vmatpush1.msra.mxu0 0.0
    %506 = vmatprep.subr.mxu0 0.0
    %507 = vmatpush1.msra.mxu0 0.0
    %508 = vmatprep.subr.mxu0 0.0
    %509 = vmatpush1.msra.mxu0 0.0
    %510 = vmatprep.subr.mxu0 0.0
    %511 = vmatpush1.msra.mxu0 0.0
    %512 = vmatprep.subr.mxu0 0.0
    %513 = vmatpush1.msra.mxu0 0.0
    %514 = vmatprep.subr.mxu0 0.0
    %515 = vmatpush1.msra.mxu0 0.0
    %516 = vmatprep.subr.mxu0 0.0
    %517 = vmatpush1.msra.mxu0 0.0
    %518 = vmatprep.subr.mxu0 0.0
    %519 = vmatpush1.msra.mxu0 0.0
    %520 = vmatprep.subr.mxu0 0.0
    %521 = vmatpush1.msra.mxu0 0.0
    %522 = vmatprep.subr.mxu0 0.0
    %523 = vmatpush1.msra.mxu0 %v212
    %524 = vmatprep.subr.mxu0 0.0
    %525 = vmatpush1.msra.mxu0 %v211
    %526 = vmatprep.subr.mxu0 0.0
    %527 = vmatpush2.msra.mxu0 0.0
    %528 = vmatprep.subr.mxu0 0.0
    %529 = vmatpush2.msra.mxu0 0.0
    %530 = vmatprep.subr.mxu0 0.0
    %531 = vmatpush2.msra.mxu0 0.0
    %532 = vmatprep.subr.mxu0 0.0
    %533 = vmatpush2.msra.mxu0 0.0
    %534 = vmatprep.subr.mxu0 0.0
    %535 = vmatpush2.msra.mxu0 0.0
    %536 = vmatprep.subr.mxu0 0.0
    %537 = vmatpush2.msra.mxu0 0.0
    %538 = vmatprep.subr.mxu0 0.0
    %539 = vmatpush2.msra.mxu0 0.0
    %540 = vmatprep.subr.mxu0 0.0
    %541 = vmatpush2.msra.mxu0 0.0
    %542 = vmatprep.subr.mxu0 0.0
    %543 = vmatpush2.msra.mxu0 0.0
    %544 = vmatprep.subr.mxu0 0.0
    %545 = vmatpush2.msra.mxu0 0.0
    %546 = vmatprep.subr.mxu0 0.0
    %547 = vmatpush2.msra.mxu0 0.0
    %548 = vmatprep.subr.mxu0 0.0
    %549 = vmatpush2.msra.mxu0 0.0
    %550 = vmatprep.subr.mxu0 0.0
    %551 = vmatpush2.msra.mxu0 0.0
    %552 = vmatprep.subr.mxu0 0.0
    %553 = vmatpush2.msra.mxu0 0.0
    %554 = vmatprep.subr.mxu0 0.0
    %555 = vmatpush2.msra.mxu0 0.0
    %556 = vmatprep.subr.mxu0 0.0
    %557 = vmatpush2.msra.mxu0 0.0
    %558 = vmatprep.mubr.f32.mxu0 0.0
    %559 = vmatmul.mubr.f32.gmra.mxu0 %v492
    %v560 = vpop.f32.mrf.mxu0
    %v561 = vadd.f32 %v491, %v560
    %v562 = vpop.f32.mrf.mxu0
    %563 = vdwg.mxu0
    %v564 = vxor.u32 %v488, 2147483648
    %v565 = vmul.f32 %v564, 1.442695
    %v566 = vpow.pop %v565
    %v567 = vadd.f32 %v566, 1.0
    %v568 = vrcp.pop %v567
    %v569 = vmul.f32 1.0, %v568
    %v570 = vtanh.pop %v488
    %v571 = vxor.u32 %v561, 2147483648
    %v572 = vmul.f32 %v571, 1.442695
    %v573 = vpow.pop %v572
    %v574 = vadd.f32 %v573, 1.0
    %v575 = vrcp.pop %v574
    %v576 = vmul.f32 1.0, %v575
    %v577 = vtanh.pop %v561
    %v578 = vmul.f32 %v569, %v383
    %580 = vrot.lane.b32.xlu0 %v570, 80
    %v581 = vpop.permute.xlu0 %580
    %v583 = vmul.f32 %v569, %v581
    %585 = vrot.lane.b32.xlu0 %v583, 16
    %v586 = vpop.permute.xlu0 %585
    %v588 = vadd.f32 %v578, %v586
    %v589 = vtanh.pop %v588
    %591 = vrot.lane.b32.xlu0 %v589, 16
    %v592 = vpop.permute.xlu0 %591
    %v594 = vmul.f32 %v569, %v592
    %v595 = vmul.f32 %v576, %v400
    %597 = vrot.lane.b32.xlu0 %v577, 80
    %v598 = vpop.permute.xlu0 %597
    %v600 = vmul.f32 %v576, %v598
    %602 = vrot.lane.b32.xlu0 %v600, 16
    %v603 = vpop.permute.xlu0 %602
    %v605 = vadd.f32 %v595, %v603
    %v606 = vtanh.pop %v605
    %608 = vrot.lane.b32.xlu0 %v606, 16
    %v609 = vpop.permute.xlu0 %608
    %v611 = vmul.f32 %v576, %v609
    %613 = vrot.lane.b32.xlu0 %v594, 96
    %v614 = vpop.permute.xlu0 %613
    %616 = vst.msk [vmem:[#allocation2 + $0x1] sm:$0x1] %vm411, %v614
    %618 = vrot.lane.b32.xlu0 %v611, 96
    %v619 = vpop.permute.xlu0 %618
    %621 = vst.msk [vmem:[#allocation3 + $0xa] sm:$0x1] %vm411, %v619
    %v622 = vld [vmem:[#allocation4 + $0x2] sm:$0x1]
    %v623 = vsel %vm214, %v614, 0
    %625 = vmatprep.subr.mxu0 0.0
    %626 = vmatpush1.msra.mxu0 0.0
    %627 = vmatprep.subr.mxu0 0.0
    %628 = vmatpush1.msra.mxu0 0.0
    %629 = vmatprep.subr.mxu0 0.0
    %630 = vmatpush1.msra.mxu0 0.0
    %631 = vmatprep.subr.mxu0 0.0
    %632 = vmatpush1.msra.mxu0 0.0
    %633 = vmatprep.subr.mxu0 0.0
    %634 = vmatpush1.msra.mxu0 0.0
    %635 = vmatprep.subr.mxu0 0.0
    %636 = vmatpush1.msra.mxu0 0.0
    %637 = vmatprep.subr.mxu0 0.0
    %638 = vmatpush1.msra.mxu0 0.0
    %639 = vmatprep.subr.mxu0 0.0
    %640 = vmatpush1.msra.mxu0 0.0
    %641 = vmatprep.subr.mxu0 0.0
    %642 = vmatpush1.msra.mxu0 0.0
    %643 = vmatprep.subr.mxu0 0.0
    %644 = vmatpush1.msra.mxu0 0.0
    %645 = vmatprep.subr.mxu0 0.0
    %646 = vmatpush1.msra.mxu0 0.0
    %647 = vmatprep.subr.mxu0 0.0
    %648 = vmatpush1.msra.mxu0 0.0
    %649 = vmatprep.subr.mxu0 0.0
    %650 = vmatpush1.msra.mxu0 0.0
    %651 = vmatprep.subr.mxu0 0.0
    %652 = vmatpush1.msra.mxu0 0.0
    %653 = vmatprep.subr.mxu0 0.0
    %654 = vmatpush1.msra.mxu0 %v210
    %655 = vmatprep.subr.mxu0 0.0
    %656 = vmatpush1.msra.mxu0 %v209
    %657 = vmatprep.subr.mxu0 0.0
    %658 = vmatpush2.msra.mxu0 0.0
    %659 = vmatprep.subr.mxu0 0.0
    %660 = vmatpush2.msra.mxu0 0.0
    %661 = vmatprep.subr.mxu0 0.0
    %662 = vmatpush2.msra.mxu0 0.0
    %663 = vmatprep.subr.mxu0 0.0
    %664 = vmatpush2.msra.mxu0 0.0
    %665 = vmatprep.subr.mxu0 0.0
    %666 = vmatpush2.msra.mxu0 0.0
    %667 = vmatprep.subr.mxu0 0.0
    %668 = vmatpush2.msra.mxu0 0.0
    %669 = vmatprep.subr.mxu0 0.0
    %670 = vmatpush2.msra.mxu0 0.0
    %671 = vmatprep.subr.mxu0 0.0
    %672 = vmatpush2.msra.mxu0 0.0
    %673 = vmatprep.subr.mxu0 0.0
    %674 = vmatpush2.msra.mxu0 0.0
    %675 = vmatprep.subr.mxu0 0.0
    %676 = vmatpush2.msra.mxu0 0.0
    %677 = vmatprep.subr.mxu0 0.0
    %678 = vmatpush2.msra.mxu0 0.0
    %679 = vmatprep.subr.mxu0 0.0
    %680 = vmatpush2.msra.mxu0 0.0
    %681 = vmatprep.subr.mxu0 0.0
    %682 = vmatpush2.msra.mxu0 0.0
    %683 = vmatprep.subr.mxu0 0.0
    %684 = vmatpush2.msra.mxu0 0.0
    %685 = vmatprep.subr.mxu0 0.0
    %686 = vmatpush2.msra.mxu0 0.0
    %687 = vmatprep.subr.mxu0 0.0
    %688 = vmatpush2.msra.mxu0 0.0
    %689 = vmatprep.mubr.f32.mxu0 0.0
    %690 = vmatmul.mubr.f32.gmra.mxu0 %v623
    %v691 = vpop.f32.mrf.mxu0
    %v692 = vadd.f32 %v622, %v691
    %v693 = vpop.f32.mrf.mxu0
    %694 = vdwg.mxu0
    %v695 = vld [vmem:[#allocation5 + $0x9] sm:$0x1]
    %v696 = vsel %vm214, %v619, 0
    %698 = vmatprep.subr.mxu0 0.0
    %699 = vmatpush1.msra.mxu0 0.0
    %700 = vmatprep.subr.mxu0 0.0
    %701 = vmatpush1.msra.mxu0 0.0
    %702 = vmatprep.subr.mxu0 0.0
    %703 = vmatpush1.msra.mxu0 0.0
    %704 = vmatprep.subr.mxu0 0.0
    %705 = vmatpush1.msra.mxu0 0.0
    %706 = vmatprep.subr.mxu0 0.0
    %707 = vmatpush1.msra.mxu0 0.0
    %708 = vmatprep.subr.mxu0 0.0
    %709 = vmatpush1.msra.mxu0 0.0
    %710 = vmatprep.subr.mxu0 0.0
    %711 = vmatpush1.msra.mxu0 0.0
    %712 = vmatprep.subr.mxu0 0.0
    %713 = vmatpush1.msra.mxu0 0.0
    %714 = vmatprep.subr.mxu0 0.0
    %715 = vmatpush1.msra.mxu0 0.0
    %716 = vmatprep.subr.mxu0 0.0
    %717 = vmatpush1.msra.mxu0 0.0
    %718 = vmatprep.subr.mxu0 0.0
    %719 = vmatpush1.msra.mxu0 0.0
    %720 = vmatprep.subr.mxu0 0.0
    %721 = vmatpush1.msra.mxu0 0.0
    %722 = vmatprep.subr.mxu0 0.0
    %723 = vmatpush1.msra.mxu0 0.0
    %724 = vmatprep.subr.mxu0 0.0
    %725 = vmatpush1.msra.mxu0 0.0
    %726 = vmatprep.subr.mxu0 0.0
    %727 = vmatpush1.msra.mxu0 %v212
    %728 = vmatprep.subr.mxu0 0.0
    %729 = vmatpush1.msra.mxu0 %v211
    %730 = vmatprep.subr.mxu0 0.0
    %731 = vmatpush2.msra.mxu0 0.0
    %732 = vmatprep.subr.mxu0 0.0
    %733 = vmatpush2.msra.mxu0 0.0
    %734 = vmatprep.subr.mxu0 0.0
    %735 = vmatpush2.msra.mxu0 0.0
    %736 = vmatprep.subr.mxu0 0.0
    %737 = vmatpush2.msra.mxu0 0.0
    %738 = vmatprep.subr.mxu0 0.0
    %739 = vmatpush2.msra.mxu0 0.0
    %740 = vmatprep.subr.mxu0 0.0
    %741 = vmatpush2.msra.mxu0 0.0
    %742 = vmatprep.subr.mxu0 0.0
    %743 = vmatpush2.msra.mxu0 0.0
    %744 = vmatprep.subr.mxu0 0.0
    %745 = vmatpush2.msra.mxu0 0.0
    %746 = vmatprep.subr.mxu0 0.0
    %747 = vmatpush2.msra.mxu0 0.0
    %748 = vmatprep.subr.mxu0 0.0
    %749 = vmatpush2.msra.mxu0 0.0
    %750 = vmatprep.subr.mxu0 0.0
    %751 = vmatpush2.msra.mxu0 0.0
    %752 = vmatprep.subr.mxu0 0.0
    %753 = vmatpush2.msra.mxu0 0.0
    %754 = vmatprep.subr.mxu0 0.0
    %755 = vmatpush2.msra.mxu0 0.0
    %756 = vmatprep.subr.mxu0 0.0
    %757 = vmatpush2.msra.mxu0 0.0
    %758 = vmatprep.subr.mxu0 0.0
    %759 = vmatpush2.msra.mxu0 0.0
    %760 = vmatprep.subr.mxu0 0.0
    %761 = vmatpush2.msra.mxu0 0.0
    %762 = vmatprep.mubr.f32.mxu0 0.0
    %763 = vmatmul.mubr.f32.gmra.mxu0 %v696
    %v764 = vpop.f32.mrf.mxu0
    %v765 = vadd.f32 %v695, %v764
    %v766 = vpop.f32.mrf.mxu0
    %767 = vdwg.mxu0
    %v768 = vxor.u32 %v692, 2147483648
    %v769 = vmul.f32 %v768, 1.442695
    %v770 = vpow.pop %v769
    %v771 = vadd.f32 %v770, 1.0
    %v772 = vrcp.pop %v771
    %v773 = vmul.f32 1.0, %v772
    %v774 = vtanh.pop %v692
    %v775 = vxor.u32 %v765, 2147483648
    %v776 = vmul.f32 %v775, 1.442695
    %v777 = vpow.pop %v776
    %v778 = vadd.f32 %v777, 1.0
    %v779 = vrcp.pop %v778
    %v780 = vmul.f32 1.0, %v779
    %v781 = vtanh.pop %v765
    %v782 = vmul.f32 %v773, %v588
    %784 = vrot.lane.b32.xlu0 %v774, 80
    %v785 = vpop.permute.xlu0 %784
    %v787 = vmul.f32 %v773, %v785
    %789 = vrot.lane.b32.xlu0 %v787, 16
    %v790 = vpop.permute.xlu0 %789
    %v792 = vadd.f32 %v782, %v790
    %v793 = vtanh.pop %v792
    %795 = vrot.lane.b32.xlu0 %v793, 16
    %v796 = vpop.permute.xlu0 %795
    %v798 = vmul.f32 %v773, %v796
    %v799 = vmul.f32 %v780, %v605
    %801 = vrot.lane.b32.xlu0 %v781, 80
    %v802 = vpop.permute.xlu0 %801
    %v804 = vmul.f32 %v780, %v802
    %806 = vrot.lane.b32.xlu0 %v804, 16
    %v807 = vpop.permute.xlu0 %806
    %v809 = vadd.f32 %v799, %v807
    %v810 = vtanh.pop %v809
    %812 = vrot.lane.b32.xlu0 %v810, 16
    %v813 = vpop.permute.xlu0 %812
    %v815 = vmul.f32 %v780, %v813
    %817 = vrot.lane.b32.xlu0 %v798, 96
    %v818 = vpop.permute.xlu0 %817
    %820 = vst.msk [vmem:[#allocation2 + $0x2] sm:$0x1] %vm411, %v818
    %822 = vrot.lane.b32.xlu0 %v815, 96
    %v823 = vpop.permute.xlu0 %822
    %825 = vst.msk [vmem:[#allocation3 + $0x9] sm:$0x1] %vm411, %v823
    %v826 = vld [vmem:[#allocation4 + $0x3] sm:$0x1]
    %v827 = vsel %vm214, %v818, 0
    %829 = vmatprep.subr.mxu0 0.0
    %830 = vmatpush1.msra.mxu0 0.0
    %831 = vmatprep.subr.mxu0 0.0
    %832 = vmatpush1.msra.mxu0 0.0
    %833 = vmatprep.subr.mxu0 0.0
    %834 = vmatpush1.msra.mxu0 0.0
    %835 = vmatprep.subr.mxu0 0.0
    %836 = vmatpush1.msra.mxu0 0.0
    %837 = vmatprep.subr.mxu0 0.0
    %838 = vmatpush1.msra.mxu0 0.0
    %839 = vmatprep.subr.mxu0 0.0
    %840 = vmatpush1.msra.mxu0 0.0
    %841 = vmatprep.subr.mxu0 0.0
    %842 = vmatpush1.msra.mxu0 0.0
    %843 = vmatprep.subr.mxu0 0.0
    %844 = vmatpush1.msra.mxu0 0.0
    %845 = vmatprep.subr.mxu0 0.0
    %846 = vmatpush1.msra.mxu0 0.0
    %847 = vmatprep.subr.mxu0 0.0
    %848 = vmatpush1.msra.mxu0 0.0
    %849 = vmatprep.subr.mxu0 0.0
    %850 = vmatpush1.msra.mxu0 0.0
    %851 = vmatprep.subr.mxu0 0.0
    %852 = vmatpush1.msra.mxu0 0.0
    %853 = vmatprep.subr.mxu0 0.0
    %854 = vmatpush1.msra.mxu0 0.0
    %855 = vmatprep.subr.mxu0 0.0
    %856 = vmatpush1.msra.mxu0 0.0
    %857 = vmatprep.subr.mxu0 0.0
    %858 = vmatpush1.msra.mxu0 %v210
    %859 = vmatprep.subr.mxu0 0.0
    %860 = vmatpush1.msra.mxu0 %v209
    %861 = vmatprep.subr.mxu0 0.0
    %862 = vmatpush2.msra.mxu0 0.0
    %863 = vmatprep.subr.mxu0 0.0
    %864 = vmatpush2.msra.mxu0 0.0
    %865 = vmatprep.subr.mxu0 0.0
    %866 = vmatpush2.msra.mxu0 0.0
    %867 = vmatprep.subr.mxu0 0.0
    %868 = vmatpush2.msra.mxu0 0.0
    %869 = vmatprep.subr.mxu0 0.0
    %870 = vmatpush2.msra.mxu0 0.0
    %871 = vmatprep.subr.mxu0 0.0
    %872 = vmatpush2.msra.mxu0 0.0
    %873 = vmatprep.subr.mxu0 0.0
    %874 = vmatpush2.msra.mxu0 0.0
    %875 = vmatprep.subr.mxu0 0.0
    %876 = vmatpush2.msra.mxu0 0.0
    %877 = vmatprep.subr.mxu0 0.0
    %878 = vmatpush2.msra.mxu0 0.0
    %879 = vmatprep.subr.mxu0 0.0
    %880 = vmatpush2.msra.mxu0 0.0
    %881 = vmatprep.subr.mxu0 0.0
    %882 = vmatpush2.msra.mxu0 0.0
    %883 = vmatprep.subr.mxu0 0.0
    %884 = vmatpush2.msra.mxu0 0.0
    %885 = vmatprep.subr.mxu0 0.0
    %886 = vmatpush2.msra.mxu0 0.0
    %887 = vmatprep.subr.mxu0 0.0
    %888 = vmatpush2.msra.mxu0 0.0
    %889 = vmatprep.subr.mxu0 0.0
    %890 = vmatpush2.msra.mxu0 0.0
    %891 = vmatprep.subr.mxu0 0.0
    %892 = vmatpush2.msra.mxu0 0.0
    %893 = vmatprep.mubr.f32.mxu0 0.0
    %894 = vmatmul.mubr.f32.gmra.mxu0 %v827
    %v895 = vpop.f32.mrf.mxu0
    %v896 = vadd.f32 %v826, %v895
    %v897 = vpop.f32.mrf.mxu0
    %898 = vdwg.mxu0
    %v899 = vld [vmem:[#allocation5 + $0x8] sm:$0x1]
    %v900 = vsel %vm214, %v823, 0
    %902 = vmatprep.subr.mxu0 0.0
    %903 = vmatpush1.msra.mxu0 0.0
    %904 = vmatprep.subr.mxu0 0.0
    %905 = vmatpush1.msra.mxu0 0.0
    %906 = vmatprep.subr.mxu0 0.0
    %907 = vmatpush1.msra.mxu0 0.0
    %908 = vmatprep.subr.mxu0 0.0
    %909 = vmatpush1.msra.mxu0 0.0
    %910 = vmatprep.subr.mxu0 0.0
    %911 = vmatpush1.msra.mxu0 0.0
    %912 = vmatprep.subr.mxu0 0.0
    %913 = vmatpush1.msra.mxu0 0.0
    %914 = vmatprep.subr.mxu0 0.0
    %915 = vmatpush1.msra.mxu0 0.0
    %916 = vmatprep.subr.mxu0 0.0
    %917 = vmatpush1.msra.mxu0 0.0
    %918 = vmatprep.subr.mxu0 0.0
    %919 = vmatpush1.msra.mxu0 0.0
    %920 = vmatprep.subr.mxu0 0.0
    %921 = vmatpush1.msra.mxu0 0.0
    %922 = vmatprep.subr.mxu0 0.0
    %923 = vmatpush1.msra.mxu0 0.0
    %924 = vmatprep.subr.mxu0 0.0
    %925 = vmatpush1.msra.mxu0 0.0
    %926 = vmatprep.subr.mxu0 0.0
    %927 = vmatpush1.msra.mxu0 0.0
    %928 = vmatprep.subr.mxu0 0.0
    %929 = vmatpush1.msra.mxu0 0.0
    %930 = vmatprep.subr.mxu0 0.0
    %931 = vmatpush1.msra.mxu0 %v212
    %932 = vmatprep.subr.mxu0 0.0
    %933 = vmatpush1.msra.mxu0 %v211
    %934 = vmatprep.subr.mxu0 0.0
    %935 = vmatpush2.msra.mxu0 0.0
    %936 = vmatprep.subr.mxu0 0.0
    %937 = vmatpush2.msra.mxu0 0.0
    %938 = vmatprep.subr.mxu0 0.0
    %939 = vmatpush2.msra.mxu0 0.0
    %940 = vmatprep.subr.mxu0 0.0
    %941 = vmatpush2.msra.mxu0 0.0
    %942 = vmatprep.subr.mxu0 0.0
    %943 = vmatpush2.msra.mxu0 0.0
    %944 = vmatprep.subr.mxu0 0.0
    %945 = vmatpush2.msra.mxu0 0.0
    %946 = vmatprep.subr.mxu0 0.0
    %947 = vmatpush2.msra.mxu0 0.0
    %948 = vmatprep.subr.mxu0 0.0
    %949 = vmatpush2.msra.mxu0 0.0
    %950 = vmatprep.subr.mxu0 0.0
    %951 = vmatpush2.msra.mxu0 0.0
    %952 = vmatprep.subr.mxu0 0.0
    %953 = vmatpush2.msra.mxu0 0.0
    %954 = vmatprep.subr.mxu0 0.0
    %955 = vmatpush2.msra.mxu0 0.0
    %956 = vmatprep.subr.mxu0 0.0
    %957 = vmatpush2.msra.mxu0 0.0
    %958 = vmatprep.subr.mxu0 0.0
    %959 = vmatpush2.msra.mxu0 0.0
    %960 = vmatprep.subr.mxu0 0.0
    %961 = vmatpush2.msra.mxu0 0.0
    %962 = vmatprep.subr.mxu0 0.0
    %963 = vmatpush2.msra.mxu0 0.0
    %964 = vmatprep.subr.mxu0 0.0
    %965 = vmatpush2.msra.mxu0 0.0
    %966 = vmatprep.mubr.f32.mxu0 0.0
    %967 = vmatmul.mubr.f32.gmra.mxu0 %v900
    %v968 = vpop.f32.mrf.mxu0
    %v969 = vadd.f32 %v899, %v968
    %v970 = vpop.f32.mrf.mxu0
    %971 = vdwg.mxu0
    %v972 = vxor.u32 %v896, 2147483648
    %v973 = vmul.f32 %v972, 1.442695
    %v974 = vpow.pop %v973
    %v975 = vadd.f32 %v974, 1.0
    %v976 = vrcp.pop %v975
    %v977 = vmul.f32 1.0, %v976
    %v978 = vtanh.pop %v896
    %v979 = vxor.u32 %v969, 2147483648
    %v980 = vmul.f32 %v979, 1.442695
    %v981 = vpow.pop %v980
    %v982 = vadd.f32 %v981, 1.0
    %v983 = vrcp.pop %v982
    %v984 = vmul.f32 1.0, %v983
    %v985 = vtanh.pop %v969
    %v986 = vmul.f32 %v977, %v792
    %988 = vrot.lane.b32.xlu0 %v978, 80
    %v989 = vpop.permute.xlu0 %988
    %v991 = vmul.f32 %v977, %v989
    %993 = vrot.lane.b32.xlu0 %v991, 16
    %v994 = vpop.permute.xlu0 %993
    %v996 = vadd.f32 %v986, %v994
    %v997 = vtanh.pop %v996
    %999 = vrot.lane.b32.xlu0 %v997, 16
    %v1000 = vpop.permute.xlu0 %999
    %v1002 = vmul.f32 %v977, %v1000
    %v1003 = vmul.f32 %v984, %v809
    %1005 = vrot.lane.b32.xlu0 %v985, 80
    %v1006 = vpop.permute.xlu0 %1005
    %v1008 = vmul.f32 %v984, %v1006
    %1010 = vrot.lane.b32.xlu0 %v1008, 16
    %v1011 = vpop.permute.xlu0 %1010
    %v1013 = vadd.f32 %v1003, %v1011
    %v1014 = vtanh.pop %v1013
    %1016 = vrot.lane.b32.xlu0 %v1014, 16
    %v1017 = vpop.permute.xlu0 %1016
    %v1019 = vmul.f32 %v984, %v1017
    %1021 = vrot.lane.b32.xlu0 %v1002, 96
    %v1022 = vpop.permute.xlu0 %1021
    %1024 = vst.msk [vmem:[#allocation2 + $0x3] sm:$0x1] %vm411, %v1022
    %1026 = vrot.lane.b32.xlu0 %v1019, 96
    %v1027 = vpop.permute.xlu0 %1026
    %1029 = vst.msk [vmem:[#allocation3 + $0x8] sm:$0x1] %vm411, %v1027
    %v1030 = vld [vmem:[#allocation4 + $0x4] sm:$0x1]
    %v1031 = vsel %vm214, %v1022, 0
    %1033 = vmatprep.subr.mxu0 0.0
    %1034 = vmatpush1.msra.mxu0 0.0
    %1035 = vmatprep.subr.mxu0 0.0
    %1036 = vmatpush1.msra.mxu0 0.0
    %1037 = vmatprep.subr.mxu0 0.0
    %1038 = vmatpush1.msra.mxu0 0.0
    %1039 = vmatprep.subr.mxu0 0.0
    %1040 = vmatpush1.msra.mxu0 0.0
    %1041 = vmatprep.subr.mxu0 0.0
    %1042 = vmatpush1.msra.mxu0 0.0
    %1043 = vmatprep.subr.mxu0 0.0
    %1044 = vmatpush1.msra.mxu0 0.0
    %1045 = vmatprep.subr.mxu0 0.0
    %1046 = vmatpush1.msra.mxu0 0.0
    %1047 = vmatprep.subr.mxu0 0.0
    %1048 = vmatpush1.msra.mxu0 0.0
    %1049 = vmatprep.subr.mxu0 0.0
    %1050 = vmatpush1.msra.mxu0 0.0
    %1051 = vmatprep.subr.mxu0 0.0
    %1052 = vmatpush1.msra.mxu0 0.0
    %1053 = vmatprep.subr.mxu0 0.0
    %1054 = vmatpush1.msra.mxu0 0.0
    %1055 = vmatprep.subr.mxu0 0.0
    %1056 = vmatpush1.msra.mxu0 0.0
    %1057 = vmatprep.subr.mxu0 0.0
    %1058 = vmatpush1.msra.mxu0 0.0
    %1059 = vmatprep.subr.mxu0 0.0
    %1060 = vmatpush1.msra.mxu0 0.0
    %1061 = vmatprep.subr.mxu0 0.0
    %1062 = vmatpush1.msra.mxu0 %v210
    %1063 = vmatprep.subr.mxu0 0.0
    %1064 = vmatpush1.msra.mxu0 %v209
    %1065 = vmatprep.subr.mxu0 0.0
    %1066 = vmatpush2.msra.mxu0 0.0
    %1067 = vmatprep.subr.mxu0 0.0
    %1068 = vmatpush2.msra.mxu0 0.0
    %1069 = vmatprep.subr.mxu0 0.0
    %1070 = vmatpush2.msra.mxu0 0.0
    %1071 = vmatprep.subr.mxu0 0.0
    %1072 = vmatpush2.msra.mxu0 0.0
    %1073 = vmatprep.subr.mxu0 0.0
    %1074 = vmatpush2.msra.mxu0 0.0
    %1075 = vmatprep.subr.mxu0 0.0
    %1076 = vmatpush2.msra.mxu0 0.0
    %1077 = vmatprep.subr.mxu0 0.0
    %1078 = vmatpush2.msra.mxu0 0.0
    %1079 = vmatprep.subr.mxu0 0.0
    %1080 = vmatpush2.msra.mxu0 0.0
    %1081 = vmatprep.subr.mxu0 0.0
    %1082 = vmatpush2.msra.mxu0 0.0
    %1083 = vmatprep.subr.mxu0 0.0
    %1084 = vmatpush2.msra.mxu0 0.0
    %1085 = vmatprep.subr.mxu0 0.0
    %1086 = vmatpush2.msra.mxu0 0.0
    %1087 = vmatprep.subr.mxu0 0.0
    %1088 = vmatpush2.msra.mxu0 0.0
    %1089 = vmatprep.subr.mxu0 0.0
    %1090 = vmatpush2.msra.mxu0 0.0
    %1091 = vmatprep.subr.mxu0 0.0
    %1092 = vmatpush2.msra.mxu0 0.0
    %1093 = vmatprep.subr.mxu0 0.0
    %1094 = vmatpush2.msra.mxu0 0.0
    %1095 = vmatprep.subr.mxu0 0.0
    %1096 = vmatpush2.msra.mxu0 0.0
    %1097 = vmatprep.mubr.f32.mxu0 0.0
    %1098 = vmatmul.mubr.f32.gmra.mxu0 %v1031
    %v1099 = vpop.f32.mrf.mxu0
    %v1100 = vadd.f32 %v1030, %v1099
    %v1101 = vpop.f32.mrf.mxu0
    %1102 = vdwg.mxu0
    %v1103 = vld [vmem:[#allocation5 + $0x7] sm:$0x1]
    %v1104 = vsel %vm214, %v1027, 0
    %1106 = vmatprep.subr.mxu0 0.0
    %1107 = vmatpush1.msra.mxu0 0.0
    %1108 = vmatprep.subr.mxu0 0.0
    %1109 = vmatpush1.msra.mxu0 0.0
    %1110 = vmatprep.subr.mxu0 0.0
    %1111 = vmatpush1.msra.mxu0 0.0
    %1112 = vmatprep.subr.mxu0 0.0
    %1113 = vmatpush1.msra.mxu0 0.0
    %1114 = vmatprep.subr.mxu0 0.0
    %1115 = vmatpush1.msra.mxu0 0.0
    %1116 = vmatprep.subr.mxu0 0.0
    %1117 = vmatpush1.msra.mxu0 0.0
    %1118 = vmatprep.subr.mxu0 0.0
    %1119 = vmatpush1.msra.mxu0 0.0
    %1120 = vmatprep.subr.mxu0 0.0
    %1121 = vmatpush1.msra.mxu0 0.0
    %1122 = vmatprep.subr.mxu0 0.0
    %1123 = vmatpush1.msra.mxu0 0.0
    %1124 = vmatprep.subr.mxu0 0.0
    %1125 = vmatpush1.msra.mxu0 0.0
    %1126 = vmatprep.subr.mxu0 0.0
    %1127 = vmatpush1.msra.mxu0 0.0
    %1128 = vmatprep.subr.mxu0 0.0
    %1129 = vmatpush1.msra.mxu0 0.0
    %1130 = vmatprep.subr.mxu0 0.0
    %1131 = vmatpush1.msra.mxu0 0.0
    %1132 = vmatprep.subr.mxu0 0.0
    %1133 = vmatpush1.msra.mxu0 0.0
    %1134 = vmatprep.subr.mxu0 0.0
    %1135 = vmatpush1.msra.mxu0 %v212
    %1136 = vmatprep.subr.mxu0 0.0
    %1137 = vmatpush1.msra.mxu0 %v211
    %1138 = vmatprep.subr.mxu0 0.0
    %1139 = vmatpush2.msra.mxu0 0.0
    %1140 = vmatprep.subr.mxu0 0.0
    %1141 = vmatpush2.msra.mxu0 0.0
    %1142 = vmatprep.subr.mxu0 0.0
    %1143 = vmatpush2.msra.mxu0 0.0
    %1144 = vmatprep.subr.mxu0 0.0
    %1145 = vmatpush2.msra.mxu0 0.0
    %1146 = vmatprep.subr.mxu0 0.0
    %1147 = vmatpush2.msra.mxu0 0.0
    %1148 = vmatprep.subr.mxu0 0.0
    %1149 = vmatpush2.msra.mxu0 0.0
    %1150 = vmatprep.subr.mxu0 0.0
    %1151 = vmatpush2.msra.mxu0 0.0
    %1152 = vmatprep.subr.mxu0 0.0
    %1153 = vmatpush2.msra.mxu0 0.0
    %1154 = vmatprep.subr.mxu0 0.0
    %1155 = vmatpush2.msra.mxu0 0.0
    %1156 = vmatprep.subr.mxu0 0.0
    %1157 = vmatpush2.msra.mxu0 0.0
    %1158 = vmatprep.subr.mxu0 0.0
    %1159 = vmatpush2.msra.mxu0 0.0
    %1160 = vmatprep.subr.mxu0 0.0
    %1161 = vmatpush2.msra.mxu0 0.0
    %1162 = vmatprep.subr.mxu0 0.0
    %1163 = vmatpush2.msra.mxu0 0.0
    %1164 = vmatprep.subr.mxu0 0.0
    %1165 = vmatpush2.msra.mxu0 0.0
    %1166 = vmatprep.subr.mxu0 0.0
    %1167 = vmatpush2.msra.mxu0 0.0
    %1168 = vmatprep.subr.mxu0 0.0
    %1169 = vmatpush2.msra.mxu0 0.0
    %1170 = vmatprep.mubr.f32.mxu0 0.0
    %1171 = vmatmul.mubr.f32.gmra.mxu0 %v1104
    %v1172 = vpop.f32.mrf.mxu0
    %v1173 = vadd.f32 %v1103, %v1172
    %v1174 = vpop.f32.mrf.mxu0
    %1175 = vdwg.mxu0
    %v1176 = vxor.u32 %v1100, 2147483648
    %v1177 = vmul.f32 %v1176, 1.442695
    %v1178 = vpow.pop %v1177
    %v1179 = vadd.f32 %v1178, 1.0
    %v1180 = vrcp.pop %v1179
    %v1181 = vmul.f32 1.0, %v1180
    %v1182 = vtanh.pop %v1100
    %v1183 = vxor.u32 %v1173, 2147483648
    %v1184 = vmul.f32 %v1183, 1.442695
    %v1185 = vpow.pop %v1184
    %v1186 = vadd.f32 %v1185, 1.0
    %v1187 = vrcp.pop %v1186
    %v1188 = vmul.f32 1.0, %v1187
    %v1189 = vtanh.pop %v1173
    %v1190 = vmul.f32 %v1181, %v996
    %1192 = vrot.lane.b32.xlu0 %v1182, 80
    %v1193 = vpop.permute.xlu0 %1192
    %v1195 = vmul.f32 %v1181, %v1193
    %1197 = vrot.lane.b32.xlu0 %v1195, 16
    %v1198 = vpop.permute.xlu0 %1197
    %v1200 = vadd.f32 %v1190, %v1198
    %v1201 = vtanh.pop %v1200
    %1203 = vrot.lane.b32.xlu0 %v1201, 16
    %v1204 = vpop.permute.xlu0 %1203
    %v1206 = vmul.f32 %v1181, %v1204
    %v1207 = vmul.f32 %v1188, %v1013
    %1209 = vrot.lane.b32.xlu0 %v1189, 80
    %v1210 = vpop.permute.xlu0 %1209
    %v1212 = vmul.f32 %v1188, %v1210
    %1214 = vrot.lane.b32.xlu0 %v1212, 16
    %v1215 = vpop.permute.xlu0 %1214
    %v1217 = vadd.f32 %v1207, %v1215
    %v1218 = vtanh.pop %v1217
    %1220 = vrot.lane.b32.xlu0 %v1218, 16
    %v1221 = vpop.permute.xlu0 %1220
    %v1223 = vmul.f32 %v1188, %v1221
    %1225 = vrot.lane.b32.xlu0 %v1206, 96
    %v1226 = vpop.permute.xlu0 %1225
    %1228 = vst.msk [vmem:[#allocation2 + $0x4] sm:$0x1] %vm411, %v1226
    %1230 = vrot.lane.b32.xlu0 %v1223, 96
    %v1231 = vpop.permute.xlu0 %1230
    %1233 = vst.msk [vmem:[#allocation3 + $0x7] sm:$0x1] %vm411, %v1231
    %v1234 = vld [vmem:[#allocation4 + $0x5] sm:$0x1]
    %v1235 = vsel %vm214, %v1226, 0
    %1237 = vmatprep.subr.mxu0 0.0
    %1238 = vmatpush1.msra.mxu0 0.0
    %1239 = vmatprep.subr.mxu0 0.0
    %1240 = vmatpush1.msra.mxu0 0.0
    %1241 = vmatprep.subr.mxu0 0.0
    %1242 = vmatpush1.msra.mxu0 0.0
    %1243 = vmatprep.subr.mxu0 0.0
    %1244 = vmatpush1.msra.mxu0 0.0
    %1245 = vmatprep.subr.mxu0 0.0
    %1246 = vmatpush1.msra.mxu0 0.0
    %1247 = vmatprep.subr.mxu0 0.0
    %1248 = vmatpush1.msra.mxu0 0.0
    %1249 = vmatprep.subr.mxu0 0.0
    %1250 = vmatpush1.msra.mxu0 0.0
    %1251 = vmatprep.subr.mxu0 0.0
    %1252 = vmatpush1.msra.mxu0 0.0
    %1253 = vmatprep.subr.mxu0 0.0
    %1254 = vmatpush1.msra.mxu0 0.0
    %1255 = vmatprep.subr.mxu0 0.0
    %1256 = vmatpush1.msra.mxu0 0.0
    %1257 = vmatprep.subr.mxu0 0.0
    %1258 = vmatpush1.msra.mxu0 0.0
    %1259 = vmatprep.subr.mxu0 0.0
    %1260 = vmatpush1.msra.mxu0 0.0
    %1261 = vmatprep.subr.mxu0 0.0
    %1262 = vmatpush1.msra.mxu0 0.0
    %1263 = vmatprep.subr.mxu0 0.0
    %1264 = vmatpush1.msra.mxu0 0.0
    %1265 = vmatprep.subr.mxu0 0.0
    %1266 = vmatpush1.msra.mxu0 %v210
    %1267 = vmatprep.subr.mxu0 0.0
    %1268 = vmatpush1.msra.mxu0 %v209
    %1269 = vmatprep.subr.mxu0 0.0
    %1270 = vmatpush2.msra.mxu0 0.0
    %1271 = vmatprep.subr.mxu0 0.0
    %1272 = vmatpush2.msra.mxu0 0.0
    %1273 = vmatprep.subr.mxu0 0.0
    %1274 = vmatpush2.msra.mxu0 0.0
    %1275 = vmatprep.subr.mxu0 0.0
    %1276 = vmatpush2.msra.mxu0 0.0
    %1277 = vmatprep.subr.mxu0 0.0
    %1278 = vmatpush2.msra.mxu0 0.0
    %1279 = vmatprep.subr.mxu0 0.0
    %1280 = vmatpush2.msra.mxu0 0.0
    %1281 = vmatprep.subr.mxu0 0.0
    %1282 = vmatpush2.msra.mxu0 0.0
    %1283 = vmatprep.subr.mxu0 0.0
    %1284 = vmatpush2.msra.mxu0 0.0
    %1285 = vmatprep.subr.mxu0 0.0
    %1286 = vmatpush2.msra.mxu0 0.0
    %1287 = vmatprep.subr.mxu0 0.0
    %1288 = vmatpush2.msra.mxu0 0.0
    %1289 = vmatprep.subr.mxu0 0.0
    %1290 = vmatpush2.msra.mxu0 0.0
    %1291 = vmatprep.subr.mxu0 0.0
    %1292 = vmatpush2.msra.mxu0 0.0
    %1293 = vmatprep.subr.mxu0 0.0
    %1294 = vmatpush2.msra.mxu0 0.0
    %1295 = vmatprep.subr.mxu0 0.0
    %1296 = vmatpush2.msra.mxu0 0.0
    %1297 = vmatprep.subr.mxu0 0.0
    %1298 = vmatpush2.msra.mxu0 0.0
    %1299 = vmatprep.subr.mxu0 0.0
    %1300 = vmatpush2.msra.mxu0 0.0
    %1301 = vmatprep.mubr.f32.mxu0 0.0
    %1302 = vmatmul.mubr.f32.gmra.mxu0 %v1235
    %v1303 = vpop.f32.mrf.mxu0
    %v1304 = vadd.f32 %v1234, %v1303
    %v1305 = vpop.f32.mrf.mxu0
    %1306 = vdwg.mxu0
    %v1307 = vld [vmem:[#allocation5 + $0x6] sm:$0x1]
    %v1308 = vsel %vm214, %v1231, 0
    %1310 = vmatprep.subr.mxu0 0.0
    %1311 = vmatpush1.msra.mxu0 0.0
    %1312 = vmatprep.subr.mxu0 0.0
    %1313 = vmatpush1.msra.mxu0 0.0
    %1314 = vmatprep.subr.mxu0 0.0
    %1315 = vmatpush1.msra.mxu0 0.0
    %1316 = vmatprep.subr.mxu0 0.0
    %1317 = vmatpush1.msra.mxu0 0.0
    %1318 = vmatprep.subr.mxu0 0.0
    %1319 = vmatpush1.msra.mxu0 0.0
    %1320 = vmatprep.subr.mxu0 0.0
    %1321 = vmatpush1.msra.mxu0 0.0
    %1322 = vmatprep.subr.mxu0 0.0
    %1323 = vmatpush1.msra.mxu0 0.0
    %1324 = vmatprep.subr.mxu0 0.0
    %1325 = vmatpush1.msra.mxu0 0.0
    %1326 = vmatprep.subr.mxu0 0.0
    %1327 = vmatpush1.msra.mxu0 0.0
    %1328 = vmatprep.subr.mxu0 0.0
    %1329 = vmatpush1.msra.mxu0 0.0
    %1330 = vmatprep.subr.mxu0 0.0
    %1331 = vmatpush1.msra.mxu0 0.0
    %1332 = vmatprep.subr.mxu0 0.0
    %1333 = vmatpush1.msra.mxu0 0.0
    %1334 = vmatprep.subr.mxu0 0.0
    %1335 = vmatpush1.msra.mxu0 0.0
    %1336 = vmatprep.subr.mxu0 0.0
    %1337 = vmatpush1.msra.mxu0 0.0
    %1338 = vmatprep.subr.mxu0 0.0
    %1339 = vmatpush1.msra.mxu0 %v212
    %1340 = vmatprep.subr.mxu0 0.0
    %1341 = vmatpush1.msra.mxu0 %v211
    %1342 = vmatprep.subr.mxu0 0.0
    %1343 = vmatpush2.msra.mxu0 0.0
    %1344 = vmatprep.subr.mxu0 0.0
    %1345 = vmatpush2.msra.mxu0 0.0
    %1346 = vmatprep.subr.mxu0 0.0
    %1347 = vmatpush2.msra.mxu0 0.0
    %1348 = vmatprep.subr.mxu0 0.0
    %1349 = vmatpush2.msra.mxu0 0.0
    %1350 = vmatprep.subr.mxu0 0.0
    %1351 = vmatpush2.msra.mxu0 0.0
    %1352 = vmatprep.subr.mxu0 0.0
    %1353 = vmatpush2.msra.mxu0 0.0
    %1354 = vmatprep.subr.mxu0 0.0
    %1355 = vmatpush2.msra.mxu0 0.0
    %1356 = vmatprep.subr.mxu0 0.0
    %1357 = vmatpush2.msra.mxu0 0.0
    %1358 = vmatprep.subr.mxu0 0.0
    %1359 = vmatpush2.msra.mxu0 0.0
    %1360 = vmatprep.subr.mxu0 0.0
    %1361 = vmatpush2.msra.mxu0 0.0
    %1362 = vmatprep.subr.mxu0 0.0
    %1363 = vmatpush2.msra.mxu0 0.0
    %1364 = vmatprep.subr.mxu0 0.0
    %1365 = vmatpush2.msra.mxu0 0.0
    %1366 = vmatprep.subr.mxu0 0.0
    %1367 = vmatpush2.msra.mxu0 0.0
    %1368 = vmatprep.subr.mxu0 0.0
    %1369 = vmatpush2.msra.mxu0 0.0
    %1370 = vmatprep.subr.mxu0 0.0
    %1371 = vmatpush2.msra.mxu0 0.0
    %1372 = vmatprep.subr.mxu0 0.0
    %1373 = vmatpush2.msra.mxu0 0.0
    %1374 = vmatprep.mubr.f32.mxu0 0.0
    %1375 = vmatmul.mubr.f32.gmra.mxu0 %v1308
    %v1376 = vpop.f32.mrf.mxu0
    %v1377 = vadd.f32 %v1307, %v1376
    %v1378 = vpop.f32.mrf.mxu0
    %1379 = vdwg.mxu0
    %v1380 = vxor.u32 %v1304, 2147483648
    %v1381 = vmul.f32 %v1380, 1.442695
    %v1382 = vpow.pop %v1381
    %v1383 = vadd.f32 %v1382, 1.0
    %v1384 = vrcp.pop %v1383
    %v1385 = vmul.f32 1.0, %v1384
    %v1386 = vtanh.pop %v1304
    %v1387 = vxor.u32 %v1377, 2147483648
    %v1388 = vmul.f32 %v1387, 1.442695
    %v1389 = vpow.pop %v1388
    %v1390 = vadd.f32 %v1389, 1.0
    %v1391 = vrcp.pop %v1390
    %v1392 = vmul.f32 1.0, %v1391
    %v1393 = vtanh.pop %v1377
    %v1394 = vmul.f32 %v1385, %v1200
    %1396 = vrot.lane.b32.xlu0 %v1386, 80
    %v1397 = vpop.permute.xlu0 %1396
    %v1399 = vmul.f32 %v1385, %v1397
    %1401 = vrot.lane.b32.xlu0 %v1399, 16
    %v1402 = vpop.permute.xlu0 %1401
    %v1404 = vadd.f32 %v1394, %v1402
    %v1405 = vtanh.pop %v1404
    %1407 = vrot.lane.b32.xlu0 %v1405, 16
    %v1408 = vpop.permute.xlu0 %1407
    %v1410 = vmul.f32 %v1385, %v1408
    %v1411 = vmul.f32 %v1392, %v1217
    %1413 = vrot.lane.b32.xlu0 %v1393, 80
    %v1414 = vpop.permute.xlu0 %1413
    %v1416 = vmul.f32 %v1392, %v1414
    %1418 = vrot.lane.b32.xlu0 %v1416, 16
    %v1419 = vpop.permute.xlu0 %1418
    %v1421 = vadd.f32 %v1411, %v1419
    %v1422 = vtanh.pop %v1421
    %1424 = vrot.lane.b32.xlu0 %v1422, 16
    %v1425 = vpop.permute.xlu0 %1424
    %v1427 = vmul.f32 %v1392, %v1425
    %1429 = vrot.lane.b32.xlu0 %v1410, 96
    %v1430 = vpop.permute.xlu0 %1429
    %1432 = vst.msk [vmem:[#allocation2 + $0x5] sm:$0x1] %vm411, %v1430
    %1434 = vrot.lane.b32.xlu0 %v1427, 96
    %v1435 = vpop.permute.xlu0 %1434
    %1437 = vst.msk [vmem:[#allocation3 + $0x6] sm:$0x1] %vm411, %v1435
    %v1438 = vld [vmem:[#allocation4 + $0x6] sm:$0x1]
    %v1439 = vsel %vm214, %v1430, 0
    %1441 = vmatprep.subr.mxu0 0.0
    %1442 = vmatpush1.msra.mxu0 0.0
    %1443 = vmatprep.subr.mxu0 0.0
    %1444 = vmatpush1.msra.mxu0 0.0
    %1445 = vmatprep.subr.mxu0 0.0
    %1446 = vmatpush1.msra.mxu0 0.0
    %1447 = vmatprep.subr.mxu0 0.0
    %1448 = vmatpush1.msra.mxu0 0.0
    %1449 = vmatprep.subr.mxu0 0.0
    %1450 = vmatpush1.msra.mxu0 0.0
    %1451 = vmatprep.subr.mxu0 0.0
    %1452 = vmatpush1.msra.mxu0 0.0
    %1453 = vmatprep.subr.mxu0 0.0
    %1454 = vmatpush1.msra.mxu0 0.0
    %1455 = vmatprep.subr.mxu0 0.0
    %1456 = vmatpush1.msra.mxu0 0.0
    %1457 = vmatprep.subr.mxu0 0.0
    %1458 = vmatpush1.msra.mxu0 0.0
    %1459 = vmatprep.subr.mxu0 0.0
    %1460 = vmatpush1.msra.mxu0 0.0
    %1461 = vmatprep.subr.mxu0 0.0
    %1462 = vmatpush1.msra.mxu0 0.0
    %1463 = vmatprep.subr.mxu0 0.0
    %1464 = vmatpush1.msra.mxu0 0.0
    %1465 = vmatprep.subr.mxu0 0.0
    %1466 = vmatpush1.msra.mxu0 0.0
    %1467 = vmatprep.subr.mxu0 0.0
    %1468 = vmatpush1.msra.mxu0 0.0
    %1469 = vmatprep.subr.mxu0 0.0
    %1470 = vmatpush1.msra.mxu0 %v210
    %1471 = vmatprep.subr.mxu0 0.0
    %1472 = vmatpush1.msra.mxu0 %v209
    %1473 = vmatprep.subr.mxu0 0.0
    %1474 = vmatpush2.msra.mxu0 0.0
    %1475 = vmatprep.subr.mxu0 0.0
    %1476 = vmatpush2.msra.mxu0 0.0
    %1477 = vmatprep.subr.mxu0 0.0
    %1478 = vmatpush2.msra.mxu0 0.0
    %1479 = vmatprep.subr.mxu0 0.0
    %1480 = vmatpush2.msra.mxu0 0.0
    %1481 = vmatprep.subr.mxu0 0.0
    %1482 = vmatpush2.msra.mxu0 0.0
    %1483 = vmatprep.subr.mxu0 0.0
    %1484 = vmatpush2.msra.mxu0 0.0
    %1485 = vmatprep.subr.mxu0 0.0
    %1486 = vmatpush2.msra.mxu0 0.0
    %1487 = vmatprep.subr.mxu0 0.0
    %1488 = vmatpush2.msra.mxu0 0.0
    %1489 = vmatprep.subr.mxu0 0.0
    %1490 = vmatpush2.msra.mxu0 0.0
    %1491 = vmatprep.subr.mxu0 0.0
    %1492 = vmatpush2.msra.mxu0 0.0
    %1493 = vmatprep.subr.mxu0 0.0
    %1494 = vmatpush2.msra.mxu0 0.0
    %1495 = vmatprep.subr.mxu0 0.0
    %1496 = vmatpush2.msra.mxu0 0.0
    %1497 = vmatprep.subr.mxu0 0.0
    %1498 = vmatpush2.msra.mxu0 0.0
    %1499 = vmatprep.subr.mxu0 0.0
    %1500 = vmatpush2.msra.mxu0 0.0
    %1501 = vmatprep.subr.mxu0 0.0
    %1502 = vmatpush2.msra.mxu0 0.0
    %1503 = vmatprep.subr.mxu0 0.0
    %1504 = vmatpush2.msra.mxu0 0.0
    %1505 = vmatprep.mubr.f32.mxu0 0.0
    %1506 = vmatmul.mubr.f32.gmra.mxu0 %v1439
    %v1507 = vpop.f32.mrf.mxu0
    %v1508 = vadd.f32 %v1438, %v1507
    %v1509 = vpop.f32.mrf.mxu0
    %1510 = vdwg.mxu0
    %v1511 = vld [vmem:[#allocation5 + $0x5] sm:$0x1]
    %v1512 = vsel %vm214, %v1435, 0
    %1514 = vmatprep.subr.mxu0 0.0
    %1515 = vmatpush1.msra.mxu0 0.0
    %1516 = vmatprep.subr.mxu0 0.0
    %1517 = vmatpush1.msra.mxu0 0.0
    %1518 = vmatprep.subr.mxu0 0.0
    %1519 = vmatpush1.msra.mxu0 0.0
    %1520 = vmatprep.subr.mxu0 0.0
    %1521 = vmatpush1.msra.mxu0 0.0
    %1522 = vmatprep.subr.mxu0 0.0
    %1523 = vmatpush1.msra.mxu0 0.0
    %1524 = vmatprep.subr.mxu0 0.0
    %1525 = vmatpush1.msra.mxu0 0.0
    %1526 = vmatprep.subr.mxu0 0.0
    %1527 = vmatpush1.msra.mxu0 0.0
    %1528 = vmatprep.subr.mxu0 0.0
    %1529 = vmatpush1.msra.mxu0 0.0
    %1530 = vmatprep.subr.mxu0 0.0
    %1531 = vmatpush1.msra.mxu0 0.0
    %1532 = vmatprep.subr.mxu0 0.0
    %1533 = vmatpush1.msra.mxu0 0.0
    %1534 = vmatprep.subr.mxu0 0.0
    %1535 = vmatpush1.msra.mxu0 0.0
    %1536 = vmatprep.subr.mxu0 0.0
    %1537 = vmatpush1.msra.mxu0 0.0
    %1538 = vmatprep.subr.mxu0 0.0
    %1539 = vmatpush1.msra.mxu0 0.0
    %1540 = vmatprep.subr.mxu0 0.0
    %1541 = vmatpush1.msra.mxu0 0.0
    %1542 = vmatprep.subr.mxu0 0.0
    %1543 = vmatpush1.msra.mxu0 %v212
    %1544 = vmatprep.subr.mxu0 0.0
    %1545 = vmatpush1.msra.mxu0 %v211
    %1546 = vmatprep.subr.mxu0 0.0
    %1547 = vmatpush2.msra.mxu0 0.0
    %1548 = vmatprep.subr.mxu0 0.0
    %1549 = vmatpush2.msra.mxu0 0.0
    %1550 = vmatprep.subr.mxu0 0.0
    %1551 = vmatpush2.msra.mxu0 0.0
    %1552 = vmatprep.subr.mxu0 0.0
    %1553 = vmatpush2.msra.mxu0 0.0
    %1554 = vmatprep.subr.mxu0 0.0
    %1555 = vmatpush2.msra.mxu0 0.0
    %1556 = vmatprep.subr.mxu0 0.0
    %1557 = vmatpush2.msra.mxu0 0.0
    %1558 = vmatprep.subr.mxu0 0.0
    %1559 = vmatpush2.msra.mxu0 0.0
    %1560 = vmatprep.subr.mxu0 0.0
    %1561 = vmatpush2.msra.mxu0 0.0
    %1562 = vmatprep.subr.mxu0 0.0
    %1563 = vmatpush2.msra.mxu0 0.0
    %1564 = vmatprep.subr.mxu0 0.0
    %1565 = vmatpush2.msra.mxu0 0.0
    %1566 = vmatprep.subr.mxu0 0.0
    %1567 = vmatpush2.msra.mxu0 0.0
    %1568 = vmatprep.subr.mxu0 0.0
    %1569 = vmatpush2.msra.mxu0 0.0
    %1570 = vmatprep.subr.mxu0 0.0
    %1571 = vmatpush2.msra.mxu0 0.0
    %1572 = vmatprep.subr.mxu0 0.0
    %1573 = vmatpush2.msra.mxu0 0.0
    %1574 = vmatprep.subr.mxu0 0.0
    %1575 = vmatpush2.msra.mxu0 0.0
    %1576 = vmatprep.subr.mxu0 0.0
    %1577 = vmatpush2.msra.mxu0 0.0
    %1578 = vmatprep.mubr.f32.mxu0 0.0
    %1579 = vmatmul.mubr.f32.gmra.mxu0 %v1512
    %v1580 = vpop.f32.mrf.mxu0
    %v1581 = vadd.f32 %v1511, %v1580
    %v1582 = vpop.f32.mrf.mxu0
    %1583 = vdwg.mxu0
    %v1584 = vxor.u32 %v1508, 2147483648
    %v1585 = vmul.f32 %v1584, 1.442695
    %v1586 = vpow.pop %v1585
    %v1587 = vadd.f32 %v1586, 1.0
    %v1588 = vrcp.pop %v1587
    %v1589 = vmul.f32 1.0, %v1588
    %v1590 = vtanh.pop %v1508
    %v1591 = vxor.u32 %v1581, 2147483648
    %v1592 = vmul.f32 %v1591, 1.442695
    %v1593 = vpow.pop %v1592
    %v1594 = vadd.f32 %v1593, 1.0
    %v1595 = vrcp.pop %v1594
    %v1596 = vmul.f32 1.0, %v1595
    %v1597 = vtanh.pop %v1581
    %v1598 = vmul.f32 %v1589, %v1404
    %1600 = vrot.lane.b32.xlu0 %v1590, 80
    %v1601 = vpop.permute.xlu0 %1600
    %v1603 = vmul.f32 %v1589, %v1601
    %1605 = vrot.lane.b32.xlu0 %v1603, 16
    %v1606 = vpop.permute.xlu0 %1605
    %v1608 = vadd.f32 %v1598, %v1606
    %v1609 = vtanh.pop %v1608
    %1611 = vrot.lane.b32.xlu0 %v1609, 16
    %v1612 = vpop.permute.xlu0 %1611
    %v1614 = vmul.f32 %v1589, %v1612
    %v1615 = vmul.f32 %v1596, %v1421
    %1617 = vrot.lane.b32.xlu0 %v1597, 80
    %v1618 = vpop.permute.xlu0 %1617
    %v1620 = vmul.f32 %v1596, %v1618
    %1622 = vrot.lane.b32.xlu0 %v1620, 16
    %v1623 = vpop.permute.xlu0 %1622
    %v1625 = vadd.f32 %v1615, %v1623
    %v1626 = vtanh.pop %v1625
    %1628 = vrot.lane.b32.xlu0 %v1626, 16
    %v1629 = vpop.permute.xlu0 %1628
    %v1631 = vmul.f32 %v1596, %v1629
    %1633 = vrot.lane.b32.xlu0 %v1614, 96
    %v1634 = vpop.permute.xlu0 %1633
    %1636 = vst.msk [vmem:[#allocation2 + $0x6] sm:$0x1] %vm411, %v1634
    %1638 = vrot.lane.b32.xlu0 %v1631, 96
    %v1639 = vpop.permute.xlu0 %1638
    %1641 = vst.msk [vmem:[#allocation3 + $0x5] sm:$0x1] %vm411, %v1639
    %v1642 = vld [vmem:[#allocation4 + $0x7] sm:$0x1]
    %v1643 = vsel %vm214, %v1634, 0
    %1645 = vmatprep.subr.mxu0 0.0
    %1646 = vmatpush1.msra.mxu0 0.0
    %1647 = vmatprep.subr.mxu0 0.0
    %1648 = vmatpush1.msra.mxu0 0.0
    %1649 = vmatprep.subr.mxu0 0.0
    %1650 = vmatpush1.msra.mxu0 0.0
    %1651 = vmatprep.subr.mxu0 0.0
    %1652 = vmatpush1.msra.mxu0 0.0
    %1653 = vmatprep.subr.mxu0 0.0
    %1654 = vmatpush1.msra.mxu0 0.0
    %1655 = vmatprep.subr.mxu0 0.0
    %1656 = vmatpush1.msra.mxu0 0.0
    %1657 = vmatprep.subr.mxu0 0.0
    %1658 = vmatpush1.msra.mxu0 0.0
    %1659 = vmatprep.subr.mxu0 0.0
    %1660 = vmatpush1.msra.mxu0 0.0
    %1661 = vmatprep.subr.mxu0 0.0
    %1662 = vmatpush1.msra.mxu0 0.0
    %1663 = vmatprep.subr.mxu0 0.0
    %1664 = vmatpush1.msra.mxu0 0.0
    %1665 = vmatprep.subr.mxu0 0.0
    %1666 = vmatpush1.msra.mxu0 0.0
    %1667 = vmatprep.subr.mxu0 0.0
    %1668 = vmatpush1.msra.mxu0 0.0
    %1669 = vmatprep.subr.mxu0 0.0
    %1670 = vmatpush1.msra.mxu0 0.0
    %1671 = vmatprep.subr.mxu0 0.0
    %1672 = vmatpush1.msra.mxu0 0.0
    %1673 = vmatprep.subr.mxu0 0.0
    %1674 = vmatpush1.msra.mxu0 %v210
    %1675 = vmatprep.subr.mxu0 0.0
    %1676 = vmatpush1.msra.mxu0 %v209
    %1677 = vmatprep.subr.mxu0 0.0
    %1678 = vmatpush2.msra.mxu0 0.0
    %1679 = vmatprep.subr.mxu0 0.0
    %1680 = vmatpush2.msra.mxu0 0.0
    %1681 = vmatprep.subr.mxu0 0.0
    %1682 = vmatpush2.msra.mxu0 0.0
    %1683 = vmatprep.subr.mxu0 0.0
    %1684 = vmatpush2.msra.mxu0 0.0
    %1685 = vmatprep.subr.mxu0 0.0
    %1686 = vmatpush2.msra.mxu0 0.0
    %1687 = vmatprep.subr.mxu0 0.0
    %1688 = vmatpush2.msra.mxu0 0.0
    %1689 = vmatprep.subr.mxu0 0.0
    %1690 = vmatpush2.msra.mxu0 0.0
    %1691 = vmatprep.subr.mxu0 0.0
    %1692 = vmatpush2.msra.mxu0 0.0
    %1693 = vmatprep.subr.mxu0 0.0
    %1694 = vmatpush2.msra.mxu0 0.0
    %1695 = vmatprep.subr.mxu0 0.0
    %1696 = vmatpush2.msra.mxu0 0.0
    %1697 = vmatprep.subr.mxu0 0.0
    %1698 = vmatpush2.msra.mxu0 0.0
    %1699 = vmatprep.subr.mxu0 0.0
    %1700 = vmatpush2.msra.mxu0 0.0
    %1701 = vmatprep.subr.mxu0 0.0
    %1702 = vmatpush2.msra.mxu0 0.0
    %1703 = vmatprep.subr.mxu0 0.0
    %1704 = vmatpush2.msra.mxu0 0.0
    %1705 = vmatprep.subr.mxu0 0.0
    %1706 = vmatpush2.msra.mxu0 0.0
    %1707 = vmatprep.subr.mxu0 0.0
    %1708 = vmatpush2.msra.mxu0 0.0
    %1709 = vmatprep.mubr.f32.mxu0 0.0
    %1710 = vmatmul.mubr.f32.gmra.mxu0 %v1643
    %v1711 = vpop.f32.mrf.mxu0
    %v1712 = vadd.f32 %v1642, %v1711
    %v1713 = vpop.f32.mrf.mxu0
    %1714 = vdwg.mxu0
    %v1715 = vld [vmem:[#allocation5 + $0x4] sm:$0x1]
    %v1716 = vsel %vm214, %v1639, 0
    %1718 = vmatprep.subr.mxu0 0.0
    %1719 = vmatpush1.msra.mxu0 0.0
    %1720 = vmatprep.subr.mxu0 0.0
    %1721 = vmatpush1.msra.mxu0 0.0
    %1722 = vmatprep.subr.mxu0 0.0
    %1723 = vmatpush1.msra.mxu0 0.0
    %1724 = vmatprep.subr.mxu0 0.0
    %1725 = vmatpush1.msra.mxu0 0.0
    %1726 = vmatprep.subr.mxu0 0.0
    %1727 = vmatpush1.msra.mxu0 0.0
    %1728 = vmatprep.subr.mxu0 0.0
    %1729 = vmatpush1.msra.mxu0 0.0
    %1730 = vmatprep.subr.mxu0 0.0
    %1731 = vmatpush1.msra.mxu0 0.0
    %1732 = vmatprep.subr.mxu0 0.0
    %1733 = vmatpush1.msra.mxu0 0.0
    %1734 = vmatprep.subr.mxu0 0.0
    %1735 = vmatpush1.msra.mxu0 0.0
    %1736 = vmatprep.subr.mxu0 0.0
    %1737 = vmatpush1.msra.mxu0 0.0
    %1738 = vmatprep.subr.mxu0 0.0
    %1739 = vmatpush1.msra.mxu0 0.0
    %1740 = vmatprep.subr.mxu0 0.0
    %1741 = vmatpush1.msra.mxu0 0.0
    %1742 = vmatprep.subr.mxu0 0.0
    %1743 = vmatpush1.msra.mxu0 0.0
    %1744 = vmatprep.subr.mxu0 0.0
    %1745 = vmatpush1.msra.mxu0 0.0
    %1746 = vmatprep.subr.mxu0 0.0
    %1747 = vmatpush1.msra.mxu0 %v212
    %1748 = vmatprep.subr.mxu0 0.0
    %1749 = vmatpush1.msra.mxu0 %v211
    %1750 = vmatprep.subr.mxu0 0.0
    %1751 = vmatpush2.msra.mxu0 0.0
    %1752 = vmatprep.subr.mxu0 0.0
    %1753 = vmatpush2.msra.mxu0 0.0
    %1754 = vmatprep.subr.mxu0 0.0
    %1755 = vmatpush2.msra.mxu0 0.0
    %1756 = vmatprep.subr.mxu0 0.0
    %1757 = vmatpush2.msra.mxu0 0.0
    %1758 = vmatprep.subr.mxu0 0.0
    %1759 = vmatpush2.msra.mxu0 0.0
    %1760 = vmatprep.subr.mxu0 0.0
    %1761 = vmatpush2.msra.mxu0 0.0
    %1762 = vmatprep.subr.mxu0 0.0
    %1763 = vmatpush2.msra.mxu0 0.0
    %1764 = vmatprep.subr.mxu0 0.0
    %1765 = vmatpush2.msra.mxu0 0.0
    %1766 = vmatprep.subr.mxu0 0.0
    %1767 = vmatpush2.msra.mxu0 0.0
    %1768 = vmatprep.subr.mxu0 0.0
    %1769 = vmatpush2.msra.mxu0 0.0
    %1770 = vmatprep.subr.mxu0 0.0
    %1771 = vmatpush2.msra.mxu0 0.0
    %1772 = vmatprep.subr.mxu0 0.0
    %1773 = vmatpush2.msra.mxu0 0.0
    %1774 = vmatprep.subr.mxu0 0.0
    %1775 = vmatpush2.msra.mxu0 0.0
    %1776 = vmatprep.subr.mxu0 0.0
    %1777 = vmatpush2.msra.mxu0 0.0
    %1778 = vmatprep.subr.mxu0 0.0
    %1779 = vmatpush2.msra.mxu0 0.0
    %1780 = vmatprep.subr.mxu0 0.0
    %1781 = vmatpush2.msra.mxu0 0.0
    %1782 = vmatprep.mubr.f32.mxu0 0.0
    %1783 = vmatmul.mubr.f32.gmra.mxu0 %v1716
    %v1784 = vpop.f32.mrf.mxu0
    %v1785 = vadd.f32 %v1715, %v1784
    %v1786 = vpop.f32.mrf.mxu0
    %1787 = vdwg.mxu0
    %v1788 = vxor.u32 %v1712, 2147483648
    %v1789 = vmul.f32 %v1788, 1.442695
    %v1790 = vpow.pop %v1789
    %v1791 = vadd.f32 %v1790, 1.0
    %v1792 = vrcp.pop %v1791
    %v1793 = vmul.f32 1.0, %v1792
    %v1794 = vtanh.pop %v1712
    %v1795 = vxor.u32 %v1785, 2147483648
    %v1796 = vmul.f32 %v1795, 1.442695
    %v1797 = vpow.pop %v1796
    %v1798 = vadd.f32 %v1797, 1.0
    %v1799 = vrcp.pop %v1798
    %v1800 = vmul.f32 1.0, %v1799
    %v1801 = vtanh.pop %v1785
    %v1802 = vmul.f32 %v1793, %v1608
    %1804 = vrot.lane.b32.xlu0 %v1794, 80
    %v1805 = vpop.permute.xlu0 %1804
    %v1807 = vmul.f32 %v1793, %v1805
    %1809 = vrot.lane.b32.xlu0 %v1807, 16
    %v1810 = vpop.permute.xlu0 %1809
    %v1812 = vadd.f32 %v1802, %v1810
    %v1813 = vtanh.pop %v1812
    %1815 = vrot.lane.b32.xlu0 %v1813, 16
    %v1816 = vpop.permute.xlu0 %1815
    %v1818 = vmul.f32 %v1793, %v1816
    %v1819 = vmul.f32 %v1800, %v1625
    %1821 = vrot.lane.b32.xlu0 %v1801, 80
    %v1822 = vpop.permute.xlu0 %1821
    %v1824 = vmul.f32 %v1800, %v1822
    %1826 = vrot.lane.b32.xlu0 %v1824, 16
    %v1827 = vpop.permute.xlu0 %1826
    %v1829 = vadd.f32 %v1819, %v1827
    %v1830 = vtanh.pop %v1829
    %1832 = vrot.lane.b32.xlu0 %v1830, 16
    %v1833 = vpop.permute.xlu0 %1832
    %v1835 = vmul.f32 %v1800, %v1833
    %1837 = vrot.lane.b32.xlu0 %v1818, 96
    %v1838 = vpop.permute.xlu0 %1837
    %1840 = vst.msk [vmem:[#allocation2 + $0x7] sm:$0x1] %vm411, %v1838
    %1842 = vrot.lane.b32.xlu0 %v1835, 96
    %v1843 = vpop.permute.xlu0 %1842
    %1845 = vst.msk [vmem:[#allocation3 + $0x4] sm:$0x1] %vm411, %v1843
    %v1846 = vld [vmem:[#allocation4 + $0x8] sm:$0x1]
    %v1847 = vsel %vm214, %v1838, 0
    %1849 = vmatprep.subr.mxu0 0.0
    %1850 = vmatpush1.msra.mxu0 0.0
    %1851 = vmatprep.subr.mxu0 0.0
    %1852 = vmatpush1.msra.mxu0 0.0
    %1853 = vmatprep.subr.mxu0 0.0
    %1854 = vmatpush1.msra.mxu0 0.0
    %1855 = vmatprep.subr.mxu0 0.0
    %1856 = vmatpush1.msra.mxu0 0.0
    %1857 = vmatprep.subr.mxu0 0.0
    %1858 = vmatpush1.msra.mxu0 0.0
    %1859 = vmatprep.subr.mxu0 0.0
    %1860 = vmatpush1.msra.mxu0 0.0
    %1861 = vmatprep.subr.mxu0 0.0
    %1862 = vmatpush1.msra.mxu0 0.0
    %1863 = vmatprep.subr.mxu0 0.0
    %1864 = vmatpush1.msra.mxu0 0.0
    %1865 = vmatprep.subr.mxu0 0.0
    %1866 = vmatpush1.msra.mxu0 0.0
    %1867 = vmatprep.subr.mxu0 0.0
    %1868 = vmatpush1.msra.mxu0 0.0
    %1869 = vmatprep.subr.mxu0 0.0
    %1870 = vmatpush1.msra.mxu0 0.0
    %1871 = vmatprep.subr.mxu0 0.0
    %1872 = vmatpush1.msra.mxu0 0.0
    %1873 = vmatprep.subr.mxu0 0.0
    %1874 = vmatpush1.msra.mxu0 0.0
    %1875 = vmatprep.subr.mxu0 0.0
    %1876 = vmatpush1.msra.mxu0 0.0
    %1877 = vmatprep.subr.mxu0 0.0
    %1878 = vmatpush1.msra.mxu0 %v210
    %1879 = vmatprep.subr.mxu0 0.0
    %1880 = vmatpush1.msra.mxu0 %v209
    %1881 = vmatprep.subr.mxu0 0.0
    %1882 = vmatpush2.msra.mxu0 0.0
    %1883 = vmatprep.subr.mxu0 0.0
    %1884 = vmatpush2.msra.mxu0 0.0
    %1885 = vmatprep.subr.mxu0 0.0
    %1886 = vmatpush2.msra.mxu0 0.0
    %1887 = vmatprep.subr.mxu0 0.0
    %1888 = vmatpush2.msra.mxu0 0.0
    %1889 = vmatprep.subr.mxu0 0.0
    %1890 = vmatpush2.msra.mxu0 0.0
    %1891 = vmatprep.subr.mxu0 0.0
    %1892 = vmatpush2.msra.mxu0 0.0
    %1893 = vmatprep.subr.mxu0 0.0
    %1894 = vmatpush2.msra.mxu0 0.0
    %1895 = vmatprep.subr.mxu0 0.0
    %1896 = vmatpush2.msra.mxu0 0.0
    %1897 = vmatprep.subr.mxu0 0.0
    %1898 = vmatpush2.msra.mxu0 0.0
    %1899 = vmatprep.subr.mxu0 0.0
    %1900 = vmatpush2.msra.mxu0 0.0
    %1901 = vmatprep.subr.mxu0 0.0
    %1902 = vmatpush2.msra.mxu0 0.0
    %1903 = vmatprep.subr.mxu0 0.0
    %1904 = vmatpush2.msra.mxu0 0.0
    %1905 = vmatprep.subr.mxu0 0.0
    %1906 = vmatpush2.msra.mxu0 0.0
    %1907 = vmatprep.subr.mxu0 0.0
    %1908 = vmatpush2.msra.mxu0 0.0
    %1909 = vmatprep.subr.mxu0 0.0
    %1910 = vmatpush2.msra.mxu0 0.0
    %1911 = vmatprep.subr.mxu0 0.0
    %1912 = vmatpush2.msra.mxu0 0.0
    %1913 = vmatprep.mubr.f32.mxu0 0.0
    %1914 = vmatmul.mubr.f32.gmra.mxu0 %v1847
    %v1915 = vpop.f32.mrf.mxu0
    %v1916 = vadd.f32 %v1846, %v1915
    %v1917 = vpop.f32.mrf.mxu0
    %1918 = vdwg.mxu0
    %v1919 = vld [vmem:[#allocation5 + $0x3] sm:$0x1]
    %v1920 = vsel %vm214, %v1843, 0
    %1922 = vmatprep.subr.mxu0 0.0
    %1923 = vmatpush1.msra.mxu0 0.0
    %1924 = vmatprep.subr.mxu0 0.0
    %1925 = vmatpush1.msra.mxu0 0.0
    %1926 = vmatprep.subr.mxu0 0.0
    %1927 = vmatpush1.msra.mxu0 0.0
    %1928 = vmatprep.subr.mxu0 0.0
    %1929 = vmatpush1.msra.mxu0 0.0
    %1930 = vmatprep.subr.mxu0 0.0
    %1931 = vmatpush1.msra.mxu0 0.0
    %1932 = vmatprep.subr.mxu0 0.0
    %1933 = vmatpush1.msra.mxu0 0.0
    %1934 = vmatprep.subr.mxu0 0.0
    %1935 = vmatpush1.msra.mxu0 0.0
    %1936 = vmatprep.subr.mxu0 0.0
    %1937 = vmatpush1.msra.mxu0 0.0
    %1938 = vmatprep.subr.mxu0 0.0
    %1939 = vmatpush1.msra.mxu0 0.0
    %1940 = vmatprep.subr.mxu0 0.0
    %1941 = vmatpush1.msra.mxu0 0.0
    %1942 = vmatprep.subr.mxu0 0.0
    %1943 = vmatpush1.msra.mxu0 0.0
    %1944 = vmatprep.subr.mxu0 0.0
    %1945 = vmatpush1.msra.mxu0 0.0
    %1946 = vmatprep.subr.mxu0 0.0
    %1947 = vmatpush1.msra.mxu0 0.0
    %1948 = vmatprep.subr.mxu0 0.0
    %1949 = vmatpush1.msra.mxu0 0.0
    %1950 = vmatprep.subr.mxu0 0.0
    %1951 = vmatpush1.msra.mxu0 %v212
    %1952 = vmatprep.subr.mxu0 0.0
    %1953 = vmatpush1.msra.mxu0 %v211
    %1954 = vmatprep.subr.mxu0 0.0
    %1955 = vmatpush2.msra.mxu0 0.0
    %1956 = vmatprep.subr.mxu0 0.0
    %1957 = vmatpush2.msra.mxu0 0.0
    %1958 = vmatprep.subr.mxu0 0.0
    %1959 = vmatpush2.msra.mxu0 0.0
    %1960 = vmatprep.subr.mxu0 0.0
    %1961 = vmatpush2.msra.mxu0 0.0
    %1962 = vmatprep.subr.mxu0 0.0
    %1963 = vmatpush2.msra.mxu0 0.0
    %1964 = vmatprep.subr.mxu0 0.0
    %1965 = vmatpush2.msra.mxu0 0.0
    %1966 = vmatprep.subr.mxu0 0.0
    %1967 = vmatpush2.msra.mxu0 0.0
    %1968 = vmatprep.subr.mxu0 0.0
    %1969 = vmatpush2.msra.mxu0 0.0
    %1970 = vmatprep.subr.mxu0 0.0
    %1971 = vmatpush2.msra.mxu0 0.0
    %1972 = vmatprep.subr.mxu0 0.0
    %1973 = vmatpush2.msra.mxu0 0.0
    %1974 = vmatprep.subr.mxu0 0.0
    %1975 = vmatpush2.msra.mxu0 0.0
    %1976 = vmatprep.subr.mxu0 0.0
    %1977 = vmatpush2.msra.mxu0 0.0
    %1978 = vmatprep.subr.mxu0 0.0
    %1979 = vmatpush2.msra.mxu0 0.0
    %1980 = vmatprep.subr.mxu0 0.0
    %1981 = vmatpush2.msra.mxu0 0.0
    %1982 = vmatprep.subr.mxu0 0.0
    %1983 = vmatpush2.msra.mxu0 0.0
    %1984 = vmatprep.subr.mxu0 0.0
    %1985 = vmatpush2.msra.mxu0 0.0
    %1986 = vmatprep.mubr.f32.mxu0 0.0
    %1987 = vmatmul.mubr.f32.gmra.mxu0 %v1920
    %v1988 = vpop.f32.mrf.mxu0
    %v1989 = vadd.f32 %v1919, %v1988
    %v1990 = vpop.f32.mrf.mxu0
    %1991 = vdwg.mxu0
    %v1992 = vxor.u32 %v1916, 2147483648
    %v1993 = vmul.f32 %v1992, 1.442695
    %v1994 = vpow.pop %v1993
    %v1995 = vadd.f32 %v1994, 1.0
    %v1996 = vrcp.pop %v1995
    %v1997 = vmul.f32 1.0, %v1996
    %v1998 = vtanh.pop %v1916
    %v1999 = vxor.u32 %v1989, 2147483648
    %v2000 = vmul.f32 %v1999, 1.442695
    %v2001 = vpow.pop %v2000
    %v2002 = vadd.f32 %v2001, 1.0
    %v2003 = vrcp.pop %v2002
    %v2004 = vmul.f32 1.0, %v2003
    %v2005 = vtanh.pop %v1989
    %v2006 = vmul.f32 %v1997, %v1812
    %2008 = vrot.lane.b32.xlu0 %v1998, 80
    %v2009 = vpop.permute.xlu0 %2008
    %v2011 = vmul.f32 %v1997, %v2009
    %2013 = vrot.lane.b32.xlu0 %v2011, 16
    %v2014 = vpop.permute.xlu0 %2013
    %v2016 = vadd.f32 %v2006, %v2014
    %v2017 = vtanh.pop %v2016
    %2019 = vrot.lane.b32.xlu0 %v2017, 16
    %v2020 = vpop.permute.xlu0 %2019
    %v2022 = vmul.f32 %v1997, %v2020
    %v2023 = vmul.f32 %v2004, %v1829
    %2025 = vrot.lane.b32.xlu0 %v2005, 80
    %v2026 = vpop.permute.xlu0 %2025
    %v2028 = vmul.f32 %v2004, %v2026
    %2030 = vrot.lane.b32.xlu0 %v2028, 16
    %v2031 = vpop.permute.xlu0 %2030
    %v2033 = vadd.f32 %v2023, %v2031
    %v2034 = vtanh.pop %v2033
    %2036 = vrot.lane.b32.xlu0 %v2034, 16
    %v2037 = vpop.permute.xlu0 %2036
    %v2039 = vmul.f32 %v2004, %v2037
    %2041 = vrot.lane.b32.xlu0 %v2022, 96
    %v2042 = vpop.permute.xlu0 %2041
    %2044 = vst.msk [vmem:[#allocation2 + $0x8] sm:$0x1] %vm411, %v2042
    %2046 = vrot.lane.b32.xlu0 %v2039, 96
    %v2047 = vpop.permute.xlu0 %2046
    %2049 = vst.msk [vmem:[#allocation3 + $0x3] sm:$0x1] %vm411, %v2047
    %v2050 = vld [vmem:[#allocation4 + $0x9] sm:$0x1]
    %v2051 = vsel %vm214, %v2042, 0
    %2053 = vmatprep.subr.mxu0 0.0
    %2054 = vmatpush1.msra.mxu0 0.0
    %2055 = vmatprep.subr.mxu0 0.0
    %2056 = vmatpush1.msra.mxu0 0.0
    %2057 = vmatprep.subr.mxu0 0.0
    %2058 = vmatpush1.msra.mxu0 0.0
    %2059 = vmatprep.subr.mxu0 0.0
    %2060 = vmatpush1.msra.mxu0 0.0
    %2061 = vmatprep.subr.mxu0 0.0
    %2062 = vmatpush1.msra.mxu0 0.0
    %2063 = vmatprep.subr.mxu0 0.0
    %2064 = vmatpush1.msra.mxu0 0.0
    %2065 = vmatprep.subr.mxu0 0.0
    %2066 = vmatpush1.msra.mxu0 0.0
    %2067 = vmatprep.subr.mxu0 0.0
    %2068 = vmatpush1.msra.mxu0 0.0
    %2069 = vmatprep.subr.mxu0 0.0
    %2070 = vmatpush1.msra.mxu0 0.0
    %2071 = vmatprep.subr.mxu0 0.0
    %2072 = vmatpush1.msra.mxu0 0.0
    %2073 = vmatprep.subr.mxu0 0.0
    %2074 = vmatpush1.msra.mxu0 0.0
    %2075 = vmatprep.subr.mxu0 0.0
    %2076 = vmatpush1.msra.mxu0 0.0
    %2077 = vmatprep.subr.mxu0 0.0
    %2078 = vmatpush1.msra.mxu0 0.0
    %2079 = vmatprep.subr.mxu0 0.0
    %2080 = vmatpush1.msra.mxu0 0.0
    %2081 = vmatprep.subr.mxu0 0.0
    %2082 = vmatpush1.msra.mxu0 %v210
    %2083 = vmatprep.subr.mxu0 0.0
    %2084 = vmatpush1.msra.mxu0 %v209
    %2085 = vmatprep.subr.mxu0 0.0
    %2086 = vmatpush2.msra.mxu0 0.0
    %2087 = vmatprep.subr.mxu0 0.0
    %2088 = vmatpush2.msra.mxu0 0.0
    %2089 = vmatprep.subr.mxu0 0.0
    %2090 = vmatpush2.msra.mxu0 0.0
    %2091 = vmatprep.subr.mxu0 0.0
    %2092 = vmatpush2.msra.mxu0 0.0
    %2093 = vmatprep.subr.mxu0 0.0
    %2094 = vmatpush2.msra.mxu0 0.0
    %2095 = vmatprep.subr.mxu0 0.0
    %2096 = vmatpush2.msra.mxu0 0.0
    %2097 = vmatprep.subr.mxu0 0.0
    %2098 = vmatpush2.msra.mxu0 0.0
    %2099 = vmatprep.subr.mxu0 0.0
    %2100 = vmatpush2.msra.mxu0 0.0
    %2101 = vmatprep.subr.mxu0 0.0
    %2102 = vmatpush2.msra.mxu0 0.0
    %2103 = vmatprep.subr.mxu0 0.0
    %2104 = vmatpush2.msra.mxu0 0.0
    %2105 = vmatprep.subr.mxu0 0.0
    %2106 = vmatpush2.msra.mxu0 0.0
    %2107 = vmatprep.subr.mxu0 0.0
    %2108 = vmatpush2.msra.mxu0 0.0
    %2109 = vmatprep.subr.mxu0 0.0
    %2110 = vmatpush2.msra.mxu0 0.0
    %2111 = vmatprep.subr.mxu0 0.0
    %2112 = vmatpush2.msra.mxu0 0.0
    %2113 = vmatprep.subr.mxu0 0.0
    %2114 = vmatpush2.msra.mxu0 0.0
    %2115 = vmatprep.subr.mxu0 0.0
    %2116 = vmatpush2.msra.mxu0 0.0
    %2117 = vmatprep.mubr.f32.mxu0 0.0
    %2118 = vmatmul.mubr.f32.gmra.mxu0 %v2051
    %v2119 = vpop.f32.mrf.mxu0
    %v2120 = vadd.f32 %v2050, %v2119
    %v2121 = vpop.f32.mrf.mxu0
    %2122 = vdwg.mxu0
    %v2123 = vld [vmem:[#allocation5 + $0x2] sm:$0x1]
    %v2124 = vsel %vm214, %v2047, 0
    %2126 = vmatprep.subr.mxu0 0.0
    %2127 = vmatpush1.msra.mxu0 0.0
    %2128 = vmatprep.subr.mxu0 0.0
    %2129 = vmatpush1.msra.mxu0 0.0
    %2130 = vmatprep.subr.mxu0 0.0
    %2131 = vmatpush1.msra.mxu0 0.0
    %2132 = vmatprep.subr.mxu0 0.0
    %2133 = vmatpush1.msra.mxu0 0.0
    %2134 = vmatprep.subr.mxu0 0.0
    %2135 = vmatpush1.msra.mxu0 0.0
    %2136 = vmatprep.subr.mxu0 0.0
    %2137 = vmatpush1.msra.mxu0 0.0
    %2138 = vmatprep.subr.mxu0 0.0
    %2139 = vmatpush1.msra.mxu0 0.0
    %2140 = vmatprep.subr.mxu0 0.0
    %2141 = vmatpush1.msra.mxu0 0.0
    %2142 = vmatprep.subr.mxu0 0.0
    %2143 = vmatpush1.msra.mxu0 0.0
    %2144 = vmatprep.subr.mxu0 0.0
    %2145 = vmatpush1.msra.mxu0 0.0
    %2146 = vmatprep.subr.mxu0 0.0
    %2147 = vmatpush1.msra.mxu0 0.0
    %2148 = vmatprep.subr.mxu0 0.0
    %2149 = vmatpush1.msra.mxu0 0.0
    %2150 = vmatprep.subr.mxu0 0.0
    %2151 = vmatpush1.msra.mxu0 0.0
    %2152 = vmatprep.subr.mxu0 0.0
    %2153 = vmatpush1.msra.mxu0 0.0
    %2154 = vmatprep.subr.mxu0 0.0
    %2155 = vmatpush1.msra.mxu0 %v212
    %2156 = vmatprep.subr.mxu0 0.0
    %2157 = vmatpush1.msra.mxu0 %v211
    %2158 = vmatprep.subr.mxu0 0.0
    %2159 = vmatpush2.msra.mxu0 0.0
    %2160 = vmatprep.subr.mxu0 0.0
    %2161 = vmatpush2.msra.mxu0 0.0
    %2162 = vmatprep.subr.mxu0 0.0
    %2163 = vmatpush2.msra.mxu0 0.0
    %2164 = vmatprep.subr.mxu0 0.0
    %2165 = vmatpush2.msra.mxu0 0.0
    %2166 = vmatprep.subr.mxu0 0.0
    %2167 = vmatpush2.msra.mxu0 0.0
    %2168 = vmatprep.subr.mxu0 0.0
    %2169 = vmatpush2.msra.mxu0 0.0
    %2170 = vmatprep.subr.mxu0 0.0
    %2171 = vmatpush2.msra.mxu0 0.0
    %2172 = vmatprep.subr.mxu0 0.0
    %2173 = vmatpush2.msra.mxu0 0.0
    %2174 = vmatprep.subr.mxu0 0.0
    %2175 = vmatpush2.msra.mxu0 0.0
    %2176 = vmatprep.subr.mxu0 0.0
    %2177 = vmatpush2.msra.mxu0 0.0
    %2178 = vmatprep.subr.mxu0 0.0
    %2179 = vmatpush2.msra.mxu0 0.0
    %2180 = vmatprep.subr.mxu0 0.0
    %2181 = vmatpush2.msra.mxu0 0.0
    %2182 = vmatprep.subr.mxu0 0.0
    %2183 = vmatpush2.msra.mxu0 0.0
    %2184 = vmatprep.subr.mxu0 0.0
    %2185 = vmatpush2.msra.mxu0 0.0
    %2186 = vmatprep.subr.mxu0 0.0
    %2187 = vmatpush2.msra.mxu0 0.0
    %2188 = vmatprep.subr.mxu0 0.0
    %2189 = vmatpush2.msra.mxu0 0.0
    %2190 = vmatprep.mubr.f32.mxu0 0.0
    %2191 = vmatmul.mubr.f32.gmra.mxu0 %v2124
    %v2192 = vpop.f32.mrf.mxu0
    %v2193 = vadd.f32 %v2123, %v2192
    %v2194 = vpop.f32.mrf.mxu0
    %2195 = vdwg.mxu0
    %v2196 = vxor.u32 %v2120, 2147483648
    %v2197 = vmul.f32 %v2196, 1.442695
    %v2198 = vpow.pop %v2197
    %v2199 = vadd.f32 %v2198, 1.0
    %v2200 = vrcp.pop %v2199
    %v2201 = vmul.f32 1.0, %v2200
    %v2202 = vtanh.pop %v2120
    %v2203 = vxor.u32 %v2193, 2147483648
    %v2204 = vmul.f32 %v2203, 1.442695
    %v2205 = vpow.pop %v2204
    %v2206 = vadd.f32 %v2205, 1.0
    %v2207 = vrcp.pop %v2206
    %v2208 = vmul.f32 1.0, %v2207
    %v2209 = vtanh.pop %v2193
    %v2210 = vmul.f32 %v2201, %v2016
    %2212 = vrot.lane.b32.xlu0 %v2202, 80
    %v2213 = vpop.permute.xlu0 %2212
    %v2215 = vmul.f32 %v2201, %v2213
    %2217 = vrot.lane.b32.xlu0 %v2215, 16
    %v2218 = vpop.permute.xlu0 %2217
    %v2220 = vadd.f32 %v2210, %v2218
    %v2221 = vtanh.pop %v2220
    %2223 = vrot.lane.b32.xlu0 %v2221, 16
    %v2224 = vpop.permute.xlu0 %2223
    %v2226 = vmul.f32 %v2201, %v2224
    %v2227 = vmul.f32 %v2208, %v2033
    %2229 = vrot.lane.b32.xlu0 %v2209, 80
    %v2230 = vpop.permute.xlu0 %2229
    %v2232 = vmul.f32 %v2208, %v2230
    %2234 = vrot.lane.b32.xlu0 %v2232, 16
    %v2235 = vpop.permute.xlu0 %2234
    %v2237 = vadd.f32 %v2227, %v2235
    %v2238 = vtanh.pop %v2237
    %2240 = vrot.lane.b32.xlu0 %v2238, 16
    %v2241 = vpop.permute.xlu0 %2240
    %v2243 = vmul.f32 %v2208, %v2241
    %2245 = vrot.lane.b32.xlu0 %v2226, 96
    %v2246 = vpop.permute.xlu0 %2245
    %2248 = vst.msk [vmem:[#allocation2 + $0x9] sm:$0x1] %vm411, %v2246
    %2250 = vrot.lane.b32.xlu0 %v2243, 96
    %v2251 = vpop.permute.xlu0 %2250
    %2253 = vst.msk [vmem:[#allocation3 + $0x2] sm:$0x1] %vm411, %v2251
    %v2254 = vld [vmem:[#allocation4 + $0xa] sm:$0x1]
    %v2255 = vsel %vm214, %v2246, 0
    %2257 = vmatprep.subr.mxu0 0.0
    %2258 = vmatpush1.msra.mxu0 0.0
    %2259 = vmatprep.subr.mxu0 0.0
    %2260 = vmatpush1.msra.mxu0 0.0
    %2261 = vmatprep.subr.mxu0 0.0
    %2262 = vmatpush1.msra.mxu0 0.0
    %2263 = vmatprep.subr.mxu0 0.0
    %2264 = vmatpush1.msra.mxu0 0.0
    %2265 = vmatprep.subr.mxu0 0.0
    %2266 = vmatpush1.msra.mxu0 0.0
    %2267 = vmatprep.subr.mxu0 0.0
    %2268 = vmatpush1.msra.mxu0 0.0
    %2269 = vmatprep.subr.mxu0 0.0
    %2270 = vmatpush1.msra.mxu0 0.0
    %2271 = vmatprep.subr.mxu0 0.0
    %2272 = vmatpush1.msra.mxu0 0.0
    %2273 = vmatprep.subr.mxu0 0.0
    %2274 = vmatpush1.msra.mxu0 0.0
    %2275 = vmatprep.subr.mxu0 0.0
    %2276 = vmatpush1.msra.mxu0 0.0
    %2277 = vmatprep.subr.mxu0 0.0
    %2278 = vmatpush1.msra.mxu0 0.0
    %2279 = vmatprep.subr.mxu0 0.0
    %2280 = vmatpush1.msra.mxu0 0.0
    %2281 = vmatprep.subr.mxu0 0.0
    %2282 = vmatpush1.msra.mxu0 0.0
    %2283 = vmatprep.subr.mxu0 0.0
    %2284 = vmatpush1.msra.mxu0 0.0
    %2285 = vmatprep.subr.mxu0 0.0
    %2286 = vmatpush1.msra.mxu0 %v210
    %2287 = vmatprep.subr.mxu0 0.0
    %2288 = vmatpush1.msra.mxu0 %v209
    %2289 = vmatprep.subr.mxu0 0.0
    %2290 = vmatpush2.msra.mxu0 0.0
    %2291 = vmatprep.subr.mxu0 0.0
    %2292 = vmatpush2.msra.mxu0 0.0
    %2293 = vmatprep.subr.mxu0 0.0
    %2294 = vmatpush2.msra.mxu0 0.0
    %2295 = vmatprep.subr.mxu0 0.0
    %2296 = vmatpush2.msra.mxu0 0.0
    %2297 = vmatprep.subr.mxu0 0.0
    %2298 = vmatpush2.msra.mxu0 0.0
    %2299 = vmatprep.subr.mxu0 0.0
    %2300 = vmatpush2.msra.mxu0 0.0
    %2301 = vmatprep.subr.mxu0 0.0
    %2302 = vmatpush2.msra.mxu0 0.0
    %2303 = vmatprep.subr.mxu0 0.0
    %2304 = vmatpush2.msra.mxu0 0.0
    %2305 = vmatprep.subr.mxu0 0.0
    %2306 = vmatpush2.msra.mxu0 0.0
    %2307 = vmatprep.subr.mxu0 0.0
    %2308 = vmatpush2.msra.mxu0 0.0
    %2309 = vmatprep.subr.mxu0 0.0
    %2310 = vmatpush2.msra.mxu0 0.0
    %2311 = vmatprep.subr.mxu0 0.0
    %2312 = vmatpush2.msra.mxu0 0.0
    %2313 = vmatprep.subr.mxu0 0.0
    %2314 = vmatpush2.msra.mxu0 0.0
    %2315 = vmatprep.subr.mxu0 0.0
    %2316 = vmatpush2.msra.mxu0 0.0
    %2317 = vmatprep.subr.mxu0 0.0
    %2318 = vmatpush2.msra.mxu0 0.0
    %2319 = vmatprep.subr.mxu0 0.0
    %2320 = vmatpush2.msra.mxu0 0.0
    %2321 = vmatprep.mubr.f32.mxu0 0.0
    %2322 = vmatmul.mubr.f32.gmra.mxu0 %v2255
    %v2323 = vpop.f32.mrf.mxu0
    %v2324 = vadd.f32 %v2254, %v2323
    %v2325 = vpop.f32.mrf.mxu0
    %2326 = vdwg.mxu0
    %v2327 = vld [vmem:[#allocation5 + $0x1] sm:$0x1]
    %v2328 = vsel %vm214, %v2251, 0
    %2330 = vmatprep.subr.mxu0 0.0
    %2331 = vmatpush1.msra.mxu0 0.0
    %2332 = vmatprep.subr.mxu0 0.0
    %2333 = vmatpush1.msra.mxu0 0.0
    %2334 = vmatprep.subr.mxu0 0.0
    %2335 = vmatpush1.msra.mxu0 0.0
    %2336 = vmatprep.subr.mxu0 0.0
    %2337 = vmatpush1.msra.mxu0 0.0
    %2338 = vmatprep.subr.mxu0 0.0
    %2339 = vmatpush1.msra.mxu0 0.0
    %2340 = vmatprep.subr.mxu0 0.0
    %2341 = vmatpush1.msra.mxu0 0.0
    %2342 = vmatprep.subr.mxu0 0.0
    %2343 = vmatpush1.msra.mxu0 0.0
    %2344 = vmatprep.subr.mxu0 0.0
    %2345 = vmatpush1.msra.mxu0 0.0
    %2346 = vmatprep.subr.mxu0 0.0
    %2347 = vmatpush1.msra.mxu0 0.0
    %2348 = vmatprep.subr.mxu0 0.0
    %2349 = vmatpush1.msra.mxu0 0.0
    %2350 = vmatprep.subr.mxu0 0.0
    %2351 = vmatpush1.msra.mxu0 0.0
    %2352 = vmatprep.subr.mxu0 0.0
    %2353 = vmatpush1.msra.mxu0 0.0
    %2354 = vmatprep.subr.mxu0 0.0
    %2355 = vmatpush1.msra.mxu0 0.0
    %2356 = vmatprep.subr.mxu0 0.0
    %2357 = vmatpush1.msra.mxu0 0.0
    %2358 = vmatprep.subr.mxu0 0.0
    %2359 = vmatpush1.msra.mxu0 %v212
    %2360 = vmatprep.subr.mxu0 0.0
    %2361 = vmatpush1.msra.mxu0 %v211
    %2362 = vmatprep.subr.mxu0 0.0
    %2363 = vmatpush2.msra.mxu0 0.0
    %2364 = vmatprep.subr.mxu0 0.0
    %2365 = vmatpush2.msra.mxu0 0.0
    %2366 = vmatprep.subr.mxu0 0.0
    %2367 = vmatpush2.msra.mxu0 0.0
    %2368 = vmatprep.subr.mxu0 0.0
    %2369 = vmatpush2.msra.mxu0 0.0
    %2370 = vmatprep.subr.mxu0 0.0
    %2371 = vmatpush2.msra.mxu0 0.0
    %2372 = vmatprep.subr.mxu0 0.0
    %2373 = vmatpush2.msra.mxu0 0.0
    %2374 = vmatprep.subr.mxu0 0.0
    %2375 = vmatpush2.msra.mxu0 0.0
    %2376 = vmatprep.subr.mxu0 0.0
    %2377 = vmatpush2.msra.mxu0 0.0
    %2378 = vmatprep.subr.mxu0 0.0
    %2379 = vmatpush2.msra.mxu0 0.0
    %2380 = vmatprep.subr.mxu0 0.0
    %2381 = vmatpush2.msra.mxu0 0.0
    %2382 = vmatprep.subr.mxu0 0.0
    %2383 = vmatpush2.msra.mxu0 0.0
    %2384 = vmatprep.subr.mxu0 0.0
    %2385 = vmatpush2.msra.mxu0 0.0
    %2386 = vmatprep.subr.mxu0 0.0
    %2387 = vmatpush2.msra.mxu0 0.0
    %2388 = vmatprep.subr.mxu0 0.0
    %2389 = vmatpush2.msra.mxu0 0.0
    %2390 = vmatprep.subr.mxu0 0.0
    %2391 = vmatpush2.msra.mxu0 0.0
    %2392 = vmatprep.subr.mxu0 0.0
    %2393 = vmatpush2.msra.mxu0 0.0
    %2394 = vmatprep.mubr.f32.mxu0 0.0
    %2395 = vmatmul.mubr.f32.gmra.mxu0 %v2328
    %v2396 = vpop.f32.mrf.mxu0
    %v2397 = vadd.f32 %v2327, %v2396
    %v2398 = vpop.f32.mrf.mxu0
    %2399 = vdwg.mxu0
    %v2400 = vxor.u32 %v2324, 2147483648
    %v2401 = vmul.f32 %v2400, 1.442695
    %v2402 = vpow.pop %v2401
    %v2403 = vadd.f32 %v2402, 1.0
    %v2404 = vrcp.pop %v2403
    %v2405 = vmul.f32 1.0, %v2404
    %v2406 = vtanh.pop %v2324
    %v2407 = vxor.u32 %v2397, 2147483648
    %v2408 = vmul.f32 %v2407, 1.442695
    %v2409 = vpow.pop %v2408
    %v2410 = vadd.f32 %v2409, 1.0
    %v2411 = vrcp.pop %v2410
    %v2412 = vmul.f32 1.0, %v2411
    %v2413 = vtanh.pop %v2397
    %v2414 = vmul.f32 %v2405, %v2220
    %2416 = vrot.lane.b32.xlu0 %v2406, 80
    %v2417 = vpop.permute.xlu0 %2416
    %v2419 = vmul.f32 %v2405, %v2417
    %2421 = vrot.lane.b32.xlu0 %v2419, 16
    %v2422 = vpop.permute.xlu0 %2421
    %v2424 = vadd.f32 %v2414, %v2422
    %v2425 = vtanh.pop %v2424
    %2427 = vrot.lane.b32.xlu0 %v2425, 16
    %v2428 = vpop.permute.xlu0 %2427
    %v2430 = vmul.f32 %v2405, %v2428
    %v2431 = vmul.f32 %v2412, %v2237
    %2433 = vrot.lane.b32.xlu0 %v2413, 80
    %v2434 = vpop.permute.xlu0 %2433
    %v2436 = vmul.f32 %v2412, %v2434
    %2438 = vrot.lane.b32.xlu0 %v2436, 16
    %v2439 = vpop.permute.xlu0 %2438
    %v2441 = vadd.f32 %v2431, %v2439
    %v2442 = vtanh.pop %v2441
    %2444 = vrot.lane.b32.xlu0 %v2442, 16
    %v2445 = vpop.permute.xlu0 %2444
    %v2447 = vmul.f32 %v2412, %v2445
    %2449 = vrot.lane.b32.xlu0 %v2430, 96
    %v2450 = vpop.permute.xlu0 %2449
    %2452 = vst.msk [vmem:[#allocation2 + $0xa] sm:$0x1] %vm411, %v2450
    %2454 = vrot.lane.b32.xlu0 %v2447, 96
    %v2455 = vpop.permute.xlu0 %2454
    %2457 = vst.msk [vmem:[#allocation3 + $0x1] sm:$0x1] %vm411, %v2455
    %v2458 = vld [vmem:[#allocation4 + $0xb] sm:$0x1]
    %v2459 = vsel %vm214, %v2450, 0
    %2461 = vmatprep.subr.mxu0 0.0
    %2462 = vmatpush1.msra.mxu0 0.0
    %2463 = vmatprep.subr.mxu0 0.0
    %2464 = vmatpush1.msra.mxu0 0.0
    %2465 = vmatprep.subr.mxu0 0.0
    %2466 = vmatpush1.msra.mxu0 0.0
    %2467 = vmatprep.subr.mxu0 0.0
    %2468 = vmatpush1.msra.mxu0 0.0
    %2469 = vmatprep.subr.mxu0 0.0
    %2470 = vmatpush1.msra.mxu0 0.0
    %2471 = vmatprep.subr.mxu0 0.0
    %2472 = vmatpush1.msra.mxu0 0.0
    %2473 = vmatprep.subr.mxu0 0.0
    %2474 = vmatpush1.msra.mxu0 0.0
    %2475 = vmatprep.subr.mxu0 0.0
    %2476 = vmatpush1.msra.mxu0 0.0
    %2477 = vmatprep.subr.mxu0 0.0
    %2478 = vmatpush1.msra.mxu0 0.0
    %2479 = vmatprep.subr.mxu0 0.0
    %2480 = vmatpush1.msra.mxu0 0.0
    %2481 = vmatprep.subr.mxu0 0.0
    %2482 = vmatpush1.msra.mxu0 0.0
    %2483 = vmatprep.subr.mxu0 0.0
    %2484 = vmatpush1.msra.mxu0 0.0
    %2485 = vmatprep.subr.mxu0 0.0
    %2486 = vmatpush1.msra.mxu0 0.0
    %2487 = vmatprep.subr.mxu0 0.0
    %2488 = vmatpush1.msra.mxu0 0.0
    %2489 = vmatprep.subr.mxu0 0.0
    %2490 = vmatpush1.msra.mxu0 %v210
    %2491 = vmatprep.subr.mxu0 0.0
    %2492 = vmatpush1.msra.mxu0 %v209
    %2493 = vmatprep.subr.mxu0 0.0
    %2494 = vmatpush2.msra.mxu0 0.0
    %2495 = vmatprep.subr.mxu0 0.0
    %2496 = vmatpush2.msra.mxu0 0.0
    %2497 = vmatprep.subr.mxu0 0.0
    %2498 = vmatpush2.msra.mxu0 0.0
    %2499 = vmatprep.subr.mxu0 0.0
    %2500 = vmatpush2.msra.mxu0 0.0
    %2501 = vmatprep.subr.mxu0 0.0
    %2502 = vmatpush2.msra.mxu0 0.0
    %2503 = vmatprep.subr.mxu0 0.0
    %2504 = vmatpush2.msra.mxu0 0.0
    %2505 = vmatprep.subr.mxu0 0.0
    %2506 = vmatpush2.msra.mxu0 0.0
    %2507 = vmatprep.subr.mxu0 0.0
    %2508 = vmatpush2.msra.mxu0 0.0
    %2509 = vmatprep.subr.mxu0 0.0
    %2510 = vmatpush2.msra.mxu0 0.0
    %2511 = vmatprep.subr.mxu0 0.0
    %2512 = vmatpush2.msra.mxu0 0.0
    %2513 = vmatprep.subr.mxu0 0.0
    %2514 = vmatpush2.msra.mxu0 0.0
    %2515 = vmatprep.subr.mxu0 0.0
    %2516 = vmatpush2.msra.mxu0 0.0
    %2517 = vmatprep.subr.mxu0 0.0
    %2518 = vmatpush2.msra.mxu0 0.0
    %2519 = vmatprep.subr.mxu0 0.0
    %2520 = vmatpush2.msra.mxu0 0.0
    %2521 = vmatprep.subr.mxu0 0.0
    %2522 = vmatpush2.msra.mxu0 0.0
    %2523 = vmatprep.subr.mxu0 0.0
    %2524 = vmatpush2.msra.mxu0 0.0
    %2525 = vmatprep.mubr.f32.mxu0 0.0
    %2526 = vmatmul.mubr.f32.gmra.mxu0 %v2459
    %v2527 = vpop.f32.mrf.mxu0
    %v2528 = vadd.f32 %v2458, %v2527
    %v2529 = vpop.f32.mrf.mxu0
    %2530 = vdwg.mxu0
    %v2531 = vld [vmem:[#allocation5] sm:$0x1]
    %v2532 = vsel %vm214, %v2455, 0
    %2534 = vmatprep.subr.mxu0 0.0
    %2535 = vmatpush1.msra.mxu0 0.0
    %2536 = vmatprep.subr.mxu0 0.0
    %2537 = vmatpush1.msra.mxu0 0.0
    %2538 = vmatprep.subr.mxu0 0.0
    %2539 = vmatpush1.msra.mxu0 0.0
    %2540 = vmatprep.subr.mxu0 0.0
    %2541 = vmatpush1.msra.mxu0 0.0
    %2542 = vmatprep.subr.mxu0 0.0
    %2543 = vmatpush1.msra.mxu0 0.0
    %2544 = vmatprep.subr.mxu0 0.0
    %2545 = vmatpush1.msra.mxu0 0.0
    %2546 = vmatprep.subr.mxu0 0.0
    %2547 = vmatpush1.msra.mxu0 0.0
    %2548 = vmatprep.subr.mxu0 0.0
    %2549 = vmatpush1.msra.mxu0 0.0
    %2550 = vmatprep.subr.mxu0 0.0
    %2551 = vmatpush1.msra.mxu0 0.0
    %2552 = vmatprep.subr.mxu0 0.0
    %2553 = vmatpush1.msra.mxu0 0.0
    %2554 = vmatprep.subr.mxu0 0.0
    %2555 = vmatpush1.msra.mxu0 0.0
    %2556 = vmatprep.subr.mxu0 0.0
    %2557 = vmatpush1.msra.mxu0 0.0
    %2558 = vmatprep.subr.mxu0 0.0
    %2559 = vmatpush1.msra.mxu0 0.0
    %2560 = vmatprep.subr.mxu0 0.0
    %2561 = vmatpush1.msra.mxu0 0.0
    %2562 = vmatprep.subr.mxu0 0.0
    %2563 = vmatpush1.msra.mxu0 %v212
    %2564 = vmatprep.subr.mxu0 0.0
    %2565 = vmatpush1.msra.mxu0 %v211
    %2566 = vmatprep.subr.mxu0 0.0
    %2567 = vmatpush2.msra.mxu0 0.0
    %2568 = vmatprep.subr.mxu0 0.0
    %2569 = vmatpush2.msra.mxu0 0.0
    %2570 = vmatprep.subr.mxu0 0.0
    %2571 = vmatpush2.msra.mxu0 0.0
    %2572 = vmatprep.subr.mxu0 0.0
    %2573 = vmatpush2.msra.mxu0 0.0
    %2574 = vmatprep.subr.mxu0 0.0
    %2575 = vmatpush2.msra.mxu0 0.0
    %2576 = vmatprep.subr.mxu0 0.0
    %2577 = vmatpush2.msra.mxu0 0.0
    %2578 = vmatprep.subr.mxu0 0.0
    %2579 = vmatpush2.msra.mxu0 0.0
    %2580 = vmatprep.subr.mxu0 0.0
    %2581 = vmatpush2.msra.mxu0 0.0
    %2582 = vmatprep.subr.mxu0 0.0
    %2583 = vmatpush2.msra.mxu0 0.0
    %2584 = vmatprep.subr.mxu0 0.0
    %2585 = vmatpush2.msra.mxu0 0.0
    %2586 = vmatprep.subr.mxu0 0.0
    %2587 = vmatpush2.msra.mxu0 0.0
    %2588 = vmatprep.subr.mxu0 0.0
    %2589 = vmatpush2.msra.mxu0 0.0
    %2590 = vmatprep.subr.mxu0 0.0
    %2591 = vmatpush2.msra.mxu0 0.0
    %2592 = vmatprep.subr.mxu0 0.0
    %2593 = vmatpush2.msra.mxu0 0.0
    %2594 = vmatprep.subr.mxu0 0.0
    %2595 = vmatpush2.msra.mxu0 0.0
    %2596 = vmatprep.subr.mxu0 0.0
    %2597 = vmatpush2.msra.mxu0 0.0
    %2598 = vmatprep.mubr.f32.mxu0 0.0
    %2599 = vmatmul.mubr.f32.gmra.mxu0 %v2532
    %v2600 = vpop.f32.mrf.mxu0
    %v2601 = vadd.f32 %v2531, %v2600
    %v2602 = vpop.f32.mrf.mxu0
    %2603 = vdwg.mxu0
    %v2604 = vxor.u32 %v2528, 2147483648
    %v2605 = vmul.f32 %v2604, 1.442695
    %v2606 = vpow.pop %v2605
    %v2607 = vadd.f32 %v2606, 1.0
    %v2608 = vrcp.pop %v2607
    %v2609 = vmul.f32 1.0, %v2608
    %v2610 = vtanh.pop %v2528
    %v2611 = vxor.u32 %v2601, 2147483648
    %v2612 = vmul.f32 %v2611, 1.442695
    %v2613 = vpow.pop %v2612
    %v2614 = vadd.f32 %v2613, 1.0
    %v2615 = vrcp.pop %v2614
    %v2616 = vmul.f32 1.0, %v2615
    %v2617 = vtanh.pop %v2601
    %v2618 = vmul.f32 %v2609, %v2424
    %2620 = vrot.lane.b32.xlu0 %v2610, 80
    %v2621 = vpop.permute.xlu0 %2620
    %v2623 = vmul.f32 %v2609, %v2621
    %2625 = vrot.lane.b32.xlu0 %v2623, 16
    %v2626 = vpop.permute.xlu0 %2625
    %v2628 = vadd.f32 %v2618, %v2626
    %v2629 = vtanh.pop %v2628
    %2631 = vrot.lane.b32.xlu0 %v2629, 16
    %v2632 = vpop.permute.xlu0 %2631
    %v2634 = vmul.f32 %v2609, %v2632
    %v2635 = vmul.f32 %v2616, %v2441
    %2637 = vrot.lane.b32.xlu0 %v2617, 80
    %v2638 = vpop.permute.xlu0 %2637
    %v2640 = vmul.f32 %v2616, %v2638
    %2642 = vrot.lane.b32.xlu0 %v2640, 16
    %v2643 = vpop.permute.xlu0 %2642
    %v2645 = vadd.f32 %v2635, %v2643
    %v2646 = vtanh.pop %v2645
    %2648 = vrot.lane.b32.xlu0 %v2646, 16
    %v2649 = vpop.permute.xlu0 %2648
    %v2651 = vmul.f32 %v2616, %v2649
    %2653 = vrot.lane.b32.xlu0 %v2634, 96
    %v2654 = vpop.permute.xlu0 %2653
    %2656 = vst.msk [vmem:[#allocation2 + $0xb] sm:$0x1] %vm411, %v2654
    %2658 = vrot.lane.b32.xlu0 %v2651, 96
    %v2659 = vpop.permute.xlu0 %2658
    %2661 = vst.msk [vmem:[#allocation3] sm:$0x1] %vm411, %v2659
    %s2662 = smul.u32 3, 16
    %s2663 = smul.u32 %s2662, 1
    %s2664 = sshll.u32 %s2663, 4
    %2665 = dma.done [#allocation9], %s2664
    %s2666 = sshll.u32 %s2663, 4
    %2667 = dma.done %s93, %s2666
    %v2668 = vld [vmem:[#allocation6] sm:$0xff]
    %v2669 = vld [vmem:[#allocation6 + $0x8] sm:$0xff]
    %s2670 = scalar_lea.vmem [#allocation6], 16
    %v2671 = vld [vmem:[%s2670] sm:$0xff]
    %v2672 = vld [vmem:[%s2670 + $0x8] sm:$0xff]
    %s2673 = scalar_lea.vmem [#allocation6], 32
    %v2674 = vld [vmem:[%s2673] sm:$0xff]
    %v2675 = vld [vmem:[%s2673 + $0x8] sm:$0xff]
    %v2676 = vld [vmem:[#allocation7] sm:$0xff]
    %v2677 = vld [vmem:[#allocation7 + $0x8] sm:$0xff]
    %s2678 = scalar_lea.vmem [#allocation7], 16
    %v2679 = vld [vmem:[%s2678] sm:$0xff]
    %v2680 = vld [vmem:[%s2678 + $0x8] sm:$0xff]
    %s2681 = scalar_lea.vmem [#allocation7], 32
    %v2682 = vld [vmem:[%s2681] sm:$0xff]
    %v2683 = vld [vmem:[%s2681 + $0x8] sm:$0xff]
    %v2684 = vld [vmem:[#allocation2] sm:$0xff]
    %v2685 = vld [vmem:[#allocation2 + $0x8] sm:$0xf]
    %v2686 = vld [vmem:[#allocation3] sm:$0xff]
    %v2687 = vld [vmem:[#allocation3 + $0x8] sm:$0xf]
    %v2689 = vsel %vm214, %v2686, 0
    %v2692 = vsel %vm214, %v2687, 0
    %2694 = vmatprep.subr.mxu0 0.0
    %2695 = vmatpush1.msra.mxu0 0.0
    %2696 = vmatprep.subr.mxu0 0.0
    %2697 = vmatpush1.msra.mxu0 0.0
    %2698 = vmatprep.subr.mxu0 0.0
    %2699 = vmatpush1.msra.mxu0 0.0
    %2700 = vmatprep.subr.mxu0 0.0
    %2701 = vmatpush1.msra.mxu0 0.0
    %2702 = vmatprep.subr.mxu0 0.0
    %2703 = vmatpush1.msra.mxu0 0.0
    %2704 = vmatprep.subr.mxu0 0.0
    %2705 = vmatpush1.msra.mxu0 0.0
    %2706 = vmatprep.subr.mxu0 0.0
    %2707 = vmatpush1.msra.mxu0 0.0
    %2708 = vmatprep.subr.mxu0 0.0
    %2709 = vmatpush1.msra.mxu0 0.0
    %2710 = vmatprep.subr.mxu0 0.0
    %2711 = vmatpush1.msra.mxu0 0.0
    %2712 = vmatprep.subr.mxu0 0.0
    %2713 = vmatpush1.msra.mxu0 0.0
    %2714 = vmatprep.subr.mxu0 0.0
    %2715 = vmatpush1.msra.mxu0 0.0
    %2716 = vmatprep.subr.mxu0 0.0
    %2717 = vmatpush1.msra.mxu0 0.0
    %2718 = vmatprep.subr.mxu0 0.0
    %2719 = vmatpush1.msra.mxu0 0.0
    %2720 = vmatprep.subr.mxu0 0.0
    %2721 = vmatpush1.msra.mxu0 0.0
    %2722 = vmatprep.subr.mxu0 0.0
    %2723 = vmatpush1.msra.mxu0 %v2672
    %2724 = vmatprep.subr.mxu0 0.0
    %2725 = vmatpush1.msra.mxu0 %v2671
    %2726 = vmatprep.subr.mxu0 0.0
    %2727 = vmatpush2.msra.mxu0 0.0
    %2728 = vmatprep.subr.mxu0 0.0
    %2729 = vmatpush2.msra.mxu0 0.0
    %2730 = vmatprep.subr.mxu0 0.0
    %2731 = vmatpush2.msra.mxu0 0.0
    %2732 = vmatprep.subr.mxu0 0.0
    %2733 = vmatpush2.msra.mxu0 0.0
    %2734 = vmatprep.subr.mxu0 0.0
    %2735 = vmatpush2.msra.mxu0 0.0
    %2736 = vmatprep.subr.mxu0 0.0
    %2737 = vmatpush2.msra.mxu0 0.0
    %2738 = vmatprep.subr.mxu0 0.0
    %2739 = vmatpush2.msra.mxu0 0.0
    %2740 = vmatprep.subr.mxu0 0.0
    %2741 = vmatpush2.msra.mxu0 0.0
    %2742 = vmatprep.subr.mxu0 0.0
    %2743 = vmatpush2.msra.mxu0 0.0
    %2744 = vmatprep.subr.mxu0 0.0
    %2745 = vmatpush2.msra.mxu0 0.0
    %2746 = vmatprep.subr.mxu0 0.0
    %2747 = vmatpush2.msra.mxu0 0.0
    %2748 = vmatprep.subr.mxu0 0.0
    %2749 = vmatpush2.msra.mxu0 0.0
    %2750 = vmatprep.subr.mxu0 0.0
    %2751 = vmatpush2.msra.mxu0 0.0
    %2752 = vmatprep.subr.mxu0 0.0
    %2753 = vmatpush2.msra.mxu0 0.0
    %2754 = vmatprep.subr.mxu0 0.0
    %2755 = vmatpush2.msra.mxu0 0.0
    %2756 = vmatprep.subr.mxu0 0.0
    %2757 = vmatpush2.msra.mxu0 0.0
    %2758 = vmatprep.mubr.f32.mxu0 0.0
    %2759 = vmatmul.mubr.f32.gmra.mxu0 %v2689
    %v2760 = vpop.f32.mrf.mxu0
    %v2761 = vadd.f32 0.0, %v2760
    %v2762 = vpop.f32.mrf.mxu0
    %2763 = vmatprep.mubr.f32.mxu0 0.0
    %2764 = vmatmul.mubr.f32.gmra.mxu0 %v2692
    %v2765 = vpop.f32.mrf.mxu0
    %v2766 = vadd.f32 0.0, %v2765
    %v2767 = vpop.f32.mrf.mxu0
    %2768 = vdwg.mxu0
    %v2770 = vsel %vm214, %v2684, 0
    %v2773 = vsel %vm214, %v2685, 0
    %2775 = vmatprep.subr.mxu0 0.0
    %2776 = vmatpush1.msra.mxu0 0.0
    %2777 = vmatprep.subr.mxu0 0.0
    %2778 = vmatpush1.msra.mxu0 0.0
    %2779 = vmatprep.subr.mxu0 0.0
    %2780 = vmatpush1.msra.mxu0 0.0
    %2781 = vmatprep.subr.mxu0 0.0
    %2782 = vmatpush1.msra.mxu0 0.0
    %2783 = vmatprep.subr.mxu0 0.0
    %2784 = vmatpush1.msra.mxu0 0.0
    %2785 = vmatprep.subr.mxu0 0.0
    %2786 = vmatpush1.msra.mxu0 0.0
    %2787 = vmatprep.subr.mxu0 0.0
    %2788 = vmatpush1.msra.mxu0 0.0
    %2789 = vmatprep.subr.mxu0 0.0
    %2790 = vmatpush1.msra.mxu0 0.0
    %2791 = vmatprep.subr.mxu0 0.0
    %2792 = vmatpush1.msra.mxu0 0.0
    %2793 = vmatprep.subr.mxu0 0.0
    %2794 = vmatpush1.msra.mxu0 0.0
    %2795 = vmatprep.subr.mxu0 0.0
    %2796 = vmatpush1.msra.mxu0 0.0
    %2797 = vmatprep.subr.mxu0 0.0
    %2798 = vmatpush1.msra.mxu0 0.0
    %2799 = vmatprep.subr.mxu0 0.0
    %2800 = vmatpush1.msra.mxu0 0.0
    %2801 = vmatprep.subr.mxu0 0.0
    %2802 = vmatpush1.msra.mxu0 0.0
    %2803 = vmatprep.subr.mxu0 0.0
    %2804 = vmatpush1.msra.mxu0 %v2669
    %2805 = vmatprep.subr.mxu0 0.0
    %2806 = vmatpush1.msra.mxu0 %v2668
    %2807 = vmatprep.subr.mxu0 0.0
    %2808 = vmatpush2.msra.mxu0 0.0
    %2809 = vmatprep.subr.mxu0 0.0
    %2810 = vmatpush2.msra.mxu0 0.0
    %2811 = vmatprep.subr.mxu0 0.0
    %2812 = vmatpush2.msra.mxu0 0.0
    %2813 = vmatprep.subr.mxu0 0.0
    %2814 = vmatpush2.msra.mxu0 0.0
    %2815 = vmatprep.subr.mxu0 0.0
    %2816 = vmatpush2.msra.mxu0 0.0
    %2817 = vmatprep.subr.mxu0 0.0
    %2818 = vmatpush2.msra.mxu0 0.0
    %2819 = vmatprep.subr.mxu0 0.0
    %2820 = vmatpush2.msra.mxu0 0.0
    %2821 = vmatprep.subr.mxu0 0.0
    %2822 = vmatpush2.msra.mxu0 0.0
    %2823 = vmatprep.subr.mxu0 0.0
    %2824 = vmatpush2.msra.mxu0 0.0
    %2825 = vmatprep.subr.mxu0 0.0
    %2826 = vmatpush2.msra.mxu0 0.0
    %2827 = vmatprep.subr.mxu0 0.0
    %2828 = vmatpush2.msra.mxu0 0.0
    %2829 = vmatprep.subr.mxu0 0.0
    %2830 = vmatpush2.msra.mxu0 0.0
    %2831 = vmatprep.subr.mxu0 0.0
    %2832 = vmatpush2.msra.mxu0 0.0
    %2833 = vmatprep.subr.mxu0 0.0
    %2834 = vmatpush2.msra.mxu0 0.0
    %2835 = vmatprep.subr.mxu0 0.0
    %2836 = vmatpush2.msra.mxu0 0.0
    %2837 = vmatprep.subr.mxu0 0.0
    %2838 = vmatpush2.msra.mxu0 0.0
    %2839 = vmatprep.mubr.f32.mxu0 0.0
    %2840 = vmatmul.mubr.f32.gmra.mxu0 %v2770
    %v2841 = vpop.f32.mrf.mxu0
    %v2842 = vadd.f32 %v2761, %v2841
    %v2843 = vpop.f32.mrf.mxu0
    %2844 = vmatprep.mubr.f32.mxu0 0.0
    %2845 = vmatmul.mubr.f32.gmra.mxu0 %v2773
    %v2846 = vpop.f32.mrf.mxu0
    %v2847 = vadd.f32 %v2766, %v2846
    %v2848 = vpop.f32.mrf.mxu0
    %2849 = vdwg.mxu0
    %v2850 = vld [vmem:[%s8] sm:$0x1]
    %v2852 = vlaneseq
    %v2853 = vshrl.u32 %v2852, 7
    %v2854 = vsub.s32 0, %v2853
    %v2855 = vrot.slane %v2850, %v2854
    %v2857 = vadd.f32 %v2842, %v2855
    %v2858 = vadd.f32 %v2847, %v2855
    %2859 = vst.msk [vmem:[#allocation4] sm:$0xff] %vm185, %v2857
    %2860 = vst.msk [vmem:[#allocation4 + $0x8] sm:$0xf] %vm187, %v2858
    %2861 = vmatprep.subr.mxu0 0.0
    %2862 = vmatpush1.msra.mxu0 0.0
    %2863 = vmatprep.subr.mxu0 0.0
    %2864 = vmatpush1.msra.mxu0 0.0
    %2865 = vmatprep.subr.mxu0 0.0
    %2866 = vmatpush1.msra.mxu0 0.0
    %2867 = vmatprep.subr.mxu0 0.0
    %2868 = vmatpush1.msra.mxu0 0.0
    %2869 = vmatprep.subr.mxu0 0.0
    %2870 = vmatpush1.msra.mxu0 0.0
    %2871 = vmatprep.subr.mxu0 0.0
    %2872 = vmatpush1.msra.mxu0 0.0
    %2873 = vmatprep.subr.mxu0 0.0
    %2874 = vmatpush1.msra.mxu0 0.0
    %2875 = vmatprep.subr.mxu0 0.0
    %2876 = vmatpush1.msra.mxu0 0.0
    %2877 = vmatprep.subr.mxu0 0.0
    %2878 = vmatpush1.msra.mxu0 0.0
    %2879 = vmatprep.subr.mxu0 0.0
    %2880 = vmatpush1.msra.mxu0 0.0
    %2881 = vmatprep.subr.mxu0 0.0
    %2882 = vmatpush1.msra.mxu0 0.0
    %2883 = vmatprep.subr.mxu0 0.0
    %2884 = vmatpush1.msra.mxu0 0.0
    %2885 = vmatprep.subr.mxu0 0.0
    %2886 = vmatpush1.msra.mxu0 0.0
    %2887 = vmatprep.subr.mxu0 0.0
    %2888 = vmatpush1.msra.mxu0 0.0
    %2889 = vmatprep.subr.mxu0 0.0
    %2890 = vmatpush1.msra.mxu0 %v2680
    %2891 = vmatprep.subr.mxu0 0.0
    %2892 = vmatpush1.msra.mxu0 %v2679
    %2893 = vmatprep.subr.mxu0 0.0
    %2894 = vmatpush2.msra.mxu0 0.0
    %2895 = vmatprep.subr.mxu0 0.0
    %2896 = vmatpush2.msra.mxu0 0.0
    %2897 = vmatprep.subr.mxu0 0.0
    %2898 = vmatpush2.msra.mxu0 0.0
    %2899 = vmatprep.subr.mxu0 0.0
    %2900 = vmatpush2.msra.mxu0 0.0
    %2901 = vmatprep.subr.mxu0 0.0
    %2902 = vmatpush2.msra.mxu0 0.0
    %2903 = vmatprep.subr.mxu0 0.0
    %2904 = vmatpush2.msra.mxu0 0.0
    %2905 = vmatprep.subr.mxu0 0.0
    %2906 = vmatpush2.msra.mxu0 0.0
    %2907 = vmatprep.subr.mxu0 0.0
    %2908 = vmatpush2.msra.mxu0 0.0
    %2909 = vmatprep.subr.mxu0 0.0
    %2910 = vmatpush2.msra.mxu0 0.0
    %2911 = vmatprep.subr.mxu0 0.0
    %2912 = vmatpush2.msra.mxu0 0.0
    %2913 = vmatprep.subr.mxu0 0.0
    %2914 = vmatpush2.msra.mxu0 0.0
    %2915 = vmatprep.subr.mxu0 0.0
    %2916 = vmatpush2.msra.mxu0 0.0
    %2917 = vmatprep.subr.mxu0 0.0
    %2918 = vmatpush2.msra.mxu0 0.0
    %2919 = vmatprep.subr.mxu0 0.0
    %2920 = vmatpush2.msra.mxu0 0.0
    %2921 = vmatprep.subr.mxu0 0.0
    %2922 = vmatpush2.msra.mxu0 0.0
    %2923 = vmatprep.subr.mxu0 0.0
    %2924 = vmatpush2.msra.mxu0 0.0
    %2925 = vmatprep.mubr.f32.mxu0 0.0
    %2926 = vmatmul.mubr.f32.gmra.mxu0 %v2689
    %v2927 = vpop.f32.mrf.mxu0
    %v2928 = vadd.f32 0.0, %v2927
    %v2929 = vpop.f32.mrf.mxu0
    %2930 = vmatprep.mubr.f32.mxu0 0.0
    %2931 = vmatmul.mubr.f32.gmra.mxu0 %v2692
    %v2932 = vpop.f32.mrf.mxu0
    %v2933 = vadd.f32 0.0, %v2932
    %v2934 = vpop.f32.mrf.mxu0
    %2935 = vdwg.mxu0
    %2936 = vmatprep.subr.mxu0 0.0
    %2937 = vmatpush1.msra.mxu0 0.0
    %2938 = vmatprep.subr.mxu0 0.0
    %2939 = vmatpush1.msra.mxu0 0.0
    %2940 = vmatprep.subr.mxu0 0.0
    %2941 = vmatpush1.msra.mxu0 0.0
    %2942 = vmatprep.subr.mxu0 0.0
    %2943 = vmatpush1.msra.mxu0 0.0
    %2944 = vmatprep.subr.mxu0 0.0
    %2945 = vmatpush1.msra.mxu0 0.0
    %2946 = vmatprep.subr.mxu0 0.0
    %2947 = vmatpush1.msra.mxu0 0.0
    %2948 = vmatprep.subr.mxu0 0.0
    %2949 = vmatpush1.msra.mxu0 0.0
    %2950 = vmatprep.subr.mxu0 0.0
    %2951 = vmatpush1.msra.mxu0 0.0
    %2952 = vmatprep.subr.mxu0 0.0
    %2953 = vmatpush1.msra.mxu0 0.0
    %2954 = vmatprep.subr.mxu0 0.0
    %2955 = vmatpush1.msra.mxu0 0.0
    %2956 = vmatprep.subr.mxu0 0.0
    %2957 = vmatpush1.msra.mxu0 0.0
    %2958 = vmatprep.subr.mxu0 0.0
    %2959 = vmatpush1.msra.mxu0 0.0
    %2960 = vmatprep.subr.mxu0 0.0
    %2961 = vmatpush1.msra.mxu0 0.0
    %2962 = vmatprep.subr.mxu0 0.0
    %2963 = vmatpush1.msra.mxu0 0.0
    %2964 = vmatprep.subr.mxu0 0.0
    %2965 = vmatpush1.msra.mxu0 %v2677
    %2966 = vmatprep.subr.mxu0 0.0
    %2967 = vmatpush1.msra.mxu0 %v2676
    %2968 = vmatprep.subr.mxu0 0.0
    %2969 = vmatpush2.msra.mxu0 0.0
    %2970 = vmatprep.subr.mxu0 0.0
    %2971 = vmatpush2.msra.mxu0 0.0
    %2972 = vmatprep.subr.mxu0 0.0
    %2973 = vmatpush2.msra.mxu0 0.0
    %2974 = vmatprep.subr.mxu0 0.0
    %2975 = vmatpush2.msra.mxu0 0.0
    %2976 = vmatprep.subr.mxu0 0.0
    %2977 = vmatpush2.msra.mxu0 0.0
    %2978 = vmatprep.subr.mxu0 0.0
    %2979 = vmatpush2.msra.mxu0 0.0
    %2980 = vmatprep.subr.mxu0 0.0
    %2981 = vmatpush2.msra.mxu0 0.0
    %2982 = vmatprep.subr.mxu0 0.0
    %2983 = vmatpush2.msra.mxu0 0.0
    %2984 = vmatprep.subr.mxu0 0.0
    %2985 = vmatpush2.msra.mxu0 0.0
    %2986 = vmatprep.subr.mxu0 0.0
    %2987 = vmatpush2.msra.mxu0 0.0
    %2988 = vmatprep.subr.mxu0 0.0
    %2989 = vmatpush2.msra.mxu0 0.0
    %2990 = vmatprep.subr.mxu0 0.0
    %2991 = vmatpush2.msra.mxu0 0.0
    %2992 = vmatprep.subr.mxu0 0.0
    %2993 = vmatpush2.msra.mxu0 0.0
    %2994 = vmatprep.subr.mxu0 0.0
    %2995 = vmatpush2.msra.mxu0 0.0
    %2996 = vmatprep.subr.mxu0 0.0
    %2997 = vmatpush2.msra.mxu0 0.0
    %2998 = vmatprep.subr.mxu0 0.0
    %2999 = vmatpush2.msra.mxu0 0.0
    %3000 = vmatprep.mubr.f32.mxu0 0.0
    %3001 = vmatmul.mubr.f32.gmra.mxu0 %v2770
    %v3002 = vpop.f32.mrf.mxu0
    %v3003 = vadd.f32 %v2928, %v3002
    %v3004 = vpop.f32.mrf.mxu0
    %3005 = vmatprep.mubr.f32.mxu0 0.0
    %3006 = vmatmul.mubr.f32.gmra.mxu0 %v2773
    %v3007 = vpop.f32.mrf.mxu0
    %v3008 = vadd.f32 %v2933, %v3007
    %v3009 = vpop.f32.mrf.mxu0
    %3010 = vdwg.mxu0
    %v3011 = vld [vmem:[#allocation15] sm:$0x1]
    %v3013 = vlaneseq
    %v3014 = vshrl.u32 %v3013, 7
    %v3015 = vsub.s32 0, %v3014
    %v3016 = vrot.slane %v3011, %v3015
    %v3018 = vadd.f32 %v3003, %v3016
    %v3019 = vadd.f32 %v3008, %v3016
    %3020 = vst.msk [vmem:[#allocation5] sm:$0xff] %vm185, %v3018
    %3021 = vst.msk [vmem:[#allocation5 + $0x8] sm:$0xf] %vm187, %v3019
    %v3022 = vld [vmem:[#allocation4] sm:$0x1]
    %3023 = vmatprep.subr.mxu0 0.0
    %3024 = vmatpush1.msra.mxu0 0.0
    %3025 = vmatprep.subr.mxu0 0.0
    %3026 = vmatpush1.msra.mxu0 0.0
    %3027 = vmatprep.subr.mxu0 0.0
    %3028 = vmatpush1.msra.mxu0 0.0
    %3029 = vmatprep.subr.mxu0 0.0
    %3030 = vmatpush1.msra.mxu0 0.0
    %3031 = vmatprep.subr.mxu0 0.0
    %3032 = vmatpush1.msra.mxu0 0.0
    %3033 = vmatprep.subr.mxu0 0.0
    %3034 = vmatpush1.msra.mxu0 0.0
    %3035 = vmatprep.subr.mxu0 0.0
    %3036 = vmatpush1.msra.mxu0 0.0
    %3037 = vmatprep.subr.mxu0 0.0
    %3038 = vmatpush1.msra.mxu0 0.0
    %3039 = vmatprep.subr.mxu0 0.0
    %3040 = vmatpush1.msra.mxu0 0.0
    %3041 = vmatprep.subr.mxu0 0.0
    %3042 = vmatpush1.msra.mxu0 0.0
    %3043 = vmatprep.subr.mxu0 0.0
    %3044 = vmatpush1.msra.mxu0 0.0
    %3045 = vmatprep.subr.mxu0 0.0
    %3046 = vmatpush1.msra.mxu0 0.0
    %3047 = vmatprep.subr.mxu0 0.0
    %3048 = vmatpush1.msra.mxu0 0.0
    %3049 = vmatprep.subr.mxu0 0.0
    %3050 = vmatpush1.msra.mxu0 0.0
    %3051 = vmatprep.subr.mxu0 0.0
    %3052 = vmatpush1.msra.mxu0 %v2675
    %3053 = vmatprep.subr.mxu0 0.0
    %3054 = vmatpush1.msra.mxu0 %v2674
    %3055 = vmatprep.subr.mxu0 0.0
    %3056 = vmatpush2.msra.mxu0 0.0
    %3057 = vmatprep.subr.mxu0 0.0
    %3058 = vmatpush2.msra.mxu0 0.0
    %3059 = vmatprep.subr.mxu0 0.0
    %3060 = vmatpush2.msra.mxu0 0.0
    %3061 = vmatprep.subr.mxu0 0.0
    %3062 = vmatpush2.msra.mxu0 0.0
    %3063 = vmatprep.subr.mxu0 0.0
    %3064 = vmatpush2.msra.mxu0 0.0
    %3065 = vmatprep.subr.mxu0 0.0
    %3066 = vmatpush2.msra.mxu0 0.0
    %3067 = vmatprep.subr.mxu0 0.0
    %3068 = vmatpush2.msra.mxu0 0.0
    %3069 = vmatprep.subr.mxu0 0.0
    %3070 = vmatpush2.msra.mxu0 0.0
    %3071 = vmatprep.subr.mxu0 0.0
    %3072 = vmatpush2.msra.mxu0 0.0
    %3073 = vmatprep.subr.mxu0 0.0
    %3074 = vmatpush2.msra.mxu0 0.0
    %3075 = vmatprep.subr.mxu0 0.0
    %3076 = vmatpush2.msra.mxu0 0.0
    %3077 = vmatprep.subr.mxu0 0.0
    %3078 = vmatpush2.msra.mxu0 0.0
    %3079 = vmatprep.subr.mxu0 0.0
    %3080 = vmatpush2.msra.mxu0 0.0
    %3081 = vmatprep.subr.mxu0 0.0
    %3082 = vmatpush2.msra.mxu0 0.0
    %3083 = vmatprep.subr.mxu0 0.0
    %3084 = vmatpush2.msra.mxu0 0.0
    %3085 = vmatprep.subr.mxu0 0.0
    %3086 = vmatpush2.msra.mxu0 0.0
    %3087 = vmatprep.mubr.f32.mxu0 0.0
    %3088 = vmatmul.mubr.f32.gmra.mxu0 %v216
    %v3089 = vpop.f32.mrf.mxu0
    %v3090 = vadd.f32 %v3022, %v3089
    %v3091 = vpop.f32.mrf.mxu0
    %3092 = vdwg.mxu0
    %v3093 = vld [vmem:[#allocation5 + $0xb] sm:$0x1]
    %3094 = vmatprep.subr.mxu0 0.0
    %3095 = vmatpush1.msra.mxu0 0.0
    %3096 = vmatprep.subr.mxu0 0.0
    %3097 = vmatpush1.msra.mxu0 0.0
    %3098 = vmatprep.subr.mxu0 0.0
    %3099 = vmatpush1.msra.mxu0 0.0
    %3100 = vmatprep.subr.mxu0 0.0
    %3101 = vmatpush1.msra.mxu0 0.0
    %3102 = vmatprep.subr.mxu0 0.0
    %3103 = vmatpush1.msra.mxu0 0.0
    %3104 = vmatprep.subr.mxu0 0.0
    %3105 = vmatpush1.msra.mxu0 0.0
    %3106 = vmatprep.subr.mxu0 0.0
    %3107 = vmatpush1.msra.mxu0 0.0
    %3108 = vmatprep.subr.mxu0 0.0
    %3109 = vmatpush1.msra.mxu0 0.0
    %3110 = vmatprep.subr.mxu0 0.0
    %3111 = vmatpush1.msra.mxu0 0.0
    %3112 = vmatprep.subr.mxu0 0.0
    %3113 = vmatpush1.msra.mxu0 0.0
    %3114 = vmatprep.subr.mxu0 0.0
    %3115 = vmatpush1.msra.mxu0 0.0
    %3116 = vmatprep.subr.mxu0 0.0
    %3117 = vmatpush1.msra.mxu0 0.0
    %3118 = vmatprep.subr.mxu0 0.0
    %3119 = vmatpush1.msra.mxu0 0.0
    %3120 = vmatprep.subr.mxu0 0.0
    %3121 = vmatpush1.msra.mxu0 0.0
    %3122 = vmatprep.subr.mxu0 0.0
    %3123 = vmatpush1.msra.mxu0 %v2683
    %3124 = vmatprep.subr.mxu0 0.0
    %3125 = vmatpush1.msra.mxu0 %v2682
    %3126 = vmatprep.subr.mxu0 0.0
    %3127 = vmatpush2.msra.mxu0 0.0
    %3128 = vmatprep.subr.mxu0 0.0
    %3129 = vmatpush2.msra.mxu0 0.0
    %3130 = vmatprep.subr.mxu0 0.0
    %3131 = vmatpush2.msra.mxu0 0.0
    %3132 = vmatprep.subr.mxu0 0.0
    %3133 = vmatpush2.msra.mxu0 0.0
    %3134 = vmatprep.subr.mxu0 0.0
    %3135 = vmatpush2.msra.mxu0 0.0
    %3136 = vmatprep.subr.mxu0 0.0
    %3137 = vmatpush2.msra.mxu0 0.0
    %3138 = vmatprep.subr.mxu0 0.0
    %3139 = vmatpush2.msra.mxu0 0.0
    %3140 = vmatprep.subr.mxu0 0.0
    %3141 = vmatpush2.msra.mxu0 0.0
    %3142 = vmatprep.subr.mxu0 0.0
    %3143 = vmatpush2.msra.mxu0 0.0
    %3144 = vmatprep.subr.mxu0 0.0
    %3145 = vmatpush2.msra.mxu0 0.0
    %3146 = vmatprep.subr.mxu0 0.0
    %3147 = vmatpush2.msra.mxu0 0.0
    %3148 = vmatprep.subr.mxu0 0.0
    %3149 = vmatpush2.msra.mxu0 0.0
    %3150 = vmatprep.subr.mxu0 0.0
    %3151 = vmatpush2.msra.mxu0 0.0
    %3152 = vmatprep.subr.mxu0 0.0
    %3153 = vmatpush2.msra.mxu0 0.0
    %3154 = vmatprep.subr.mxu0 0.0
    %3155 = vmatpush2.msra.mxu0 0.0
    %3156 = vmatprep.subr.mxu0 0.0
    %3157 = vmatpush2.msra.mxu0 0.0
    %3158 = vmatprep.mubr.f32.mxu0 0.0
    %3159 = vmatmul.mubr.f32.gmra.mxu0 %v216
    %v3160 = vpop.f32.mrf.mxu0
    %v3161 = vadd.f32 %v3093, %v3160
    %v3162 = vpop.f32.mrf.mxu0
    %3163 = vdwg.mxu0
    %v3164 = vxor.u32 %v3090, 2147483648
    %v3165 = vmul.f32 %v3164, 1.442695
    %v3166 = vpow.pop %v3165
    %v3167 = vadd.f32 %v3166, 1.0
    %v3168 = vrcp.pop %v3167
    %v3169 = vmul.f32 1.0, %v3168
    %v3170 = vtanh.pop %v3090
    %v3171 = vxor.u32 %v3161, 2147483648
    %v3172 = vmul.f32 %v3171, 1.442695
    %v3173 = vpow.pop %v3172
    %v3174 = vadd.f32 %v3173, 1.0
    %v3175 = vrcp.pop %v3174
    %v3176 = vmul.f32 1.0, %v3175
    %v3177 = vtanh.pop %v3161
    %v3178 = vmul.f32 %v3169, 0.0
    %3180 = vrot.lane.b32.xlu0 %v3170, 80
    %v3181 = vpop.permute.xlu0 %3180
    %v3183 = vmul.f32 %v3169, %v3181
    %3185 = vrot.lane.b32.xlu0 %v3183, 16
    %v3186 = vpop.permute.xlu0 %3185
    %v3188 = vadd.f32 %v3178, %v3186
    %v3189 = vtanh.pop %v3188
    %3191 = vrot.lane.b32.xlu0 %v3189, 16
    %v3192 = vpop.permute.xlu0 %3191
    %v3194 = vmul.f32 %v3169, %v3192
    %v3195 = vmul.f32 %v3176, 0.0
    %3197 = vrot.lane.b32.xlu0 %v3177, 80
    %v3198 = vpop.permute.xlu0 %3197
    %v3200 = vmul.f32 %v3176, %v3198
    %3202 = vrot.lane.b32.xlu0 %v3200, 16
    %v3203 = vpop.permute.xlu0 %3202
    %v3205 = vadd.f32 %v3195, %v3203
    %v3206 = vtanh.pop %v3205
    %3208 = vrot.lane.b32.xlu0 %v3206, 16
    %v3209 = vpop.permute.xlu0 %3208
    %v3211 = vmul.f32 %v3176, %v3209
    %3213 = vrot.lane.b32.xlu0 %v3194, 96
    %v3214 = vpop.permute.xlu0 %3213
    %3216 = vst.msk [vmem:[#allocation2] sm:$0x1] %vm411, %v3214
    %3218 = vrot.lane.b32.xlu0 %v3211, 96
    %v3219 = vpop.permute.xlu0 %3218
    %3221 = vst.msk [vmem:[#allocation3 + $0xb] sm:$0x1] %vm411, %v3219
    %v3222 = vld [vmem:[#allocation4 + $0x1] sm:$0x1]
    %v3223 = vsel %vm214, %v3214, 0
    %3225 = vmatprep.subr.mxu0 0.0
    %3226 = vmatpush1.msra.mxu0 0.0
    %3227 = vmatprep.subr.mxu0 0.0
    %3228 = vmatpush1.msra.mxu0 0.0
    %3229 = vmatprep.subr.mxu0 0.0
    %3230 = vmatpush1.msra.mxu0 0.0
    %3231 = vmatprep.subr.mxu0 0.0
    %3232 = vmatpush1.msra.mxu0 0.0
    %3233 = vmatprep.subr.mxu0 0.0
    %3234 = vmatpush1.msra.mxu0 0.0
    %3235 = vmatprep.subr.mxu0 0.0
    %3236 = vmatpush1.msra.mxu0 0.0
    %3237 = vmatprep.subr.mxu0 0.0
    %3238 = vmatpush1.msra.mxu0 0.0
    %3239 = vmatprep.subr.mxu0 0.0
    %3240 = vmatpush1.msra.mxu0 0.0
    %3241 = vmatprep.subr.mxu0 0.0
    %3242 = vmatpush1.msra.mxu0 0.0
    %3243 = vmatprep.subr.mxu0 0.0
    %3244 = vmatpush1.msra.mxu0 0.0
    %3245 = vmatprep.subr.mxu0 0.0
    %3246 = vmatpush1.msra.mxu0 0.0
    %3247 = vmatprep.subr.mxu0 0.0
    %3248 = vmatpush1.msra.mxu0 0.0
    %3249 = vmatprep.subr.mxu0 0.0
    %3250 = vmatpush1.msra.mxu0 0.0
    %3251 = vmatprep.subr.mxu0 0.0
    %3252 = vmatpush1.msra.mxu0 0.0
    %3253 = vmatprep.subr.mxu0 0.0
    %3254 = vmatpush1.msra.mxu0 %v2675
    %3255 = vmatprep.subr.mxu0 0.0
    %3256 = vmatpush1.msra.mxu0 %v2674
    %3257 = vmatprep.subr.mxu0 0.0
    %3258 = vmatpush2.msra.mxu0 0.0
    %3259 = vmatprep.subr.mxu0 0.0
    %3260 = vmatpush2.msra.mxu0 0.0
    %3261 = vmatprep.subr.mxu0 0.0
    %3262 = vmatpush2.msra.mxu0 0.0
    %3263 = vmatprep.subr.mxu0 0.0
    %3264 = vmatpush2.msra.mxu0 0.0
    %3265 = vmatprep.subr.mxu0 0.0
    %3266 = vmatpush2.msra.mxu0 0.0
    %3267 = vmatprep.subr.mxu0 0.0
    %3268 = vmatpush2.msra.mxu0 0.0
    %3269 = vmatprep.subr.mxu0 0.0
    %3270 = vmatpush2.msra.mxu0 0.0
    %3271 = vmatprep.subr.mxu0 0.0
    %3272 = vmatpush2.msra.mxu0 0.0
    %3273 = vmatprep.subr.mxu0 0.0
    %3274 = vmatpush2.msra.mxu0 0.0
    %3275 = vmatprep.subr.mxu0 0.0
    %3276 = vmatpush2.msra.mxu0 0.0
    %3277 = vmatprep.subr.mxu0 0.0
    %3278 = vmatpush2.msra.mxu0 0.0
    %3279 = vmatprep.subr.mxu0 0.0
    %3280 = vmatpush2.msra.mxu0 0.0
    %3281 = vmatprep.subr.mxu0 0.0
    %3282 = vmatpush2.msra.mxu0 0.0
    %3283 = vmatprep.subr.mxu0 0.0
    %3284 = vmatpush2.msra.mxu0 0.0
    %3285 = vmatprep.subr.mxu0 0.0
    %3286 = vmatpush2.msra.mxu0 0.0
    %3287 = vmatprep.subr.mxu0 0.0
    %3288 = vmatpush2.msra.mxu0 0.0
    %3289 = vmatprep.mubr.f32.mxu0 0.0
    %3290 = vmatmul.mubr.f32.gmra.mxu0 %v3223
    %v3291 = vpop.f32.mrf.mxu0
    %v3292 = vadd.f32 %v3222, %v3291
    %v3293 = vpop.f32.mrf.mxu0
    %3294 = vdwg.mxu0
    %v3295 = vld [vmem:[#allocation5 + $0xa] sm:$0x1]
    %v3296 = vsel %vm214, %v3219, 0
    %3298 = vmatprep.subr.mxu0 0.0
    %3299 = vmatpush1.msra.mxu0 0.0
    %3300 = vmatprep.subr.mxu0 0.0
    %3301 = vmatpush1.msra.mxu0 0.0
    %3302 = vmatprep.subr.mxu0 0.0
    %3303 = vmatpush1.msra.mxu0 0.0
    %3304 = vmatprep.subr.mxu0 0.0
    %3305 = vmatpush1.msra.mxu0 0.0
    %3306 = vmatprep.subr.mxu0 0.0
    %3307 = vmatpush1.msra.mxu0 0.0
    %3308 = vmatprep.subr.mxu0 0.0
    %3309 = vmatpush1.msra.mxu0 0.0
    %3310 = vmatprep.subr.mxu0 0.0
    %3311 = vmatpush1.msra.mxu0 0.0
    %3312 = vmatprep.subr.mxu0 0.0
    %3313 = vmatpush1.msra.mxu0 0.0
    %3314 = vmatprep.subr.mxu0 0.0
    %3315 = vmatpush1.msra.mxu0 0.0
    %3316 = vmatprep.subr.mxu0 0.0
    %3317 = vmatpush1.msra.mxu0 0.0
    %3318 = vmatprep.subr.mxu0 0.0
    %3319 = vmatpush1.msra.mxu0 0.0
    %3320 = vmatprep.subr.mxu0 0.0
    %3321 = vmatpush1.msra.mxu0 0.0
    %3322 = vmatprep.subr.mxu0 0.0
    %3323 = vmatpush1.msra.mxu0 0.0
    %3324 = vmatprep.subr.mxu0 0.0
    %3325 = vmatpush1.msra.mxu0 0.0
    %3326 = vmatprep.subr.mxu0 0.0
    %3327 = vmatpush1.msra.mxu0 %v2683
    %3328 = vmatprep.subr.mxu0 0.0
    %3329 = vmatpush1.msra.mxu0 %v2682
    %3330 = vmatprep.subr.mxu0 0.0
    %3331 = vmatpush2.msra.mxu0 0.0
    %3332 = vmatprep.subr.mxu0 0.0
    %3333 = vmatpush2.msra.mxu0 0.0
    %3334 = vmatprep.subr.mxu0 0.0
    %3335 = vmatpush2.msra.mxu0 0.0
    %3336 = vmatprep.subr.mxu0 0.0
    %3337 = vmatpush2.msra.mxu0 0.0
    %3338 = vmatprep.subr.mxu0 0.0
    %3339 = vmatpush2.msra.mxu0 0.0
    %3340 = vmatprep.subr.mxu0 0.0
    %3341 = vmatpush2.msra.mxu0 0.0
    %3342 = vmatprep.subr.mxu0 0.0
    %3343 = vmatpush2.msra.mxu0 0.0
    %3344 = vmatprep.subr.mxu0 0.0
    %3345 = vmatpush2.msra.mxu0 0.0
    %3346 = vmatprep.subr.mxu0 0.0
    %3347 = vmatpush2.msra.mxu0 0.0
    %3348 = vmatprep.subr.mxu0 0.0
    %3349 = vmatpush2.msra.mxu0 0.0
    %3350 = vmatprep.subr.mxu0 0.0
    %3351 = vmatpush2.msra.mxu0 0.0
    %3352 = vmatprep.subr.mxu0 0.0
    %3353 = vmatpush2.msra.mxu0 0.0
    %3354 = vmatprep.subr.mxu0 0.0
    %3355 = vmatpush2.msra.mxu0 0.0
    %3356 = vmatprep.subr.mxu0 0.0
    %3357 = vmatpush2.msra.mxu0 0.0
    %3358 = vmatprep.subr.mxu0 0.0
    %3359 = vmatpush2.msra.mxu0 0.0
    %3360 = vmatprep.subr.mxu0 0.0
    %3361 = vmatpush2.msra.mxu0 0.0
    %3362 = vmatprep.mubr.f32.mxu0 0.0
    %3363 = vmatmul.mubr.f32.gmra.mxu0 %v3296
    %v3364 = vpop.f32.mrf.mxu0
    %v3365 = vadd.f32 %v3295, %v3364
    %v3366 = vpop.f32.mrf.mxu0
    %3367 = vdwg.mxu0
    %v3368 = vxor.u32 %v3292, 2147483648
    %v3369 = vmul.f32 %v3368, 1.442695
    %v3370 = vpow.pop %v3369
    %v3371 = vadd.f32 %v3370, 1.0
    %v3372 = vrcp.pop %v3371
    %v3373 = vmul.f32 1.0, %v3372
    %v3374 = vtanh.pop %v3292
    %v3375 = vxor.u32 %v3365, 2147483648
    %v3376 = vmul.f32 %v3375, 1.442695
    %v3377 = vpow.pop %v3376
    %v3378 = vadd.f32 %v3377, 1.0
    %v3379 = vrcp.pop %v3378
    %v3380 = vmul.f32 1.0, %v3379
    %v3381 = vtanh.pop %v3365
    %v3382 = vmul.f32 %v3373, %v3188
    %3384 = vrot.lane.b32.xlu0 %v3374, 80
    %v3385 = vpop.permute.xlu0 %3384
    %v3387 = vmul.f32 %v3373, %v3385
    %3389 = vrot.lane.b32.xlu0 %v3387, 16
    %v3390 = vpop.permute.xlu0 %3389
    %v3392 = vadd.f32 %v3382, %v3390
    %v3393 = vtanh.pop %v3392
    %3395 = vrot.lane.b32.xlu0 %v3393, 16
    %v3396 = vpop.permute.xlu0 %3395
    %v3398 = vmul.f32 %v3373, %v3396
    %v3399 = vmul.f32 %v3380, %v3205
    %3401 = vrot.lane.b32.xlu0 %v3381, 80
    %v3402 = vpop.permute.xlu0 %3401
    %v3404 = vmul.f32 %v3380, %v3402
    %3406 = vrot.lane.b32.xlu0 %v3404, 16
    %v3407 = vpop.permute.xlu0 %3406
    %v3409 = vadd.f32 %v3399, %v3407
    %v3410 = vtanh.pop %v3409
    %3412 = vrot.lane.b32.xlu0 %v3410, 16
    %v3413 = vpop.permute.xlu0 %3412
    %v3415 = vmul.f32 %v3380, %v3413
    %3417 = vrot.lane.b32.xlu0 %v3398, 96
    %v3418 = vpop.permute.xlu0 %3417
    %3420 = vst.msk [vmem:[#allocation2 + $0x1] sm:$0x1] %vm411, %v3418
    %3422 = vrot.lane.b32.xlu0 %v3415, 96
    %v3423 = vpop.permute.xlu0 %3422
    %3425 = vst.msk [vmem:[#allocation3 + $0xa] sm:$0x1] %vm411, %v3423
    %v3426 = vld [vmem:[#allocation4 + $0x2] sm:$0x1]
    %v3427 = vsel %vm214, %v3418, 0
    %3429 = vmatprep.subr.mxu0 0.0
    %3430 = vmatpush1.msra.mxu0 0.0
    %3431 = vmatprep.subr.mxu0 0.0
    %3432 = vmatpush1.msra.mxu0 0.0
    %3433 = vmatprep.subr.mxu0 0.0
    %3434 = vmatpush1.msra.mxu0 0.0
    %3435 = vmatprep.subr.mxu0 0.0
    %3436 = vmatpush1.msra.mxu0 0.0
    %3437 = vmatprep.subr.mxu0 0.0
    %3438 = vmatpush1.msra.mxu0 0.0
    %3439 = vmatprep.subr.mxu0 0.0
    %3440 = vmatpush1.msra.mxu0 0.0
    %3441 = vmatprep.subr.mxu0 0.0
    %3442 = vmatpush1.msra.mxu0 0.0
    %3443 = vmatprep.subr.mxu0 0.0
    %3444 = vmatpush1.msra.mxu0 0.0
    %3445 = vmatprep.subr.mxu0 0.0
    %3446 = vmatpush1.msra.mxu0 0.0
    %3447 = vmatprep.subr.mxu0 0.0
    %3448 = vmatpush1.msra.mxu0 0.0
    %3449 = vmatprep.subr.mxu0 0.0
    %3450 = vmatpush1.msra.mxu0 0.0
    %3451 = vmatprep.subr.mxu0 0.0
    %3452 = vmatpush1.msra.mxu0 0.0
    %3453 = vmatprep.subr.mxu0 0.0
    %3454 = vmatpush1.msra.mxu0 0.0
    %3455 = vmatprep.subr.mxu0 0.0
    %3456 = vmatpush1.msra.mxu0 0.0
    %3457 = vmatprep.subr.mxu0 0.0
    %3458 = vmatpush1.msra.mxu0 %v2675
    %3459 = vmatprep.subr.mxu0 0.0
    %3460 = vmatpush1.msra.mxu0 %v2674
    %3461 = vmatprep.subr.mxu0 0.0
    %3462 = vmatpush2.msra.mxu0 0.0
    %3463 = vmatprep.subr.mxu0 0.0
    %3464 = vmatpush2.msra.mxu0 0.0
    %3465 = vmatprep.subr.mxu0 0.0
    %3466 = vmatpush2.msra.mxu0 0.0
    %3467 = vmatprep.subr.mxu0 0.0
    %3468 = vmatpush2.msra.mxu0 0.0
    %3469 = vmatprep.subr.mxu0 0.0
    %3470 = vmatpush2.msra.mxu0 0.0
    %3471 = vmatprep.subr.mxu0 0.0
    %3472 = vmatpush2.msra.mxu0 0.0
    %3473 = vmatprep.subr.mxu0 0.0
    %3474 = vmatpush2.msra.mxu0 0.0
    %3475 = vmatprep.subr.mxu0 0.0
    %3476 = vmatpush2.msra.mxu0 0.0
    %3477 = vmatprep.subr.mxu0 0.0
    %3478 = vmatpush2.msra.mxu0 0.0
    %3479 = vmatprep.subr.mxu0 0.0
    %3480 = vmatpush2.msra.mxu0 0.0
    %3481 = vmatprep.subr.mxu0 0.0
    %3482 = vmatpush2.msra.mxu0 0.0
    %3483 = vmatprep.subr.mxu0 0.0
    %3484 = vmatpush2.msra.mxu0 0.0
    %3485 = vmatprep.subr.mxu0 0.0
    %3486 = vmatpush2.msra.mxu0 0.0
    %3487 = vmatprep.subr.mxu0 0.0
    %3488 = vmatpush2.msra.mxu0 0.0
    %3489 = vmatprep.subr.mxu0 0.0
    %3490 = vmatpush2.msra.mxu0 0.0
    %3491 = vmatprep.subr.mxu0 0.0
    %3492 = vmatpush2.msra.mxu0 0.0
    %3493 = vmatprep.mubr.f32.mxu0 0.0
    %3494 = vmatmul.mubr.f32.gmra.mxu0 %v3427
    %v3495 = vpop.f32.mrf.mxu0
    %v3496 = vadd.f32 %v3426, %v3495
    %v3497 = vpop.f32.mrf.mxu0
    %3498 = vdwg.mxu0
    %v3499 = vld [vmem:[#allocation5 + $0x9] sm:$0x1]
    %v3500 = vsel %vm214, %v3423, 0
    %3502 = vmatprep.subr.mxu0 0.0
    %3503 = vmatpush1.msra.mxu0 0.0
    %3504 = vmatprep.subr.mxu0 0.0
    %3505 = vmatpush1.msra.mxu0 0.0
    %3506 = vmatprep.subr.mxu0 0.0
    %3507 = vmatpush1.msra.mxu0 0.0
    %3508 = vmatprep.subr.mxu0 0.0
    %3509 = vmatpush1.msra.mxu0 0.0
    %3510 = vmatprep.subr.mxu0 0.0
    %3511 = vmatpush1.msra.mxu0 0.0
    %3512 = vmatprep.subr.mxu0 0.0
    %3513 = vmatpush1.msra.mxu0 0.0
    %3514 = vmatprep.subr.mxu0 0.0
    %3515 = vmatpush1.msra.mxu0 0.0
    %3516 = vmatprep.subr.mxu0 0.0
    %3517 = vmatpush1.msra.mxu0 0.0
    %3518 = vmatprep.subr.mxu0 0.0
    %3519 = vmatpush1.msra.mxu0 0.0
    %3520 = vmatprep.subr.mxu0 0.0
    %3521 = vmatpush1.msra.mxu0 0.0
    %3522 = vmatprep.subr.mxu0 0.0
    %3523 = vmatpush1.msra.mxu0 0.0
    %3524 = vmatprep.subr.mxu0 0.0
    %3525 = vmatpush1.msra.mxu0 0.0
    %3526 = vmatprep.subr.mxu0 0.0
    %3527 = vmatpush1.msra.mxu0 0.0
    %3528 = vmatprep.subr.mxu0 0.0
    %3529 = vmatpush1.msra.mxu0 0.0
    %3530 = vmatprep.subr.mxu0 0.0
    %3531 = vmatpush1.msra.mxu0 %v2683
    %3532 = vmatprep.subr.mxu0 0.0
    %3533 = vmatpush1.msra.mxu0 %v2682
    %3534 = vmatprep.subr.mxu0 0.0
    %3535 = vmatpush2.msra.mxu0 0.0
    %3536 = vmatprep.subr.mxu0 0.0
    %3537 = vmatpush2.msra.mxu0 0.0
    %3538 = vmatprep.subr.mxu0 0.0
    %3539 = vmatpush2.msra.mxu0 0.0
    %3540 = vmatprep.subr.mxu0 0.0
    %3541 = vmatpush2.msra.mxu0 0.0
    %3542 = vmatprep.subr.mxu0 0.0
    %3543 = vmatpush2.msra.mxu0 0.0
    %3544 = vmatprep.subr.mxu0 0.0
    %3545 = vmatpush2.msra.mxu0 0.0
    %3546 = vmatprep.subr.mxu0 0.0
    %3547 = vmatpush2.msra.mxu0 0.0
    %3548 = vmatprep.subr.mxu0 0.0
    %3549 = vmatpush2.msra.mxu0 0.0
    %3550 = vmatprep.subr.mxu0 0.0
    %3551 = vmatpush2.msra.mxu0 0.0
    %3552 = vmatprep.subr.mxu0 0.0
    %3553 = vmatpush2.msra.mxu0 0.0
    %3554 = vmatprep.subr.mxu0 0.0
    %3555 = vmatpush2.msra.mxu0 0.0
    %3556 = vmatprep.subr.mxu0 0.0
    %3557 = vmatpush2.msra.mxu0 0.0
    %3558 = vmatprep.subr.mxu0 0.0
    %3559 = vmatpush2.msra.mxu0 0.0
    %3560 = vmatprep.subr.mxu0 0.0
    %3561 = vmatpush2.msra.mxu0 0.0
    %3562 = vmatprep.subr.mxu0 0.0
    %3563 = vmatpush2.msra.mxu0 0.0
    %3564 = vmatprep.subr.mxu0 0.0
    %3565 = vmatpush2.msra.mxu0 0.0
    %3566 = vmatprep.mubr.f32.mxu0 0.0
    %3567 = vmatmul.mubr.f32.gmra.mxu0 %v3500
    %v3568 = vpop.f32.mrf.mxu0
    %v3569 = vadd.f32 %v3499, %v3568
    %v3570 = vpop.f32.mrf.mxu0
    %3571 = vdwg.mxu0
    %v3572 = vxor.u32 %v3496, 2147483648
    %v3573 = vmul.f32 %v3572, 1.442695
    %v3574 = vpow.pop %v3573
    %v3575 = vadd.f32 %v3574, 1.0
    %v3576 = vrcp.pop %v3575
    %v3577 = vmul.f32 1.0, %v3576
    %v3578 = vtanh.pop %v3496
    %v3579 = vxor.u32 %v3569, 2147483648
    %v3580 = vmul.f32 %v3579, 1.442695
    %v3581 = vpow.pop %v3580
    %v3582 = vadd.f32 %v3581, 1.0
    %v3583 = vrcp.pop %v3582
    %v3584 = vmul.f32 1.0, %v3583
    %v3585 = vtanh.pop %v3569
    %v3586 = vmul.f32 %v3577, %v3392
    %3588 = vrot.lane.b32.xlu0 %v3578, 80
    %v3589 = vpop.permute.xlu0 %3588
    %v3591 = vmul.f32 %v3577, %v3589
    %3593 = vrot.lane.b32.xlu0 %v3591, 16
    %v3594 = vpop.permute.xlu0 %3593
    %v3596 = vadd.f32 %v3586, %v3594
    %v3597 = vtanh.pop %v3596
    %3599 = vrot.lane.b32.xlu0 %v3597, 16
    %v3600 = vpop.permute.xlu0 %3599
    %v3602 = vmul.f32 %v3577, %v3600
    %v3603 = vmul.f32 %v3584, %v3409
    %3605 = vrot.lane.b32.xlu0 %v3585, 80
    %v3606 = vpop.permute.xlu0 %3605
    %v3608 = vmul.f32 %v3584, %v3606
    %3610 = vrot.lane.b32.xlu0 %v3608, 16
    %v3611 = vpop.permute.xlu0 %3610
    %v3613 = vadd.f32 %v3603, %v3611
    %v3614 = vtanh.pop %v3613
    %3616 = vrot.lane.b32.xlu0 %v3614, 16
    %v3617 = vpop.permute.xlu0 %3616
    %v3619 = vmul.f32 %v3584, %v3617
    %3621 = vrot.lane.b32.xlu0 %v3602, 96
    %v3622 = vpop.permute.xlu0 %3621
    %3624 = vst.msk [vmem:[#allocation2 + $0x2] sm:$0x1] %vm411, %v3622
    %3626 = vrot.lane.b32.xlu0 %v3619, 96
    %v3627 = vpop.permute.xlu0 %3626
    %3629 = vst.msk [vmem:[#allocation3 + $0x9] sm:$0x1] %vm411, %v3627
    %v3630 = vld [vmem:[#allocation4 + $0x3] sm:$0x1]
    %v3631 = vsel %vm214, %v3622, 0
    %3633 = vmatprep.subr.mxu0 0.0
    %3634 = vmatpush1.msra.mxu0 0.0
    %3635 = vmatprep.subr.mxu0 0.0
    %3636 = vmatpush1.msra.mxu0 0.0
    %3637 = vmatprep.subr.mxu0 0.0
    %3638 = vmatpush1.msra.mxu0 0.0
    %3639 = vmatprep.subr.mxu0 0.0
    %3640 = vmatpush1.msra.mxu0 0.0
    %3641 = vmatprep.subr.mxu0 0.0
    %3642 = vmatpush1.msra.mxu0 0.0
    %3643 = vmatprep.subr.mxu0 0.0
    %3644 = vmatpush1.msra.mxu0 0.0
    %3645 = vmatprep.subr.mxu0 0.0
    %3646 = vmatpush1.msra.mxu0 0.0
    %3647 = vmatprep.subr.mxu0 0.0
    %3648 = vmatpush1.msra.mxu0 0.0
    %3649 = vmatprep.subr.mxu0 0.0
    %3650 = vmatpush1.msra.mxu0 0.0
    %3651 = vmatprep.subr.mxu0 0.0
    %3652 = vmatpush1.msra.mxu0 0.0
    %3653 = vmatprep.subr.mxu0 0.0
    %3654 = vmatpush1.msra.mxu0 0.0
    %3655 = vmatprep.subr.mxu0 0.0
    %3656 = vmatpush1.msra.mxu0 0.0
    %3657 = vmatprep.subr.mxu0 0.0
    %3658 = vmatpush1.msra.mxu0 0.0
    %3659 = vmatprep.subr.mxu0 0.0
    %3660 = vmatpush1.msra.mxu0 0.0
    %3661 = vmatprep.subr.mxu0 0.0
    %3662 = vmatpush1.msra.mxu0 %v2675
    %3663 = vmatprep.subr.mxu0 0.0
    %3664 = vmatpush1.msra.mxu0 %v2674
    %3665 = vmatprep.subr.mxu0 0.0
    %3666 = vmatpush2.msra.mxu0 0.0
    %3667 = vmatprep.subr.mxu0 0.0
    %3668 = vmatpush2.msra.mxu0 0.0
    %3669 = vmatprep.subr.mxu0 0.0
    %3670 = vmatpush2.msra.mxu0 0.0
    %3671 = vmatprep.subr.mxu0 0.0
    %3672 = vmatpush2.msra.mxu0 0.0
    %3673 = vmatprep.subr.mxu0 0.0
    %3674 = vmatpush2.msra.mxu0 0.0
    %3675 = vmatprep.subr.mxu0 0.0
    %3676 = vmatpush2.msra.mxu0 0.0
    %3677 = vmatprep.subr.mxu0 0.0
    %3678 = vmatpush2.msra.mxu0 0.0
    %3679 = vmatprep.subr.mxu0 0.0
    %3680 = vmatpush2.msra.mxu0 0.0
    %3681 = vmatprep.subr.mxu0 0.0
    %3682 = vmatpush2.msra.mxu0 0.0
    %3683 = vmatprep.subr.mxu0 0.0
    %3684 = vmatpush2.msra.mxu0 0.0
    %3685 = vmatprep.subr.mxu0 0.0
    %3686 = vmatpush2.msra.mxu0 0.0
    %3687 = vmatprep.subr.mxu0 0.0
    %3688 = vmatpush2.msra.mxu0 0.0
    %3689 = vmatprep.subr.mxu0 0.0
    %3690 = vmatpush2.msra.mxu0 0.0
    %3691 = vmatprep.subr.mxu0 0.0
    %3692 = vmatpush2.msra.mxu0 0.0
    %3693 = vmatprep.subr.mxu0 0.0
    %3694 = vmatpush2.msra.mxu0 0.0
    %3695 = vmatprep.subr.mxu0 0.0
    %3696 = vmatpush2.msra.mxu0 0.0
    %3697 = vmatprep.mubr.f32.mxu0 0.0
    %3698 = vmatmul.mubr.f32.gmra.mxu0 %v3631
    %v3699 = vpop.f32.mrf.mxu0
    %v3700 = vadd.f32 %v3630, %v3699
    %v3701 = vpop.f32.mrf.mxu0
    %3702 = vdwg.mxu0
    %v3703 = vld [vmem:[#allocation5 + $0x8] sm:$0x1]
    %v3704 = vsel %vm214, %v3627, 0
    %3706 = vmatprep.subr.mxu0 0.0
    %3707 = vmatpush1.msra.mxu0 0.0
    %3708 = vmatprep.subr.mxu0 0.0
    %3709 = vmatpush1.msra.mxu0 0.0
    %3710 = vmatprep.subr.mxu0 0.0
    %3711 = vmatpush1.msra.mxu0 0.0
    %3712 = vmatprep.subr.mxu0 0.0
    %3713 = vmatpush1.msra.mxu0 0.0
    %3714 = vmatprep.subr.mxu0 0.0
    %3715 = vmatpush1.msra.mxu0 0.0
    %3716 = vmatprep.subr.mxu0 0.0
    %3717 = vmatpush1.msra.mxu0 0.0
    %3718 = vmatprep.subr.mxu0 0.0
    %3719 = vmatpush1.msra.mxu0 0.0
    %3720 = vmatprep.subr.mxu0 0.0
    %3721 = vmatpush1.msra.mxu0 0.0
    %3722 = vmatprep.subr.mxu0 0.0
    %3723 = vmatpush1.msra.mxu0 0.0
    %3724 = vmatprep.subr.mxu0 0.0
    %3725 = vmatpush1.msra.mxu0 0.0
    %3726 = vmatprep.subr.mxu0 0.0
    %3727 = vmatpush1.msra.mxu0 0.0
    %3728 = vmatprep.subr.mxu0 0.0
    %3729 = vmatpush1.msra.mxu0 0.0
    %3730 = vmatprep.subr.mxu0 0.0
    %3731 = vmatpush1.msra.mxu0 0.0
    %3732 = vmatprep.subr.mxu0 0.0
    %3733 = vmatpush1.msra.mxu0 0.0
    %3734 = vmatprep.subr.mxu0 0.0
    %3735 = vmatpush1.msra.mxu0 %v2683
    %3736 = vmatprep.subr.mxu0 0.0
    %3737 = vmatpush1.msra.mxu0 %v2682
    %3738 = vmatprep.subr.mxu0 0.0
    %3739 = vmatpush2.msra.mxu0 0.0
    %3740 = vmatprep.subr.mxu0 0.0
    %3741 = vmatpush2.msra.mxu0 0.0
    %3742 = vmatprep.subr.mxu0 0.0
    %3743 = vmatpush2.msra.mxu0 0.0
    %3744 = vmatprep.subr.mxu0 0.0
    %3745 = vmatpush2.msra.mxu0 0.0
    %3746 = vmatprep.subr.mxu0 0.0
    %3747 = vmatpush2.msra.mxu0 0.0
    %3748 = vmatprep.subr.mxu0 0.0
    %3749 = vmatpush2.msra.mxu0 0.0
    %3750 = vmatprep.subr.mxu0 0.0
    %3751 = vmatpush2.msra.mxu0 0.0
    %3752 = vmatprep.subr.mxu0 0.0
    %3753 = vmatpush2.msra.mxu0 0.0
    %3754 = vmatprep.subr.mxu0 0.0
    %3755 = vmatpush2.msra.mxu0 0.0
    %3756 = vmatprep.subr.mxu0 0.0
    %3757 = vmatpush2.msra.mxu0 0.0
    %3758 = vmatprep.subr.mxu0 0.0
    %3759 = vmatpush2.msra.mxu0 0.0
    %3760 = vmatprep.subr.mxu0 0.0
    %3761 = vmatpush2.msra.mxu0 0.0
    %3762 = vmatprep.subr.mxu0 0.0
    %3763 = vmatpush2.msra.mxu0 0.0
    %3764 = vmatprep.subr.mxu0 0.0
    %3765 = vmatpush2.msra.mxu0 0.0
    %3766 = vmatprep.subr.mxu0 0.0
    %3767 = vmatpush2.msra.mxu0 0.0
    %3768 = vmatprep.subr.mxu0 0.0
    %3769 = vmatpush2.msra.mxu0 0.0
    %3770 = vmatprep.mubr.f32.mxu0 0.0
    %3771 = vmatmul.mubr.f32.gmra.mxu0 %v3704
    %v3772 = vpop.f32.mrf.mxu0
    %v3773 = vadd.f32 %v3703, %v3772
    %v3774 = vpop.f32.mrf.mxu0
    %3775 = vdwg.mxu0
    %v3776 = vxor.u32 %v3700, 2147483648
    %v3777 = vmul.f32 %v3776, 1.442695
    %v3778 = vpow.pop %v3777
    %v3779 = vadd.f32 %v3778, 1.0
    %v3780 = vrcp.pop %v3779
    %v3781 = vmul.f32 1.0, %v3780
    %v3782 = vtanh.pop %v3700
    %v3783 = vxor.u32 %v3773, 2147483648
    %v3784 = vmul.f32 %v3783, 1.442695
    %v3785 = vpow.pop %v3784
    %v3786 = vadd.f32 %v3785, 1.0
    %v3787 = vrcp.pop %v3786
    %v3788 = vmul.f32 1.0, %v3787
    %v3789 = vtanh.pop %v3773
    %v3790 = vmul.f32 %v3781, %v3596
    %3792 = vrot.lane.b32.xlu0 %v3782, 80
    %v3793 = vpop.permute.xlu0 %3792
    %v3795 = vmul.f32 %v3781, %v3793
    %3797 = vrot.lane.b32.xlu0 %v3795, 16
    %v3798 = vpop.permute.xlu0 %3797
    %v3800 = vadd.f32 %v3790, %v3798
    %v3801 = vtanh.pop %v3800
    %3803 = vrot.lane.b32.xlu0 %v3801, 16
    %v3804 = vpop.permute.xlu0 %3803
    %v3806 = vmul.f32 %v3781, %v3804
    %v3807 = vmul.f32 %v3788, %v3613
    %3809 = vrot.lane.b32.xlu0 %v3789, 80
    %v3810 = vpop.permute.xlu0 %3809
    %v3812 = vmul.f32 %v3788, %v3810
    %3814 = vrot.lane.b32.xlu0 %v3812, 16
    %v3815 = vpop.permute.xlu0 %3814
    %v3817 = vadd.f32 %v3807, %v3815
    %v3818 = vtanh.pop %v3817
    %3820 = vrot.lane.b32.xlu0 %v3818, 16
    %v3821 = vpop.permute.xlu0 %3820
    %v3823 = vmul.f32 %v3788, %v3821
    %3825 = vrot.lane.b32.xlu0 %v3806, 96
    %v3826 = vpop.permute.xlu0 %3825
    %3828 = vst.msk [vmem:[#allocation2 + $0x3] sm:$0x1] %vm411, %v3826
    %3830 = vrot.lane.b32.xlu0 %v3823, 96
    %v3831 = vpop.permute.xlu0 %3830
    %3833 = vst.msk [vmem:[#allocation3 + $0x8] sm:$0x1] %vm411, %v3831
    %v3834 = vld [vmem:[#allocation4 + $0x4] sm:$0x1]
    %v3835 = vsel %vm214, %v3826, 0
    %3837 = vmatprep.subr.mxu0 0.0
    %3838 = vmatpush1.msra.mxu0 0.0
    %3839 = vmatprep.subr.mxu0 0.0
    %3840 = vmatpush1.msra.mxu0 0.0
    %3841 = vmatprep.subr.mxu0 0.0
    %3842 = vmatpush1.msra.mxu0 0.0
    %3843 = vmatprep.subr.mxu0 0.0
    %3844 = vmatpush1.msra.mxu0 0.0
    %3845 = vmatprep.subr.mxu0 0.0
    %3846 = vmatpush1.msra.mxu0 0.0
    %3847 = vmatprep.subr.mxu0 0.0
    %3848 = vmatpush1.msra.mxu0 0.0
    %3849 = vmatprep.subr.mxu0 0.0
    %3850 = vmatpush1.msra.mxu0 0.0
    %3851 = vmatprep.subr.mxu0 0.0
    %3852 = vmatpush1.msra.mxu0 0.0
    %3853 = vmatprep.subr.mxu0 0.0
    %3854 = vmatpush1.msra.mxu0 0.0
    %3855 = vmatprep.subr.mxu0 0.0
    %3856 = vmatpush1.msra.mxu0 0.0
    %3857 = vmatprep.subr.mxu0 0.0
    %3858 = vmatpush1.msra.mxu0 0.0
    %3859 = vmatprep.subr.mxu0 0.0
    %3860 = vmatpush1.msra.mxu0 0.0
    %3861 = vmatprep.subr.mxu0 0.0
    %3862 = vmatpush1.msra.mxu0 0.0
    %3863 = vmatprep.subr.mxu0 0.0
    %3864 = vmatpush1.msra.mxu0 0.0
    %3865 = vmatprep.subr.mxu0 0.0
    %3866 = vmatpush1.msra.mxu0 %v2675
    %3867 = vmatprep.subr.mxu0 0.0
    %3868 = vmatpush1.msra.mxu0 %v2674
    %3869 = vmatprep.subr.mxu0 0.0
    %3870 = vmatpush2.msra.mxu0 0.0
    %3871 = vmatprep.subr.mxu0 0.0
    %3872 = vmatpush2.msra.mxu0 0.0
    %3873 = vmatprep.subr.mxu0 0.0
    %3874 = vmatpush2.msra.mxu0 0.0
    %3875 = vmatprep.subr.mxu0 0.0
    %3876 = vmatpush2.msra.mxu0 0.0
    %3877 = vmatprep.subr.mxu0 0.0
    %3878 = vmatpush2.msra.mxu0 0.0
    %3879 = vmatprep.subr.mxu0 0.0
    %3880 = vmatpush2.msra.mxu0 0.0
    %3881 = vmatprep.subr.mxu0 0.0
    %3882 = vmatpush2.msra.mxu0 0.0
    %3883 = vmatprep.subr.mxu0 0.0
    %3884 = vmatpush2.msra.mxu0 0.0
    %3885 = vmatprep.subr.mxu0 0.0
    %3886 = vmatpush2.msra.mxu0 0.0
    %3887 = vmatprep.subr.mxu0 0.0
    %3888 = vmatpush2.msra.mxu0 0.0
    %3889 = vmatprep.subr.mxu0 0.0
    %3890 = vmatpush2.msra.mxu0 0.0
    %3891 = vmatprep.subr.mxu0 0.0
    %3892 = vmatpush2.msra.mxu0 0.0
    %3893 = vmatprep.subr.mxu0 0.0
    %3894 = vmatpush2.msra.mxu0 0.0
    %3895 = vmatprep.subr.mxu0 0.0
    %3896 = vmatpush2.msra.mxu0 0.0
    %3897 = vmatprep.subr.mxu0 0.0
    %3898 = vmatpush2.msra.mxu0 0.0
    %3899 = vmatprep.subr.mxu0 0.0
    %3900 = vmatpush2.msra.mxu0 0.0
    %3901 = vmatprep.mubr.f32.mxu0 0.0
    %3902 = vmatmul.mubr.f32.gmra.mxu0 %v3835
    %v3903 = vpop.f32.mrf.mxu0
    %v3904 = vadd.f32 %v3834, %v3903
    %v3905 = vpop.f32.mrf.mxu0
    %3906 = vdwg.mxu0
    %v3907 = vld [vmem:[#allocation5 + $0x7] sm:$0x1]
    %v3908 = vsel %vm214, %v3831, 0
    %3910 = vmatprep.subr.mxu0 0.0
    %3911 = vmatpush1.msra.mxu0 0.0
    %3912 = vmatprep.subr.mxu0 0.0
    %3913 = vmatpush1.msra.mxu0 0.0
    %3914 = vmatprep.subr.mxu0 0.0
    %3915 = vmatpush1.msra.mxu0 0.0
    %3916 = vmatprep.subr.mxu0 0.0
    %3917 = vmatpush1.msra.mxu0 0.0
    %3918 = vmatprep.subr.mxu0 0.0
    %3919 = vmatpush1.msra.mxu0 0.0
    %3920 = vmatprep.subr.mxu0 0.0
    %3921 = vmatpush1.msra.mxu0 0.0
    %3922 = vmatprep.subr.mxu0 0.0
    %3923 = vmatpush1.msra.mxu0 0.0
    %3924 = vmatprep.subr.mxu0 0.0
    %3925 = vmatpush1.msra.mxu0 0.0
    %3926 = vmatprep.subr.mxu0 0.0
    %3927 = vmatpush1.msra.mxu0 0.0
    %3928 = vmatprep.subr.mxu0 0.0
    %3929 = vmatpush1.msra.mxu0 0.0
    %3930 = vmatprep.subr.mxu0 0.0
    %3931 = vmatpush1.msra.mxu0 0.0
    %3932 = vmatprep.subr.mxu0 0.0
    %3933 = vmatpush1.msra.mxu0 0.0
    %3934 = vmatprep.subr.mxu0 0.0
    %3935 = vmatpush1.msra.mxu0 0.0
    %3936 = vmatprep.subr.mxu0 0.0
    %3937 = vmatpush1.msra.mxu0 0.0
    %3938 = vmatprep.subr.mxu0 0.0
    %3939 = vmatpush1.msra.mxu0 %v2683
    %3940 = vmatprep.subr.mxu0 0.0
    %3941 = vmatpush1.msra.mxu0 %v2682
    %3942 = vmatprep.subr.mxu0 0.0
    %3943 = vmatpush2.msra.mxu0 0.0
    %3944 = vmatprep.subr.mxu0 0.0
    %3945 = vmatpush2.msra.mxu0 0.0
    %3946 = vmatprep.subr.mxu0 0.0
    %3947 = vmatpush2.msra.mxu0 0.0
    %3948 = vmatprep.subr.mxu0 0.0
    %3949 = vmatpush2.msra.mxu0 0.0
    %3950 = vmatprep.subr.mxu0 0.0
    %3951 = vmatpush2.msra.mxu0 0.0
    %3952 = vmatprep.subr.mxu0 0.0
    %3953 = vmatpush2.msra.mxu0 0.0
    %3954 = vmatprep.subr.mxu0 0.0
    %3955 = vmatpush2.msra.mxu0 0.0
    %3956 = vmatprep.subr.mxu0 0.0
    %3957 = vmatpush2.msra.mxu0 0.0
    %3958 = vmatprep.subr.mxu0 0.0
    %3959 = vmatpush2.msra.mxu0 0.0
    %3960 = vmatprep.subr.mxu0 0.0
    %3961 = vmatpush2.msra.mxu0 0.0
    %3962 = vmatprep.subr.mxu0 0.0
    %3963 = vmatpush2.msra.mxu0 0.0
    %3964 = vmatprep.subr.mxu0 0.0
    %3965 = vmatpush2.msra.mxu0 0.0
    %3966 = vmatprep.subr.mxu0 0.0
    %3967 = vmatpush2.msra.mxu0 0.0
    %3968 = vmatprep.subr.mxu0 0.0
    %3969 = vmatpush2.msra.mxu0 0.0
    %3970 = vmatprep.subr.mxu0 0.0
    %3971 = vmatpush2.msra.mxu0 0.0
    %3972 = vmatprep.subr.mxu0 0.0
    %3973 = vmatpush2.msra.mxu0 0.0
    %3974 = vmatprep.mubr.f32.mxu0 0.0
    %3975 = vmatmul.mubr.f32.gmra.mxu0 %v3908
    %v3976 = vpop.f32.mrf.mxu0
    %v3977 = vadd.f32 %v3907, %v3976
    %v3978 = vpop.f32.mrf.mxu0
    %3979 = vdwg.mxu0
    %v3980 = vxor.u32 %v3904, 2147483648
    %v3981 = vmul.f32 %v3980, 1.442695
    %v3982 = vpow.pop %v3981
    %v3983 = vadd.f32 %v3982, 1.0
    %v3984 = vrcp.pop %v3983
    %v3985 = vmul.f32 1.0, %v3984
    %v3986 = vtanh.pop %v3904
    %v3987 = vxor.u32 %v3977, 2147483648
    %v3988 = vmul.f32 %v3987, 1.442695
    %v3989 = vpow.pop %v3988
    %v3990 = vadd.f32 %v3989, 1.0
    %v3991 = vrcp.pop %v3990
    %v3992 = vmul.f32 1.0, %v3991
    %v3993 = vtanh.pop %v3977
    %v3994 = vmul.f32 %v3985, %v3800
    %3996 = vrot.lane.b32.xlu0 %v3986, 80
    %v3997 = vpop.permute.xlu0 %3996
    %v3999 = vmul.f32 %v3985, %v3997
    %4001 = vrot.lane.b32.xlu0 %v3999, 16
    %v4002 = vpop.permute.xlu0 %4001
    %v4004 = vadd.f32 %v3994, %v4002
    %v4005 = vtanh.pop %v4004
    %4007 = vrot.lane.b32.xlu0 %v4005, 16
    %v4008 = vpop.permute.xlu0 %4007
    %v4010 = vmul.f32 %v3985, %v4008
    %v4011 = vmul.f32 %v3992, %v3817
    %4013 = vrot.lane.b32.xlu0 %v3993, 80
    %v4014 = vpop.permute.xlu0 %4013
    %v4016 = vmul.f32 %v3992, %v4014
    %4018 = vrot.lane.b32.xlu0 %v4016, 16
    %v4019 = vpop.permute.xlu0 %4018
    %v4021 = vadd.f32 %v4011, %v4019
    %v4022 = vtanh.pop %v4021
    %4024 = vrot.lane.b32.xlu0 %v4022, 16
    %v4025 = vpop.permute.xlu0 %4024
    %v4027 = vmul.f32 %v3992, %v4025
    %4029 = vrot.lane.b32.xlu0 %v4010, 96
    %v4030 = vpop.permute.xlu0 %4029
    %4032 = vst.msk [vmem:[#allocation2 + $0x4] sm:$0x1] %vm411, %v4030
    %4034 = vrot.lane.b32.xlu0 %v4027, 96
    %v4035 = vpop.permute.xlu0 %4034
    %4037 = vst.msk [vmem:[#allocation3 + $0x7] sm:$0x1] %vm411, %v4035
    %v4038 = vld [vmem:[#allocation4 + $0x5] sm:$0x1]
    %v4039 = vsel %vm214, %v4030, 0
    %4041 = vmatprep.subr.mxu0 0.0
    %4042 = vmatpush1.msra.mxu0 0.0
    %4043 = vmatprep.subr.mxu0 0.0
    %4044 = vmatpush1.msra.mxu0 0.0
    %4045 = vmatprep.subr.mxu0 0.0
    %4046 = vmatpush1.msra.mxu0 0.0
    %4047 = vmatprep.subr.mxu0 0.0
    %4048 = vmatpush1.msra.mxu0 0.0
    %4049 = vmatprep.subr.mxu0 0.0
    %4050 = vmatpush1.msra.mxu0 0.0
    %4051 = vmatprep.subr.mxu0 0.0
    %4052 = vmatpush1.msra.mxu0 0.0
    %4053 = vmatprep.subr.mxu0 0.0
    %4054 = vmatpush1.msra.mxu0 0.0
    %4055 = vmatprep.subr.mxu0 0.0
    %4056 = vmatpush1.msra.mxu0 0.0
    %4057 = vmatprep.subr.mxu0 0.0
    %4058 = vmatpush1.msra.mxu0 0.0
    %4059 = vmatprep.subr.mxu0 0.0
    %4060 = vmatpush1.msra.mxu0 0.0
    %4061 = vmatprep.subr.mxu0 0.0
    %4062 = vmatpush1.msra.mxu0 0.0
    %4063 = vmatprep.subr.mxu0 0.0
    %4064 = vmatpush1.msra.mxu0 0.0
    %4065 = vmatprep.subr.mxu0 0.0
    %4066 = vmatpush1.msra.mxu0 0.0
    %4067 = vmatprep.subr.mxu0 0.0
    %4068 = vmatpush1.msra.mxu0 0.0
    %4069 = vmatprep.subr.mxu0 0.0
    %4070 = vmatpush1.msra.mxu0 %v2675
    %4071 = vmatprep.subr.mxu0 0.0
    %4072 = vmatpush1.msra.mxu0 %v2674
    %4073 = vmatprep.subr.mxu0 0.0
    %4074 = vmatpush2.msra.mxu0 0.0
    %4075 = vmatprep.subr.mxu0 0.0
    %4076 = vmatpush2.msra.mxu0 0.0
    %4077 = vmatprep.subr.mxu0 0.0
    %4078 = vmatpush2.msra.mxu0 0.0
    %4079 = vmatprep.subr.mxu0 0.0
    %4080 = vmatpush2.msra.mxu0 0.0
    %4081 = vmatprep.subr.mxu0 0.0
    %4082 = vmatpush2.msra.mxu0 0.0
    %4083 = vmatprep.subr.mxu0 0.0
    %4084 = vmatpush2.msra.mxu0 0.0
    %4085 = vmatprep.subr.mxu0 0.0
    %4086 = vmatpush2.msra.mxu0 0.0
    %4087 = vmatprep.subr.mxu0 0.0
    %4088 = vmatpush2.msra.mxu0 0.0
    %4089 = vmatprep.subr.mxu0 0.0
    %4090 = vmatpush2.msra.mxu0 0.0
    %4091 = vmatprep.subr.mxu0 0.0
    %4092 = vmatpush2.msra.mxu0 0.0
    %4093 = vmatprep.subr.mxu0 0.0
    %4094 = vmatpush2.msra.mxu0 0.0
    %4095 = vmatprep.subr.mxu0 0.0
    %4096 = vmatpush2.msra.mxu0 0.0
    %4097 = vmatprep.subr.mxu0 0.0
    %4098 = vmatpush2.msra.mxu0 0.0
    %4099 = vmatprep.subr.mxu0 0.0
    %4100 = vmatpush2.msra.mxu0 0.0
    %4101 = vmatprep.subr.mxu0 0.0
    %4102 = vmatpush2.msra.mxu0 0.0
    %4103 = vmatprep.subr.mxu0 0.0
    %4104 = vmatpush2.msra.mxu0 0.0
    %4105 = vmatprep.mubr.f32.mxu0 0.0
    %4106 = vmatmul.mubr.f32.gmra.mxu0 %v4039
    %v4107 = vpop.f32.mrf.mxu0
    %v4108 = vadd.f32 %v4038, %v4107
    %v4109 = vpop.f32.mrf.mxu0
    %4110 = vdwg.mxu0
    %v4111 = vld [vmem:[#allocation5 + $0x6] sm:$0x1]
    %v4112 = vsel %vm214, %v4035, 0
    %4114 = vmatprep.subr.mxu0 0.0
    %4115 = vmatpush1.msra.mxu0 0.0
    %4116 = vmatprep.subr.mxu0 0.0
    %4117 = vmatpush1.msra.mxu0 0.0
    %4118 = vmatprep.subr.mxu0 0.0
    %4119 = vmatpush1.msra.mxu0 0.0
    %4120 = vmatprep.subr.mxu0 0.0
    %4121 = vmatpush1.msra.mxu0 0.0
    %4122 = vmatprep.subr.mxu0 0.0
    %4123 = vmatpush1.msra.mxu0 0.0
    %4124 = vmatprep.subr.mxu0 0.0
    %4125 = vmatpush1.msra.mxu0 0.0
    %4126 = vmatprep.subr.mxu0 0.0
    %4127 = vmatpush1.msra.mxu0 0.0
    %4128 = vmatprep.subr.mxu0 0.0
    %4129 = vmatpush1.msra.mxu0 0.0
    %4130 = vmatprep.subr.mxu0 0.0
    %4131 = vmatpush1.msra.mxu0 0.0
    %4132 = vmatprep.subr.mxu0 0.0
    %4133 = vmatpush1.msra.mxu0 0.0
    %4134 = vmatprep.subr.mxu0 0.0
    %4135 = vmatpush1.msra.mxu0 0.0
    %4136 = vmatprep.subr.mxu0 0.0
    %4137 = vmatpush1.msra.mxu0 0.0
    %4138 = vmatprep.subr.mxu0 0.0
    %4139 = vmatpush1.msra.mxu0 0.0
    %4140 = vmatprep.subr.mxu0 0.0
    %4141 = vmatpush1.msra.mxu0 0.0
    %4142 = vmatprep.subr.mxu0 0.0
    %4143 = vmatpush1.msra.mxu0 %v2683
    %4144 = vmatprep.subr.mxu0 0.0
    %4145 = vmatpush1.msra.mxu0 %v2682
    %4146 = vmatprep.subr.mxu0 0.0
    %4147 = vmatpush2.msra.mxu0 0.0
    %4148 = vmatprep.subr.mxu0 0.0
    %4149 = vmatpush2.msra.mxu0 0.0
    %4150 = vmatprep.subr.mxu0 0.0
    %4151 = vmatpush2.msra.mxu0 0.0
    %4152 = vmatprep.subr.mxu0 0.0
    %4153 = vmatpush2.msra.mxu0 0.0
    %4154 = vmatprep.subr.mxu0 0.0
    %4155 = vmatpush2.msra.mxu0 0.0
    %4156 = vmatprep.subr.mxu0 0.0
    %4157 = vmatpush2.msra.mxu0 0.0
    %4158 = vmatprep.subr.mxu0 0.0
    %4159 = vmatpush2.msra.mxu0 0.0
    %4160 = vmatprep.subr.mxu0 0.0
    %4161 = vmatpush2.msra.mxu0 0.0
    %4162 = vmatprep.subr.mxu0 0.0
    %4163 = vmatpush2.msra.mxu0 0.0
    %4164 = vmatprep.subr.mxu0 0.0
    %4165 = vmatpush2.msra.mxu0 0.0
    %4166 = vmatprep.subr.mxu0 0.0
    %4167 = vmatpush2.msra.mxu0 0.0
    %4168 = vmatprep.subr.mxu0 0.0
    %4169 = vmatpush2.msra.mxu0 0.0
    %4170 = vmatprep.subr.mxu0 0.0
    %4171 = vmatpush2.msra.mxu0 0.0
    %4172 = vmatprep.subr.mxu0 0.0
    %4173 = vmatpush2.msra.mxu0 0.0
    %4174 = vmatprep.subr.mxu0 0.0
    %4175 = vmatpush2.msra.mxu0 0.0
    %4176 = vmatprep.subr.mxu0 0.0
    %4177 = vmatpush2.msra.mxu0 0.0
    %4178 = vmatprep.mubr.f32.mxu0 0.0
    %4179 = vmatmul.mubr.f32.gmra.mxu0 %v4112
    %v4180 = vpop.f32.mrf.mxu0
    %v4181 = vadd.f32 %v4111, %v4180
    %v4182 = vpop.f32.mrf.mxu0
    %4183 = vdwg.mxu0
    %v4184 = vxor.u32 %v4108, 2147483648
    %v4185 = vmul.f32 %v4184, 1.442695
    %v4186 = vpow.pop %v4185
    %v4187 = vadd.f32 %v4186, 1.0
    %v4188 = vrcp.pop %v4187
    %v4189 = vmul.f32 1.0, %v4188
    %v4190 = vtanh.pop %v4108
    %v4191 = vxor.u32 %v4181, 2147483648
    %v4192 = vmul.f32 %v4191, 1.442695
    %v4193 = vpow.pop %v4192
    %v4194 = vadd.f32 %v4193, 1.0
    %v4195 = vrcp.pop %v4194
    %v4196 = vmul.f32 1.0, %v4195
    %v4197 = vtanh.pop %v4181
    %v4198 = vmul.f32 %v4189, %v4004
    %4200 = vrot.lane.b32.xlu0 %v4190, 80
    %v4201 = vpop.permute.xlu0 %4200
    %v4203 = vmul.f32 %v4189, %v4201
    %4205 = vrot.lane.b32.xlu0 %v4203, 16
    %v4206 = vpop.permute.xlu0 %4205
    %v4208 = vadd.f32 %v4198, %v4206
    %v4209 = vtanh.pop %v4208
    %4211 = vrot.lane.b32.xlu0 %v4209, 16
    %v4212 = vpop.permute.xlu0 %4211
    %v4214 = vmul.f32 %v4189, %v4212
    %v4215 = vmul.f32 %v4196, %v4021
    %4217 = vrot.lane.b32.xlu0 %v4197, 80
    %v4218 = vpop.permute.xlu0 %4217
    %v4220 = vmul.f32 %v4196, %v4218
    %4222 = vrot.lane.b32.xlu0 %v4220, 16
    %v4223 = vpop.permute.xlu0 %4222
    %v4225 = vadd.f32 %v4215, %v4223
    %v4226 = vtanh.pop %v4225
    %4228 = vrot.lane.b32.xlu0 %v4226, 16
    %v4229 = vpop.permute.xlu0 %4228
    %v4231 = vmul.f32 %v4196, %v4229
    %4233 = vrot.lane.b32.xlu0 %v4214, 96
    %v4234 = vpop.permute.xlu0 %4233
    %4236 = vst.msk [vmem:[#allocation2 + $0x5] sm:$0x1] %vm411, %v4234
    %4238 = vrot.lane.b32.xlu0 %v4231, 96
    %v4239 = vpop.permute.xlu0 %4238
    %4241 = vst.msk [vmem:[#allocation3 + $0x6] sm:$0x1] %vm411, %v4239
    %v4242 = vld [vmem:[#allocation4 + $0x6] sm:$0x1]
    %v4243 = vsel %vm214, %v4234, 0
    %4245 = vmatprep.subr.mxu0 0.0
    %4246 = vmatpush1.msra.mxu0 0.0
    %4247 = vmatprep.subr.mxu0 0.0
    %4248 = vmatpush1.msra.mxu0 0.0
    %4249 = vmatprep.subr.mxu0 0.0
    %4250 = vmatpush1.msra.mxu0 0.0
    %4251 = vmatprep.subr.mxu0 0.0
    %4252 = vmatpush1.msra.mxu0 0.0
    %4253 = vmatprep.subr.mxu0 0.0
    %4254 = vmatpush1.msra.mxu0 0.0
    %4255 = vmatprep.subr.mxu0 0.0
    %4256 = vmatpush1.msra.mxu0 0.0
    %4257 = vmatprep.subr.mxu0 0.0
    %4258 = vmatpush1.msra.mxu0 0.0
    %4259 = vmatprep.subr.mxu0 0.0
    %4260 = vmatpush1.msra.mxu0 0.0
    %4261 = vmatprep.subr.mxu0 0.0
    %4262 = vmatpush1.msra.mxu0 0.0
    %4263 = vmatprep.subr.mxu0 0.0
    %4264 = vmatpush1.msra.mxu0 0.0
    %4265 = vmatprep.subr.mxu0 0.0
    %4266 = vmatpush1.msra.mxu0 0.0
    %4267 = vmatprep.subr.mxu0 0.0
    %4268 = vmatpush1.msra.mxu0 0.0
    %4269 = vmatprep.subr.mxu0 0.0
    %4270 = vmatpush1.msra.mxu0 0.0
    %4271 = vmatprep.subr.mxu0 0.0
    %4272 = vmatpush1.msra.mxu0 0.0
    %4273 = vmatprep.subr.mxu0 0.0
    %4274 = vmatpush1.msra.mxu0 %v2675
    %4275 = vmatprep.subr.mxu0 0.0
    %4276 = vmatpush1.msra.mxu0 %v2674
    %4277 = vmatprep.subr.mxu0 0.0
    %4278 = vmatpush2.msra.mxu0 0.0
    %4279 = vmatprep.subr.mxu0 0.0
    %4280 = vmatpush2.msra.mxu0 0.0
    %4281 = vmatprep.subr.mxu0 0.0
    %4282 = vmatpush2.msra.mxu0 0.0
    %4283 = vmatprep.subr.mxu0 0.0
    %4284 = vmatpush2.msra.mxu0 0.0
    %4285 = vmatprep.subr.mxu0 0.0
    %4286 = vmatpush2.msra.mxu0 0.0
    %4287 = vmatprep.subr.mxu0 0.0
    %4288 = vmatpush2.msra.mxu0 0.0
    %4289 = vmatprep.subr.mxu0 0.0
    %4290 = vmatpush2.msra.mxu0 0.0
    %4291 = vmatprep.subr.mxu0 0.0
    %4292 = vmatpush2.msra.mxu0 0.0
    %4293 = vmatprep.subr.mxu0 0.0
    %4294 = vmatpush2.msra.mxu0 0.0
    %4295 = vmatprep.subr.mxu0 0.0
    %4296 = vmatpush2.msra.mxu0 0.0
    %4297 = vmatprep.subr.mxu0 0.0
    %4298 = vmatpush2.msra.mxu0 0.0
    %4299 = vmatprep.subr.mxu0 0.0
    %4300 = vmatpush2.msra.mxu0 0.0
    %4301 = vmatprep.subr.mxu0 0.0
    %4302 = vmatpush2.msra.mxu0 0.0
    %4303 = vmatprep.subr.mxu0 0.0
    %4304 = vmatpush2.msra.mxu0 0.0
    %4305 = vmatprep.subr.mxu0 0.0
    %4306 = vmatpush2.msra.mxu0 0.0
    %4307 = vmatprep.subr.mxu0 0.0
    %4308 = vmatpush2.msra.mxu0 0.0
    %4309 = vmatprep.mubr.f32.mxu0 0.0
    %4310 = vmatmul.mubr.f32.gmra.mxu0 %v4243
    %v4311 = vpop.f32.mrf.mxu0
    %v4312 = vadd.f32 %v4242, %v4311
    %v4313 = vpop.f32.mrf.mxu0
    %4314 = vdwg.mxu0
    %v4315 = vld [vmem:[#allocation5 + $0x5] sm:$0x1]
    %v4316 = vsel %vm214, %v4239, 0
    %4318 = vmatprep.subr.mxu0 0.0
    %4319 = vmatpush1.msra.mxu0 0.0
    %4320 = vmatprep.subr.mxu0 0.0
    %4321 = vmatpush1.msra.mxu0 0.0
    %4322 = vmatprep.subr.mxu0 0.0
    %4323 = vmatpush1.msra.mxu0 0.0
    %4324 = vmatprep.subr.mxu0 0.0
    %4325 = vmatpush1.msra.mxu0 0.0
    %4326 = vmatprep.subr.mxu0 0.0
    %4327 = vmatpush1.msra.mxu0 0.0
    %4328 = vmatprep.subr.mxu0 0.0
    %4329 = vmatpush1.msra.mxu0 0.0
    %4330 = vmatprep.subr.mxu0 0.0
    %4331 = vmatpush1.msra.mxu0 0.0
    %4332 = vmatprep.subr.mxu0 0.0
    %4333 = vmatpush1.msra.mxu0 0.0
    %4334 = vmatprep.subr.mxu0 0.0
    %4335 = vmatpush1.msra.mxu0 0.0
    %4336 = vmatprep.subr.mxu0 0.0
    %4337 = vmatpush1.msra.mxu0 0.0
    %4338 = vmatprep.subr.mxu0 0.0
    %4339 = vmatpush1.msra.mxu0 0.0
    %4340 = vmatprep.subr.mxu0 0.0
    %4341 = vmatpush1.msra.mxu0 0.0
    %4342 = vmatprep.subr.mxu0 0.0
    %4343 = vmatpush1.msra.mxu0 0.0
    %4344 = vmatprep.subr.mxu0 0.0
    %4345 = vmatpush1.msra.mxu0 0.0
    %4346 = vmatprep.subr.mxu0 0.0
    %4347 = vmatpush1.msra.mxu0 %v2683
    %4348 = vmatprep.subr.mxu0 0.0
    %4349 = vmatpush1.msra.mxu0 %v2682
    %4350 = vmatprep.subr.mxu0 0.0
    %4351 = vmatpush2.msra.mxu0 0.0
    %4352 = vmatprep.subr.mxu0 0.0
    %4353 = vmatpush2.msra.mxu0 0.0
    %4354 = vmatprep.subr.mxu0 0.0
    %4355 = vmatpush2.msra.mxu0 0.0
    %4356 = vmatprep.subr.mxu0 0.0
    %4357 = vmatpush2.msra.mxu0 0.0
    %4358 = vmatprep.subr.mxu0 0.0
    %4359 = vmatpush2.msra.mxu0 0.0
    %4360 = vmatprep.subr.mxu0 0.0
    %4361 = vmatpush2.msra.mxu0 0.0
    %4362 = vmatprep.subr.mxu0 0.0
    %4363 = vmatpush2.msra.mxu0 0.0
    %4364 = vmatprep.subr.mxu0 0.0
    %4365 = vmatpush2.msra.mxu0 0.0
    %4366 = vmatprep.subr.mxu0 0.0
    %4367 = vmatpush2.msra.mxu0 0.0
    %4368 = vmatprep.subr.mxu0 0.0
    %4369 = vmatpush2.msra.mxu0 0.0
    %4370 = vmatprep.subr.mxu0 0.0
    %4371 = vmatpush2.msra.mxu0 0.0
    %4372 = vmatprep.subr.mxu0 0.0
    %4373 = vmatpush2.msra.mxu0 0.0
    %4374 = vmatprep.subr.mxu0 0.0
    %4375 = vmatpush2.msra.mxu0 0.0
    %4376 = vmatprep.subr.mxu0 0.0
    %4377 = vmatpush2.msra.mxu0 0.0
    %4378 = vmatprep.subr.mxu0 0.0
    %4379 = vmatpush2.msra.mxu0 0.0
    %4380 = vmatprep.subr.mxu0 0.0
    %4381 = vmatpush2.msra.mxu0 0.0
    %4382 = vmatprep.mubr.f32.mxu0 0.0
    %4383 = vmatmul.mubr.f32.gmra.mxu0 %v4316
    %v4384 = vpop.f32.mrf.mxu0
    %v4385 = vadd.f32 %v4315, %v4384
    %v4386 = vpop.f32.mrf.mxu0
    %4387 = vdwg.mxu0
    %v4388 = vxor.u32 %v4312, 2147483648
    %v4389 = vmul.f32 %v4388, 1.442695
    %v4390 = vpow.pop %v4389
    %v4391 = vadd.f32 %v4390, 1.0
    %v4392 = vrcp.pop %v4391
    %v4393 = vmul.f32 1.0, %v4392
    %v4394 = vtanh.pop %v4312
    %v4395 = vxor.u32 %v4385, 2147483648
    %v4396 = vmul.f32 %v4395, 1.442695
    %v4397 = vpow.pop %v4396
    %v4398 = vadd.f32 %v4397, 1.0
    %v4399 = vrcp.pop %v4398
    %v4400 = vmul.f32 1.0, %v4399
    %v4401 = vtanh.pop %v4385
    %v4402 = vmul.f32 %v4393, %v4208
    %4404 = vrot.lane.b32.xlu0 %v4394, 80
    %v4405 = vpop.permute.xlu0 %4404
    %v4407 = vmul.f32 %v4393, %v4405
    %4409 = vrot.lane.b32.xlu0 %v4407, 16
    %v4410 = vpop.permute.xlu0 %4409
    %v4412 = vadd.f32 %v4402, %v4410
    %v4413 = vtanh.pop %v4412
    %4415 = vrot.lane.b32.xlu0 %v4413, 16
    %v4416 = vpop.permute.xlu0 %4415
    %v4418 = vmul.f32 %v4393, %v4416
    %v4419 = vmul.f32 %v4400, %v4225
    %4421 = vrot.lane.b32.xlu0 %v4401, 80
    %v4422 = vpop.permute.xlu0 %4421
    %v4424 = vmul.f32 %v4400, %v4422
    %4426 = vrot.lane.b32.xlu0 %v4424, 16
    %v4427 = vpop.permute.xlu0 %4426
    %v4429 = vadd.f32 %v4419, %v4427
    %v4430 = vtanh.pop %v4429
    %4432 = vrot.lane.b32.xlu0 %v4430, 16
    %v4433 = vpop.permute.xlu0 %4432
    %v4435 = vmul.f32 %v4400, %v4433
    %4437 = vrot.lane.b32.xlu0 %v4418, 96
    %v4438 = vpop.permute.xlu0 %4437
    %4440 = vst.msk [vmem:[#allocation2 + $0x6] sm:$0x1] %vm411, %v4438
    %4442 = vrot.lane.b32.xlu0 %v4435, 96
    %v4443 = vpop.permute.xlu0 %4442
    %4445 = vst.msk [vmem:[#allocation3 + $0x5] sm:$0x1] %vm411, %v4443
    %v4446 = vld [vmem:[#allocation4 + $0x7] sm:$0x1]
    %v4447 = vsel %vm214, %v4438, 0
    %4449 = vmatprep.subr.mxu0 0.0
    %4450 = vmatpush1.msra.mxu0 0.0
    %4451 = vmatprep.subr.mxu0 0.0
    %4452 = vmatpush1.msra.mxu0 0.0
    %4453 = vmatprep.subr.mxu0 0.0
    %4454 = vmatpush1.msra.mxu0 0.0
    %4455 = vmatprep.subr.mxu0 0.0
    %4456 = vmatpush1.msra.mxu0 0.0
    %4457 = vmatprep.subr.mxu0 0.0
    %4458 = vmatpush1.msra.mxu0 0.0
    %4459 = vmatprep.subr.mxu0 0.0
    %4460 = vmatpush1.msra.mxu0 0.0
    %4461 = vmatprep.subr.mxu0 0.0
    %4462 = vmatpush1.msra.mxu0 0.0
    %4463 = vmatprep.subr.mxu0 0.0
    %4464 = vmatpush1.msra.mxu0 0.0
    %4465 = vmatprep.subr.mxu0 0.0
    %4466 = vmatpush1.msra.mxu0 0.0
    %4467 = vmatprep.subr.mxu0 0.0
    %4468 = vmatpush1.msra.mxu0 0.0
    %4469 = vmatprep.subr.mxu0 0.0
    %4470 = vmatpush1.msra.mxu0 0.0
    %4471 = vmatprep.subr.mxu0 0.0
    %4472 = vmatpush1.msra.mxu0 0.0
    %4473 = vmatprep.subr.mxu0 0.0
    %4474 = vmatpush1.msra.mxu0 0.0
    %4475 = vmatprep.subr.mxu0 0.0
    %4476 = vmatpush1.msra.mxu0 0.0
    %4477 = vmatprep.subr.mxu0 0.0
    %4478 = vmatpush1.msra.mxu0 %v2675
    %4479 = vmatprep.subr.mxu0 0.0
    %4480 = vmatpush1.msra.mxu0 %v2674
    %4481 = vmatprep.subr.mxu0 0.0
    %4482 = vmatpush2.msra.mxu0 0.0
    %4483 = vmatprep.subr.mxu0 0.0
    %4484 = vmatpush2.msra.mxu0 0.0
    %4485 = vmatprep.subr.mxu0 0.0
    %4486 = vmatpush2.msra.mxu0 0.0
    %4487 = vmatprep.subr.mxu0 0.0
    %4488 = vmatpush2.msra.mxu0 0.0
    %4489 = vmatprep.subr.mxu0 0.0
    %4490 = vmatpush2.msra.mxu0 0.0
    %4491 = vmatprep.subr.mxu0 0.0
    %4492 = vmatpush2.msra.mxu0 0.0
    %4493 = vmatprep.subr.mxu0 0.0
    %4494 = vmatpush2.msra.mxu0 0.0
    %4495 = vmatprep.subr.mxu0 0.0
    %4496 = vmatpush2.msra.mxu0 0.0
    %4497 = vmatprep.subr.mxu0 0.0
    %4498 = vmatpush2.msra.mxu0 0.0
    %4499 = vmatprep.subr.mxu0 0.0
    %4500 = vmatpush2.msra.mxu0 0.0
    %4501 = vmatprep.subr.mxu0 0.0
    %4502 = vmatpush2.msra.mxu0 0.0
    %4503 = vmatprep.subr.mxu0 0.0
    %4504 = vmatpush2.msra.mxu0 0.0
    %4505 = vmatprep.subr.mxu0 0.0
    %4506 = vmatpush2.msra.mxu0 0.0
    %4507 = vmatprep.subr.mxu0 0.0
    %4508 = vmatpush2.msra.mxu0 0.0
    %4509 = vmatprep.subr.mxu0 0.0
    %4510 = vmatpush2.msra.mxu0 0.0
    %4511 = vmatprep.subr.mxu0 0.0
    %4512 = vmatpush2.msra.mxu0 0.0
    %4513 = vmatprep.mubr.f32.mxu0 0.0
    %4514 = vmatmul.mubr.f32.gmra.mxu0 %v4447
    %v4515 = vpop.f32.mrf.mxu0
    %v4516 = vadd.f32 %v4446, %v4515
    %v4517 = vpop.f32.mrf.mxu0
    %4518 = vdwg.mxu0
    %v4519 = vld [vmem:[#allocation5 + $0x4] sm:$0x1]
    %v4520 = vsel %vm214, %v4443, 0
    %4522 = vmatprep.subr.mxu0 0.0
    %4523 = vmatpush1.msra.mxu0 0.0
    %4524 = vmatprep.subr.mxu0 0.0
    %4525 = vmatpush1.msra.mxu0 0.0
    %4526 = vmatprep.subr.mxu0 0.0
    %4527 = vmatpush1.msra.mxu0 0.0
    %4528 = vmatprep.subr.mxu0 0.0
    %4529 = vmatpush1.msra.mxu0 0.0
    %4530 = vmatprep.subr.mxu0 0.0
    %4531 = vmatpush1.msra.mxu0 0.0
    %4532 = vmatprep.subr.mxu0 0.0
    %4533 = vmatpush1.msra.mxu0 0.0
    %4534 = vmatprep.subr.mxu0 0.0
    %4535 = vmatpush1.msra.mxu0 0.0
    %4536 = vmatprep.subr.mxu0 0.0
    %4537 = vmatpush1.msra.mxu0 0.0
    %4538 = vmatprep.subr.mxu0 0.0
    %4539 = vmatpush1.msra.mxu0 0.0
    %4540 = vmatprep.subr.mxu0 0.0
    %4541 = vmatpush1.msra.mxu0 0.0
    %4542 = vmatprep.subr.mxu0 0.0
    %4543 = vmatpush1.msra.mxu0 0.0
    %4544 = vmatprep.subr.mxu0 0.0
    %4545 = vmatpush1.msra.mxu0 0.0
    %4546 = vmatprep.subr.mxu0 0.0
    %4547 = vmatpush1.msra.mxu0 0.0
    %4548 = vmatprep.subr.mxu0 0.0
    %4549 = vmatpush1.msra.mxu0 0.0
    %4550 = vmatprep.subr.mxu0 0.0
    %4551 = vmatpush1.msra.mxu0 %v2683
    %4552 = vmatprep.subr.mxu0 0.0
    %4553 = vmatpush1.msra.mxu0 %v2682
    %4554 = vmatprep.subr.mxu0 0.0
    %4555 = vmatpush2.msra.mxu0 0.0
    %4556 = vmatprep.subr.mxu0 0.0
    %4557 = vmatpush2.msra.mxu0 0.0
    %4558 = vmatprep.subr.mxu0 0.0
    %4559 = vmatpush2.msra.mxu0 0.0
    %4560 = vmatprep.subr.mxu0 0.0
    %4561 = vmatpush2.msra.mxu0 0.0
    %4562 = vmatprep.subr.mxu0 0.0
    %4563 = vmatpush2.msra.mxu0 0.0
    %4564 = vmatprep.subr.mxu0 0.0
    %4565 = vmatpush2.msra.mxu0 0.0
    %4566 = vmatprep.subr.mxu0 0.0
    %4567 = vmatpush2.msra.mxu0 0.0
    %4568 = vmatprep.subr.mxu0 0.0
    %4569 = vmatpush2.msra.mxu0 0.0
    %4570 = vmatprep.subr.mxu0 0.0
    %4571 = vmatpush2.msra.mxu0 0.0
    %4572 = vmatprep.subr.mxu0 0.0
    %4573 = vmatpush2.msra.mxu0 0.0
    %4574 = vmatprep.subr.mxu0 0.0
    %4575 = vmatpush2.msra.mxu0 0.0
    %4576 = vmatprep.subr.mxu0 0.0
    %4577 = vmatpush2.msra.mxu0 0.0
    %4578 = vmatprep.subr.mxu0 0.0
    %4579 = vmatpush2.msra.mxu0 0.0
    %4580 = vmatprep.subr.mxu0 0.0
    %4581 = vmatpush2.msra.mxu0 0.0
    %4582 = vmatprep.subr.mxu0 0.0
    %4583 = vmatpush2.msra.mxu0 0.0
    %4584 = vmatprep.subr.mxu0 0.0
    %4585 = vmatpush2.msra.mxu0 0.0
    %4586 = vmatprep.mubr.f32.mxu0 0.0
    %4587 = vmatmul.mubr.f32.gmra.mxu0 %v4520
    %v4588 = vpop.f32.mrf.mxu0
    %v4589 = vadd.f32 %v4519, %v4588
    %v4590 = vpop.f32.mrf.mxu0
    %4591 = vdwg.mxu0
    %v4592 = vxor.u32 %v4516, 2147483648
    %v4593 = vmul.f32 %v4592, 1.442695
    %v4594 = vpow.pop %v4593
    %v4595 = vadd.f32 %v4594, 1.0
    %v4596 = vrcp.pop %v4595
    %v4597 = vmul.f32 1.0, %v4596
    %v4598 = vtanh.pop %v4516
    %v4599 = vxor.u32 %v4589, 2147483648
    %v4600 = vmul.f32 %v4599, 1.442695
    %v4601 = vpow.pop %v4600
    %v4602 = vadd.f32 %v4601, 1.0
    %v4603 = vrcp.pop %v4602
    %v4604 = vmul.f32 1.0, %v4603
    %v4605 = vtanh.pop %v4589
    %v4606 = vmul.f32 %v4597, %v4412
    %4608 = vrot.lane.b32.xlu0 %v4598, 80
    %v4609 = vpop.permute.xlu0 %4608
    %v4611 = vmul.f32 %v4597, %v4609
    %4613 = vrot.lane.b32.xlu0 %v4611, 16
    %v4614 = vpop.permute.xlu0 %4613
    %v4616 = vadd.f32 %v4606, %v4614
    %v4617 = vtanh.pop %v4616
    %4619 = vrot.lane.b32.xlu0 %v4617, 16
    %v4620 = vpop.permute.xlu0 %4619
    %v4622 = vmul.f32 %v4597, %v4620
    %v4623 = vmul.f32 %v4604, %v4429
    %4625 = vrot.lane.b32.xlu0 %v4605, 80
    %v4626 = vpop.permute.xlu0 %4625
    %v4628 = vmul.f32 %v4604, %v4626
    %4630 = vrot.lane.b32.xlu0 %v4628, 16
    %v4631 = vpop.permute.xlu0 %4630
    %v4633 = vadd.f32 %v4623, %v4631
    %v4634 = vtanh.pop %v4633
    %4636 = vrot.lane.b32.xlu0 %v4634, 16
    %v4637 = vpop.permute.xlu0 %4636
    %v4639 = vmul.f32 %v4604, %v4637
    %4641 = vrot.lane.b32.xlu0 %v4622, 96
    %v4642 = vpop.permute.xlu0 %4641
    %4644 = vst.msk [vmem:[#allocation2 + $0x7] sm:$0x1] %vm411, %v4642
    %4646 = vrot.lane.b32.xlu0 %v4639, 96
    %v4647 = vpop.permute.xlu0 %4646
    %4649 = vst.msk [vmem:[#allocation3 + $0x4] sm:$0x1] %vm411, %v4647
    %v4650 = vld [vmem:[#allocation4 + $0x8] sm:$0x1]
    %v4651 = vsel %vm214, %v4642, 0
    %4653 = vmatprep.subr.mxu0 0.0
    %4654 = vmatpush1.msra.mxu0 0.0
    %4655 = vmatprep.subr.mxu0 0.0
    %4656 = vmatpush1.msra.mxu0 0.0
    %4657 = vmatprep.subr.mxu0 0.0
    %4658 = vmatpush1.msra.mxu0 0.0
    %4659 = vmatprep.subr.mxu0 0.0
    %4660 = vmatpush1.msra.mxu0 0.0
    %4661 = vmatprep.subr.mxu0 0.0
    %4662 = vmatpush1.msra.mxu0 0.0
    %4663 = vmatprep.subr.mxu0 0.0
    %4664 = vmatpush1.msra.mxu0 0.0
    %4665 = vmatprep.subr.mxu0 0.0
    %4666 = vmatpush1.msra.mxu0 0.0
    %4667 = vmatprep.subr.mxu0 0.0
    %4668 = vmatpush1.msra.mxu0 0.0
    %4669 = vmatprep.subr.mxu0 0.0
    %4670 = vmatpush1.msra.mxu0 0.0
    %4671 = vmatprep.subr.mxu0 0.0
    %4672 = vmatpush1.msra.mxu0 0.0
    %4673 = vmatprep.subr.mxu0 0.0
    %4674 = vmatpush1.msra.mxu0 0.0
    %4675 = vmatprep.subr.mxu0 0.0
    %4676 = vmatpush1.msra.mxu0 0.0
    %4677 = vmatprep.subr.mxu0 0.0
    %4678 = vmatpush1.msra.mxu0 0.0
    %4679 = vmatprep.subr.mxu0 0.0
    %4680 = vmatpush1.msra.mxu0 0.0
    %4681 = vmatprep.subr.mxu0 0.0
    %4682 = vmatpush1.msra.mxu0 %v2675
    %4683 = vmatprep.subr.mxu0 0.0
    %4684 = vmatpush1.msra.mxu0 %v2674
    %4685 = vmatprep.subr.mxu0 0.0
    %4686 = vmatpush2.msra.mxu0 0.0
    %4687 = vmatprep.subr.mxu0 0.0
    %4688 = vmatpush2.msra.mxu0 0.0
    %4689 = vmatprep.subr.mxu0 0.0
    %4690 = vmatpush2.msra.mxu0 0.0
    %4691 = vmatprep.subr.mxu0 0.0
    %4692 = vmatpush2.msra.mxu0 0.0
    %4693 = vmatprep.subr.mxu0 0.0
    %4694 = vmatpush2.msra.mxu0 0.0
    %4695 = vmatprep.subr.mxu0 0.0
    %4696 = vmatpush2.msra.mxu0 0.0
    %4697 = vmatprep.subr.mxu0 0.0
    %4698 = vmatpush2.msra.mxu0 0.0
    %4699 = vmatprep.subr.mxu0 0.0
    %4700 = vmatpush2.msra.mxu0 0.0
    %4701 = vmatprep.subr.mxu0 0.0
    %4702 = vmatpush2.msra.mxu0 0.0
    %4703 = vmatprep.subr.mxu0 0.0
    %4704 = vmatpush2.msra.mxu0 0.0
    %4705 = vmatprep.subr.mxu0 0.0
    %4706 = vmatpush2.msra.mxu0 0.0
    %4707 = vmatprep.subr.mxu0 0.0
    %4708 = vmatpush2.msra.mxu0 0.0
    %4709 = vmatprep.subr.mxu0 0.0
    %4710 = vmatpush2.msra.mxu0 0.0
    %4711 = vmatprep.subr.mxu0 0.0
    %4712 = vmatpush2.msra.mxu0 0.0
    %4713 = vmatprep.subr.mxu0 0.0
    %4714 = vmatpush2.msra.mxu0 0.0
    %4715 = vmatprep.subr.mxu0 0.0
    %4716 = vmatpush2.msra.mxu0 0.0
    %4717 = vmatprep.mubr.f32.mxu0 0.0
    %4718 = vmatmul.mubr.f32.gmra.mxu0 %v4651
    %v4719 = vpop.f32.mrf.mxu0
    %v4720 = vadd.f32 %v4650, %v4719
    %v4721 = vpop.f32.mrf.mxu0
    %4722 = vdwg.mxu0
    %v4723 = vld [vmem:[#allocation5 + $0x3] sm:$0x1]
    %v4724 = vsel %vm214, %v4647, 0
    %4726 = vmatprep.subr.mxu0 0.0
    %4727 = vmatpush1.msra.mxu0 0.0
    %4728 = vmatprep.subr.mxu0 0.0
    %4729 = vmatpush1.msra.mxu0 0.0
    %4730 = vmatprep.subr.mxu0 0.0
    %4731 = vmatpush1.msra.mxu0 0.0
    %4732 = vmatprep.subr.mxu0 0.0
    %4733 = vmatpush1.msra.mxu0 0.0
    %4734 = vmatprep.subr.mxu0 0.0
    %4735 = vmatpush1.msra.mxu0 0.0
    %4736 = vmatprep.subr.mxu0 0.0
    %4737 = vmatpush1.msra.mxu0 0.0
    %4738 = vmatprep.subr.mxu0 0.0
    %4739 = vmatpush1.msra.mxu0 0.0
    %4740 = vmatprep.subr.mxu0 0.0
    %4741 = vmatpush1.msra.mxu0 0.0
    %4742 = vmatprep.subr.mxu0 0.0
    %4743 = vmatpush1.msra.mxu0 0.0
    %4744 = vmatprep.subr.mxu0 0.0
    %4745 = vmatpush1.msra.mxu0 0.0
    %4746 = vmatprep.subr.mxu0 0.0
    %4747 = vmatpush1.msra.mxu0 0.0
    %4748 = vmatprep.subr.mxu0 0.0
    %4749 = vmatpush1.msra.mxu0 0.0
    %4750 = vmatprep.subr.mxu0 0.0
    %4751 = vmatpush1.msra.mxu0 0.0
    %4752 = vmatprep.subr.mxu0 0.0
    %4753 = vmatpush1.msra.mxu0 0.0
    %4754 = vmatprep.subr.mxu0 0.0
    %4755 = vmatpush1.msra.mxu0 %v2683
    %4756 = vmatprep.subr.mxu0 0.0
    %4757 = vmatpush1.msra.mxu0 %v2682
    %4758 = vmatprep.subr.mxu0 0.0
    %4759 = vmatpush2.msra.mxu0 0.0
    %4760 = vmatprep.subr.mxu0 0.0
    %4761 = vmatpush2.msra.mxu0 0.0
    %4762 = vmatprep.subr.mxu0 0.0
    %4763 = vmatpush2.msra.mxu0 0.0
    %4764 = vmatprep.subr.mxu0 0.0
    %4765 = vmatpush2.msra.mxu0 0.0
    %4766 = vmatprep.subr.mxu0 0.0
    %4767 = vmatpush2.msra.mxu0 0.0
    %4768 = vmatprep.subr.mxu0 0.0
    %4769 = vmatpush2.msra.mxu0 0.0
    %4770 = vmatprep.subr.mxu0 0.0
    %4771 = vmatpush2.msra.mxu0 0.0
    %4772 = vmatprep.subr.mxu0 0.0
    %4773 = vmatpush2.msra.mxu0 0.0
    %4774 = vmatprep.subr.mxu0 0.0
    %4775 = vmatpush2.msra.mxu0 0.0
    %4776 = vmatprep.subr.mxu0 0.0
    %4777 = vmatpush2.msra.mxu0 0.0
    %4778 = vmatprep.subr.mxu0 0.0
    %4779 = vmatpush2.msra.mxu0 0.0
    %4780 = vmatprep.subr.mxu0 0.0
    %4781 = vmatpush2.msra.mxu0 0.0
    %4782 = vmatprep.subr.mxu0 0.0
    %4783 = vmatpush2.msra.mxu0 0.0
    %4784 = vmatprep.subr.mxu0 0.0
    %4785 = vmatpush2.msra.mxu0 0.0
    %4786 = vmatprep.subr.mxu0 0.0
    %4787 = vmatpush2.msra.mxu0 0.0
    %4788 = vmatprep.subr.mxu0 0.0
    %4789 = vmatpush2.msra.mxu0 0.0
    %4790 = vmatprep.mubr.f32.mxu0 0.0
    %4791 = vmatmul.mubr.f32.gmra.mxu0 %v4724
    %v4792 = vpop.f32.mrf.mxu0
    %v4793 = vadd.f32 %v4723, %v4792
    %v4794 = vpop.f32.mrf.mxu0
    %4795 = vdwg.mxu0
    %v4796 = vxor.u32 %v4720, 2147483648
    %v4797 = vmul.f32 %v4796, 1.442695
    %v4798 = vpow.pop %v4797
    %v4799 = vadd.f32 %v4798, 1.0
    %v4800 = vrcp.pop %v4799
    %v4801 = vmul.f32 1.0, %v4800
    %v4802 = vtanh.pop %v4720
    %v4803 = vxor.u32 %v4793, 2147483648
    %v4804 = vmul.f32 %v4803, 1.442695
    %v4805 = vpow.pop %v4804
    %v4806 = vadd.f32 %v4805, 1.0
    %v4807 = vrcp.pop %v4806
    %v4808 = vmul.f32 1.0, %v4807
    %v4809 = vtanh.pop %v4793
    %v4810 = vmul.f32 %v4801, %v4616
    %4812 = vrot.lane.b32.xlu0 %v4802, 80
    %v4813 = vpop.permute.xlu0 %4812
    %v4815 = vmul.f32 %v4801, %v4813
    %4817 = vrot.lane.b32.xlu0 %v4815, 16
    %v4818 = vpop.permute.xlu0 %4817
    %v4820 = vadd.f32 %v4810, %v4818
    %v4821 = vtanh.pop %v4820
    %4823 = vrot.lane.b32.xlu0 %v4821, 16
    %v4824 = vpop.permute.xlu0 %4823
    %v4826 = vmul.f32 %v4801, %v4824
    %v4827 = vmul.f32 %v4808, %v4633
    %4829 = vrot.lane.b32.xlu0 %v4809, 80
    %v4830 = vpop.permute.xlu0 %4829
    %v4832 = vmul.f32 %v4808, %v4830
    %4834 = vrot.lane.b32.xlu0 %v4832, 16
    %v4835 = vpop.permute.xlu0 %4834
    %v4837 = vadd.f32 %v4827, %v4835
    %v4838 = vtanh.pop %v4837
    %4840 = vrot.lane.b32.xlu0 %v4838, 16
    %v4841 = vpop.permute.xlu0 %4840
    %v4843 = vmul.f32 %v4808, %v4841
    %4845 = vrot.lane.b32.xlu0 %v4826, 96
    %v4846 = vpop.permute.xlu0 %4845
    %4848 = vst.msk [vmem:[#allocation2 + $0x8] sm:$0x1] %vm411, %v4846
    %4850 = vrot.lane.b32.xlu0 %v4843, 96
    %v4851 = vpop.permute.xlu0 %4850
    %4853 = vst.msk [vmem:[#allocation3 + $0x3] sm:$0x1] %vm411, %v4851
    %v4854 = vld [vmem:[#allocation4 + $0x9] sm:$0x1]
    %v4855 = vsel %vm214, %v4846, 0
    %4857 = vmatprep.subr.mxu0 0.0
    %4858 = vmatpush1.msra.mxu0 0.0
    %4859 = vmatprep.subr.mxu0 0.0
    %4860 = vmatpush1.msra.mxu0 0.0
    %4861 = vmatprep.subr.mxu0 0.0
    %4862 = vmatpush1.msra.mxu0 0.0
    %4863 = vmatprep.subr.mxu0 0.0
    %4864 = vmatpush1.msra.mxu0 0.0
    %4865 = vmatprep.subr.mxu0 0.0
    %4866 = vmatpush1.msra.mxu0 0.0
    %4867 = vmatprep.subr.mxu0 0.0
    %4868 = vmatpush1.msra.mxu0 0.0
    %4869 = vmatprep.subr.mxu0 0.0
    %4870 = vmatpush1.msra.mxu0 0.0
    %4871 = vmatprep.subr.mxu0 0.0
    %4872 = vmatpush1.msra.mxu0 0.0
    %4873 = vmatprep.subr.mxu0 0.0
    %4874 = vmatpush1.msra.mxu0 0.0
    %4875 = vmatprep.subr.mxu0 0.0
    %4876 = vmatpush1.msra.mxu0 0.0
    %4877 = vmatprep.subr.mxu0 0.0
    %4878 = vmatpush1.msra.mxu0 0.0
    %4879 = vmatprep.subr.mxu0 0.0
    %4880 = vmatpush1.msra.mxu0 0.0
    %4881 = vmatprep.subr.mxu0 0.0
    %4882 = vmatpush1.msra.mxu0 0.0
    %4883 = vmatprep.subr.mxu0 0.0
    %4884 = vmatpush1.msra.mxu0 0.0
    %4885 = vmatprep.subr.mxu0 0.0
    %4886 = vmatpush1.msra.mxu0 %v2675
    %4887 = vmatprep.subr.mxu0 0.0
    %4888 = vmatpush1.msra.mxu0 %v2674
    %4889 = vmatprep.subr.mxu0 0.0
    %4890 = vmatpush2.msra.mxu0 0.0
    %4891 = vmatprep.subr.mxu0 0.0
    %4892 = vmatpush2.msra.mxu0 0.0
    %4893 = vmatprep.subr.mxu0 0.0
    %4894 = vmatpush2.msra.mxu0 0.0
    %4895 = vmatprep.subr.mxu0 0.0
    %4896 = vmatpush2.msra.mxu0 0.0
    %4897 = vmatprep.subr.mxu0 0.0
    %4898 = vmatpush2.msra.mxu0 0.0
    %4899 = vmatprep.subr.mxu0 0.0
    %4900 = vmatpush2.msra.mxu0 0.0
    %4901 = vmatprep.subr.mxu0 0.0
    %4902 = vmatpush2.msra.mxu0 0.0
    %4903 = vmatprep.subr.mxu0 0.0
    %4904 = vmatpush2.msra.mxu0 0.0
    %4905 = vmatprep.subr.mxu0 0.0
    %4906 = vmatpush2.msra.mxu0 0.0
    %4907 = vmatprep.subr.mxu0 0.0
    %4908 = vmatpush2.msra.mxu0 0.0
    %4909 = vmatprep.subr.mxu0 0.0
    %4910 = vmatpush2.msra.mxu0 0.0
    %4911 = vmatprep.subr.mxu0 0.0
    %4912 = vmatpush2.msra.mxu0 0.0
    %4913 = vmatprep.subr.mxu0 0.0
    %4914 = vmatpush2.msra.mxu0 0.0
    %4915 = vmatprep.subr.mxu0 0.0
    %4916 = vmatpush2.msra.mxu0 0.0
    %4917 = vmatprep.subr.mxu0 0.0
    %4918 = vmatpush2.msra.mxu0 0.0
    %4919 = vmatprep.subr.mxu0 0.0
    %4920 = vmatpush2.msra.mxu0 0.0
    %4921 = vmatprep.mubr.f32.mxu0 0.0
    %4922 = vmatmul.mubr.f32.gmra.mxu0 %v4855
    %v4923 = vpop.f32.mrf.mxu0
    %v4924 = vadd.f32 %v4854, %v4923
    %v4925 = vpop.f32.mrf.mxu0
    %4926 = vdwg.mxu0
    %v4927 = vld [vmem:[#allocation5 + $0x2] sm:$0x1]
    %v4928 = vsel %vm214, %v4851, 0
    %4930 = vmatprep.subr.mxu0 0.0
    %4931 = vmatpush1.msra.mxu0 0.0
    %4932 = vmatprep.subr.mxu0 0.0
    %4933 = vmatpush1.msra.mxu0 0.0
    %4934 = vmatprep.subr.mxu0 0.0
    %4935 = vmatpush1.msra.mxu0 0.0
    %4936 = vmatprep.subr.mxu0 0.0
    %4937 = vmatpush1.msra.mxu0 0.0
    %4938 = vmatprep.subr.mxu0 0.0
    %4939 = vmatpush1.msra.mxu0 0.0
    %4940 = vmatprep.subr.mxu0 0.0
    %4941 = vmatpush1.msra.mxu0 0.0
    %4942 = vmatprep.subr.mxu0 0.0
    %4943 = vmatpush1.msra.mxu0 0.0
    %4944 = vmatprep.subr.mxu0 0.0
    %4945 = vmatpush1.msra.mxu0 0.0
    %4946 = vmatprep.subr.mxu0 0.0
    %4947 = vmatpush1.msra.mxu0 0.0
    %4948 = vmatprep.subr.mxu0 0.0
    %4949 = vmatpush1.msra.mxu0 0.0
    %4950 = vmatprep.subr.mxu0 0.0
    %4951 = vmatpush1.msra.mxu0 0.0
    %4952 = vmatprep.subr.mxu0 0.0
    %4953 = vmatpush1.msra.mxu0 0.0
    %4954 = vmatprep.subr.mxu0 0.0
    %4955 = vmatpush1.msra.mxu0 0.0
    %4956 = vmatprep.subr.mxu0 0.0
    %4957 = vmatpush1.msra.mxu0 0.0
    %4958 = vmatprep.subr.mxu0 0.0
    %4959 = vmatpush1.msra.mxu0 %v2683
    %4960 = vmatprep.subr.mxu0 0.0
    %4961 = vmatpush1.msra.mxu0 %v2682
    %4962 = vmatprep.subr.mxu0 0.0
    %4963 = vmatpush2.msra.mxu0 0.0
    %4964 = vmatprep.subr.mxu0 0.0
    %4965 = vmatpush2.msra.mxu0 0.0
    %4966 = vmatprep.subr.mxu0 0.0
    %4967 = vmatpush2.msra.mxu0 0.0
    %4968 = vmatprep.subr.mxu0 0.0
    %4969 = vmatpush2.msra.mxu0 0.0
    %4970 = vmatprep.subr.mxu0 0.0
    %4971 = vmatpush2.msra.mxu0 0.0
    %4972 = vmatprep.subr.mxu0 0.0
    %4973 = vmatpush2.msra.mxu0 0.0
    %4974 = vmatprep.subr.mxu0 0.0
    %4975 = vmatpush2.msra.mxu0 0.0
    %4976 = vmatprep.subr.mxu0 0.0
    %4977 = vmatpush2.msra.mxu0 0.0
    %4978 = vmatprep.subr.mxu0 0.0
    %4979 = vmatpush2.msra.mxu0 0.0
    %4980 = vmatprep.subr.mxu0 0.0
    %4981 = vmatpush2.msra.mxu0 0.0
    %4982 = vmatprep.subr.mxu0 0.0
    %4983 = vmatpush2.msra.mxu0 0.0
    %4984 = vmatprep.subr.mxu0 0.0
    %4985 = vmatpush2.msra.mxu0 0.0
    %4986 = vmatprep.subr.mxu0 0.0
    %4987 = vmatpush2.msra.mxu0 0.0
    %4988 = vmatprep.subr.mxu0 0.0
    %4989 = vmatpush2.msra.mxu0 0.0
    %4990 = vmatprep.subr.mxu0 0.0
    %4991 = vmatpush2.msra.mxu0 0.0
    %4992 = vmatprep.subr.mxu0 0.0
    %4993 = vmatpush2.msra.mxu0 0.0
    %4994 = vmatprep.mubr.f32.mxu0 0.0
    %4995 = vmatmul.mubr.f32.gmra.mxu0 %v4928
    %v4996 = vpop.f32.mrf.mxu0
    %v4997 = vadd.f32 %v4927, %v4996
    %v4998 = vpop.f32.mrf.mxu0
    %4999 = vdwg.mxu0
    %v5000 = vxor.u32 %v4924, 2147483648
    %v5001 = vmul.f32 %v5000, 1.442695
    %v5002 = vpow.pop %v5001
    %v5003 = vadd.f32 %v5002, 1.0
    %v5004 = vrcp.pop %v5003
    %v5005 = vmul.f32 1.0, %v5004
    %v5006 = vtanh.pop %v4924
    %v5007 = vxor.u32 %v4997, 2147483648
    %v5008 = vmul.f32 %v5007, 1.442695
    %v5009 = vpow.pop %v5008
    %v5010 = vadd.f32 %v5009, 1.0
    %v5011 = vrcp.pop %v5010
    %v5012 = vmul.f32 1.0, %v5011
    %v5013 = vtanh.pop %v4997
    %v5014 = vmul.f32 %v5005, %v4820
    %5016 = vrot.lane.b32.xlu0 %v5006, 80
    %v5017 = vpop.permute.xlu0 %5016
    %v5019 = vmul.f32 %v5005, %v5017
    %5021 = vrot.lane.b32.xlu0 %v5019, 16
    %v5022 = vpop.permute.xlu0 %5021
    %v5024 = vadd.f32 %v5014, %v5022
    %v5025 = vtanh.pop %v5024
    %5027 = vrot.lane.b32.xlu0 %v5025, 16
    %v5028 = vpop.permute.xlu0 %5027
    %v5030 = vmul.f32 %v5005, %v5028
    %v5031 = vmul.f32 %v5012, %v4837
    %5033 = vrot.lane.b32.xlu0 %v5013, 80
    %v5034 = vpop.permute.xlu0 %5033
    %v5036 = vmul.f32 %v5012, %v5034
    %5038 = vrot.lane.b32.xlu0 %v5036, 16
    %v5039 = vpop.permute.xlu0 %5038
    %v5041 = vadd.f32 %v5031, %v5039
    %v5042 = vtanh.pop %v5041
    %5044 = vrot.lane.b32.xlu0 %v5042, 16
    %v5045 = vpop.permute.xlu0 %5044
    %v5047 = vmul.f32 %v5012, %v5045
    %5049 = vrot.lane.b32.xlu0 %v5030, 96
    %v5050 = vpop.permute.xlu0 %5049
    %5052 = vst.msk [vmem:[#allocation2 + $0x9] sm:$0x1] %vm411, %v5050
    %5054 = vrot.lane.b32.xlu0 %v5047, 96
    %v5055 = vpop.permute.xlu0 %5054
    %5057 = vst.msk [vmem:[#allocation3 + $0x2] sm:$0x1] %vm411, %v5055
    %v5058 = vld [vmem:[#allocation4 + $0xa] sm:$0x1]
    %v5059 = vsel %vm214, %v5050, 0
    %5061 = vmatprep.subr.mxu0 0.0
    %5062 = vmatpush1.msra.mxu0 0.0
    %5063 = vmatprep.subr.mxu0 0.0
    %5064 = vmatpush1.msra.mxu0 0.0
    %5065 = vmatprep.subr.mxu0 0.0
    %5066 = vmatpush1.msra.mxu0 0.0
    %5067 = vmatprep.subr.mxu0 0.0
    %5068 = vmatpush1.msra.mxu0 0.0
    %5069 = vmatprep.subr.mxu0 0.0
    %5070 = vmatpush1.msra.mxu0 0.0
    %5071 = vmatprep.subr.mxu0 0.0
    %5072 = vmatpush1.msra.mxu0 0.0
    %5073 = vmatprep.subr.mxu0 0.0
    %5074 = vmatpush1.msra.mxu0 0.0
    %5075 = vmatprep.subr.mxu0 0.0
    %5076 = vmatpush1.msra.mxu0 0.0
    %5077 = vmatprep.subr.mxu0 0.0
    %5078 = vmatpush1.msra.mxu0 0.0
    %5079 = vmatprep.subr.mxu0 0.0
    %5080 = vmatpush1.msra.mxu0 0.0
    %5081 = vmatprep.subr.mxu0 0.0
    %5082 = vmatpush1.msra.mxu0 0.0
    %5083 = vmatprep.subr.mxu0 0.0
    %5084 = vmatpush1.msra.mxu0 0.0
    %5085 = vmatprep.subr.mxu0 0.0
    %5086 = vmatpush1.msra.mxu0 0.0
    %5087 = vmatprep.subr.mxu0 0.0
    %5088 = vmatpush1.msra.mxu0 0.0
    %5089 = vmatprep.subr.mxu0 0.0
    %5090 = vmatpush1.msra.mxu0 %v2675
    %5091 = vmatprep.subr.mxu0 0.0
    %5092 = vmatpush1.msra.mxu0 %v2674
    %5093 = vmatprep.subr.mxu0 0.0
    %5094 = vmatpush2.msra.mxu0 0.0
    %5095 = vmatprep.subr.mxu0 0.0
    %5096 = vmatpush2.msra.mxu0 0.0
    %5097 = vmatprep.subr.mxu0 0.0
    %5098 = vmatpush2.msra.mxu0 0.0
    %5099 = vmatprep.subr.mxu0 0.0
    %5100 = vmatpush2.msra.mxu0 0.0
    %5101 = vmatprep.subr.mxu0 0.0
    %5102 = vmatpush2.msra.mxu0 0.0
    %5103 = vmatprep.subr.mxu0 0.0
    %5104 = vmatpush2.msra.mxu0 0.0
    %5105 = vmatprep.subr.mxu0 0.0
    %5106 = vmatpush2.msra.mxu0 0.0
    %5107 = vmatprep.subr.mxu0 0.0
    %5108 = vmatpush2.msra.mxu0 0.0
    %5109 = vmatprep.subr.mxu0 0.0
    %5110 = vmatpush2.msra.mxu0 0.0
    %5111 = vmatprep.subr.mxu0 0.0
    %5112 = vmatpush2.msra.mxu0 0.0
    %5113 = vmatprep.subr.mxu0 0.0
    %5114 = vmatpush2.msra.mxu0 0.0
    %5115 = vmatprep.subr.mxu0 0.0
    %5116 = vmatpush2.msra.mxu0 0.0
    %5117 = vmatprep.subr.mxu0 0.0
    %5118 = vmatpush2.msra.mxu0 0.0
    %5119 = vmatprep.subr.mxu0 0.0
    %5120 = vmatpush2.msra.mxu0 0.0
    %5121 = vmatprep.subr.mxu0 0.0
    %5122 = vmatpush2.msra.mxu0 0.0
    %5123 = vmatprep.subr.mxu0 0.0
    %5124 = vmatpush2.msra.mxu0 0.0
    %5125 = vmatprep.mubr.f32.mxu0 0.0
    %5126 = vmatmul.mubr.f32.gmra.mxu0 %v5059
    %v5127 = vpop.f32.mrf.mxu0
    %v5128 = vadd.f32 %v5058, %v5127
    %v5129 = vpop.f32.mrf.mxu0
    %5130 = vdwg.mxu0
    %v5131 = vld [vmem:[#allocation5 + $0x1] sm:$0x1]
    %v5132 = vsel %vm214, %v5055, 0
    %5134 = vmatprep.subr.mxu0 0.0
    %5135 = vmatpush1.msra.mxu0 0.0
    %5136 = vmatprep.subr.mxu0 0.0
    %5137 = vmatpush1.msra.mxu0 0.0
    %5138 = vmatprep.subr.mxu0 0.0
    %5139 = vmatpush1.msra.mxu0 0.0
    %5140 = vmatprep.subr.mxu0 0.0
    %5141 = vmatpush1.msra.mxu0 0.0
    %5142 = vmatprep.subr.mxu0 0.0
    %5143 = vmatpush1.msra.mxu0 0.0
    %5144 = vmatprep.subr.mxu0 0.0
    %5145 = vmatpush1.msra.mxu0 0.0
    %5146 = vmatprep.subr.mxu0 0.0
    %5147 = vmatpush1.msra.mxu0 0.0
    %5148 = vmatprep.subr.mxu0 0.0
    %5149 = vmatpush1.msra.mxu0 0.0
    %5150 = vmatprep.subr.mxu0 0.0
    %5151 = vmatpush1.msra.mxu0 0.0
    %5152 = vmatprep.subr.mxu0 0.0
    %5153 = vmatpush1.msra.mxu0 0.0
    %5154 = vmatprep.subr.mxu0 0.0
    %5155 = vmatpush1.msra.mxu0 0.0
    %5156 = vmatprep.subr.mxu0 0.0
    %5157 = vmatpush1.msra.mxu0 0.0
    %5158 = vmatprep.subr.mxu0 0.0
    %5159 = vmatpush1.msra.mxu0 0.0
    %5160 = vmatprep.subr.mxu0 0.0
    %5161 = vmatpush1.msra.mxu0 0.0
    %5162 = vmatprep.subr.mxu0 0.0
    %5163 = vmatpush1.msra.mxu0 %v2683
    %5164 = vmatprep.subr.mxu0 0.0
    %5165 = vmatpush1.msra.mxu0 %v2682
    %5166 = vmatprep.subr.mxu0 0.0
    %5167 = vmatpush2.msra.mxu0 0.0
    %5168 = vmatprep.subr.mxu0 0.0
    %5169 = vmatpush2.msra.mxu0 0.0
    %5170 = vmatprep.subr.mxu0 0.0
    %5171 = vmatpush2.msra.mxu0 0.0
    %5172 = vmatprep.subr.mxu0 0.0
    %5173 = vmatpush2.msra.mxu0 0.0
    %5174 = vmatprep.subr.mxu0 0.0
    %5175 = vmatpush2.msra.mxu0 0.0
    %5176 = vmatprep.subr.mxu0 0.0
    %5177 = vmatpush2.msra.mxu0 0.0
    %5178 = vmatprep.subr.mxu0 0.0
    %5179 = vmatpush2.msra.mxu0 0.0
    %5180 = vmatprep.subr.mxu0 0.0
    %5181 = vmatpush2.msra.mxu0 0.0
    %5182 = vmatprep.subr.mxu0 0.0
    %5183 = vmatpush2.msra.mxu0 0.0
    %5184 = vmatprep.subr.mxu0 0.0
    %5185 = vmatpush2.msra.mxu0 0.0
    %5186 = vmatprep.subr.mxu0 0.0
    %5187 = vmatpush2.msra.mxu0 0.0
    %5188 = vmatprep.subr.mxu0 0.0
    %5189 = vmatpush2.msra.mxu0 0.0
    %5190 = vmatprep.subr.mxu0 0.0
    %5191 = vmatpush2.msra.mxu0 0.0
    %5192 = vmatprep.subr.mxu0 0.0
    %5193 = vmatpush2.msra.mxu0 0.0
    %5194 = vmatprep.subr.mxu0 0.0
    %5195 = vmatpush2.msra.mxu0 0.0
    %5196 = vmatprep.subr.mxu0 0.0
    %5197 = vmatpush2.msra.mxu0 0.0
    %5198 = vmatprep.mubr.f32.mxu0 0.0
    %5199 = vmatmul.mubr.f32.gmra.mxu0 %v5132
    %v5200 = vpop.f32.mrf.mxu0
    %v5201 = vadd.f32 %v5131, %v5200
    %v5202 = vpop.f32.mrf.mxu0
    %5203 = vdwg.mxu0
    %v5204 = vxor.u32 %v5128, 2147483648
    %v5205 = vmul.f32 %v5204, 1.442695
    %v5206 = vpow.pop %v5205
    %v5207 = vadd.f32 %v5206, 1.0
    %v5208 = vrcp.pop %v5207
    %v5209 = vmul.f32 1.0, %v5208
    %v5210 = vtanh.pop %v5128
    %v5211 = vxor.u32 %v5201, 2147483648
    %v5212 = vmul.f32 %v5211, 1.442695
    %v5213 = vpow.pop %v5212
    %v5214 = vadd.f32 %v5213, 1.0
    %v5215 = vrcp.pop %v5214
    %v5216 = vmul.f32 1.0, %v5215
    %v5217 = vtanh.pop %v5201
    %v5218 = vmul.f32 %v5209, %v5024
    %5220 = vrot.lane.b32.xlu0 %v5210, 80
    %v5221 = vpop.permute.xlu0 %5220
    %v5223 = vmul.f32 %v5209, %v5221
    %5225 = vrot.lane.b32.xlu0 %v5223, 16
    %v5226 = vpop.permute.xlu0 %5225
    %v5228 = vadd.f32 %v5218, %v5226
    %v5229 = vtanh.pop %v5228
    %5231 = vrot.lane.b32.xlu0 %v5229, 16
    %v5232 = vpop.permute.xlu0 %5231
    %v5234 = vmul.f32 %v5209, %v5232
    %v5235 = vmul.f32 %v5216, %v5041
    %5237 = vrot.lane.b32.xlu0 %v5217, 80
    %v5238 = vpop.permute.xlu0 %5237
    %v5240 = vmul.f32 %v5216, %v5238
    %5242 = vrot.lane.b32.xlu0 %v5240, 16
    %v5243 = vpop.permute.xlu0 %5242
    %v5245 = vadd.f32 %v5235, %v5243
    %v5246 = vtanh.pop %v5245
    %5248 = vrot.lane.b32.xlu0 %v5246, 16
    %v5249 = vpop.permute.xlu0 %5248
    %v5251 = vmul.f32 %v5216, %v5249
    %5253 = vrot.lane.b32.xlu0 %v5234, 96
    %v5254 = vpop.permute.xlu0 %5253
    %5256 = vst.msk [vmem:[#allocation2 + $0xa] sm:$0x1] %vm411, %v5254
    %5258 = vrot.lane.b32.xlu0 %v5251, 96
    %v5259 = vpop.permute.xlu0 %5258
    %5261 = vst.msk [vmem:[#allocation3 + $0x1] sm:$0x1] %vm411, %v5259
    %v5262 = vld [vmem:[#allocation4 + $0xb] sm:$0x1]
    %v5263 = vsel %vm214, %v5254, 0
    %5265 = vmatprep.subr.mxu0 0.0
    %5266 = vmatpush1.msra.mxu0 0.0
    %5267 = vmatprep.subr.mxu0 0.0
    %5268 = vmatpush1.msra.mxu0 0.0
    %5269 = vmatprep.subr.mxu0 0.0
    %5270 = vmatpush1.msra.mxu0 0.0
    %5271 = vmatprep.subr.mxu0 0.0
    %5272 = vmatpush1.msra.mxu0 0.0
    %5273 = vmatprep.subr.mxu0 0.0
    %5274 = vmatpush1.msra.mxu0 0.0
    %5275 = vmatprep.subr.mxu0 0.0
    %5276 = vmatpush1.msra.mxu0 0.0
    %5277 = vmatprep.subr.mxu0 0.0
    %5278 = vmatpush1.msra.mxu0 0.0
    %5279 = vmatprep.subr.mxu0 0.0
    %5280 = vmatpush1.msra.mxu0 0.0
    %5281 = vmatprep.subr.mxu0 0.0
    %5282 = vmatpush1.msra.mxu0 0.0
    %5283 = vmatprep.subr.mxu0 0.0
    %5284 = vmatpush1.msra.mxu0 0.0
    %5285 = vmatprep.subr.mxu0 0.0
    %5286 = vmatpush1.msra.mxu0 0.0
    %5287 = vmatprep.subr.mxu0 0.0
    %5288 = vmatpush1.msra.mxu0 0.0
    %5289 = vmatprep.subr.mxu0 0.0
    %5290 = vmatpush1.msra.mxu0 0.0
    %5291 = vmatprep.subr.mxu0 0.0
    %5292 = vmatpush1.msra.mxu0 0.0
    %5293 = vmatprep.subr.mxu0 0.0
    %5294 = vmatpush1.msra.mxu0 %v2675
    %5295 = vmatprep.subr.mxu0 0.0
    %5296 = vmatpush1.msra.mxu0 %v2674
    %5297 = vmatprep.subr.mxu0 0.0
    %5298 = vmatpush2.msra.mxu0 0.0
    %5299 = vmatprep.subr.mxu0 0.0
    %5300 = vmatpush2.msra.mxu0 0.0
    %5301 = vmatprep.subr.mxu0 0.0
    %5302 = vmatpush2.msra.mxu0 0.0
    %5303 = vmatprep.subr.mxu0 0.0
    %5304 = vmatpush2.msra.mxu0 0.0
    %5305 = vmatprep.subr.mxu0 0.0
    %5306 = vmatpush2.msra.mxu0 0.0
    %5307 = vmatprep.subr.mxu0 0.0
    %5308 = vmatpush2.msra.mxu0 0.0
    %5309 = vmatprep.subr.mxu0 0.0
    %5310 = vmatpush2.msra.mxu0 0.0
    %5311 = vmatprep.subr.mxu0 0.0
    %5312 = vmatpush2.msra.mxu0 0.0
    %5313 = vmatprep.subr.mxu0 0.0
    %5314 = vmatpush2.msra.mxu0 0.0
    %5315 = vmatprep.subr.mxu0 0.0
    %5316 = vmatpush2.msra.mxu0 0.0
    %5317 = vmatprep.subr.mxu0 0.0
    %5318 = vmatpush2.msra.mxu0 0.0
    %5319 = vmatprep.subr.mxu0 0.0
    %5320 = vmatpush2.msra.mxu0 0.0
    %5321 = vmatprep.subr.mxu0 0.0
    %5322 = vmatpush2.msra.mxu0 0.0
    %5323 = vmatprep.subr.mxu0 0.0
    %5324 = vmatpush2.msra.mxu0 0.0
    %5325 = vmatprep.subr.mxu0 0.0
    %5326 = vmatpush2.msra.mxu0 0.0
    %5327 = vmatprep.subr.mxu0 0.0
    %5328 = vmatpush2.msra.mxu0 0.0
    %5329 = vmatprep.mubr.f32.mxu0 0.0
    %5330 = vmatmul.mubr.f32.gmra.mxu0 %v5263
    %v5331 = vpop.f32.mrf.mxu0
    %v5332 = vadd.f32 %v5262, %v5331
    %v5333 = vpop.f32.mrf.mxu0
    %5334 = vdwg.mxu0
    %v5335 = vld [vmem:[#allocation5] sm:$0x1]
    %v5336 = vsel %vm214, %v5259, 0
    %5338 = vmatprep.subr.mxu0 0.0
    %5339 = vmatpush1.msra.mxu0 0.0
    %5340 = vmatprep.subr.mxu0 0.0
    %5341 = vmatpush1.msra.mxu0 0.0
    %5342 = vmatprep.subr.mxu0 0.0
    %5343 = vmatpush1.msra.mxu0 0.0
    %5344 = vmatprep.subr.mxu0 0.0
    %5345 = vmatpush1.msra.mxu0 0.0
    %5346 = vmatprep.subr.mxu0 0.0
    %5347 = vmatpush1.msra.mxu0 0.0
    %5348 = vmatprep.subr.mxu0 0.0
    %5349 = vmatpush1.msra.mxu0 0.0
    %5350 = vmatprep.subr.mxu0 0.0
    %5351 = vmatpush1.msra.mxu0 0.0
    %5352 = vmatprep.subr.mxu0 0.0
    %5353 = vmatpush1.msra.mxu0 0.0
    %5354 = vmatprep.subr.mxu0 0.0
    %5355 = vmatpush1.msra.mxu0 0.0
    %5356 = vmatprep.subr.mxu0 0.0
    %5357 = vmatpush1.msra.mxu0 0.0
    %5358 = vmatprep.subr.mxu0 0.0
    %5359 = vmatpush1.msra.mxu0 0.0
    %5360 = vmatprep.subr.mxu0 0.0
    %5361 = vmatpush1.msra.mxu0 0.0
    %5362 = vmatprep.subr.mxu0 0.0
    %5363 = vmatpush1.msra.mxu0 0.0
    %5364 = vmatprep.subr.mxu0 0.0
    %5365 = vmatpush1.msra.mxu0 0.0
    %5366 = vmatprep.subr.mxu0 0.0
    %5367 = vmatpush1.msra.mxu0 %v2683
    %5368 = vmatprep.subr.mxu0 0.0
    %5369 = vmatpush1.msra.mxu0 %v2682
    %5370 = vmatprep.subr.mxu0 0.0
    %5371 = vmatpush2.msra.mxu0 0.0
    %5372 = vmatprep.subr.mxu0 0.0
    %5373 = vmatpush2.msra.mxu0 0.0
    %5374 = vmatprep.subr.mxu0 0.0
    %5375 = vmatpush2.msra.mxu0 0.0
    %5376 = vmatprep.subr.mxu0 0.0
    %5377 = vmatpush2.msra.mxu0 0.0
    %5378 = vmatprep.subr.mxu0 0.0
    %5379 = vmatpush2.msra.mxu0 0.0
    %5380 = vmatprep.subr.mxu0 0.0
    %5381 = vmatpush2.msra.mxu0 0.0
    %5382 = vmatprep.subr.mxu0 0.0
    %5383 = vmatpush2.msra.mxu0 0.0
    %5384 = vmatprep.subr.mxu0 0.0
    %5385 = vmatpush2.msra.mxu0 0.0
    %5386 = vmatprep.subr.mxu0 0.0
    %5387 = vmatpush2.msra.mxu0 0.0
    %5388 = vmatprep.subr.mxu0 0.0
    %5389 = vmatpush2.msra.mxu0 0.0
    %5390 = vmatprep.subr.mxu0 0.0
    %5391 = vmatpush2.msra.mxu0 0.0
    %5392 = vmatprep.subr.mxu0 0.0
    %5393 = vmatpush2.msra.mxu0 0.0
    %5394 = vmatprep.subr.mxu0 0.0
    %5395 = vmatpush2.msra.mxu0 0.0
    %5396 = vmatprep.subr.mxu0 0.0
    %5397 = vmatpush2.msra.mxu0 0.0
    %5398 = vmatprep.subr.mxu0 0.0
    %5399 = vmatpush2.msra.mxu0 0.0
    %5400 = vmatprep.subr.mxu0 0.0
    %5401 = vmatpush2.msra.mxu0 0.0
    %5402 = vmatprep.mubr.f32.mxu0 0.0
    %5403 = vmatmul.mubr.f32.gmra.mxu0 %v5336
    %v5404 = vpop.f32.mrf.mxu0
    %v5405 = vadd.f32 %v5335, %v5404
    %v5406 = vpop.f32.mrf.mxu0
    %5407 = vdwg.mxu0
    %v5408 = vxor.u32 %v5332, 2147483648
    %v5409 = vmul.f32 %v5408, 1.442695
    %v5410 = vpow.pop %v5409
    %v5411 = vadd.f32 %v5410, 1.0
    %v5412 = vrcp.pop %v5411
    %v5413 = vmul.f32 1.0, %v5412
    %v5414 = vtanh.pop %v5332
    %v5415 = vxor.u32 %v5405, 2147483648
    %v5416 = vmul.f32 %v5415, 1.442695
    %v5417 = vpow.pop %v5416
    %v5418 = vadd.f32 %v5417, 1.0
    %v5419 = vrcp.pop %v5418
    %v5420 = vmul.f32 1.0, %v5419
    %v5421 = vtanh.pop %v5405
    %v5422 = vmul.f32 %v5413, %v5228
    %5424 = vrot.lane.b32.xlu0 %v5414, 80
    %v5425 = vpop.permute.xlu0 %5424
    %v5427 = vmul.f32 %v5413, %v5425
    %5429 = vrot.lane.b32.xlu0 %v5427, 16
    %v5430 = vpop.permute.xlu0 %5429
    %v5432 = vadd.f32 %v5422, %v5430
    %v5433 = vtanh.pop %v5432
    %5435 = vrot.lane.b32.xlu0 %v5433, 16
    %v5436 = vpop.permute.xlu0 %5435
    %v5438 = vmul.f32 %v5413, %v5436
    %v5439 = vmul.f32 %v5420, %v5245
    %5441 = vrot.lane.b32.xlu0 %v5421, 80
    %v5442 = vpop.permute.xlu0 %5441
    %v5444 = vmul.f32 %v5420, %v5442
    %5446 = vrot.lane.b32.xlu0 %v5444, 16
    %v5447 = vpop.permute.xlu0 %5446
    %v5449 = vadd.f32 %v5439, %v5447
    %v5450 = vtanh.pop %v5449
    %5452 = vrot.lane.b32.xlu0 %v5450, 16
    %v5453 = vpop.permute.xlu0 %5452
    %v5455 = vmul.f32 %v5420, %v5453
    %5457 = vrot.lane.b32.xlu0 %v5438, 96
    %v5458 = vpop.permute.xlu0 %5457
    %5460 = vst.msk [vmem:[#allocation2 + $0xb] sm:$0x1] %vm411, %v5458
    %5462 = vrot.lane.b32.xlu0 %v5455, 96
    %v5463 = vpop.permute.xlu0 %5462
    %5465 = vst.msk [vmem:[#allocation3] sm:$0x1] %vm411, %v5463
    %v5466 = vld [vmem:[#allocation2] sm:$0xff]
    %v5467 = vld [vmem:[#allocation2 + $0x8] sm:$0xf]
    %v5468 = vld [vmem:[#allocation3] sm:$0xff]
    %v5469 = vld [vmem:[#allocation3 + $0x8] sm:$0xf]
    %5472 = vrot.lane.b32.xlu0 %v5468, 16
    %v5473 = vpop.permute.xlu0 %5472
    %5474 = vrot.lane.b32.xlu0 %v5469, 16
    %v5475 = vpop.permute.xlu0 %5474
    %v5478 = vsel %vm214, %v5466, %v5473
    %v5479 = vsel %vm214, %v5467, %v5475
    %vm5480 = vcmask 261120
    %5481 = vst.msk [vmem:[#allocation16] sm:$0xff] %vm5480, %v5478
    %vm5482 = vcmask 257024
    %5483 = vst.msk [vmem:[#allocation16 + $0x8] sm:$0xf] %vm5482, %v5479
    %s5484 = smul.u32 32, 1
    %s5485 = sshll.u32 %s5484, 4
    %5486 = dma.done %s105, %s5485
    %5487 = vrot.lane.b32.xlu0 %v2651, 112
    %v5488 = vpop.permute.xlu0 %5487
    %v5490 = vsel %vm214, %v2654, %v5488
    %5491 = vrot.lane.b32.xlu0 %v5455, 112
    %v5492 = vpop.permute.xlu0 %5491
    %v5494 = vsel %vm214, %v5458, %v5492
    %v5496 = vrot.slane %v5494, 7
    %vm5498 = vcmask 1040384
    %v5499 = vsel %vm5498, %v5490, %v5496
    %5501 = vrot.lane.b32.xlu0 %v2628, 112
    %v5502 = vpop.permute.xlu0 %5501
    %v5504 = vsel %vm214, %v5502, %v2645
    %5506 = vrot.lane.b32.xlu0 %v5432, 112
    %v5507 = vpop.permute.xlu0 %5506
    %v5509 = vsel %vm214, %v5507, %v5449
    %v5511 = vrot.slane %v5509, 7
    %v5513 = vsel %vm5498, %v5504, %v5511
    %vm5514 = vcmask 254976
    %5515 = vst.msk [vmem:[#allocation19] sm:$0x3] %vm5514, %v5513
    %v5516 = vld [vmem:[#allocation8] sm:$0xff]
    %v5517 = vld [vmem:[#allocation8 + $0x8] sm:$0xff]
    %v5518 = vld [vmem:[#allocation8 + $0x10] sm:$0xff]
    %v5519 = vld [vmem:[#allocation8 + $0x18] sm:$0xff]
    %v5520 = vld [vmem:[%s12] sm:$0x1]
    %v5522 = vlaneseq
    %v5523 = vshrl.u32 %v5522, 7
    %v5524 = vsub.s32 0, %v5523
    %v5525 = vrot.slane %v5520, %v5524
    %v5528 = vsel %vm5480, %v5499, 0
    %5530 = vmatprep.subr.mxu0 0.0
    %5531 = vmatpush1.msra.mxu0 0.0
    %5532 = vmatprep.subr.mxu0 0.0
    %5533 = vmatpush1.msra.mxu0 0.0
    %5534 = vmatprep.subr.mxu0 0.0
    %5535 = vmatpush1.msra.mxu0 0.0
    %5536 = vmatprep.subr.mxu0 0.0
    %5537 = vmatpush1.msra.mxu0 0.0
    %5538 = vmatprep.subr.mxu0 0.0
    %5539 = vmatpush1.msra.mxu0 0.0
    %5540 = vmatprep.subr.mxu0 0.0
    %5541 = vmatpush1.msra.mxu0 0.0
    %5542 = vmatprep.subr.mxu0 0.0
    %5543 = vmatpush1.msra.mxu0 0.0
    %5544 = vmatprep.subr.mxu0 0.0
    %5545 = vmatpush1.msra.mxu0 0.0
    %5546 = vmatprep.subr.mxu0 0.0
    %5547 = vmatpush1.msra.mxu0 0.0
    %5548 = vmatprep.subr.mxu0 0.0
    %5549 = vmatpush1.msra.mxu0 0.0
    %5550 = vmatprep.subr.mxu0 0.0
    %5551 = vmatpush1.msra.mxu0 0.0
    %5552 = vmatprep.subr.mxu0 0.0
    %5553 = vmatpush1.msra.mxu0 0.0
    %5554 = vmatprep.subr.mxu0 0.0
    %5555 = vmatpush1.msra.mxu0 %v5519
    %5556 = vmatprep.subr.mxu0 0.0
    %5557 = vmatpush1.msra.mxu0 %v5518
    %5558 = vmatprep.subr.mxu0 0.0
    %5559 = vmatpush1.msra.mxu0 %v5517
    %5560 = vmatprep.subr.mxu0 0.0
    %5561 = vmatpush1.msra.mxu0 %v5516
    %5562 = vmatprep.subr.mxu0 0.0
    %5563 = vmatpush2.msra.mxu0 0.0
    %5564 = vmatprep.subr.mxu0 0.0
    %5565 = vmatpush2.msra.mxu0 0.0
    %5566 = vmatprep.subr.mxu0 0.0
    %5567 = vmatpush2.msra.mxu0 0.0
    %5568 = vmatprep.subr.mxu0 0.0
    %5569 = vmatpush2.msra.mxu0 0.0
    %5570 = vmatprep.subr.mxu0 0.0
    %5571 = vmatpush2.msra.mxu0 0.0
    %5572 = vmatprep.subr.mxu0 0.0
    %5573 = vmatpush2.msra.mxu0 0.0
    %5574 = vmatprep.subr.mxu0 0.0
    %5575 = vmatpush2.msra.mxu0 0.0
    %5576 = vmatprep.subr.mxu0 0.0
    %5577 = vmatpush2.msra.mxu0 0.0
    %5578 = vmatprep.subr.mxu0 0.0
    %5579 = vmatpush2.msra.mxu0 0.0
    %5580 = vmatprep.subr.mxu0 0.0
    %5581 = vmatpush2.msra.mxu0 0.0
    %5582 = vmatprep.subr.mxu0 0.0
    %5583 = vmatpush2.msra.mxu0 0.0
    %5584 = vmatprep.subr.mxu0 0.0
    %5585 = vmatpush2.msra.mxu0 0.0
    %5586 = vmatprep.subr.mxu0 0.0
    %5587 = vmatpush2.msra.mxu0 0.0
    %5588 = vmatprep.subr.mxu0 0.0
    %5589 = vmatpush2.msra.mxu0 0.0
    %5590 = vmatprep.subr.mxu0 0.0
    %5591 = vmatpush2.msra.mxu0 0.0
    %5592 = vmatprep.subr.mxu0 0.0
    %5593 = vmatpush2.msra.mxu0 0.0
    %5594 = vmatprep.mubr.f32.mxu0 0.0
    %5595 = vmatmul.mubr.f32.gmra.mxu0 %v5528
    %v5596 = vpop.f32.mrf.mxu0
    %v5597 = vadd.f32 %v5525, %v5596
    %v5598 = vpop.f32.mrf.mxu0
    %5599 = vdwg.mxu0
    %v5600 = vtanh.pop %v5597
    %5601 = vst.msk [vmem:[#allocation17] sm:$0x3] %vm5514, %v5600
    // Predicated region
    $region96: #{tpu_custom_call.1} parent=1 // pred_check
      _
    $region97: #{tpu_custom_call.1} parent=1 // pred_check_branch
      %5603 = sbr.rel (0) target = $region99
    $region98: #{tpu_custom_call.1} parent=1 // pred_region
      %s5605 = ssub.s32 256, 256
      %5606 = vsyncadd [#allocation12], %s5605
      %s5607 = sshll.u32 [#allocation16], 4
      %s5608 = int_to_ptr.vmem [resolvable:$true] %s5607
      %5613 = dma.vmem_to_hbm [thread:$0]  %s5608, 256, %s13, [#allocation12], 128, 128, 8
    $region99: #{tpu_custom_call.1} parent=1 // pred_fallthru
      _
    // Predicated region
    $region100: #{tpu_custom_call.1} parent=1 // pred_check
      _
    $region101: #{tpu_custom_call.1} parent=1 // pred_check_branch
      %5615 = sbr.rel (0) target = $region103
    $region102: #{tpu_custom_call.1} parent=1 // pred_region
      %s5617 = ssub.s32 32, 32
      %5618 = vsyncadd [#allocation18], %s5617
      %s5620 = sshll.u32 [#allocation17], 4
      %s5621 = int_to_ptr.vmem [resolvable:$true] %s5620
      %5623 = dma.vmem_to_hbm [thread:$0]  %s5621, 32, %s14, [#allocation18]
    $region103: #{tpu_custom_call.1} parent=1 // pred_fallthru
      _
    // Predicated region
    $region104: #{tpu_custom_call.1} parent=1 // pred_check
      _
    $region105: #{tpu_custom_call.1} parent=1 // pred_check_branch
      %5625 = sbr.rel (0) target = $region107
    $region106: #{tpu_custom_call.1} parent=1 // pred_region
      %s5627 = ssub.s32 32, 32
      %5628 = vsyncadd [#allocation18], %s5627
      %s5630 = sshll.u32 [#allocation19], 4
      %s5631 = int_to_ptr.vmem [resolvable:$true] %s5630
      %5633 = dma.vmem_to_hbm [thread:$0]  %s5631, 32, %s15, [#allocation18]
    $region107: #{tpu_custom_call.1} parent=1 // pred_fallthru
      _
    // Predicated region
    $region108: #{tpu_custom_call.1} parent=1 // pred_check
      _
    $region109: #{tpu_custom_call.1} parent=1 // pred_check_branch
      %5635 = sbr.rel (0) target = $region111
    $region110: #{tpu_custom_call.1} parent=1 // pred_region
      %5636 = dma.done [#allocation12], 256
    $region111: #{tpu_custom_call.1} parent=1 // pred_fallthru
      _
    // Predicated region
    $region112: #{tpu_custom_call.1} parent=1 // pred_check
      _
    $region113: #{tpu_custom_call.1} parent=1 // pred_check_branch
      %5638 = sbr.rel (0) target = $region115
    $region114: #{tpu_custom_call.1} parent=1 // pred_region
      %5639 = dma.done [#allocation18], 32
    $region115: #{tpu_custom_call.1} parent=1 // pred_fallthru
      _
    // Predicated region
    $region116: #{tpu_custom_call.1} parent=1 // pred_check
      _
    $region117: #{tpu_custom_call.1} parent=1 // pred_check_branch
      %5641 = sbr.rel (0) target = $region119
    $region118: #{tpu_custom_call.1} parent=1 // pred_region
      %5642 = dma.done [#allocation18], 32
    $region119: #{tpu_custom_call.1} parent=1 // pred_fallthru
      _
    %5643 = vsyncpa [#allocation11], 1
    %5644 = vsyncpa [#allocation14], 1
    %5645 = vsyncpa [#allocation12], 1
    %5646 = vsyncpa [#allocation18], 1
  %5647 = vsyncmov [#allocation9]
  %s5648 = vpop.sfrf %5647
  %p5649 = scmp.eq.s32.totalorder %s5648, 0
  %p5650 = pneg %p5649
  %5652 = shalt.err (%p5650)
  %s5653 = scalar_lea.sflag [#allocation9], 1
  %5654 = vsyncmov %s5653
  %s5655 = vpop.sfrf %5654
  %p5656 = scmp.eq.s32.totalorder %s5655, 0
  %p5657 = pneg %p5656
  %5659 = shalt.err (%p5657)
  %s5660 = scalar_lea.sflag [#allocation9], 2
  %5661 = vsyncmov %s5660
  %s5662 = vpop.sfrf %5661
  %p5663 = scmp.eq.s32.totalorder %s5662, 0
  %p5664 = pneg %p5663
  %5666 = shalt.err (%p5664)

</llo_original>
